<compile_context>
chip_gen: v6e
topology: v6e:2x2x1
jax: 0.10.0
libtpu: 0.0.40
codegen_flags: <defaults>
</compile_context>

<pallas_src>
from functools import partial

import numpy as np
import jax
import jax.numpy as jnp
from jax.experimental import pallas as pl
from jax.experimental.pallas import tpu as pltpu

# ----------------------------- model hyper-params -----------------------------
N_HEADS = 2
N_POINTS = 4
D_FFN = 64
NUM_LAYERS = 2
LN_EPS = 1e-5
USE_BF16_MATMUL = True      # bf16 MXU operands, f32 accumulation (native on v6e/v7x)


def _compute_dtype():
    return jnp.bfloat16 if USE_BF16_MATMUL else jnp.float32


# =============================== Pallas kernel ================================

def _layernorm(h, g, b):
    mu = jnp.mean(h, axis=-1, keepdims=True)
    var = jnp.mean(jnp.square(h - mu), axis=-1, keepdims=True)
    return (h - mu) * jax.lax.rsqrt(var + LN_EPS) * g + b


def encoder_layer_kernel(src_full_ref, src_q_ref, pos_ref, base_ref, const_ref,
                         wv_ref, bv_ref, woa_ref, boa_ref, wom_ref, bo_ref,
                         g1_ref, be1_ref, w1_ref, bf1_ref, w2_ref, bf2_ref,
                         g2_ref, be2_ref, out_ref, value_ref,
                         *, n_heads, n_points, n_levels):
    """One deformable-DETR encoder layer for one (batch, q-tile) block."""
    qt = pl.program_id(1)
    S = src_full_ref.shape[1]
    C = src_full_ref.shape[2]
    TQ = src_q_ref.shape[1]
    M, P, L = n_heads, n_points, n_levels
    LP = L * P
    MLP = M * LP
    cdt = value_ref.dtype                                   # MXU compute dtype

    # ---- value projection over the FULL sequence, once per batch element ----
    @pl.when(qt == 0)
    def _():
        s_all = src_full_ref[0].astype(cdt)
        v = jnp.dot(s_all, wv_ref[...].astype(cdt), preferred_element_type=jnp.float32)
        value_ref[...] = (v + bv_ref[...]).astype(cdt)

    src_q = src_q_ref[0].astype(jnp.float32)                # (TQ, C)
    q = src_q + pos_ref[0].astype(jnp.float32)              # with_pos_embed (dropout=identity)

    # fused [offset_x | offset_y | attn_logits] projection on q (one lane-dense matmul)
    oa = jnp.dot(q.astype(cdt), woa_ref[...].astype(cdt),
                 preferred_element_type=jnp.float32) + boa_ref[...]          # (TQ, 3*MLP)

    # ---- lane-packed bilinear sampling math over all (head, level, point) lanes ----
    # base = [ref_x * W_l - 0.5 | ref_y * H_l - 0.5]   (host-precomputed per query row)
    # grid_sample(align_corners=False, padding_mode='zeros'): pix = ref*size + off - 0.5
    base = base_ref[...]                                    # (TQ, 2*MLP)
    x = oa[:, 0 * MLP:1 * MLP] + base[:, 0 * MLP:1 * MLP]
    y = oa[:, 1 * MLP:2 * MLP] + base[:, 1 * MLP:2 * MLP]
    logits = oa[:, 2 * MLP:3 * MLP]

    cst = const_ref[...]                                    # (3, MLP) int32
    Wl = cst[0:1, :]
    Hl = cst[1:2, :]
    st = cst[2:3, :]

    x0f = jnp.floor(x)
    y0f = jnp.floor(y)
    fx = x - x0f
    fy = y - y0f
    gx = 1.0 - fx
    gy = 1.0 - fy
    x0i = x0f.astype(jnp.int32)
    y0i = y0f.astype(jnp.int32)
    x1i = x0i + 1
    y1i = y0i + 1
    vx0 = (x0i >= 0) & (x0i < Wl)
    vx1 = (x1i >= 0) & (x1i < Wl)
    vy0 = (y0i >= 0) & (y0i < Hl)
    vy1 = (y1i >= 0) & (y1i < Hl)
    cx0 = jnp.clip(x0i, 0, Wl - 1)
    cx1 = jnp.clip(x1i, 0, Wl - 1)
    r0 = st + jnp.clip(y0i, 0, Hl - 1) * Wl
    r1 = st + jnp.clip(y1i, 0, Hl - 1) * Wl
    i00 = r0 + cx0
    i01 = r0 + cx1
    i10 = r1 + cx0
    i11 = r1 + cx1
    zero = jnp.zeros_like(fx)
    b00 = jnp.where(vy0 & vx0, gy * gx, zero)               # OOB corners -> weight 0
    b01 = jnp.where(vy0 & vx1, gy * fx, zero)
    b10 = jnp.where(vy1 & vx0, fy * gx, zero)
    b11 = jnp.where(vy1 & vx1, fy * fx, zero)

    col_iota = jax.lax.broadcasted_iota(jnp.int32, (TQ, S), 1)   # global flattened index
    value = value_ref[...]                                       # (S, C), compute dtype

    attn_out = jnp.zeros((TQ, C), jnp.float32)
    # TODO(synk): switch to lax.fori_loop over heads before scaling to M=8.
    for m in range(M):
        sl = slice(m * LP, (m + 1) * LP)
        lg = logits[:, sl]
        lg = lg - jnp.max(lg, axis=-1, keepdims=True)
        e = jnp.exp(lg)
        # approx reciprocal (EUP slot): ~2^-12 relative error vs exact softmax division.
        aw = e * pl.reciprocal(jnp.sum(e, axis=-1, keepdims=True), approx=True)

        w00 = b00[:, sl] * aw
        w01 = b01[:, sl] * aw
        w10 = b10[:, sl] * aw
        w11 = b11[:, sl] * aw
        h00 = i00[:, sl]
        h01 = i01[:, sl]
        h10 = i10[:, sl]
        h11 = i11[:, sl]

        # Dense one-hot scatter matrix for this head: sum the 4 corner contributions of each
        # point into a temp first, then accumulate smat once per point.
        smat = jnp.zeros((TQ, S), jnp.float32)
        for j in range(LP):
            c = slice(j, j + 1)
            contrib = (jnp.where(h00[:, c] == col_iota, w00[:, c], 0.0)
                       + jnp.where(h01[:, c] == col_iota, w01[:, c], 0.0)
                       + jnp.where(h10[:, c] == col_iota, w10[:, c], 0.0)
                       + jnp.where(h11[:, c] == col_iota, w11[:, c], 0.0))
            smat = smat + contrib

        # ONE MXU dot against the full-C value slab (lane-dense B operand); head selection is
        # folded into the per-head row-masked output-projection slab wom_ref[m].
        head_ctx = jnp.dot(smat.astype(cdt), value, preferred_element_type=jnp.float32)
        attn_out = attn_out + jnp.dot(head_ctx.astype(cdt), wom_ref[m].astype(cdt),
                                      preferred_element_type=jnp.float32)

    attn_out = attn_out + bo_ref[...]

    # residual + norm1 (dropout1 = identity)
    h = _layernorm(src_q + attn_out, g1_ref[...], be1_ref[...])
    # FFN: linear2(relu(linear1(h))) (dropout2/3 = identity), residual + norm2
    ff = jnp.maximum(jnp.dot(h.astype(cdt), w1_ref[...].astype(cdt),
                             preferred_element_type=jnp.float32) + bf1_ref[...], 0.0)
    ff = jnp.dot(ff.astype(cdt), w2_ref[...].astype(cdt),
                 preferred_element_type=jnp.float32) + bf2_ref[...]
    out = _layernorm(h + ff, g2_ref[...], be2_ref[...])
    out_ref[0] = out.astype(out_ref.dtype)


# ============================== Pallas wrapper ================================

def _bcast_spec(shape):
    n = len(shape)
    return pl.BlockSpec(shape, lambda b, q, _n=n: (0,) * _n)


def _pick_tq(S):
    for t in (512, 256, 128, 64, 32, 16, 8):
        if S % t == 0 and S // t >= 2:
            return t
    return S


def _encoder_layer(src, pos, base, consts, fp, n_levels, tq):
    B, S, C = src.shape
    MLP = N_HEADS * n_levels * N_POINTS
    n_q = S // tq
    cdt = _compute_dtype()
    itemsize = 2 if USE_BF16_MATMUL else 4

    # Rough VMEM budget: resident full-S src block + value scratch + q-tile blocks + (TQ,S)
    # temporaries; 2x headroom, clamped to v7x's 64 MiB physical VMEM.
    est = (4 * 2 * S * C                    # full-S src block (double buffered)
           + itemsize * S * C               # value scratch
           + 4 * 8 * tq * C                 # q-tile src/pos/out blocks + activations
           + 4 * 4 * tq * S                 # smat / col_iota temporaries
           + 4 * 16 * tq * MLP              # lane-packed bilinear temporaries
           + 4 * (4 * C * C + 2 * C * D_FFN + C * 3 * MLP))
    vmem_limit = int(min(max(2 * est, 16 * 2 ** 20), 64 * 2 ** 20))

    kernel = partial(encoder_layer_kernel, n_heads=N_HEADS, n_points=N_POINTS,
                     n_levels=n_levels)
    return pl.pallas_call(
        kernel,
        out_shape=jax.ShapeDtypeStruct((B, S, C), src.dtype),
        grid=(B, n_q),
        in_specs=[
            pl.BlockSpec((1, S, C), lambda b, q: (b, 0, 0)),        # src, full S (value proj)
            pl.BlockSpec((1, tq, C), lambda b, q: (b, q, 0)),       # src, q-tile rows
            pl.BlockSpec((1, tq, C), lambda b, q: (b, q, 0)),       # pos, q-tile rows
            pl.BlockSpec((tq, 2 * MLP), lambda b, q: (q, 0)),       # base pixel coords
            _bcast_spec((3, MLP)),                                  # per-lane W/H/start consts
            _bcast_spec((C, C)), _bcast_spec((1, C)),               # Wv, bv
            _bcast_spec((C, 3 * MLP)), _bcast_spec((1, 3 * MLP)),   # fused W_off/W_attn, bias
            _bcast_spec((N_HEADS, C, C)), _bcast_spec((1, C)),      # per-head masked Wo, bo
            _bcast_spec((1, C)), _bcast_spec((1, C)),               # norm1 gamma, beta
            _bcast_spec((C, D_FFN)), _bcast_spec((1, D_FFN)),       # W1, b1
            _bcast_spec((D_FFN, C)), _bcast_spec((1, C)),           # W2, b2
            _bcast_spec((1, C)), _bcast_spec((1, C)),               # norm2 gamma, beta
        ],
        out_specs=pl.BlockSpec((1, tq, C), lambda b, q: (b, q, 0)),
        scratch_shapes=[pltpu.VMEM((S, C), cdt)],                   # per-batch value slab
        compiler_params=pltpu.CompilerParams(
            dimension_semantics=("parallel", "arbitrary"),
            vmem_limit_bytes=vmem_limit),
    )(src, src, pos, base, consts,
      fp["Wv"], fp["bv"], fp["Woa"], fp["boa"], fp["WoM"], fp["bo"],
      fp["g1"], fp["be1"], fp["W1"], fp["bf1"], fp["W2"], fp["bf2"],
      fp["g2"], fp["be2"])


# =============================== model (glue) =================================

def get_reference_points(spatial_shapes):
    """Encoder.get_reference_points, evaluated at trace time (compile-time constant)."""
    refs = []
    for (H, W) in spatial_shapes:
        ys = (np.arange(H, dtype=np.float32) + 0.5) / H
        xs = (np.arange(W, dtype=np.float32) + 0.5) / W
        ry, rx = np.meshgrid(ys, xs, indexing="ij")
        refs.append(np.stack([rx.reshape(-1), ry.reshape(-1)], axis=-1))     # (HW, 2)
    return np.concatenate(refs, axis=0)                                      # (S, 2)


def build_sampling_constants(spatial_shapes, n_heads, n_points):
    """Host-precomputed lane-packed constants for the bilinear sampler."""
    L = len(spatial_shapes)
    starts = [0]
    for (H, W) in spatial_shapes[:-1]:
        starts.append(starts[-1] + H * W)
    ref = get_reference_points(spatial_shapes)                               # (S, 2)
    lane_l = [l for _ in range(n_heads) for l in range(L) for _ in range(n_points)]
    W_lane = np.array([spatial_shapes[l][1] for l in lane_l], np.float32)    # (MLP,)
    H_lane = np.array([spatial_shapes[l][0] for l in lane_l], np.float32)
    s_lane = np.array([starts[l] for l in lane_l], np.float32)
    base_x = ref[:, 0:1] * W_lane[None, :] - 0.5
    base_y = ref[:, 1:2] * H_lane[None, :] - 0.5
    base = np.concatenate([base_x, base_y], axis=1).astype(np.float32)       # (S, 2*MLP)
    consts = np.stack([W_lane, H_lane, s_lane]).astype(np.int32)             # (3, MLP)
    return jnp.asarray(base), jnp.asarray(consts)


def fuse_encoder_params(params, C, n_levels):
    """One-time host-side re-layout of the tiny weight tensors (NOT per forward call)."""
    M, L, P = N_HEADS, n_levels, N_POINTS
    LP = L * P
    MLP = M * LP
    Dh = C // M
    row_head = jnp.asarray(np.arange(C) // Dh)               # head id of each Wo row
    fused = []
    for p in params["layers"]:
        woff = p["Woff"].reshape(C, M, L, P, 2)
        boff = p["boff"].reshape(M, L, P, 2)
        woa = jnp.concatenate([woff[..., 0].reshape(C, MLP),
                               woff[..., 1].reshape(C, MLP),
                               p["Wa"]], axis=1)                             # (C, 3*MLP)
        boa = jnp.concatenate([boff[..., 0].reshape(MLP),
                               boff[..., 1].reshape(MLP),
                               p["ba"]], axis=0)
        # per-head row-masked Wo slabs: dot(head_ctx_full_C, WoM[m]) == head-m contribution
        wom = jnp.stack([jnp.where(row_head[:, None] == m, p["Wo"], 0.0)
                         for m in range(M)], axis=0)                         # (M, C, C)
        r1 = lambda v: v.reshape(1, -1)
        fused.append(dict(Wv=p["Wv"], bv=r1(p["bv"]), Woa=woa, boa=r1(boa),
                          WoM=wom, bo=r1(p["bo"]),
                          g1=r1(p["g1"]), be1=r1(p["be1"]),
                          W1=p["W1"], bf1=r1(p["bf1"]), W2=p["W2"], bf2=r1(p["bf2"]),
                          g2=r1(p["g2"]), be2=r1(p["be2"])))
    return dict(layers=fused)


def encoder_forward(fused_params, src, spatial_shapes, level_start_index, pos):
    del level_start_index            # derived statically from spatial_shapes
    spatial_shapes = tuple(tuple(int(v) for v in s) for s in spatial_shapes)
    B, S, C = src.shape
    L = len(spatial_shapes)
    base, consts = build_sampling_constants(spatial_shapes, N_HEADS, N_POINTS)
    tq = _pick_tq(S)

    output = src
    for fp in fused_params["layers"]:
        output = _encoder_layer(output, pos, base, consts, fp, L, tq)
    return output


def init_params(key, C, M, L, P, d_ffn, num_layers):
    layers = []
    for _ in range(num_layers):
        key, *ks = jax.random.split(key, 8)

        def winit(k, shape, scale=0.05):
            return scale * jax.random.normal(k, shape, jnp.float32)

        layers.append(dict(
            Wv=winit(ks[0], (C, C)), bv=jnp.zeros((C,), jnp.float32),
            Woff=winit(ks[1], (C, M * L * P * 2), 0.02),
            boff=0.1 * jax.random.normal(ks[2], (M * L * P * 2,), jnp.float32),
            Wa=winit(ks[3], (C, M * L * P)), ba=jnp.zeros((M * L * P,), jnp.float32),
            Wo=winit(ks[4], (C, C)), bo=jnp.zeros((C,), jnp.float32),
            g1=jnp.ones((C,), jnp.float32), be1=jnp.zeros((C,), jnp.float32),
            W1=winit(ks[5], (C, d_ffn)), bf1=jnp.zeros((d_ffn,), jnp.float32),
            W2=winit(ks[6], (d_ffn, C)), bf2=jnp.zeros((C,), jnp.float32),
            g2=jnp.ones((C,), jnp.float32), be2=jnp.zeros((C,), jnp.float32),
        ))
    return dict(layers=layers)


if __name__ == "__main__":
    B, C = 2, 32
    spatial_shapes = ((8, 8), (8, 8))                 # static (needed for kernel tiling)
    S = sum(h * w for h, w in spatial_shapes)
    L = len(spatial_shapes)

    key = jax.random.PRNGKey(0)
    k1, k2, k3 = jax.random.split(key, 3)
    src = jax.random.normal(k1, (B, S, C), jnp.float32)
    pos = jax.random.normal(k2, (B, S, C), jnp.float32)
    level_start_index = jnp.array([0, spatial_shapes[0][0] * spatial_shapes[0][1]], jnp.int32)

    params = init_params(k3, C, N_HEADS, L, N_POINTS, D_FFN, NUM_LAYERS)
    fused_params = fuse_encoder_params(params, C, L)          # one-time, outside the fwd path

    fwd = jax.jit(encoder_forward, static_argnames=("spatial_shapes",))
    out = fwd(fused_params, src, spatial_shapes=spatial_shapes,
              level_start_index=level_start_index, pos=pos)
    out = jax.block_until_ready(out)

    assert out.shape == (B, S, C), out.shape
    assert bool(jnp.all(jnp.isfinite(out)))
    print("KERNEL_OK")
</pallas_src>

<mosaic_0001>
module attributes {stable_mosaic.version = 11 : i64} {
  func.func @encoder_layer_kernel(%arg0: i32, %arg1: i32, %arg2: memref<1x128x32xf32, #tpu.memory_space<vmem>>, %arg3: memref<1x64x32xf32, #tpu.memory_space<vmem>>, %arg4: memref<1x64x32xf32, #tpu.memory_space<vmem>>, %arg5: memref<64x32xf32, #tpu.memory_space<vmem>>, %arg6: memref<3x16xi32, #tpu.memory_space<vmem>>, %arg7: memref<32x32xf32, #tpu.memory_space<vmem>>, %arg8: memref<1x32xf32, #tpu.memory_space<vmem>>, %arg9: memref<32x48xf32, #tpu.memory_space<vmem>>, %arg10: memref<1x48xf32, #tpu.memory_space<vmem>>, %arg11: memref<2x32x32xf32, #tpu.memory_space<vmem>>, %arg12: memref<1x32xf32, #tpu.memory_space<vmem>>, %arg13: memref<1x32xf32, #tpu.memory_space<vmem>>, %arg14: memref<1x32xf32, #tpu.memory_space<vmem>>, %arg15: memref<32x64xf32, #tpu.memory_space<vmem>>, %arg16: memref<1x64xf32, #tpu.memory_space<vmem>>, %arg17: memref<64x32xf32, #tpu.memory_space<vmem>>, %arg18: memref<1x32xf32, #tpu.memory_space<vmem>>, %arg19: memref<1x32xf32, #tpu.memory_space<vmem>>, %arg20: memref<1x32xf32, #tpu.memory_space<vmem>>, %arg21: memref<1x64x32xf32, #tpu.memory_space<vmem>>, %arg22: memref<128x32xbf16, #tpu.memory_space<vmem>>) attributes {dimension_semantics = [#tpu.dimension_semantics<parallel>, #tpu.dimension_semantics<arbitrary>], iteration_bounds = array<i64: 2, 2>, scalar_prefetch = 0 : i64, scratch_operands = 1 : i64, tpu.core_type = #tpu.core_type<tc>, window_params = [{transform_indices = @transform_0, window_bounds = array<i64: 1, 128, 32>}, {transform_indices = @transform_1, window_bounds = array<i64: 1, 64, 32>}, {transform_indices = @transform_2, window_bounds = array<i64: 1, 64, 32>}, {transform_indices = @transform_3, window_bounds = array<i64: 64, 32>}, {pipeline_mode = #tpu.pipeline_mode<synchronous>, transform_indices = @transform_4, window_bounds = array<i64: 3, 16>}, {pipeline_mode = #tpu.pipeline_mode<synchronous>, transform_indices = @transform_5, window_bounds = array<i64: 32, 32>}, {pipeline_mode = #tpu.pipeline_mode<synchronous>, transform_indices = @transform_6, window_bounds = array<i64: 1, 32>}, {pipeline_mode = #tpu.pipeline_mode<synchronous>, transform_indices = @transform_7, window_bounds = array<i64: 32, 48>}, {pipeline_mode = #tpu.pipeline_mode<synchronous>, transform_indices = @transform_8, window_bounds = array<i64: 1, 48>}, {pipeline_mode = #tpu.pipeline_mode<synchronous>, transform_indices = @transform_9, window_bounds = array<i64: 2, 32, 32>}, {pipeline_mode = #tpu.pipeline_mode<synchronous>, transform_indices = @transform_10, window_bounds = array<i64: 1, 32>}, {pipeline_mode = #tpu.pipeline_mode<synchronous>, transform_indices = @transform_11, window_bounds = array<i64: 1, 32>}, {pipeline_mode = #tpu.pipeline_mode<synchronous>, transform_indices = @transform_12, window_bounds = array<i64: 1, 32>}, {pipeline_mode = #tpu.pipeline_mode<synchronous>, transform_indices = @transform_13, window_bounds = array<i64: 32, 64>}, {pipeline_mode = #tpu.pipeline_mode<synchronous>, transform_indices = @transform_14, window_bounds = array<i64: 1, 64>}, {pipeline_mode = #tpu.pipeline_mode<synchronous>, transform_indices = @transform_15, window_bounds = array<i64: 64, 32>}, {pipeline_mode = #tpu.pipeline_mode<synchronous>, transform_indices = @transform_16, window_bounds = array<i64: 1, 32>}, {pipeline_mode = #tpu.pipeline_mode<synchronous>, transform_indices = @transform_17, window_bounds = array<i64: 1, 32>}, {pipeline_mode = #tpu.pipeline_mode<synchronous>, transform_indices = @transform_18, window_bounds = array<i64: 1, 32>}, {transform_indices = @transform_19, window_bounds = array<i64: 1, 64, 32>}]} {
    %c0_i32 = arith.constant 0 : i32
    %0 = arith.cmpi eq, %arg1, %c0_i32 : i32
    %1 = arith.extui %0 : i1 to i32
    %c0_i32_0 = arith.constant 0 : i32
    %2 = arith.cmpi ne, %1, %c0_i32_0 : i32
    scf.if %2 {
      %c0_146 = arith.constant 0 : index
      %c0_147 = arith.constant 0 : index
      %c0_148 = arith.constant 0 : index
      %825 = vector.load %arg2[%c0_146, %c0_147, %c0_148] : memref<1x128x32xf32, #tpu.memory_space<vmem>>, vector<1x128x32xf32>
      %826 = vector.shape_cast %825 : vector<1x128x32xf32> to vector<128x32xf32>
      %827 = arith.truncf %826 : vector<128x32xf32> to vector<128x32xbf16>
      %c0_149 = arith.constant 0 : index
      %c0_150 = arith.constant 0 : index
      %828 = vector.load %arg7[%c0_149, %c0_150] : memref<32x32xf32, #tpu.memory_space<vmem>>, vector<32x32xf32>
      %829 = arith.truncf %828 : vector<32x32xf32> to vector<32x32xbf16>
      %cst_151 = arith.constant dense<0.000000e+00> : vector<128x32xf32>
      %830 = tpu.matmul %827, %829, %cst_151 {dimension_numbers = #tpu.dot_dimension_numbers<[1], [0], [0], [1], [0, 0, 1, 1], [], []>} : vector<128x32xbf16>, vector<32x32xbf16>, vector<128x32xf32> -> vector<128x32xf32>
      %c0_152 = arith.constant 0 : index
      %c0_153 = arith.constant 0 : index
      %831 = vector.load %arg8[%c0_152, %c0_153] : memref<1x32xf32, #tpu.memory_space<vmem>>, vector<1x32xf32>
      %832 = vector.broadcast %831 : vector<1x32xf32> to vector<128x32xf32>
      %833 = arith.addf %830, %832 : vector<128x32xf32>
      %834 = arith.truncf %833 : vector<128x32xf32> to vector<128x32xbf16>
      %c0_154 = arith.constant 0 : index
      %c0_155 = arith.constant 0 : index
      %835 = vector.load %arg22[%c0_154, %c0_155] : memref<128x32xbf16, #tpu.memory_space<vmem>>, vector<128x32xbf16>
      tpu.vector_store %arg22[%c0_154, %c0_155], %834 {strides = array<i32>} : memref<128x32xbf16, #tpu.memory_space<vmem>>, vector<128x32xbf16>,
    } else {
    }
    %c0 = arith.constant 0 : index
    %c0_1 = arith.constant 0 : index
    %c0_2 = arith.constant 0 : index
    %3 = vector.load %arg3[%c0, %c0_1, %c0_2] : memref<1x64x32xf32, #tpu.memory_space<vmem>>, vector<1x64x32xf32>
    %4 = vector.shape_cast %3 : vector<1x64x32xf32> to vector<64x32xf32>
    %c0_3 = arith.constant 0 : index
    %c0_4 = arith.constant 0 : index
    %c0_5 = arith.constant 0 : index
    %5 = vector.load %arg4[%c0_3, %c0_4, %c0_5] : memref<1x64x32xf32, #tpu.memory_space<vmem>>, vector<1x64x32xf32>
    %6 = vector.shape_cast %5 : vector<1x64x32xf32> to vector<64x32xf32>
    %7 = arith.addf %4, %6 : vector<64x32xf32>
    %8 = arith.truncf %7 : vector<64x32xf32> to vector<64x32xbf16>
    %c0_6 = arith.constant 0 : index
    %c0_7 = arith.constant 0 : index
    %9 = vector.load %arg9[%c0_6, %c0_7] : memref<32x48xf32, #tpu.memory_space<vmem>>, vector<32x48xf32>
    %10 = arith.truncf %9 : vector<32x48xf32> to vector<32x48xbf16>
    %cst = arith.constant dense<0.000000e+00> : vector<64x48xf32>
    %11 = tpu.matmul %8, %10, %cst {dimension_numbers = #tpu.dot_dimension_numbers<[1], [0], [0], [1], [0, 0, 1, 1], [], []>} : vector<64x32xbf16>, vector<32x48xbf16>, vector<64x48xf32> -> vector<64x48xf32>
    %c0_8 = arith.constant 0 : index
    %c0_9 = arith.constant 0 : index
    %12 = vector.load %arg10[%c0_8, %c0_9] : memref<1x48xf32, #tpu.memory_space<vmem>>, vector<1x48xf32>
    %13 = vector.broadcast %12 : vector<1x48xf32> to vector<64x48xf32>
    %14 = arith.addf %11, %13 : vector<64x48xf32>
    %c0_10 = arith.constant 0 : index
    %c0_11 = arith.constant 0 : index
    %15 = vector.load %arg5[%c0_10, %c0_11] : memref<64x32xf32, #tpu.memory_space<vmem>>, vector<64x32xf32>
    %16 = vector.extract_strided_slice %14 {offsets = [0, 0], sizes = [64, 16], strides = [1, 1]} : vector<64x48xf32> to vector<64x16xf32>
    %17 = vector.extract_strided_slice %15 {offsets = [0, 0], sizes = [64, 16], strides = [1, 1]} : vector<64x32xf32> to vector<64x16xf32>
    %18 = arith.addf %16, %17 : vector<64x16xf32>
    %19 = vector.extract_strided_slice %14 {offsets = [0, 16], sizes = [64, 16], strides = [1, 1]} : vector<64x48xf32> to vector<64x16xf32>
    %20 = vector.extract_strided_slice %15 {offsets = [0, 16], sizes = [64, 16], strides = [1, 1]} : vector<64x32xf32> to vector<64x16xf32>
    %21 = arith.addf %19, %20 : vector<64x16xf32>
    %22 = vector.extract_strided_slice %14 {offsets = [0, 32], sizes = [64, 16], strides = [1, 1]} : vector<64x48xf32> to vector<64x16xf32>
    %c0_12 = arith.constant 0 : index
    %c0_13 = arith.constant 0 : index
    %23 = vector.load %arg6[%c0_12, %c0_13] : memref<3x16xi32, #tpu.memory_space<vmem>>, vector<3x16xi32>
    %24 = vector.extract_strided_slice %23 {offsets = [0, 0], sizes = [1, 16], strides = [1, 1]} : vector<3x16xi32> to vector<1x16xi32>
    %25 = vector.extract_strided_slice %23 {offsets = [1, 0], sizes = [1, 16], strides = [1, 1]} : vector<3x16xi32> to vector<1x16xi32>
    %26 = vector.extract_strided_slice %23 {offsets = [2, 0], sizes = [1, 16], strides = [1, 1]} : vector<3x16xi32> to vector<1x16xi32>
    %27 = math.floor %18 : vector<64x16xf32>
    %28 = math.floor %21 : vector<64x16xf32>
    %29 = arith.subf %18, %27 : vector<64x16xf32>
    %30 = arith.subf %21, %28 : vector<64x16xf32>
    %cst_14 = arith.constant 1.000000e+00 : f32
    %31 = vector.broadcast %cst_14 : f32 to vector<64x16xf32>
    %32 = arith.subf %31, %29 : vector<64x16xf32>
    %cst_15 = arith.constant 1.000000e+00 : f32
    %33 = vector.broadcast %cst_15 : f32 to vector<64x16xf32>
    %34 = arith.subf %33, %30 : vector<64x16xf32>
    %35 = arith.fptosi %27 : vector<64x16xf32> to vector<64x16xi32>
    %36 = arith.fptosi %28 : vector<64x16xf32> to vector<64x16xi32>
    %c1_i32 = arith.constant 1 : i32
    %37 = vector.broadcast %c1_i32 : i32 to vector<64x16xi32>
    %38 = arith.addi %35, %37 : vector<64x16xi32>
    %c1_i32_16 = arith.constant 1 : i32
    %39 = vector.broadcast %c1_i32_16 : i32 to vector<64x16xi32>
    %40 = arith.addi %36, %39 : vector<64x16xi32>
    %c0_i32_17 = arith.constant 0 : i32
    %41 = vector.broadcast %c0_i32_17 : i32 to vector<64x16xi32>
    %42 = arith.cmpi sge, %35, %41 : vector<64x16xi32>
    %43 = vector.broadcast %24 : vector<1x16xi32> to vector<64x16xi32>
    %44 = arith.cmpi slt, %35, %43 : vector<64x16xi32>
    %45 = arith.andi %42, %44 : vector<64x16xi1>
    %c0_i32_18 = arith.constant 0 : i32
    %46 = vector.broadcast %c0_i32_18 : i32 to vector<64x16xi32>
    %47 = arith.cmpi sge, %38, %46 : vector<64x16xi32>
    %48 = vector.broadcast %24 : vector<1x16xi32> to vector<64x16xi32>
    %49 = arith.cmpi slt, %38, %48 : vector<64x16xi32>
    %50 = arith.andi %47, %49 : vector<64x16xi1>
    %c0_i32_19 = arith.constant 0 : i32
    %51 = vector.broadcast %c0_i32_19 : i32 to vector<64x16xi32>
    %52 = arith.cmpi sge, %36, %51 : vector<64x16xi32>
    %53 = vector.broadcast %25 : vector<1x16xi32> to vector<64x16xi32>
    %54 = arith.cmpi slt, %36, %53 : vector<64x16xi32>
    %55 = arith.andi %52, %54 : vector<64x16xi1>
    %c0_i32_20 = arith.constant 0 : i32
    %56 = vector.broadcast %c0_i32_20 : i32 to vector<64x16xi32>
    %57 = arith.cmpi sge, %40, %56 : vector<64x16xi32>
    %58 = vector.broadcast %25 : vector<1x16xi32> to vector<64x16xi32>
    %59 = arith.cmpi slt, %40, %58 : vector<64x16xi32>
    %60 = arith.andi %57, %59 : vector<64x16xi1>
    %c1_i32_21 = arith.constant 1 : i32
    %61 = vector.broadcast %c1_i32_21 : i32 to vector<1x16xi32>
    %62 = arith.subi %24, %61 : vector<1x16xi32>
    %c0_i32_22 = arith.constant 0 : i32
    %63 = vector.broadcast %c0_i32_22 : i32 to vector<64x16xi32>
    %64 = arith.maxsi %63, %35 : vector<64x16xi32>
    %65 = vector.broadcast %62 : vector<1x16xi32> to vector<64x16xi32>
    %66 = arith.minsi %65, %64 : vector<64x16xi32>
    %c1_i32_23 = arith.constant 1 : i32
    %67 = vector.broadcast %c1_i32_23 : i32 to vector<1x16xi32>
    %68 = arith.subi %24, %67 : vector<1x16xi32>
    %c0_i32_24 = arith.constant 0 : i32
    %69 = vector.broadcast %c0_i32_24 : i32 to vector<64x16xi32>
    %70 = arith.maxsi %69, %38 : vector<64x16xi32>
    %71 = vector.broadcast %68 : vector<1x16xi32> to vector<64x16xi32>
    %72 = arith.minsi %71, %70 : vector<64x16xi32>
    %c1_i32_25 = arith.constant 1 : i32
    %73 = vector.broadcast %c1_i32_25 : i32 to vector<1x16xi32>
    %74 = arith.subi %25, %73 : vector<1x16xi32>
    %c0_i32_26 = arith.constant 0 : i32
    %75 = vector.broadcast %c0_i32_26 : i32 to vector<64x16xi32>
    %76 = arith.maxsi %75, %36 : vector<64x16xi32>
    %77 = vector.broadcast %74 : vector<1x16xi32> to vector<64x16xi32>
    %78 = arith.minsi %77, %76 : vector<64x16xi32>
    %79 = vector.broadcast %24 : vector<1x16xi32> to vector<64x16xi32>
    %80 = arith.muli %78, %79 : vector<64x16xi32>
    %81 = vector.broadcast %26 : vector<1x16xi32> to vector<64x16xi32>
    %82 = arith.addi %81, %80 : vector<64x16xi32>
    %c1_i32_27 = arith.constant 1 : i32
    %83 = vector.broadcast %c1_i32_27 : i32 to vector<1x16xi32>
    %84 = arith.subi %25, %83 : vector<1x16xi32>
    %c0_i32_28 = arith.constant 0 : i32
    %85 = vector.broadcast %c0_i32_28 : i32 to vector<64x16xi32>
    %86 = arith.maxsi %85, %40 : vector<64x16xi32>
    %87 = vector.broadcast %84 : vector<1x16xi32> to vector<64x16xi32>
    %88 = arith.minsi %87, %86 : vector<64x16xi32>
    %89 = vector.broadcast %24 : vector<1x16xi32> to vector<64x16xi32>
    %90 = arith.muli %88, %89 : vector<64x16xi32>
    %91 = vector.broadcast %26 : vector<1x16xi32> to vector<64x16xi32>
    %92 = arith.addi %91, %90 : vector<64x16xi32>
    %93 = arith.addi %82, %66 : vector<64x16xi32>
    %94 = arith.addi %82, %72 : vector<64x16xi32>
    %95 = arith.addi %92, %66 : vector<64x16xi32>
    %96 = arith.addi %92, %72 : vector<64x16xi32>
    %cst_29 = arith.constant 0.000000e+00 : f32
    %97 = vector.broadcast %cst_29 : f32 to vector<64x16xf32>
    %98 = arith.andi %55, %45 : vector<64x16xi1>
    %99 = arith.mulf %34, %32 : vector<64x16xf32>
    %100 = arith.select %98, %99, %97 : vector<64x16xi1>, vector<64x16xf32>
    %101 = arith.andi %55, %50 : vector<64x16xi1>
    %102 = arith.mulf %34, %29 : vector<64x16xf32>
    %103 = arith.select %101, %102, %97 : vector<64x16xi1>, vector<64x16xf32>
    %104 = arith.andi %60, %45 : vector<64x16xi1>
    %105 = arith.mulf %30, %32 : vector<64x16xf32>
    %106 = arith.select %104, %105, %97 : vector<64x16xi1>, vector<64x16xf32>
    %107 = arith.andi %60, %50 : vector<64x16xi1>
    %108 = arith.mulf %30, %29 : vector<64x16xf32>
    %109 = arith.select %107, %108, %97 : vector<64x16xi1>, vector<64x16xf32>
    %110 = tpu.iota {dimensions = array<i32: 1>} : vector<64x128xi32>
    %c0_30 = arith.constant 0 : index
    %c0_31 = arith.constant 0 : index
    %111 = vector.load %arg22[%c0_30, %c0_31] : memref<128x32xbf16, #tpu.memory_space<vmem>>, vector<128x32xbf16>
    %cst_32 = arith.constant 0.000000e+00 : f32
    %112 = vector.broadcast %cst_32 : f32 to vector<64x32xf32>
    %113 = vector.extract_strided_slice %22 {offsets = [0, 0], sizes = [64, 8], strides = [1, 1]} : vector<64x16xf32> to vector<64x8xf32>
    %cst_33 = arith.constant dense<0xFF800000> : vector<64xf32>
    %114 = vector.multi_reduction <maximumf>, %113, %cst_33 [1] : vector<64x8xf32> to vector<64xf32>
    %115 = vector.shape_cast %114 : vector<64xf32> to vector<64x1xf32>
    %116 = vector.broadcast %115 : vector<64x1xf32> to vector<64x8xf32>
    %117 = arith.subf %113, %116 : vector<64x8xf32>
    %118 = math.exp %117 : vector<64x8xf32>
    %cst_34 = arith.constant dense<0.000000e+00> : vector<64xf32>
    %119 = vector.multi_reduction <add>, %118, %cst_34 [1] : vector<64x8xf32> to vector<64xf32>
    %120 = vector.shape_cast %119 : vector<64xf32> to vector<64x1xf32>
    %121 = tpu.reciprocal %120 {approx = true} : vector<64x1xf32> -> vector<64x1xf32>
    %122 = vector.broadcast %121 : vector<64x1xf32> to vector<64x8xf32>
    %123 = arith.mulf %118, %122 : vector<64x8xf32>
    %124 = vector.extract_strided_slice %100 {offsets = [0, 0], sizes = [64, 8], strides = [1, 1]} : vector<64x16xf32> to vector<64x8xf32>
    %125 = arith.mulf %124, %123 : vector<64x8xf32>
    %126 = vector.extract_strided_slice %103 {offsets = [0, 0], sizes = [64, 8], strides = [1, 1]} : vector<64x16xf32> to vector<64x8xf32>
    %127 = arith.mulf %126, %123 : vector<64x8xf32>
    %128 = vector.extract_strided_slice %106 {offsets = [0, 0], sizes = [64, 8], strides = [1, 1]} : vector<64x16xf32> to vector<64x8xf32>
    %129 = arith.mulf %128, %123 : vector<64x8xf32>
    %130 = vector.extract_strided_slice %109 {offsets = [0, 0], sizes = [64, 8], strides = [1, 1]} : vector<64x16xf32> to vector<64x8xf32>
    %131 = arith.mulf %130, %123 : vector<64x8xf32>
    %132 = vector.extract_strided_slice %93 {offsets = [0, 0], sizes = [64, 8], strides = [1, 1]} : vector<64x16xi32> to vector<64x8xi32>
    %133 = vector.extract_strided_slice %94 {offsets = [0, 0], sizes = [64, 8], strides = [1, 1]} : vector<64x16xi32> to vector<64x8xi32>
    %134 = vector.extract_strided_slice %95 {offsets = [0, 0], sizes = [64, 8], strides = [1, 1]} : vector<64x16xi32> to vector<64x8xi32>
    %135 = vector.extract_strided_slice %96 {offsets = [0, 0], sizes = [64, 8], strides = [1, 1]} : vector<64x16xi32> to vector<64x8xi32>
    %cst_35 = arith.constant 0.000000e+00 : f32
    %136 = vector.broadcast %cst_35 : f32 to vector<64x128xf32>
    %137 = vector.extract_strided_slice %132 {offsets = [0, 0], sizes = [64, 1], strides = [1, 1]} : vector<64x8xi32> to vector<64x1xi32>
    %138 = vector.broadcast %137 : vector<64x1xi32> to vector<64x128xi32>
    %139 = arith.cmpi eq, %138, %110 : vector<64x128xi32>
    %140 = vector.extract_strided_slice %125 {offsets = [0, 0], sizes = [64, 1], strides = [1, 1]} : vector<64x8xf32> to vector<64x1xf32>
    %cst_36 = arith.constant 0.000000e+00 : f32
    %141 = vector.shape_cast %140 : vector<64x1xf32> to vector<64x1xf32>
    %142 = vector.broadcast %141 : vector<64x1xf32> to vector<64x128xf32>
    %143 = vector.broadcast %cst_36 : f32 to vector<64x128xf32>
    %144 = arith.select %139, %142, %143 : vector<64x128xi1>, vector<64x128xf32>
    %145 = vector.extract_strided_slice %133 {offsets = [0, 0], sizes = [64, 1], strides = [1, 1]} : vector<64x8xi32> to vector<64x1xi32>
    %146 = vector.broadcast %145 : vector<64x1xi32> to vector<64x128xi32>
    %147 = arith.cmpi eq, %146, %110 : vector<64x128xi32>
    %148 = vector.extract_strided_slice %127 {offsets = [0, 0], sizes = [64, 1], strides = [1, 1]} : vector<64x8xf32> to vector<64x1xf32>
    %cst_37 = arith.constant 0.000000e+00 : f32
    %149 = vector.shape_cast %148 : vector<64x1xf32> to vector<64x1xf32>
    %150 = vector.broadcast %149 : vector<64x1xf32> to vector<64x128xf32>
    %151 = vector.broadcast %cst_37 : f32 to vector<64x128xf32>
    %152 = arith.select %147, %150, %151 : vector<64x128xi1>, vector<64x128xf32>
    %153 = arith.addf %144, %152 : vector<64x128xf32>
    %154 = vector.extract_strided_slice %134 {offsets = [0, 0], sizes = [64, 1], strides = [1, 1]} : vector<64x8xi32> to vector<64x1xi32>
    %155 = vector.broadcast %154 : vector<64x1xi32> to vector<64x128xi32>
    %156 = arith.cmpi eq, %155, %110 : vector<64x128xi32>
    %157 = vector.extract_strided_slice %129 {offsets = [0, 0], sizes = [64, 1], strides = [1, 1]} : vector<64x8xf32> to vector<64x1xf32>
    %cst_38 = arith.constant 0.000000e+00 : f32
    %158 = vector.shape_cast %157 : vector<64x1xf32> to vector<64x1xf32>
    %159 = vector.broadcast %158 : vector<64x1xf32> to vector<64x128xf32>
    %160 = vector.broadcast %cst_38 : f32 to vector<64x128xf32>
    %161 = arith.select %156, %159, %160 : vector<64x128xi1>, vector<64x128xf32>
    %162 = arith.addf %153, %161 : vector<64x128xf32>
    %163 = vector.extract_strided_slice %135 {offsets = [0, 0], sizes = [64, 1], strides = [1, 1]} : vector<64x8xi32> to vector<64x1xi32>
    %164 = vector.broadcast %163 : vector<64x1xi32> to vector<64x128xi32>
    %165 = arith.cmpi eq, %164, %110 : vector<64x128xi32>
    %166 = vector.extract_strided_slice %131 {offsets = [0, 0], sizes = [64, 1], strides = [1, 1]} : vector<64x8xf32> to vector<64x1xf32>
    %cst_39 = arith.constant 0.000000e+00 : f32
    %167 = vector.shape_cast %166 : vector<64x1xf32> to vector<64x1xf32>
    %168 = vector.broadcast %167 : vector<64x1xf32> to vector<64x128xf32>
    %169 = vector.broadcast %cst_39 : f32 to vector<64x128xf32>
    %170 = arith.select %165, %168, %169 : vector<64x128xi1>, vector<64x128xf32>
    %171 = arith.addf %162, %170 : vector<64x128xf32>
    %172 = arith.addf %136, %171 : vector<64x128xf32>
    %173 = vector.extract_strided_slice %132 {offsets = [0, 1], sizes = [64, 1], strides = [1, 1]} : vector<64x8xi32> to vector<64x1xi32>
    %174 = vector.broadcast %173 : vector<64x1xi32> to vector<64x128xi32>
    %175 = arith.cmpi eq, %174, %110 : vector<64x128xi32>
    %176 = vector.extract_strided_slice %125 {offsets = [0, 1], sizes = [64, 1], strides = [1, 1]} : vector<64x8xf32> to vector<64x1xf32>
    %cst_40 = arith.constant 0.000000e+00 : f32
    %177 = vector.shape_cast %176 : vector<64x1xf32> to vector<64x1xf32>
    %178 = vector.broadcast %177 : vector<64x1xf32> to vector<64x128xf32>
    %179 = vector.broadcast %cst_40 : f32 to vector<64x128xf32>
    %180 = arith.select %175, %178, %179 : vector<64x128xi1>, vector<64x128xf32>
    %181 = vector.extract_strided_slice %133 {offsets = [0, 1], sizes = [64, 1], strides = [1, 1]} : vector<64x8xi32> to vector<64x1xi32>
    %182 = vector.broadcast %181 : vector<64x1xi32> to vector<64x128xi32>
    %183 = arith.cmpi eq, %182, %110 : vector<64x128xi32>
    %184 = vector.extract_strided_slice %127 {offsets = [0, 1], sizes = [64, 1], strides = [1, 1]} : vector<64x8xf32> to vector<64x1xf32>
    %cst_41 = arith.constant 0.000000e+00 : f32
    %185 = vector.shape_cast %184 : vector<64x1xf32> to vector<64x1xf32>
    %186 = vector.broadcast %185 : vector<64x1xf32> to vector<64x128xf32>
    %187 = vector.broadcast %cst_41 : f32 to vector<64x128xf32>
    %188 = arith.select %183, %186, %187 : vector<64x128xi1>, vector<64x128xf32>
    %189 = arith.addf %180, %188 : vector<64x128xf32>
    %190 = vector.extract_strided_slice %134 {offsets = [0, 1], sizes = [64, 1], strides = [1, 1]} : vector<64x8xi32> to vector<64x1xi32>
    %191 = vector.broadcast %190 : vector<64x1xi32> to vector<64x128xi32>
    %192 = arith.cmpi eq, %191, %110 : vector<64x128xi32>
    %193 = vector.extract_strided_slice %129 {offsets = [0, 1], sizes = [64, 1], strides = [1, 1]} : vector<64x8xf32> to vector<64x1xf32>
    %cst_42 = arith.constant 0.000000e+00 : f32
    %194 = vector.shape_cast %193 : vector<64x1xf32> to vector<64x1xf32>
    %195 = vector.broadcast %194 : vector<64x1xf32> to vector<64x128xf32>
    %196 = vector.broadcast %cst_42 : f32 to vector<64x128xf32>
    %197 = arith.select %192, %195, %196 : vector<64x128xi1>, vector<64x128xf32>
    %198 = arith.addf %189, %197 : vector<64x128xf32>
    %199 = vector.extract_strided_slice %135 {offsets = [0, 1], sizes = [64, 1], strides = [1, 1]} : vector<64x8xi32> to vector<64x1xi32>
    %200 = vector.broadcast %199 : vector<64x1xi32> to vector<64x128xi32>
    %201 = arith.cmpi eq, %200, %110 : vector<64x128xi32>
    %202 = vector.extract_strided_slice %131 {offsets = [0, 1], sizes = [64, 1], strides = [1, 1]} : vector<64x8xf32> to vector<64x1xf32>
    %cst_43 = arith.constant 0.000000e+00 : f32
    %203 = vector.shape_cast %202 : vector<64x1xf32> to vector<64x1xf32>
    %204 = vector.broadcast %203 : vector<64x1xf32> to vector<64x128xf32>
    %205 = vector.broadcast %cst_43 : f32 to vector<64x128xf32>
    %206 = arith.select %201, %204, %205 : vector<64x128xi1>, vector<64x128xf32>
    %207 = arith.addf %198, %206 : vector<64x128xf32>
    %208 = arith.addf %172, %207 : vector<64x128xf32>
    %209 = vector.extract_strided_slice %132 {offsets = [0, 2], sizes = [64, 1], strides = [1, 1]} : vector<64x8xi32> to vector<64x1xi32>
    %210 = vector.broadcast %209 : vector<64x1xi32> to vector<64x128xi32>
    %211 = arith.cmpi eq, %210, %110 : vector<64x128xi32>
    %212 = vector.extract_strided_slice %125 {offsets = [0, 2], sizes = [64, 1], strides = [1, 1]} : vector<64x8xf32> to vector<64x1xf32>
    %cst_44 = arith.constant 0.000000e+00 : f32
    %213 = vector.shape_cast %212 : vector<64x1xf32> to vector<64x1xf32>
    %214 = vector.broadcast %213 : vector<64x1xf32> to vector<64x128xf32>
    %215 = vector.broadcast %cst_44 : f32 to vector<64x128xf32>
    %216 = arith.select %211, %214, %215 : vector<64x128xi1>, vector<64x128xf32>
    %217 = vector.extract_strided_slice %133 {offsets = [0, 2], sizes = [64, 1], strides = [1, 1]} : vector<64x8xi32> to vector<64x1xi32>
    %218 = vector.broadcast %217 : vector<64x1xi32> to vector<64x128xi32>
    %219 = arith.cmpi eq, %218, %110 : vector<64x128xi32>
    %220 = vector.extract_strided_slice %127 {offsets = [0, 2], sizes = [64, 1], strides = [1, 1]} : vector<64x8xf32> to vector<64x1xf32>
    %cst_45 = arith.constant 0.000000e+00 : f32
    %221 = vector.shape_cast %220 : vector<64x1xf32> to vector<64x1xf32>
    %222 = vector.broadcast %221 : vector<64x1xf32> to vector<64x128xf32>
    %223 = vector.broadcast %cst_45 : f32 to vector<64x128xf32>
    %224 = arith.select %219, %222, %223 : vector<64x128xi1>, vector<64x128xf32>
    %225 = arith.addf %216, %224 : vector<64x128xf32>
    %226 = vector.extract_strided_slice %134 {offsets = [0, 2], sizes = [64, 1], strides = [1, 1]} : vector<64x8xi32> to vector<64x1xi32>
    %227 = vector.broadcast %226 : vector<64x1xi32> to vector<64x128xi32>
    %228 = arith.cmpi eq, %227, %110 : vector<64x128xi32>
    %229 = vector.extract_strided_slice %129 {offsets = [0, 2], sizes = [64, 1], strides = [1, 1]} : vector<64x8xf32> to vector<64x1xf32>
    %cst_46 = arith.constant 0.000000e+00 : f32
    %230 = vector.shape_cast %229 : vector<64x1xf32> to vector<64x1xf32>
    %231 = vector.broadcast %230 : vector<64x1xf32> to vector<64x128xf32>
    %232 = vector.broadcast %cst_46 : f32 to vector<64x128xf32>
    %233 = arith.select %228, %231, %232 : vector<64x128xi1>, vector<64x128xf32>
    %234 = arith.addf %225, %233 : vector<64x128xf32>
    %235 = vector.extract_strided_slice %135 {offsets = [0, 2], sizes = [64, 1], strides = [1, 1]} : vector<64x8xi32> to vector<64x1xi32>
    %236 = vector.broadcast %235 : vector<64x1xi32> to vector<64x128xi32>
    %237 = arith.cmpi eq, %236, %110 : vector<64x128xi32>
    %238 = vector.extract_strided_slice %131 {offsets = [0, 2], sizes = [64, 1], strides = [1, 1]} : vector<64x8xf32> to vector<64x1xf32>
    %cst_47 = arith.constant 0.000000e+00 : f32
    %239 = vector.shape_cast %238 : vector<64x1xf32> to vector<64x1xf32>
    %240 = vector.broadcast %239 : vector<64x1xf32> to vector<64x128xf32>
    %241 = vector.broadcast %cst_47 : f32 to vector<64x128xf32>
    %242 = arith.select %237, %240, %241 : vector<64x128xi1>, vector<64x128xf32>
    %243 = arith.addf %234, %242 : vector<64x128xf32>
    %244 = arith.addf %208, %243 : vector<64x128xf32>
    %245 = vector.extract_strided_slice %132 {offsets = [0, 3], sizes = [64, 1], strides = [1, 1]} : vector<64x8xi32> to vector<64x1xi32>
    %246 = vector.broadcast %245 : vector<64x1xi32> to vector<64x128xi32>
    %247 = arith.cmpi eq, %246, %110 : vector<64x128xi32>
    %248 = vector.extract_strided_slice %125 {offsets = [0, 3], sizes = [64, 1], strides = [1, 1]} : vector<64x8xf32> to vector<64x1xf32>
    %cst_48 = arith.constant 0.000000e+00 : f32
    %249 = vector.shape_cast %248 : vector<64x1xf32> to vector<64x1xf32>
    %250 = vector.broadcast %249 : vector<64x1xf32> to vector<64x128xf32>
    %251 = vector.broadcast %cst_48 : f32 to vector<64x128xf32>
    %252 = arith.select %247, %250, %251 : vector<64x128xi1>, vector<64x128xf32>
    %253 = vector.extract_strided_slice %133 {offsets = [0, 3], sizes = [64, 1], strides = [1, 1]} : vector<64x8xi32> to vector<64x1xi32>
    %254 = vector.broadcast %253 : vector<64x1xi32> to vector<64x128xi32>
    %255 = arith.cmpi eq, %254, %110 : vector<64x128xi32>
    %256 = vector.extract_strided_slice %127 {offsets = [0, 3], sizes = [64, 1], strides = [1, 1]} : vector<64x8xf32> to vector<64x1xf32>
    %cst_49 = arith.constant 0.000000e+00 : f32
    %257 = vector.shape_cast %256 : vector<64x1xf32> to vector<64x1xf32>
    %258 = vector.broadcast %257 : vector<64x1xf32> to vector<64x128xf32>
    %259 = vector.broadcast %cst_49 : f32 to vector<64x128xf32>
    %260 = arith.select %255, %258, %259 : vector<64x128xi1>, vector<64x128xf32>
    %261 = arith.addf %252, %260 : vector<64x128xf32>
    %262 = vector.extract_strided_slice %134 {offsets = [0, 3], sizes = [64, 1], strides = [1, 1]} : vector<64x8xi32> to vector<64x1xi32>
    %263 = vector.broadcast %262 : vector<64x1xi32> to vector<64x128xi32>
    %264 = arith.cmpi eq, %263, %110 : vector<64x128xi32>
    %265 = vector.extract_strided_slice %129 {offsets = [0, 3], sizes = [64, 1], strides = [1, 1]} : vector<64x8xf32> to vector<64x1xf32>
    %cst_50 = arith.constant 0.000000e+00 : f32
    %266 = vector.shape_cast %265 : vector<64x1xf32> to vector<64x1xf32>
    %267 = vector.broadcast %266 : vector<64x1xf32> to vector<64x128xf32>
    %268 = vector.broadcast %cst_50 : f32 to vector<64x128xf32>
    %269 = arith.select %264, %267, %268 : vector<64x128xi1>, vector<64x128xf32>
    %270 = arith.addf %261, %269 : vector<64x128xf32>
    %271 = vector.extract_strided_slice %135 {offsets = [0, 3], sizes = [64, 1], strides = [1, 1]} : vector<64x8xi32> to vector<64x1xi32>
    %272 = vector.broadcast %271 : vector<64x1xi32> to vector<64x128xi32>
    %273 = arith.cmpi eq, %272, %110 : vector<64x128xi32>
    %274 = vector.extract_strided_slice %131 {offsets = [0, 3], sizes = [64, 1], strides = [1, 1]} : vector<64x8xf32> to vector<64x1xf32>
    %cst_51 = arith.constant 0.000000e+00 : f32
    %275 = vector.shape_cast %274 : vector<64x1xf32> to vector<64x1xf32>
    %276 = vector.broadcast %275 : vector<64x1xf32> to vector<64x128xf32>
    %277 = vector.broadcast %cst_51 : f32 to vector<64x128xf32>
    %278 = arith.select %273, %276, %277 : vector<64x128xi1>, vector<64x128xf32>
    %279 = arith.addf %270, %278 : vector<64x128xf32>
    %280 = arith.addf %244, %279 : vector<64x128xf32>
    %281 = vector.extract_strided_slice %132 {offsets = [0, 4], sizes = [64, 1], strides = [1, 1]} : vector<64x8xi32> to vector<64x1xi32>
    %282 = vector.broadcast %281 : vector<64x1xi32> to vector<64x128xi32>
    %283 = arith.cmpi eq, %282, %110 : vector<64x128xi32>
    %284 = vector.extract_strided_slice %125 {offsets = [0, 4], sizes = [64, 1], strides = [1, 1]} : vector<64x8xf32> to vector<64x1xf32>
    %cst_52 = arith.constant 0.000000e+00 : f32
    %285 = vector.shape_cast %284 : vector<64x1xf32> to vector<64x1xf32>
    %286 = vector.broadcast %285 : vector<64x1xf32> to vector<64x128xf32>
    %287 = vector.broadcast %cst_52 : f32 to vector<64x128xf32>
    %288 = arith.select %283, %286, %287 : vector<64x128xi1>, vector<64x128xf32>
    %289 = vector.extract_strided_slice %133 {offsets = [0, 4], sizes = [64, 1], strides = [1, 1]} : vector<64x8xi32> to vector<64x1xi32>
    %290 = vector.broadcast %289 : vector<64x1xi32> to vector<64x128xi32>
    %291 = arith.cmpi eq, %290, %110 : vector<64x128xi32>
    %292 = vector.extract_strided_slice %127 {offsets = [0, 4], sizes = [64, 1], strides = [1, 1]} : vector<64x8xf32> to vector<64x1xf32>
    %cst_53 = arith.constant 0.000000e+00 : f32
    %293 = vector.shape_cast %292 : vector<64x1xf32> to vector<64x1xf32>
    %294 = vector.broadcast %293 : vector<64x1xf32> to vector<64x128xf32>
    %295 = vector.broadcast %cst_53 : f32 to vector<64x128xf32>
    %296 = arith.select %291, %294, %295 : vector<64x128xi1>, vector<64x128xf32>
    %297 = arith.addf %288, %296 : vector<64x128xf32>
    %298 = vector.extract_strided_slice %134 {offsets = [0, 4], sizes = [64, 1], strides = [1, 1]} : vector<64x8xi32> to vector<64x1xi32>
    %299 = vector.broadcast %298 : vector<64x1xi32> to vector<64x128xi32>
    %300 = arith.cmpi eq, %299, %110 : vector<64x128xi32>
    %301 = vector.extract_strided_slice %129 {offsets = [0, 4], sizes = [64, 1], strides = [1, 1]} : vector<64x8xf32> to vector<64x1xf32>
    %cst_54 = arith.constant 0.000000e+00 : f32
    %302 = vector.shape_cast %301 : vector<64x1xf32> to vector<64x1xf32>
    %303 = vector.broadcast %302 : vector<64x1xf32> to vector<64x128xf32>
    %304 = vector.broadcast %cst_54 : f32 to vector<64x128xf32>
    %305 = arith.select %300, %303, %304 : vector<64x128xi1>, vector<64x128xf32>
    %306 = arith.addf %297, %305 : vector<64x128xf32>
    %307 = vector.extract_strided_slice %135 {offsets = [0, 4], sizes = [64, 1], strides = [1, 1]} : vector<64x8xi32> to vector<64x1xi32>
    %308 = vector.broadcast %307 : vector<64x1xi32> to vector<64x128xi32>
    %309 = arith.cmpi eq, %308, %110 : vector<64x128xi32>
    %310 = vector.extract_strided_slice %131 {offsets = [0, 4], sizes = [64, 1], strides = [1, 1]} : vector<64x8xf32> to vector<64x1xf32>
    %cst_55 = arith.constant 0.000000e+00 : f32
    %311 = vector.shape_cast %310 : vector<64x1xf32> to vector<64x1xf32>
    %312 = vector.broadcast %311 : vector<64x1xf32> to vector<64x128xf32>
    %313 = vector.broadcast %cst_55 : f32 to vector<64x128xf32>
    %314 = arith.select %309, %312, %313 : vector<64x128xi1>, vector<64x128xf32>
    %315 = arith.addf %306, %314 : vector<64x128xf32>
    %316 = arith.addf %280, %315 : vector<64x128xf32>
    %317 = vector.extract_strided_slice %132 {offsets = [0, 5], sizes = [64, 1], strides = [1, 1]} : vector<64x8xi32> to vector<64x1xi32>
    %318 = vector.broadcast %317 : vector<64x1xi32> to vector<64x128xi32>
    %319 = arith.cmpi eq, %318, %110 : vector<64x128xi32>
    %320 = vector.extract_strided_slice %125 {offsets = [0, 5], sizes = [64, 1], strides = [1, 1]} : vector<64x8xf32> to vector<64x1xf32>
    %cst_56 = arith.constant 0.000000e+00 : f32
    %321 = vector.shape_cast %320 : vector<64x1xf32> to vector<64x1xf32>
    %322 = vector.broadcast %321 : vector<64x1xf32> to vector<64x128xf32>
    %323 = vector.broadcast %cst_56 : f32 to vector<64x128xf32>
    %324 = arith.select %319, %322, %323 : vector<64x128xi1>, vector<64x128xf32>
    %325 = vector.extract_strided_slice %133 {offsets = [0, 5], sizes = [64, 1], strides = [1, 1]} : vector<64x8xi32> to vector<64x1xi32>
    %326 = vector.broadcast %325 : vector<64x1xi32> to vector<64x128xi32>
    %327 = arith.cmpi eq, %326, %110 : vector<64x128xi32>
    %328 = vector.extract_strided_slice %127 {offsets = [0, 5], sizes = [64, 1], strides = [1, 1]} : vector<64x8xf32> to vector<64x1xf32>
    %cst_57 = arith.constant 0.000000e+00 : f32
    %329 = vector.shape_cast %328 : vector<64x1xf32> to vector<64x1xf32>
    %330 = vector.broadcast %329 : vector<64x1xf32> to vector<64x128xf32>
    %331 = vector.broadcast %cst_57 : f32 to vector<64x128xf32>
    %332 = arith.select %327, %330, %331 : vector<64x128xi1>, vector<64x128xf32>
    %333 = arith.addf %324, %332 : vector<64x128xf32>
    %334 = vector.extract_strided_slice %134 {offsets = [0, 5], sizes = [64, 1], strides = [1, 1]} : vector<64x8xi32> to vector<64x1xi32>
    %335 = vector.broadcast %334 : vector<64x1xi32> to vector<64x128xi32>
    %336 = arith.cmpi eq, %335, %110 : vector<64x128xi32>
    %337 = vector.extract_strided_slice %129 {offsets = [0, 5], sizes = [64, 1], strides = [1, 1]} : vector<64x8xf32> to vector<64x1xf32>
    %cst_58 = arith.constant 0.000000e+00 : f32
    %338 = vector.shape_cast %337 : vector<64x1xf32> to vector<64x1xf32>
    %339 = vector.broadcast %338 : vector<64x1xf32> to vector<64x128xf32>
    %340 = vector.broadcast %cst_58 : f32 to vector<64x128xf32>
    %341 = arith.select %336, %339, %340 : vector<64x128xi1>, vector<64x128xf32>
    %342 = arith.addf %333, %341 : vector<64x128xf32>
    %343 = vector.extract_strided_slice %135 {offsets = [0, 5], sizes = [64, 1], strides = [1, 1]} : vector<64x8xi32> to vector<64x1xi32>
    %344 = vector.broadcast %343 : vector<64x1xi32> to vector<64x128xi32>
    %345 = arith.cmpi eq, %344, %110 : vector<64x128xi32>
    %346 = vector.extract_strided_slice %131 {offsets = [0, 5], sizes = [64, 1], strides = [1, 1]} : vector<64x8xf32> to vector<64x1xf32>
    %cst_59 = arith.constant 0.000000e+00 : f32
    %347 = vector.shape_cast %346 : vector<64x1xf32> to vector<64x1xf32>
    %348 = vector.broadcast %347 : vector<64x1xf32> to vector<64x128xf32>
    %349 = vector.broadcast %cst_59 : f32 to vector<64x128xf32>
    %350 = arith.select %345, %348, %349 : vector<64x128xi1>, vector<64x128xf32>
    %351 = arith.addf %342, %350 : vector<64x128xf32>
    %352 = arith.addf %316, %351 : vector<64x128xf32>
    %353 = vector.extract_strided_slice %132 {offsets = [0, 6], sizes = [64, 1], strides = [1, 1]} : vector<64x8xi32> to vector<64x1xi32>
    %354 = vector.broadcast %353 : vector<64x1xi32> to vector<64x128xi32>
    %355 = arith.cmpi eq, %354, %110 : vector<64x128xi32>
    %356 = vector.extract_strided_slice %125 {offsets = [0, 6], sizes = [64, 1], strides = [1, 1]} : vector<64x8xf32> to vector<64x1xf32>
    %cst_60 = arith.constant 0.000000e+00 : f32
    %357 = vector.shape_cast %356 : vector<64x1xf32> to vector<64x1xf32>
    %358 = vector.broadcast %357 : vector<64x1xf32> to vector<64x128xf32>
    %359 = vector.broadcast %cst_60 : f32 to vector<64x128xf32>
    %360 = arith.select %355, %358, %359 : vector<64x128xi1>, vector<64x128xf32>
    %361 = vector.extract_strided_slice %133 {offsets = [0, 6], sizes = [64, 1], strides = [1, 1]} : vector<64x8xi32> to vector<64x1xi32>
    %362 = vector.broadcast %361 : vector<64x1xi32> to vector<64x128xi32>
    %363 = arith.cmpi eq, %362, %110 : vector<64x128xi32>
    %364 = vector.extract_strided_slice %127 {offsets = [0, 6], sizes = [64, 1], strides = [1, 1]} : vector<64x8xf32> to vector<64x1xf32>
    %cst_61 = arith.constant 0.000000e+00 : f32
    %365 = vector.shape_cast %364 : vector<64x1xf32> to vector<64x1xf32>
    %366 = vector.broadcast %365 : vector<64x1xf32> to vector<64x128xf32>
    %367 = vector.broadcast %cst_61 : f32 to vector<64x128xf32>
    %368 = arith.select %363, %366, %367 : vector<64x128xi1>, vector<64x128xf32>
    %369 = arith.addf %360, %368 : vector<64x128xf32>
    %370 = vector.extract_strided_slice %134 {offsets = [0, 6], sizes = [64, 1], strides = [1, 1]} : vector<64x8xi32> to vector<64x1xi32>
    %371 = vector.broadcast %370 : vector<64x1xi32> to vector<64x128xi32>
    %372 = arith.cmpi eq, %371, %110 : vector<64x128xi32>
    %373 = vector.extract_strided_slice %129 {offsets = [0, 6], sizes = [64, 1], strides = [1, 1]} : vector<64x8xf32> to vector<64x1xf32>
    %cst_62 = arith.constant 0.000000e+00 : f32
    %374 = vector.shape_cast %373 : vector<64x1xf32> to vector<64x1xf32>
    %375 = vector.broadcast %374 : vector<64x1xf32> to vector<64x128xf32>
    %376 = vector.broadcast %cst_62 : f32 to vector<64x128xf32>
    %377 = arith.select %372, %375, %376 : vector<64x128xi1>, vector<64x128xf32>
    %378 = arith.addf %369, %377 : vector<64x128xf32>
    %379 = vector.extract_strided_slice %135 {offsets = [0, 6], sizes = [64, 1], strides = [1, 1]} : vector<64x8xi32> to vector<64x1xi32>
    %380 = vector.broadcast %379 : vector<64x1xi32> to vector<64x128xi32>
    %381 = arith.cmpi eq, %380, %110 : vector<64x128xi32>
    %382 = vector.extract_strided_slice %131 {offsets = [0, 6], sizes = [64, 1], strides = [1, 1]} : vector<64x8xf32> to vector<64x1xf32>
    %cst_63 = arith.constant 0.000000e+00 : f32
    %383 = vector.shape_cast %382 : vector<64x1xf32> to vector<64x1xf32>
    %384 = vector.broadcast %383 : vector<64x1xf32> to vector<64x128xf32>
    %385 = vector.broadcast %cst_63 : f32 to vector<64x128xf32>
    %386 = arith.select %381, %384, %385 : vector<64x128xi1>, vector<64x128xf32>
    %387 = arith.addf %378, %386 : vector<64x128xf32>
    %388 = arith.addf %352, %387 : vector<64x128xf32>
    %389 = vector.extract_strided_slice %132 {offsets = [0, 7], sizes = [64, 1], strides = [1, 1]} : vector<64x8xi32> to vector<64x1xi32>
    %390 = vector.broadcast %389 : vector<64x1xi32> to vector<64x128xi32>
    %391 = arith.cmpi eq, %390, %110 : vector<64x128xi32>
    %392 = vector.extract_strided_slice %125 {offsets = [0, 7], sizes = [64, 1], strides = [1, 1]} : vector<64x8xf32> to vector<64x1xf32>
    %cst_64 = arith.constant 0.000000e+00 : f32
    %393 = vector.shape_cast %392 : vector<64x1xf32> to vector<64x1xf32>
    %394 = vector.broadcast %393 : vector<64x1xf32> to vector<64x128xf32>
    %395 = vector.broadcast %cst_64 : f32 to vector<64x128xf32>
    %396 = arith.select %391, %394, %395 : vector<64x128xi1>, vector<64x128xf32>
    %397 = vector.extract_strided_slice %133 {offsets = [0, 7], sizes = [64, 1], strides = [1, 1]} : vector<64x8xi32> to vector<64x1xi32>
    %398 = vector.broadcast %397 : vector<64x1xi32> to vector<64x128xi32>
    %399 = arith.cmpi eq, %398, %110 : vector<64x128xi32>
    %400 = vector.extract_strided_slice %127 {offsets = [0, 7], sizes = [64, 1], strides = [1, 1]} : vector<64x8xf32> to vector<64x1xf32>
    %cst_65 = arith.constant 0.000000e+00 : f32
    %401 = vector.shape_cast %400 : vector<64x1xf32> to vector<64x1xf32>
    %402 = vector.broadcast %401 : vector<64x1xf32> to vector<64x128xf32>
    %403 = vector.broadcast %cst_65 : f32 to vector<64x128xf32>
    %404 = arith.select %399, %402, %403 : vector<64x128xi1>, vector<64x128xf32>
    %405 = arith.addf %396, %404 : vector<64x128xf32>
    %406 = vector.extract_strided_slice %134 {offsets = [0, 7], sizes = [64, 1], strides = [1, 1]} : vector<64x8xi32> to vector<64x1xi32>
    %407 = vector.broadcast %406 : vector<64x1xi32> to vector<64x128xi32>
    %408 = arith.cmpi eq, %407, %110 : vector<64x128xi32>
    %409 = vector.extract_strided_slice %129 {offsets = [0, 7], sizes = [64, 1], strides = [1, 1]} : vector<64x8xf32> to vector<64x1xf32>
    %cst_66 = arith.constant 0.000000e+00 : f32
    %410 = vector.shape_cast %409 : vector<64x1xf32> to vector<64x1xf32>
    %411 = vector.broadcast %410 : vector<64x1xf32> to vector<64x128xf32>
    %412 = vector.broadcast %cst_66 : f32 to vector<64x128xf32>
    %413 = arith.select %408, %411, %412 : vector<64x128xi1>, vector<64x128xf32>
    %414 = arith.addf %405, %413 : vector<64x128xf32>
    %415 = vector.extract_strided_slice %135 {offsets = [0, 7], sizes = [64, 1], strides = [1, 1]} : vector<64x8xi32> to vector<64x1xi32>
    %416 = vector.broadcast %415 : vector<64x1xi32> to vector<64x128xi32>
    %417 = arith.cmpi eq, %416, %110 : vector<64x128xi32>
    %418 = vector.extract_strided_slice %131 {offsets = [0, 7], sizes = [64, 1], strides = [1, 1]} : vector<64x8xf32> to vector<64x1xf32>
    %cst_67 = arith.constant 0.000000e+00 : f32
    %419 = vector.shape_cast %418 : vector<64x1xf32> to vector<64x1xf32>
    %420 = vector.broadcast %419 : vector<64x1xf32> to vector<64x128xf32>
    %421 = vector.broadcast %cst_67 : f32 to vector<64x128xf32>
    %422 = arith.select %417, %420, %421 : vector<64x128xi1>, vector<64x128xf32>
    %423 = arith.addf %414, %422 : vector<64x128xf32>
    %424 = arith.addf %388, %423 : vector<64x128xf32>
    %425 = arith.truncf %424 : vector<64x128xf32> to vector<64x128xbf16>
    %cst_68 = arith.constant dense<0.000000e+00> : vector<64x32xf32>
    %426 = tpu.matmul %425, %111, %cst_68 {dimension_numbers = #tpu.dot_dimension_numbers<[1], [0], [0], [1], [0, 0, 1, 1], [], []>} : vector<64x128xbf16>, vector<128x32xbf16>, vector<64x32xf32> -> vector<64x32xf32>
    %427 = arith.truncf %426 : vector<64x32xf32> to vector<64x32xbf16>
    %c0_69 = arith.constant 0 : index
    %c0_70 = arith.constant 0 : index
    %c0_71 = arith.constant 0 : index
    %428 = vector.load %arg11[%c0_69, %c0_70, %c0_71] : memref<2x32x32xf32, #tpu.memory_space<vmem>>, vector<1x32x32xf32>
    %429 = vector.shape_cast %428 : vector<1x32x32xf32> to vector<32x32xf32>
    %430 = arith.truncf %429 : vector<32x32xf32> to vector<32x32xbf16>
    %cst_72 = arith.constant dense<0.000000e+00> : vector<64x32xf32>
    %431 = tpu.matmul %427, %430, %cst_72 {dimension_numbers = #tpu.dot_dimension_numbers<[1], [0], [0], [1], [0, 0, 1, 1], [], []>} : vector<64x32xbf16>, vector<32x32xbf16>, vector<64x32xf32> -> vector<64x32xf32>
    %432 = arith.addf %112, %431 : vector<64x32xf32>
    %433 = vector.extract_strided_slice %22 {offsets = [0, 8], sizes = [64, 8], strides = [1, 1]} : vector<64x16xf32> to vector<64x8xf32>
    %cst_73 = arith.constant dense<0xFF800000> : vector<64xf32>
    %434 = vector.multi_reduction <maximumf>, %433, %cst_73 [1] : vector<64x8xf32> to vector<64xf32>
    %435 = vector.shape_cast %434 : vector<64xf32> to vector<64x1xf32>
    %436 = vector.broadcast %435 : vector<64x1xf32> to vector<64x8xf32>
    %437 = arith.subf %433, %436 : vector<64x8xf32>
    %438 = math.exp %437 : vector<64x8xf32>
    %cst_74 = arith.constant dense<0.000000e+00> : vector<64xf32>
    %439 = vector.multi_reduction <add>, %438, %cst_74 [1] : vector<64x8xf32> to vector<64xf32>
    %440 = vector.shape_cast %439 : vector<64xf32> to vector<64x1xf32>
    %441 = tpu.reciprocal %440 {approx = true} : vector<64x1xf32> -> vector<64x1xf32>
    %442 = vector.broadcast %441 : vector<64x1xf32> to vector<64x8xf32>
    %443 = arith.mulf %438, %442 : vector<64x8xf32>
    %444 = vector.extract_strided_slice %100 {offsets = [0, 8], sizes = [64, 8], strides = [1, 1]} : vector<64x16xf32> to vector<64x8xf32>
    %445 = arith.mulf %444, %443 : vector<64x8xf32>
    %446 = vector.extract_strided_slice %103 {offsets = [0, 8], sizes = [64, 8], strides = [1, 1]} : vector<64x16xf32> to vector<64x8xf32>
    %447 = arith.mulf %446, %443 : vector<64x8xf32>
    %448 = vector.extract_strided_slice %106 {offsets = [0, 8], sizes = [64, 8], strides = [1, 1]} : vector<64x16xf32> to vector<64x8xf32>
    %449 = arith.mulf %448, %443 : vector<64x8xf32>
    %450 = vector.extract_strided_slice %109 {offsets = [0, 8], sizes = [64, 8], strides = [1, 1]} : vector<64x16xf32> to vector<64x8xf32>
    %451 = arith.mulf %450, %443 : vector<64x8xf32>
    %452 = vector.extract_strided_slice %93 {offsets = [0, 8], sizes = [64, 8], strides = [1, 1]} : vector<64x16xi32> to vector<64x8xi32>
    %453 = vector.extract_strided_slice %94 {offsets = [0, 8], sizes = [64, 8], strides = [1, 1]} : vector<64x16xi32> to vector<64x8xi32>
    %454 = vector.extract_strided_slice %95 {offsets = [0, 8], sizes = [64, 8], strides = [1, 1]} : vector<64x16xi32> to vector<64x8xi32>
    %455 = vector.extract_strided_slice %96 {offsets = [0, 8], sizes = [64, 8], strides = [1, 1]} : vector<64x16xi32> to vector<64x8xi32>
    %cst_75 = arith.constant 0.000000e+00 : f32
    %456 = vector.broadcast %cst_75 : f32 to vector<64x128xf32>
    %457 = vector.extract_strided_slice %452 {offsets = [0, 0], sizes = [64, 1], strides = [1, 1]} : vector<64x8xi32> to vector<64x1xi32>
    %458 = vector.broadcast %457 : vector<64x1xi32> to vector<64x128xi32>
    %459 = arith.cmpi eq, %458, %110 : vector<64x128xi32>
    %460 = vector.extract_strided_slice %445 {offsets = [0, 0], sizes = [64, 1], strides = [1, 1]} : vector<64x8xf32> to vector<64x1xf32>
    %cst_76 = arith.constant 0.000000e+00 : f32
    %461 = vector.shape_cast %460 : vector<64x1xf32> to vector<64x1xf32>
    %462 = vector.broadcast %461 : vector<64x1xf32> to vector<64x128xf32>
    %463 = vector.broadcast %cst_76 : f32 to vector<64x128xf32>
    %464 = arith.select %459, %462, %463 : vector<64x128xi1>, vector<64x128xf32>
    %465 = vector.extract_strided_slice %453 {offsets = [0, 0], sizes = [64, 1], strides = [1, 1]} : vector<64x8xi32> to vector<64x1xi32>
    %466 = vector.broadcast %465 : vector<64x1xi32> to vector<64x128xi32>
    %467 = arith.cmpi eq, %466, %110 : vector<64x128xi32>
    %468 = vector.extract_strided_slice %447 {offsets = [0, 0], sizes = [64, 1], strides = [1, 1]} : vector<64x8xf32> to vector<64x1xf32>
    %cst_77 = arith.constant 0.000000e+00 : f32
    %469 = vector.shape_cast %468 : vector<64x1xf32> to vector<64x1xf32>
    %470 = vector.broadcast %469 : vector<64x1xf32> to vector<64x128xf32>
    %471 = vector.broadcast %cst_77 : f32 to vector<64x128xf32>
    %472 = arith.select %467, %470, %471 : vector<64x128xi1>, vector<64x128xf32>
    %473 = arith.addf %464, %472 : vector<64x128xf32>
    %474 = vector.extract_strided_slice %454 {offsets = [0, 0], sizes = [64, 1], strides = [1, 1]} : vector<64x8xi32> to vector<64x1xi32>
    %475 = vector.broadcast %474 : vector<64x1xi32> to vector<64x128xi32>
    %476 = arith.cmpi eq, %475, %110 : vector<64x128xi32>
    %477 = vector.extract_strided_slice %449 {offsets = [0, 0], sizes = [64, 1], strides = [1, 1]} : vector<64x8xf32> to vector<64x1xf32>
    %cst_78 = arith.constant 0.000000e+00 : f32
    %478 = vector.shape_cast %477 : vector<64x1xf32> to vector<64x1xf32>
    %479 = vector.broadcast %478 : vector<64x1xf32> to vector<64x128xf32>
    %480 = vector.broadcast %cst_78 : f32 to vector<64x128xf32>
    %481 = arith.select %476, %479, %480 : vector<64x128xi1>, vector<64x128xf32>
    %482 = arith.addf %473, %481 : vector<64x128xf32>
    %483 = vector.extract_strided_slice %455 {offsets = [0, 0], sizes = [64, 1], strides = [1, 1]} : vector<64x8xi32> to vector<64x1xi32>
    %484 = vector.broadcast %483 : vector<64x1xi32> to vector<64x128xi32>
    %485 = arith.cmpi eq, %484, %110 : vector<64x128xi32>
    %486 = vector.extract_strided_slice %451 {offsets = [0, 0], sizes = [64, 1], strides = [1, 1]} : vector<64x8xf32> to vector<64x1xf32>
    %cst_79 = arith.constant 0.000000e+00 : f32
    %487 = vector.shape_cast %486 : vector<64x1xf32> to vector<64x1xf32>
    %488 = vector.broadcast %487 : vector<64x1xf32> to vector<64x128xf32>
    %489 = vector.broadcast %cst_79 : f32 to vector<64x128xf32>
    %490 = arith.select %485, %488, %489 : vector<64x128xi1>, vector<64x128xf32>
    %491 = arith.addf %482, %490 : vector<64x128xf32>
    %492 = arith.addf %456, %491 : vector<64x128xf32>
    %493 = vector.extract_strided_slice %452 {offsets = [0, 1], sizes = [64, 1], strides = [1, 1]} : vector<64x8xi32> to vector<64x1xi32>
    %494 = vector.broadcast %493 : vector<64x1xi32> to vector<64x128xi32>
    %495 = arith.cmpi eq, %494, %110 : vector<64x128xi32>
    %496 = vector.extract_strided_slice %445 {offsets = [0, 1], sizes = [64, 1], strides = [1, 1]} : vector<64x8xf32> to vector<64x1xf32>
    %cst_80 = arith.constant 0.000000e+00 : f32
    %497 = vector.shape_cast %496 : vector<64x1xf32> to vector<64x1xf32>
    %498 = vector.broadcast %497 : vector<64x1xf32> to vector<64x128xf32>
    %499 = vector.broadcast %cst_80 : f32 to vector<64x128xf32>
    %500 = arith.select %495, %498, %499 : vector<64x128xi1>, vector<64x128xf32>
    %501 = vector.extract_strided_slice %453 {offsets = [0, 1], sizes = [64, 1], strides = [1, 1]} : vector<64x8xi32> to vector<64x1xi32>
    %502 = vector.broadcast %501 : vector<64x1xi32> to vector<64x128xi32>
    %503 = arith.cmpi eq, %502, %110 : vector<64x128xi32>
    %504 = vector.extract_strided_slice %447 {offsets = [0, 1], sizes = [64, 1], strides = [1, 1]} : vector<64x8xf32> to vector<64x1xf32>
    %cst_81 = arith.constant 0.000000e+00 : f32
    %505 = vector.shape_cast %504 : vector<64x1xf32> to vector<64x1xf32>
    %506 = vector.broadcast %505 : vector<64x1xf32> to vector<64x128xf32>
    %507 = vector.broadcast %cst_81 : f32 to vector<64x128xf32>
    %508 = arith.select %503, %506, %507 : vector<64x128xi1>, vector<64x128xf32>
    %509 = arith.addf %500, %508 : vector<64x128xf32>
    %510 = vector.extract_strided_slice %454 {offsets = [0, 1], sizes = [64, 1], strides = [1, 1]} : vector<64x8xi32> to vector<64x1xi32>
    %511 = vector.broadcast %510 : vector<64x1xi32> to vector<64x128xi32>
    %512 = arith.cmpi eq, %511, %110 : vector<64x128xi32>
    %513 = vector.extract_strided_slice %449 {offsets = [0, 1], sizes = [64, 1], strides = [1, 1]} : vector<64x8xf32> to vector<64x1xf32>
    %cst_82 = arith.constant 0.000000e+00 : f32
    %514 = vector.shape_cast %513 : vector<64x1xf32> to vector<64x1xf32>
    %515 = vector.broadcast %514 : vector<64x1xf32> to vector<64x128xf32>
    %516 = vector.broadcast %cst_82 : f32 to vector<64x128xf32>
    %517 = arith.select %512, %515, %516 : vector<64x128xi1>, vector<64x128xf32>
    %518 = arith.addf %509, %517 : vector<64x128xf32>
    %519 = vector.extract_strided_slice %455 {offsets = [0, 1], sizes = [64, 1], strides = [1, 1]} : vector<64x8xi32> to vector<64x1xi32>
    %520 = vector.broadcast %519 : vector<64x1xi32> to vector<64x128xi32>
    %521 = arith.cmpi eq, %520, %110 : vector<64x128xi32>
    %522 = vector.extract_strided_slice %451 {offsets = [0, 1], sizes = [64, 1], strides = [1, 1]} : vector<64x8xf32> to vector<64x1xf32>
    %cst_83 = arith.constant 0.000000e+00 : f32
    %523 = vector.shape_cast %522 : vector<64x1xf32> to vector<64x1xf32>
    %524 = vector.broadcast %523 : vector<64x1xf32> to vector<64x128xf32>
    %525 = vector.broadcast %cst_83 : f32 to vector<64x128xf32>
    %526 = arith.select %521, %524, %525 : vector<64x128xi1>, vector<64x128xf32>
    %527 = arith.addf %518, %526 : vector<64x128xf32>
    %528 = arith.addf %492, %527 : vector<64x128xf32>
    %529 = vector.extract_strided_slice %452 {offsets = [0, 2], sizes = [64, 1], strides = [1, 1]} : vector<64x8xi32> to vector<64x1xi32>
    %530 = vector.broadcast %529 : vector<64x1xi32> to vector<64x128xi32>
    %531 = arith.cmpi eq, %530, %110 : vector<64x128xi32>
    %532 = vector.extract_strided_slice %445 {offsets = [0, 2], sizes = [64, 1], strides = [1, 1]} : vector<64x8xf32> to vector<64x1xf32>
    %cst_84 = arith.constant 0.000000e+00 : f32
    %533 = vector.shape_cast %532 : vector<64x1xf32> to vector<64x1xf32>
    %534 = vector.broadcast %533 : vector<64x1xf32> to vector<64x128xf32>
    %535 = vector.broadcast %cst_84 : f32 to vector<64x128xf32>
    %536 = arith.select %531, %534, %535 : vector<64x128xi1>, vector<64x128xf32>
    %537 = vector.extract_strided_slice %453 {offsets = [0, 2], sizes = [64, 1], strides = [1, 1]} : vector<64x8xi32> to vector<64x1xi32>
    %538 = vector.broadcast %537 : vector<64x1xi32> to vector<64x128xi32>
    %539 = arith.cmpi eq, %538, %110 : vector<64x128xi32>
    %540 = vector.extract_strided_slice %447 {offsets = [0, 2], sizes = [64, 1], strides = [1, 1]} : vector<64x8xf32> to vector<64x1xf32>
    %cst_85 = arith.constant 0.000000e+00 : f32
    %541 = vector.shape_cast %540 : vector<64x1xf32> to vector<64x1xf32>
    %542 = vector.broadcast %541 : vector<64x1xf32> to vector<64x128xf32>
    %543 = vector.broadcast %cst_85 : f32 to vector<64x128xf32>
    %544 = arith.select %539, %542, %543 : vector<64x128xi1>, vector<64x128xf32>
    %545 = arith.addf %536, %544 : vector<64x128xf32>
    %546 = vector.extract_strided_slice %454 {offsets = [0, 2], sizes = [64, 1], strides = [1, 1]} : vector<64x8xi32> to vector<64x1xi32>
    %547 = vector.broadcast %546 : vector<64x1xi32> to vector<64x128xi32>
    %548 = arith.cmpi eq, %547, %110 : vector<64x128xi32>
    %549 = vector.extract_strided_slice %449 {offsets = [0, 2], sizes = [64, 1], strides = [1, 1]} : vector<64x8xf32> to vector<64x1xf32>
    %cst_86 = arith.constant 0.000000e+00 : f32
    %550 = vector.shape_cast %549 : vector<64x1xf32> to vector<64x1xf32>
    %551 = vector.broadcast %550 : vector<64x1xf32> to vector<64x128xf32>
    %552 = vector.broadcast %cst_86 : f32 to vector<64x128xf32>
    %553 = arith.select %548, %551, %552 : vector<64x128xi1>, vector<64x128xf32>
    %554 = arith.addf %545, %553 : vector<64x128xf32>
    %555 = vector.extract_strided_slice %455 {offsets = [0, 2], sizes = [64, 1], strides = [1, 1]} : vector<64x8xi32> to vector<64x1xi32>
    %556 = vector.broadcast %555 : vector<64x1xi32> to vector<64x128xi32>
    %557 = arith.cmpi eq, %556, %110 : vector<64x128xi32>
    %558 = vector.extract_strided_slice %451 {offsets = [0, 2], sizes = [64, 1], strides = [1, 1]} : vector<64x8xf32> to vector<64x1xf32>
    %cst_87 = arith.constant 0.000000e+00 : f32
    %559 = vector.shape_cast %558 : vector<64x1xf32> to vector<64x1xf32>
    %560 = vector.broadcast %559 : vector<64x1xf32> to vector<64x128xf32>
    %561 = vector.broadcast %cst_87 : f32 to vector<64x128xf32>
    %562 = arith.select %557, %560, %561 : vector<64x128xi1>, vector<64x128xf32>
    %563 = arith.addf %554, %562 : vector<64x128xf32>
    %564 = arith.addf %528, %563 : vector<64x128xf32>
    %565 = vector.extract_strided_slice %452 {offsets = [0, 3], sizes = [64, 1], strides = [1, 1]} : vector<64x8xi32> to vector<64x1xi32>
    %566 = vector.broadcast %565 : vector<64x1xi32> to vector<64x128xi32>
    %567 = arith.cmpi eq, %566, %110 : vector<64x128xi32>
    %568 = vector.extract_strided_slice %445 {offsets = [0, 3], sizes = [64, 1], strides = [1, 1]} : vector<64x8xf32> to vector<64x1xf32>
    %cst_88 = arith.constant 0.000000e+00 : f32
    %569 = vector.shape_cast %568 : vector<64x1xf32> to vector<64x1xf32>
    %570 = vector.broadcast %569 : vector<64x1xf32> to vector<64x128xf32>
    %571 = vector.broadcast %cst_88 : f32 to vector<64x128xf32>
    %572 = arith.select %567, %570, %571 : vector<64x128xi1>, vector<64x128xf32>
    %573 = vector.extract_strided_slice %453 {offsets = [0, 3], sizes = [64, 1], strides = [1, 1]} : vector<64x8xi32> to vector<64x1xi32>
    %574 = vector.broadcast %573 : vector<64x1xi32> to vector<64x128xi32>
    %575 = arith.cmpi eq, %574, %110 : vector<64x128xi32>
    %576 = vector.extract_strided_slice %447 {offsets = [0, 3], sizes = [64, 1], strides = [1, 1]} : vector<64x8xf32> to vector<64x1xf32>
    %cst_89 = arith.constant 0.000000e+00 : f32
    %577 = vector.shape_cast %576 : vector<64x1xf32> to vector<64x1xf32>
    %578 = vector.broadcast %577 : vector<64x1xf32> to vector<64x128xf32>
    %579 = vector.broadcast %cst_89 : f32 to vector<64x128xf32>
    %580 = arith.select %575, %578, %579 : vector<64x128xi1>, vector<64x128xf32>
    %581 = arith.addf %572, %580 : vector<64x128xf32>
    %582 = vector.extract_strided_slice %454 {offsets = [0, 3], sizes = [64, 1], strides = [1, 1]} : vector<64x8xi32> to vector<64x1xi32>
    %583 = vector.broadcast %582 : vector<64x1xi32> to vector<64x128xi32>
    %584 = arith.cmpi eq, %583, %110 : vector<64x128xi32>
    %585 = vector.extract_strided_slice %449 {offsets = [0, 3], sizes = [64, 1], strides = [1, 1]} : vector<64x8xf32> to vector<64x1xf32>
    %cst_90 = arith.constant 0.000000e+00 : f32
    %586 = vector.shape_cast %585 : vector<64x1xf32> to vector<64x1xf32>
    %587 = vector.broadcast %586 : vector<64x1xf32> to vector<64x128xf32>
    %588 = vector.broadcast %cst_90 : f32 to vector<64x128xf32>
    %589 = arith.select %584, %587, %588 : vector<64x128xi1>, vector<64x128xf32>
    %590 = arith.addf %581, %589 : vector<64x128xf32>
    %591 = vector.extract_strided_slice %455 {offsets = [0, 3], sizes = [64, 1], strides = [1, 1]} : vector<64x8xi32> to vector<64x1xi32>
    %592 = vector.broadcast %591 : vector<64x1xi32> to vector<64x128xi32>
    %593 = arith.cmpi eq, %592, %110 : vector<64x128xi32>
    %594 = vector.extract_strided_slice %451 {offsets = [0, 3], sizes = [64, 1], strides = [1, 1]} : vector<64x8xf32> to vector<64x1xf32>
    %cst_91 = arith.constant 0.000000e+00 : f32
    %595 = vector.shape_cast %594 : vector<64x1xf32> to vector<64x1xf32>
    %596 = vector.broadcast %595 : vector<64x1xf32> to vector<64x128xf32>
    %597 = vector.broadcast %cst_91 : f32 to vector<64x128xf32>
    %598 = arith.select %593, %596, %597 : vector<64x128xi1>, vector<64x128xf32>
    %599 = arith.addf %590, %598 : vector<64x128xf32>
    %600 = arith.addf %564, %599 : vector<64x128xf32>
    %601 = vector.extract_strided_slice %452 {offsets = [0, 4], sizes = [64, 1], strides = [1, 1]} : vector<64x8xi32> to vector<64x1xi32>
    %602 = vector.broadcast %601 : vector<64x1xi32> to vector<64x128xi32>
    %603 = arith.cmpi eq, %602, %110 : vector<64x128xi32>
    %604 = vector.extract_strided_slice %445 {offsets = [0, 4], sizes = [64, 1], strides = [1, 1]} : vector<64x8xf32> to vector<64x1xf32>
    %cst_92 = arith.constant 0.000000e+00 : f32
    %605 = vector.shape_cast %604 : vector<64x1xf32> to vector<64x1xf32>
    %606 = vector.broadcast %605 : vector<64x1xf32> to vector<64x128xf32>
    %607 = vector.broadcast %cst_92 : f32 to vector<64x128xf32>
    %608 = arith.select %603, %606, %607 : vector<64x128xi1>, vector<64x128xf32>
    %609 = vector.extract_strided_slice %453 {offsets = [0, 4], sizes = [64, 1], strides = [1, 1]} : vector<64x8xi32> to vector<64x1xi32>
    %610 = vector.broadcast %609 : vector<64x1xi32> to vector<64x128xi32>
    %611 = arith.cmpi eq, %610, %110 : vector<64x128xi32>
    %612 = vector.extract_strided_slice %447 {offsets = [0, 4], sizes = [64, 1], strides = [1, 1]} : vector<64x8xf32> to vector<64x1xf32>
    %cst_93 = arith.constant 0.000000e+00 : f32
    %613 = vector.shape_cast %612 : vector<64x1xf32> to vector<64x1xf32>
    %614 = vector.broadcast %613 : vector<64x1xf32> to vector<64x128xf32>
    %615 = vector.broadcast %cst_93 : f32 to vector<64x128xf32>
    %616 = arith.select %611, %614, %615 : vector<64x128xi1>, vector<64x128xf32>
    %617 = arith.addf %608, %616 : vector<64x128xf32>
    %618 = vector.extract_strided_slice %454 {offsets = [0, 4], sizes = [64, 1], strides = [1, 1]} : vector<64x8xi32> to vector<64x1xi32>
    %619 = vector.broadcast %618 : vector<64x1xi32> to vector<64x128xi32>
    %620 = arith.cmpi eq, %619, %110 : vector<64x128xi32>
    %621 = vector.extract_strided_slice %449 {offsets = [0, 4], sizes = [64, 1], strides = [1, 1]} : vector<64x8xf32> to vector<64x1xf32>
    %cst_94 = arith.constant 0.000000e+00 : f32
    %622 = vector.shape_cast %621 : vector<64x1xf32> to vector<64x1xf32>
    %623 = vector.broadcast %622 : vector<64x1xf32> to vector<64x128xf32>
    %624 = vector.broadcast %cst_94 : f32 to vector<64x128xf32>
    %625 = arith.select %620, %623, %624 : vector<64x128xi1>, vector<64x128xf32>
    %626 = arith.addf %617, %625 : vector<64x128xf32>
    %627 = vector.extract_strided_slice %455 {offsets = [0, 4], sizes = [64, 1], strides = [1, 1]} : vector<64x8xi32> to vector<64x1xi32>
    %628 = vector.broadcast %627 : vector<64x1xi32> to vector<64x128xi32>
    %629 = arith.cmpi eq, %628, %110 : vector<64x128xi32>
    %630 = vector.extract_strided_slice %451 {offsets = [0, 4], sizes = [64, 1], strides = [1, 1]} : vector<64x8xf32> to vector<64x1xf32>
    %cst_95 = arith.constant 0.000000e+00 : f32
    %631 = vector.shape_cast %630 : vector<64x1xf32> to vector<64x1xf32>
    %632 = vector.broadcast %631 : vector<64x1xf32> to vector<64x128xf32>
    %633 = vector.broadcast %cst_95 : f32 to vector<64x128xf32>
    %634 = arith.select %629, %632, %633 : vector<64x128xi1>, vector<64x128xf32>
    %635 = arith.addf %626, %634 : vector<64x128xf32>
    %636 = arith.addf %600, %635 : vector<64x128xf32>
    %637 = vector.extract_strided_slice %452 {offsets = [0, 5], sizes = [64, 1], strides = [1, 1]} : vector<64x8xi32> to vector<64x1xi32>
    %638 = vector.broadcast %637 : vector<64x1xi32> to vector<64x128xi32>
    %639 = arith.cmpi eq, %638, %110 : vector<64x128xi32>
    %640 = vector.extract_strided_slice %445 {offsets = [0, 5], sizes = [64, 1], strides = [1, 1]} : vector<64x8xf32> to vector<64x1xf32>
    %cst_96 = arith.constant 0.000000e+00 : f32
    %641 = vector.shape_cast %640 : vector<64x1xf32> to vector<64x1xf32>
    %642 = vector.broadcast %641 : vector<64x1xf32> to vector<64x128xf32>
    %643 = vector.broadcast %cst_96 : f32 to vector<64x128xf32>
    %644 = arith.select %639, %642, %643 : vector<64x128xi1>, vector<64x128xf32>
    %645 = vector.extract_strided_slice %453 {offsets = [0, 5], sizes = [64, 1], strides = [1, 1]} : vector<64x8xi32> to vector<64x1xi32>
    %646 = vector.broadcast %645 : vector<64x1xi32> to vector<64x128xi32>
    %647 = arith.cmpi eq, %646, %110 : vector<64x128xi32>
    %648 = vector.extract_strided_slice %447 {offsets = [0, 5], sizes = [64, 1], strides = [1, 1]} : vector<64x8xf32> to vector<64x1xf32>
    %cst_97 = arith.constant 0.000000e+00 : f32
    %649 = vector.shape_cast %648 : vector<64x1xf32> to vector<64x1xf32>
    %650 = vector.broadcast %649 : vector<64x1xf32> to vector<64x128xf32>
    %651 = vector.broadcast %cst_97 : f32 to vector<64x128xf32>
    %652 = arith.select %647, %650, %651 : vector<64x128xi1>, vector<64x128xf32>
    %653 = arith.addf %644, %652 : vector<64x128xf32>
    %654 = vector.extract_strided_slice %454 {offsets = [0, 5], sizes = [64, 1], strides = [1, 1]} : vector<64x8xi32> to vector<64x1xi32>
    %655 = vector.broadcast %654 : vector<64x1xi32> to vector<64x128xi32>
    %656 = arith.cmpi eq, %655, %110 : vector<64x128xi32>
    %657 = vector.extract_strided_slice %449 {offsets = [0, 5], sizes = [64, 1], strides = [1, 1]} : vector<64x8xf32> to vector<64x1xf32>
    %cst_98 = arith.constant 0.000000e+00 : f32
    %658 = vector.shape_cast %657 : vector<64x1xf32> to vector<64x1xf32>
    %659 = vector.broadcast %658 : vector<64x1xf32> to vector<64x128xf32>
    %660 = vector.broadcast %cst_98 : f32 to vector<64x128xf32>
    %661 = arith.select %656, %659, %660 : vector<64x128xi1>, vector<64x128xf32>
    %662 = arith.addf %653, %661 : vector<64x128xf32>
    %663 = vector.extract_strided_slice %455 {offsets = [0, 5], sizes = [64, 1], strides = [1, 1]} : vector<64x8xi32> to vector<64x1xi32>
    %664 = vector.broadcast %663 : vector<64x1xi32> to vector<64x128xi32>
    %665 = arith.cmpi eq, %664, %110 : vector<64x128xi32>
    %666 = vector.extract_strided_slice %451 {offsets = [0, 5], sizes = [64, 1], strides = [1, 1]} : vector<64x8xf32> to vector<64x1xf32>
    %cst_99 = arith.constant 0.000000e+00 : f32
    %667 = vector.shape_cast %666 : vector<64x1xf32> to vector<64x1xf32>
    %668 = vector.broadcast %667 : vector<64x1xf32> to vector<64x128xf32>
    %669 = vector.broadcast %cst_99 : f32 to vector<64x128xf32>
    %670 = arith.select %665, %668, %669 : vector<64x128xi1>, vector<64x128xf32>
    %671 = arith.addf %662, %670 : vector<64x128xf32>
    %672 = arith.addf %636, %671 : vector<64x128xf32>
    %673 = vector.extract_strided_slice %452 {offsets = [0, 6], sizes = [64, 1], strides = [1, 1]} : vector<64x8xi32> to vector<64x1xi32>
    %674 = vector.broadcast %673 : vector<64x1xi32> to vector<64x128xi32>
    %675 = arith.cmpi eq, %674, %110 : vector<64x128xi32>
    %676 = vector.extract_strided_slice %445 {offsets = [0, 6], sizes = [64, 1], strides = [1, 1]} : vector<64x8xf32> to vector<64x1xf32>
    %cst_100 = arith.constant 0.000000e+00 : f32
    %677 = vector.shape_cast %676 : vector<64x1xf32> to vector<64x1xf32>
    %678 = vector.broadcast %677 : vector<64x1xf32> to vector<64x128xf32>
    %679 = vector.broadcast %cst_100 : f32 to vector<64x128xf32>
    %680 = arith.select %675, %678, %679 : vector<64x128xi1>, vector<64x128xf32>
    %681 = vector.extract_strided_slice %453 {offsets = [0, 6], sizes = [64, 1], strides = [1, 1]} : vector<64x8xi32> to vector<64x1xi32>
    %682 = vector.broadcast %681 : vector<64x1xi32> to vector<64x128xi32>
    %683 = arith.cmpi eq, %682, %110 : vector<64x128xi32>
    %684 = vector.extract_strided_slice %447 {offsets = [0, 6], sizes = [64, 1], strides = [1, 1]} : vector<64x8xf32> to vector<64x1xf32>
    %cst_101 = arith.constant 0.000000e+00 : f32
    %685 = vector.shape_cast %684 : vector<64x1xf32> to vector<64x1xf32>
    %686 = vector.broadcast %685 : vector<64x1xf32> to vector<64x128xf32>
    %687 = vector.broadcast %cst_101 : f32 to vector<64x128xf32>
    %688 = arith.select %683, %686, %687 : vector<64x128xi1>, vector<64x128xf32>
    %689 = arith.addf %680, %688 : vector<64x128xf32>
    %690 = vector.extract_strided_slice %454 {offsets = [0, 6], sizes = [64, 1], strides = [1, 1]} : vector<64x8xi32> to vector<64x1xi32>
    %691 = vector.broadcast %690 : vector<64x1xi32> to vector<64x128xi32>
    %692 = arith.cmpi eq, %691, %110 : vector<64x128xi32>
    %693 = vector.extract_strided_slice %449 {offsets = [0, 6], sizes = [64, 1], strides = [1, 1]} : vector<64x8xf32> to vector<64x1xf32>
    %cst_102 = arith.constant 0.000000e+00 : f32
    %694 = vector.shape_cast %693 : vector<64x1xf32> to vector<64x1xf32>
    %695 = vector.broadcast %694 : vector<64x1xf32> to vector<64x128xf32>
    %696 = vector.broadcast %cst_102 : f32 to vector<64x128xf32>
    %697 = arith.select %692, %695, %696 : vector<64x128xi1>, vector<64x128xf32>
    %698 = arith.addf %689, %697 : vector<64x128xf32>
    %699 = vector.extract_strided_slice %455 {offsets = [0, 6], sizes = [64, 1], strides = [1, 1]} : vector<64x8xi32> to vector<64x1xi32>
    %700 = vector.broadcast %699 : vector<64x1xi32> to vector<64x128xi32>
    %701 = arith.cmpi eq, %700, %110 : vector<64x128xi32>
    %702 = vector.extract_strided_slice %451 {offsets = [0, 6], sizes = [64, 1], strides = [1, 1]} : vector<64x8xf32> to vector<64x1xf32>
    %cst_103 = arith.constant 0.000000e+00 : f32
    %703 = vector.shape_cast %702 : vector<64x1xf32> to vector<64x1xf32>
    %704 = vector.broadcast %703 : vector<64x1xf32> to vector<64x128xf32>
    %705 = vector.broadcast %cst_103 : f32 to vector<64x128xf32>
    %706 = arith.select %701, %704, %705 : vector<64x128xi1>, vector<64x128xf32>
    %707 = arith.addf %698, %706 : vector<64x128xf32>
    %708 = arith.addf %672, %707 : vector<64x128xf32>
    %709 = vector.extract_strided_slice %452 {offsets = [0, 7], sizes = [64, 1], strides = [1, 1]} : vector<64x8xi32> to vector<64x1xi32>
    %710 = vector.broadcast %709 : vector<64x1xi32> to vector<64x128xi32>
    %711 = arith.cmpi eq, %710, %110 : vector<64x128xi32>
    %712 = vector.extract_strided_slice %445 {offsets = [0, 7], sizes = [64, 1], strides = [1, 1]} : vector<64x8xf32> to vector<64x1xf32>
    %cst_104 = arith.constant 0.000000e+00 : f32
    %713 = vector.shape_cast %712 : vector<64x1xf32> to vector<64x1xf32>
    %714 = vector.broadcast %713 : vector<64x1xf32> to vector<64x128xf32>
    %715 = vector.broadcast %cst_104 : f32 to vector<64x128xf32>
    %716 = arith.select %711, %714, %715 : vector<64x128xi1>, vector<64x128xf32>
    %717 = vector.extract_strided_slice %453 {offsets = [0, 7], sizes = [64, 1], strides = [1, 1]} : vector<64x8xi32> to vector<64x1xi32>
    %718 = vector.broadcast %717 : vector<64x1xi32> to vector<64x128xi32>
    %719 = arith.cmpi eq, %718, %110 : vector<64x128xi32>
    %720 = vector.extract_strided_slice %447 {offsets = [0, 7], sizes = [64, 1], strides = [1, 1]} : vector<64x8xf32> to vector<64x1xf32>
    %cst_105 = arith.constant 0.000000e+00 : f32
    %721 = vector.shape_cast %720 : vector<64x1xf32> to vector<64x1xf32>
    %722 = vector.broadcast %721 : vector<64x1xf32> to vector<64x128xf32>
    %723 = vector.broadcast %cst_105 : f32 to vector<64x128xf32>
    %724 = arith.select %719, %722, %723 : vector<64x128xi1>, vector<64x128xf32>
    %725 = arith.addf %716, %724 : vector<64x128xf32>
    %726 = vector.extract_strided_slice %454 {offsets = [0, 7], sizes = [64, 1], strides = [1, 1]} : vector<64x8xi32> to vector<64x1xi32>
    %727 = vector.broadcast %726 : vector<64x1xi32> to vector<64x128xi32>
    %728 = arith.cmpi eq, %727, %110 : vector<64x128xi32>
    %729 = vector.extract_strided_slice %449 {offsets = [0, 7], sizes = [64, 1], strides = [1, 1]} : vector<64x8xf32> to vector<64x1xf32>
    %cst_106 = arith.constant 0.000000e+00 : f32
    %730 = vector.shape_cast %729 : vector<64x1xf32> to vector<64x1xf32>
    %731 = vector.broadcast %730 : vector<64x1xf32> to vector<64x128xf32>
    %732 = vector.broadcast %cst_106 : f32 to vector<64x128xf32>
    %733 = arith.select %728, %731, %732 : vector<64x128xi1>, vector<64x128xf32>
    %734 = arith.addf %725, %733 : vector<64x128xf32>
    %735 = vector.extract_strided_slice %455 {offsets = [0, 7], sizes = [64, 1], strides = [1, 1]} : vector<64x8xi32> to vector<64x1xi32>
    %736 = vector.broadcast %735 : vector<64x1xi32> to vector<64x128xi32>
    %737 = arith.cmpi eq, %736, %110 : vector<64x128xi32>
    %738 = vector.extract_strided_slice %451 {offsets = [0, 7], sizes = [64, 1], strides = [1, 1]} : vector<64x8xf32> to vector<64x1xf32>
    %cst_107 = arith.constant 0.000000e+00 : f32
    %739 = vector.shape_cast %738 : vector<64x1xf32> to vector<64x1xf32>
    %740 = vector.broadcast %739 : vector<64x1xf32> to vector<64x128xf32>
    %741 = vector.broadcast %cst_107 : f32 to vector<64x128xf32>
    %742 = arith.select %737, %740, %741 : vector<64x128xi1>, vector<64x128xf32>
    %743 = arith.addf %734, %742 : vector<64x128xf32>
    %744 = arith.addf %708, %743 : vector<64x128xf32>
    %745 = arith.truncf %744 : vector<64x128xf32> to vector<64x128xbf16>
    %cst_108 = arith.constant dense<0.000000e+00> : vector<64x32xf32>
    %746 = tpu.matmul %745, %111, %cst_108 {dimension_numbers = #tpu.dot_dimension_numbers<[1], [0], [0], [1], [0, 0, 1, 1], [], []>} : vector<64x128xbf16>, vector<128x32xbf16>, vector<64x32xf32> -> vector<64x32xf32>
    %747 = arith.truncf %746 : vector<64x32xf32> to vector<64x32xbf16>
    %c1 = arith.constant 1 : index
    %c0_109 = arith.constant 0 : index
    %c0_110 = arith.constant 0 : index
    %748 = vector.load %arg11[%c1, %c0_109, %c0_110] : memref<2x32x32xf32, #tpu.memory_space<vmem>>, vector<1x32x32xf32>
    %749 = vector.shape_cast %748 : vector<1x32x32xf32> to vector<32x32xf32>
    %750 = arith.truncf %749 : vector<32x32xf32> to vector<32x32xbf16>
    %cst_111 = arith.constant dense<0.000000e+00> : vector<64x32xf32>
    %751 = tpu.matmul %747, %750, %cst_111 {dimension_numbers = #tpu.dot_dimension_numbers<[1], [0], [0], [1], [0, 0, 1, 1], [], []>} : vector<64x32xbf16>, vector<32x32xbf16>, vector<64x32xf32> -> vector<64x32xf32>
    %752 = arith.addf %432, %751 : vector<64x32xf32>
    %c0_112 = arith.constant 0 : index
    %c0_113 = arith.constant 0 : index
    %753 = vector.load %arg12[%c0_112, %c0_113] : memref<1x32xf32, #tpu.memory_space<vmem>>, vector<1x32xf32>
    %754 = vector.broadcast %753 : vector<1x32xf32> to vector<64x32xf32>
    %755 = arith.addf %752, %754 : vector<64x32xf32>
    %756 = arith.addf %4, %755 : vector<64x32xf32>
    %c0_114 = arith.constant 0 : index
    %c0_115 = arith.constant 0 : index
    %757 = vector.load %arg13[%c0_114, %c0_115] : memref<1x32xf32, #tpu.memory_space<vmem>>, vector<1x32xf32>
    %c0_116 = arith.constant 0 : index
    %c0_117 = arith.constant 0 : index
    %758 = vector.load %arg14[%c0_116, %c0_117] : memref<1x32xf32, #tpu.memory_space<vmem>>, vector<1x32xf32>
    %cst_118 = arith.constant dense<0.000000e+00> : vector<64xf32>
    %759 = vector.multi_reduction <add>, %756, %cst_118 [1] : vector<64x32xf32> to vector<64xf32>
    %760 = vector.shape_cast %759 : vector<64xf32> to vector<64x1xf32>
    %cst_119 = arith.constant 3.200000e+01 : f32
    %761 = vector.broadcast %cst_119 : f32 to vector<64x1xf32>
    %762 = arith.divf %760, %761 : vector<64x1xf32>
    %763 = vector.broadcast %762 : vector<64x1xf32> to vector<64x32xf32>
    %764 = arith.subf %756, %763 : vector<64x32xf32>
    %765 = arith.mulf %764, %764 : vector<64x32xf32>
    %cst_120 = arith.constant dense<0.000000e+00> : vector<64xf32>
    %766 = vector.multi_reduction <add>, %765, %cst_120 [1] : vector<64x32xf32> to vector<64xf32>
    %767 = vector.shape_cast %766 : vector<64xf32> to vector<64x1xf32>
    %cst_121 = arith.constant 3.200000e+01 : f32
    %768 = vector.broadcast %cst_121 : f32 to vector<64x1xf32>
    %769 = arith.divf %767, %768 : vector<64x1xf32>
    %770 = vector.broadcast %762 : vector<64x1xf32> to vector<64x32xf32>
    %771 = arith.subf %756, %770 : vector<64x32xf32>
    %cst_122 = arith.constant 9.99999974E-6 : f32
    %772 = vector.broadcast %cst_122 : f32 to vector<64x1xf32>
    %773 = arith.addf %769, %772 : vector<64x1xf32>
    %774 = math.rsqrt %773 : vector<64x1xf32>
    %775 = vector.broadcast %774 : vector<64x1xf32> to vector<64x32xf32>
    %776 = arith.mulf %771, %775 : vector<64x32xf32>
    %777 = vector.broadcast %757 : vector<1x32xf32> to vector<64x32xf32>
    %778 = arith.mulf %776, %777 : vector<64x32xf32>
    %779 = vector.broadcast %758 : vector<1x32xf32> to vector<64x32xf32>
    %780 = arith.addf %778, %779 : vector<64x32xf32>
    %781 = arith.truncf %780 : vector<64x32xf32> to vector<64x32xbf16>
    %c0_123 = arith.constant 0 : index
    %c0_124 = arith.constant 0 : index
    %782 = vector.load %arg15[%c0_123, %c0_124] : memref<32x64xf32, #tpu.memory_space<vmem>>, vector<32x64xf32>
    %783 = arith.truncf %782 : vector<32x64xf32> to vector<32x64xbf16>
    %cst_125 = arith.constant dense<0.000000e+00> : vector<64x64xf32>
    %784 = tpu.matmul %781, %783, %cst_125 {dimension_numbers = #tpu.dot_dimension_numbers<[1], [0], [0], [1], [0, 0, 1, 1], [], []>} : vector<64x32xbf16>, vector<32x64xbf16>, vector<64x64xf32> -> vector<64x64xf32>
    %c0_126 = arith.constant 0 : index
    %c0_127 = arith.constant 0 : index
    %785 = vector.load %arg16[%c0_126, %c0_127] : memref<1x64xf32, #tpu.memory_space<vmem>>, vector<1x64xf32>
    %786 = vector.broadcast %785 : vector<1x64xf32> to vector<64x64xf32>
    %787 = arith.addf %784, %786 : vector<64x64xf32>
    %cst_128 = arith.constant 0.000000e+00 : f32
    %788 = vector.broadcast %cst_128 : f32 to vector<64x64xf32>
    %789 = arith.maximumf %787, %788 : vector<64x64xf32>
    %790 = arith.truncf %789 : vector<64x64xf32> to vector<64x64xbf16>
    %c0_129 = arith.constant 0 : index
    %c0_130 = arith.constant 0 : index
    %791 = vector.load %arg17[%c0_129, %c0_130] : memref<64x32xf32, #tpu.memory_space<vmem>>, vector<64x32xf32>
    %792 = arith.truncf %791 : vector<64x32xf32> to vector<64x32xbf16>
    %cst_131 = arith.constant dense<0.000000e+00> : vector<64x32xf32>
    %793 = tpu.matmul %790, %792, %cst_131 {dimension_numbers = #tpu.dot_dimension_numbers<[1], [0], [0], [1], [0, 0, 1, 1], [], []>} : vector<64x64xbf16>, vector<64x32xbf16>, vector<64x32xf32> -> vector<64x32xf32>
    %c0_132 = arith.constant 0 : index
    %c0_133 = arith.constant 0 : index
    %794 = vector.load %arg18[%c0_132, %c0_133] : memref<1x32xf32, #tpu.memory_space<vmem>>, vector<1x32xf32>
    %795 = vector.broadcast %794 : vector<1x32xf32> to vector<64x32xf32>
    %796 = arith.addf %793, %795 : vector<64x32xf32>
    %797 = arith.addf %780, %796 : vector<64x32xf32>
    %c0_134 = arith.constant 0 : index
    %c0_135 = arith.constant 0 : index
    %798 = vector.load %arg19[%c0_134, %c0_135] : memref<1x32xf32, #tpu.memory_space<vmem>>, vector<1x32xf32>
    %c0_136 = arith.constant 0 : index
    %c0_137 = arith.constant 0 : index
    %799 = vector.load %arg20[%c0_136, %c0_137] : memref<1x32xf32, #tpu.memory_space<vmem>>, vector<1x32xf32>
    %cst_138 = arith.constant dense<0.000000e+00> : vector<64xf32>
    %800 = vector.multi_reduction <add>, %797, %cst_138 [1] : vector<64x32xf32> to vector<64xf32>
    %801 = vector.shape_cast %800 : vector<64xf32> to vector<64x1xf32>
    %cst_139 = arith.constant 3.200000e+01 : f32
    %802 = vector.broadcast %cst_139 : f32 to vector<64x1xf32>
    %803 = arith.divf %801, %802 : vector<64x1xf32>
    %804 = vector.broadcast %803 : vector<64x1xf32> to vector<64x32xf32>
    %805 = arith.subf %797, %804 : vector<64x32xf32>
    %806 = arith.mulf %805, %805 : vector<64x32xf32>
    %cst_140 = arith.constant dense<0.000000e+00> : vector<64xf32>
    %807 = vector.multi_reduction <add>, %806, %cst_140 [1] : vector<64x32xf32> to vector<64xf32>
    %808 = vector.shape_cast %807 : vector<64xf32> to vector<64x1xf32>
    %cst_141 = arith.constant 3.200000e+01 : f32
    %809 = vector.broadcast %cst_141 : f32 to vector<64x1xf32>
    %810 = arith.divf %808, %809 : vector<64x1xf32>
    %811 = vector.broadcast %803 : vector<64x1xf32> to vector<64x32xf32>
    %812 = arith.subf %797, %811 : vector<64x32xf32>
    %cst_142 = arith.constant 9.99999974E-6 : f32
    %813 = vector.broadcast %cst_142 : f32 to vector<64x1xf32>
    %814 = arith.addf %810, %813 : vector<64x1xf32>
    %815 = math.rsqrt %814 : vector<64x1xf32>
    %816 = vector.broadcast %815 : vector<64x1xf32> to vector<64x32xf32>
    %817 = arith.mulf %812, %816 : vector<64x32xf32>
    %818 = vector.broadcast %798 : vector<1x32xf32> to vector<64x32xf32>
    %819 = arith.mulf %817, %818 : vector<64x32xf32>
    %820 = vector.broadcast %799 : vector<1x32xf32> to vector<64x32xf32>
    %821 = arith.addf %819, %820 : vector<64x32xf32>
    %c0_143 = arith.constant 0 : index
    %c0_144 = arith.constant 0 : index
    %c0_145 = arith.constant 0 : index
    %822 = vector.load %arg21[%c0_143, %c0_144, %c0_145] : memref<1x64x32xf32, #tpu.memory_space<vmem>>, vector<1x64x32xf32>
    %823 = vector.shape_cast %822 : vector<1x64x32xf32> to vector<64x32xf32>
    %824 = vector.shape_cast %821 : vector<64x32xf32> to vector<1x64x32xf32>
    tpu.vector_store %arg21[%c0_143, %c0_144, %c0_145], %824 {strides = array<i32>} : memref<1x64x32xf32, #tpu.memory_space<vmem>>, vector<1x64x32xf32>,
    return
  }
  func.func @transform_0(%arg0: i32, %arg1: i32) -> (i32, i32, i32) {
    %c0_i32 = arith.constant 0 : i32
    %c0_i32_0 = arith.constant 0 : i32
    %c0_i32_1 = arith.constant 0 : i32
    return %arg0, %c0_i32, %c0_i32_0 : i32, i32, i32
  }
  func.func @transform_1(%arg0: i32, %arg1: i32) -> (i32, i32, i32) {
    %c0_i32 = arith.constant 0 : i32
    %c0_i32_0 = arith.constant 0 : i32
    return %arg0, %arg1, %c0_i32 : i32, i32, i32
  }
  func.func @transform_2(%arg0: i32, %arg1: i32) -> (i32, i32, i32) {
    %c0_i32 = arith.constant 0 : i32
    %c0_i32_0 = arith.constant 0 : i32
    return %arg0, %arg1, %c0_i32 : i32, i32, i32
  }
  func.func @transform_3(%arg0: i32, %arg1: i32) -> (i32, i32) {
    %c0_i32 = arith.constant 0 : i32
    %c0_i32_0 = arith.constant 0 : i32
    return %arg1, %c0_i32 : i32, i32
  }
  func.func @transform_4(%arg0: i32, %arg1: i32) -> (i32, i32) {
    %c0_i32 = arith.constant 0 : i32
    %c0_i32_0 = arith.constant 0 : i32
    %c0_i32_1 = arith.constant 0 : i32
    return %c0_i32, %c0_i32_0 : i32, i32
  }
  func.func @transform_5(%arg0: i32, %arg1: i32) -> (i32, i32) {
    %c0_i32 = arith.constant 0 : i32
    %c0_i32_0 = arith.constant 0 : i32
    %c0_i32_1 = arith.constant 0 : i32
    return %c0_i32, %c0_i32_0 : i32, i32
  }
  func.func @transform_6(%arg0: i32, %arg1: i32) -> (i32, i32) {
    %c0_i32 = arith.constant 0 : i32
    %c0_i32_0 = arith.constant 0 : i32
    %c0_i32_1 = arith.constant 0 : i32
    return %c0_i32, %c0_i32_0 : i32, i32
  }
  func.func @transform_7(%arg0: i32, %arg1: i32) -> (i32, i32) {
    %c0_i32 = arith.constant 0 : i32
    %c0_i32_0 = arith.constant 0 : i32
    %c0_i32_1 = arith.constant 0 : i32
    return %c0_i32, %c0_i32_0 : i32, i32
  }
  func.func @transform_8(%arg0: i32, %arg1: i32) -> (i32, i32) {
    %c0_i32 = arith.constant 0 : i32
    %c0_i32_0 = arith.constant 0 : i32
    %c0_i32_1 = arith.constant 0 : i32
    return %c0_i32, %c0_i32_0 : i32, i32
  }
  func.func @transform_9(%arg0: i32, %arg1: i32) -> (i32, i32, i32) {
    %c0_i32 = arith.constant 0 : i32
    %c0_i32_0 = arith.constant 0 : i32
    %c0_i32_1 = arith.constant 0 : i32
    %c0_i32_2 = arith.constant 0 : i32
    return %c0_i32, %c0_i32_0, %c0_i32_1 : i32, i32, i32
  }
  func.func @transform_10(%arg0: i32, %arg1: i32) -> (i32, i32) {
    %c0_i32 = arith.constant 0 : i32
    %c0_i32_0 = arith.constant 0 : i32
    %c0_i32_1 = arith.constant 0 : i32
    return %c0_i32, %c0_i32_0 : i32, i32
  }
  func.func @transform_11(%arg0: i32, %arg1: i32) -> (i32, i32) {
    %c0_i32 = arith.constant 0 : i32
    %c0_i32_0 = arith.constant 0 : i32
    %c0_i32_1 = arith.constant 0 : i32
    return %c0_i32, %c0_i32_0 : i32, i32
  }
  func.func @transform_12(%arg0: i32, %arg1: i32) -> (i32, i32) {
    %c0_i32 = arith.constant 0 : i32
    %c0_i32_0 = arith.constant 0 : i32
    %c0_i32_1 = arith.constant 0 : i32
    return %c0_i32, %c0_i32_0 : i32, i32
  }
  func.func @transform_13(%arg0: i32, %arg1: i32) -> (i32, i32) {
    %c0_i32 = arith.constant 0 : i32
    %c0_i32_0 = arith.constant 0 : i32
    %c0_i32_1 = arith.constant 0 : i32
    return %c0_i32, %c0_i32_0 : i32, i32
  }
  func.func @transform_14(%arg0: i32, %arg1: i32) -> (i32, i32) {
    %c0_i32 = arith.constant 0 : i32
    %c0_i32_0 = arith.constant 0 : i32
    %c0_i32_1 = arith.constant 0 : i32
    return %c0_i32, %c0_i32_0 : i32, i32
  }
  func.func @transform_15(%arg0: i32, %arg1: i32) -> (i32, i32) {
    %c0_i32 = arith.constant 0 : i32
    %c0_i32_0 = arith.constant 0 : i32
    %c0_i32_1 = arith.constant 0 : i32
    return %c0_i32, %c0_i32_0 : i32, i32
  }
  func.func @transform_16(%arg0: i32, %arg1: i32) -> (i32, i32) {
    %c0_i32 = arith.constant 0 : i32
    %c0_i32_0 = arith.constant 0 : i32
    %c0_i32_1 = arith.constant 0 : i32
    return %c0_i32, %c0_i32_0 : i32, i32
  }
  func.func @transform_17(%arg0: i32, %arg1: i32) -> (i32, i32) {
    %c0_i32 = arith.constant 0 : i32
    %c0_i32_0 = arith.constant 0 : i32
    %c0_i32_1 = arith.constant 0 : i32
    return %c0_i32, %c0_i32_0 : i32, i32
  }
  func.func @transform_18(%arg0: i32, %arg1: i32) -> (i32, i32) {
    %c0_i32 = arith.constant 0 : i32
    %c0_i32_0 = arith.constant 0 : i32
    %c0_i32_1 = arith.constant 0 : i32
    return %c0_i32, %c0_i32_0 : i32, i32
  }
  func.func @transform_19(%arg0: i32, %arg1: i32) -> (i32, i32, i32) {
    %c0_i32 = arith.constant 0 : i32
    %c0_i32_0 = arith.constant 0 : i32
    return %arg0, %arg1, %c0_i32 : i32, i32, i32
  }
}

</mosaic_0001>

<llo_original>
// kernel: encoder_forward.2
$region0: #{encoder_forward.2}
  #allocation0 [shape = 'u32[]', space=smem, size = 0x4, offset = 0x4, fixed_abs, tag = 'smem constant byte address 0x4 - core index']
  #allocation1 [shape = 'u32[144,128]{1,0:T(1,128)}', space=vmem, size = 0x12000, scoped, tag = 'internal scratch']
  #allocation2 [shape = 'bf16[128,32]{1,0:T(8,128)(2,1)}', space=vmem, size = 0x8000, scoped, tag = 'scratch operand']
  %s0 = inlined_call_operand.vmem [shape: f32[2,128,32], index: 0, kind: input, shape index: {}, may-alias: {0,1}]
  %s1 = inlined_call_operand.vmem [shape: f32[2,128,32], index: 1, kind: input, shape index: {}, may-alias: {0,1}]
  %s2 = inlined_call_operand.vmem [shape: f32[2,128,32], index: 2, kind: input, shape index: {}]
  %s3 = inlined_call_operand.vmem [shape: f32[128,32], index: 3, kind: input, shape index: {}]
  %s4 = inlined_call_operand.vmem [shape: s32[3,16], index: 4, kind: input, shape index: {}]
  %s5 = inlined_call_operand.vmem [shape: f32[32,32], index: 5, kind: input, shape index: {}]
  %s6 = inlined_call_operand.vmem [shape: f32[1,32], index: 6, kind: input, shape index: {}]
  %s7 = inlined_call_operand.vmem [shape: f32[32,48], index: 7, kind: input, shape index: {}]
  %s8 = inlined_call_operand.vmem [shape: f32[1,48], index: 8, kind: input, shape index: {}]
  %s9 = inlined_call_operand.vmem [shape: f32[2,32,32], index: 9, kind: input, shape index: {}]
  %s10 = inlined_call_operand.vmem [shape: f32[1,32], index: 10, kind: input, shape index: {}]
  %s11 = inlined_call_operand.vmem [shape: f32[1,32], index: 11, kind: input, shape index: {}]
  %s12 = inlined_call_operand.vmem [shape: f32[1,32], index: 12, kind: input, shape index: {}]
  %s13 = inlined_call_operand.vmem [shape: f32[32,64], index: 13, kind: input, shape index: {}]
  %s14 = inlined_call_operand.vmem [shape: f32[1,64], index: 14, kind: input, shape index: {}]
  %s15 = inlined_call_operand.vmem [shape: f32[64,32], index: 15, kind: input, shape index: {}]
  %s16 = inlined_call_operand.vmem [shape: f32[1,32], index: 16, kind: input, shape index: {}]
  %s17 = inlined_call_operand.vmem [shape: f32[1,32], index: 17, kind: input, shape index: {}]
  %s18 = inlined_call_operand.vmem [shape: f32[1,32], index: 18, kind: input, shape index: {}]
  %s19 = inlined_call_operand.vmem [shape: f32[2,128,32], index: 19, kind: output, shape index: {}]
  %s20 = sld [smem:[#allocation0]]
  $region113: #{encoder_forward.2} parent=0
    _
  %s22 = ssub.s32 1, %s20
  %s23 = scalar_select 0, %s22, %s20
  loop: start=0, step=1, limit=6
  $region2: #{encoder_forward.2} parent=0 // loop_pre_header
    _
  $region3: #{encoder_forward.2} parent=0 // loop_header
    %s25 = sphi 0, %s29
    %p26 = scmp.ge.s32.totalorder %s25, 6
    %s32 = sphi 0, %s44
    %s33 = sphi 0, %s40
    %s34 = sphi 0, %s32
    %s35 = sphi 0, %s33
    %s36 = sphi 0, %s34
    %s37 = sphi 0, %s35
    %s47 = sphi 0, %s49
    %s50 = sphi 0, %s47
    %s51 = sphi 0, %s50
    %s67 = sphi 0, %s51
    %s75 = sphi 0, %s77
    %s78 = sphi 0, %s75
    %s79 = sphi 0, %s78
    %s95 = sphi 0, %s79
    %s103 = sphi 0, %s105
    %s106 = sphi 0, %s103
    %s107 = sphi 0, %s106
    %s123 = sphi 0, %s107
    %s129 = sphi 0, %s131
    %s132 = sphi 0, %s129
    %s133 = sphi 0, %s132
    %s149 = sphi 0, %s133
    %s153 = sphi 0, %s153
    %s155 = sphi 0, %s153
    %s156 = sphi 0, %s155
    %s170 = sphi 0, %s156
    %s174 = sphi 0, %s174
    %s176 = sphi 0, %s174
    %s177 = sphi 0, %s176
    %s191 = sphi 0, %s177
    %s195 = sphi 0, %s195
    %s197 = sphi 0, %s195
    %s198 = sphi 0, %s197
    %s212 = sphi 0, %s198
    %s216 = sphi 0, %s216
    %s218 = sphi 0, %s216
    %s219 = sphi 0, %s218
    %s233 = sphi 0, %s219
    %s237 = sphi 0, %s237
    %s239 = sphi 0, %s237
    %s240 = sphi 0, %s239
    %s254 = sphi 0, %s240
    %s258 = sphi 0, %s258
    %s260 = sphi 0, %s258
    %s261 = sphi 0, %s260
    %s275 = sphi 0, %s261
    %s279 = sphi 0, %s279
    %s281 = sphi 0, %s279
    %s282 = sphi 0, %s281
    %s296 = sphi 0, %s282
    %s300 = sphi 0, %s300
    %s302 = sphi 0, %s300
    %s303 = sphi 0, %s302
    %s317 = sphi 0, %s303
    %s321 = sphi 0, %s321
    %s323 = sphi 0, %s321
    %s324 = sphi 0, %s323
    %s338 = sphi 0, %s324
    %s342 = sphi 0, %s342
    %s344 = sphi 0, %s342
    %s345 = sphi 0, %s344
    %s359 = sphi 0, %s345
    %s363 = sphi 0, %s363
    %s365 = sphi 0, %s363
    %s366 = sphi 0, %s365
    %s380 = sphi 0, %s366
    %s384 = sphi 0, %s384
    %s386 = sphi 0, %s384
    %s387 = sphi 0, %s386
    %s401 = sphi 0, %s387
    %s405 = sphi 0, %s405
    %s407 = sphi 0, %s405
    %s408 = sphi 0, %s407
    %s422 = sphi 0, %s408
    %s426 = sphi 0, %s426
    %s428 = sphi 0, %s426
    %s429 = sphi 0, %s428
    %s443 = sphi 0, %s429
    %s447 = sphi 0, %s447
    %s449 = sphi 0, %s447
    %s450 = sphi 0, %s449
    %s464 = sphi 0, %s450
    %s472 = sphi 0, %s474
    %s475 = sphi 0, %s472
    %s476 = sphi 0, %s475
    %s492 = sphi 0, %s476
  $region4: #{encoder_forward.2} parent=0 // loop_header_branch
    %28 = sbr.rel (%p26) target = $region8
  $region5: #{encoder_forward.2} parent=0 // loop_body
    %s30 = ssub.s32 %s25, 1
    %s31 = ssub.s32 %s25, 2
    %s38 = sadd.s32 1, %s33
    %p39 = scmp.ge.s32.totalorder %s38, 2
    %s40 = scalar_select %p39, 0, %s38
    %s41 = sadd.s32 1, %s32
    %s42 = scalar_select %p39, %s41, %s32
    %p43 = scmp.ge.s32.totalorder %s42, 2
    %s44 = scalar_select %p43, 0, %s42
    %s45 = ssub.s32 %s32, %s44
    %p46 = scmp.eq.s32.totalorder %s45, 0
    %s48 = sadd.s32 %s47, 1
    %s49 = scalar_select %p46, %s47, %s48
    %p52 = pneg %p46
    %p53 = scmp.eq.s32.totalorder %s25, 3
    %p54 = por %p52, %p53
    %p55 = scmp.ne.s32.totalorder %s47, %s50
    %p56 = scmp.eq.s32.totalorder %s25, 0
    %p57 = por %p55, %p56
    %p58 = scmp.ne.s32.totalorder %s47, %s50
    %p59 = scmp.eq.s32.totalorder %s30, 3
    %p60 = por %p58, %p59
    %p61 = scmp.ne.s32.totalorder %s50, %s51
    %p62 = scmp.eq.s32.totalorder %s30, 0
    %p63 = por %p61, %p62
    %p64 = scmp.ne.s32.totalorder %s50, %s51
    %p65 = scmp.eq.s32.totalorder %s31, 3
    %p66 = por %p64, %p65
    %p68 = scmp.ne.s32.totalorder %s51, %s67
    %p69 = scmp.eq.s32.totalorder %s31, 0
    %p70 = por %p68, %p69
    %s71 = ssub.s32 %s32, %s44
    %s72 = ssub.s32 %s33, %s40
    %s73 = sor.u32 %s71, %s72
    %p74 = scmp.eq.s32.totalorder %s73, 0
    %s76 = sadd.s32 %s75, 1
    %s77 = scalar_select %p74, %s75, %s76
    %p80 = pneg %p74
    %p81 = scmp.eq.s32.totalorder %s25, 3
    %p82 = por %p80, %p81
    %p83 = scmp.ne.s32.totalorder %s75, %s78
    %p84 = scmp.eq.s32.totalorder %s25, 0
    %p85 = por %p83, %p84
    %p86 = scmp.ne.s32.totalorder %s75, %s78
    %p87 = scmp.eq.s32.totalorder %s30, 3
    %p88 = por %p86, %p87
    %p89 = scmp.ne.s32.totalorder %s78, %s79
    %p90 = scmp.eq.s32.totalorder %s30, 0
    %p91 = por %p89, %p90
    %p92 = scmp.ne.s32.totalorder %s78, %s79
    %p93 = scmp.eq.s32.totalorder %s31, 3
    %p94 = por %p92, %p93
    %p96 = scmp.ne.s32.totalorder %s79, %s95
    %p97 = scmp.eq.s32.totalorder %s31, 0
    %p98 = por %p96, %p97
    %s99 = ssub.s32 %s32, %s44
    %s100 = ssub.s32 %s33, %s40
    %s101 = sor.u32 %s99, %s100
    %p102 = scmp.eq.s32.totalorder %s101, 0
    %s104 = sadd.s32 %s103, 1
    %s105 = scalar_select %p102, %s103, %s104
    %p108 = pneg %p102
    %p109 = scmp.eq.s32.totalorder %s25, 3
    %p110 = por %p108, %p109
    %p111 = scmp.ne.s32.totalorder %s103, %s106
    %p112 = scmp.eq.s32.totalorder %s25, 0
    %p113 = por %p111, %p112
    %p114 = scmp.ne.s32.totalorder %s103, %s106
    %p115 = scmp.eq.s32.totalorder %s30, 3
    %p116 = por %p114, %p115
    %p117 = scmp.ne.s32.totalorder %s106, %s107
    %p118 = scmp.eq.s32.totalorder %s30, 0
    %p119 = por %p117, %p118
    %p120 = scmp.ne.s32.totalorder %s106, %s107
    %p121 = scmp.eq.s32.totalorder %s31, 3
    %p122 = por %p120, %p121
    %p124 = scmp.ne.s32.totalorder %s107, %s123
    %p125 = scmp.eq.s32.totalorder %s31, 0
    %p126 = por %p124, %p125
    %s127 = ssub.s32 %s33, %s40
    %p128 = scmp.eq.s32.totalorder %s127, 0
    %s130 = sadd.s32 %s129, 1
    %s131 = scalar_select %p128, %s129, %s130
    %p134 = pneg %p128
    %p135 = scmp.eq.s32.totalorder %s25, 3
    %p136 = por %p134, %p135
    %p137 = scmp.ne.s32.totalorder %s129, %s132
    %p138 = scmp.eq.s32.totalorder %s25, 0
    %p139 = por %p137, %p138
    %p140 = scmp.ne.s32.totalorder %s129, %s132
    %p141 = scmp.eq.s32.totalorder %s30, 3
    %p142 = por %p140, %p141
    %p143 = scmp.ne.s32.totalorder %s132, %s133
    %p144 = scmp.eq.s32.totalorder %s30, 0
    %p145 = por %p143, %p144
    %p146 = scmp.ne.s32.totalorder %s132, %s133
    %p147 = scmp.eq.s32.totalorder %s31, 3
    %p148 = por %p146, %p147
    %p150 = scmp.ne.s32.totalorder %s133, %s149
    %p151 = scmp.eq.s32.totalorder %s31, 0
    %p152 = por %p150, %p151
    %s154 = sadd.s32 %s153, 1
    %p157 = scmp.eq.s32.totalorder %s25, 3
    %p158 = scmp.ne.s32.totalorder %s153, %s155
    %p159 = scmp.eq.s32.totalorder %s25, 0
    %p160 = por %p158, %p159
    %p161 = scmp.ne.s32.totalorder %s153, %s155
    %p162 = scmp.eq.s32.totalorder %s30, 3
    %p163 = por %p161, %p162
    %p164 = scmp.ne.s32.totalorder %s155, %s156
    %p165 = scmp.eq.s32.totalorder %s30, 0
    %p166 = por %p164, %p165
    %p167 = scmp.ne.s32.totalorder %s155, %s156
    %p168 = scmp.eq.s32.totalorder %s31, 3
    %p169 = por %p167, %p168
    %p171 = scmp.ne.s32.totalorder %s156, %s170
    %p172 = scmp.eq.s32.totalorder %s31, 0
    %p173 = por %p171, %p172
    %s175 = sadd.s32 %s174, 1
    %p178 = scmp.eq.s32.totalorder %s25, 3
    %p179 = scmp.ne.s32.totalorder %s174, %s176
    %p180 = scmp.eq.s32.totalorder %s25, 0
    %p181 = por %p179, %p180
    %p182 = scmp.ne.s32.totalorder %s174, %s176
    %p183 = scmp.eq.s32.totalorder %s30, 3
    %p184 = por %p182, %p183
    %p185 = scmp.ne.s32.totalorder %s176, %s177
    %p186 = scmp.eq.s32.totalorder %s30, 0
    %p187 = por %p185, %p186
    %p188 = scmp.ne.s32.totalorder %s176, %s177
    %p189 = scmp.eq.s32.totalorder %s31, 3
    %p190 = por %p188, %p189
    %p192 = scmp.ne.s32.totalorder %s177, %s191
    %p193 = scmp.eq.s32.totalorder %s31, 0
    %p194 = por %p192, %p193
    %s196 = sadd.s32 %s195, 1
    %p199 = scmp.eq.s32.totalorder %s25, 3
    %p200 = scmp.ne.s32.totalorder %s195, %s197
    %p201 = scmp.eq.s32.totalorder %s25, 0
    %p202 = por %p200, %p201
    %p203 = scmp.ne.s32.totalorder %s195, %s197
    %p204 = scmp.eq.s32.totalorder %s30, 3
    %p205 = por %p203, %p204
    %p206 = scmp.ne.s32.totalorder %s197, %s198
    %p207 = scmp.eq.s32.totalorder %s30, 0
    %p208 = por %p206, %p207
    %p209 = scmp.ne.s32.totalorder %s197, %s198
    %p210 = scmp.eq.s32.totalorder %s31, 3
    %p211 = por %p209, %p210
    %p213 = scmp.ne.s32.totalorder %s198, %s212
    %p214 = scmp.eq.s32.totalorder %s31, 0
    %p215 = por %p213, %p214
    %s217 = sadd.s32 %s216, 1
    %p220 = scmp.eq.s32.totalorder %s25, 3
    %p221 = scmp.ne.s32.totalorder %s216, %s218
    %p222 = scmp.eq.s32.totalorder %s25, 0
    %p223 = por %p221, %p222
    %p224 = scmp.ne.s32.totalorder %s216, %s218
    %p225 = scmp.eq.s32.totalorder %s30, 3
    %p226 = por %p224, %p225
    %p227 = scmp.ne.s32.totalorder %s218, %s219
    %p228 = scmp.eq.s32.totalorder %s30, 0
    %p229 = por %p227, %p228
    %p230 = scmp.ne.s32.totalorder %s218, %s219
    %p231 = scmp.eq.s32.totalorder %s31, 3
    %p232 = por %p230, %p231
    %p234 = scmp.ne.s32.totalorder %s219, %s233
    %p235 = scmp.eq.s32.totalorder %s31, 0
    %p236 = por %p234, %p235
    %s238 = sadd.s32 %s237, 1
    %p241 = scmp.eq.s32.totalorder %s25, 3
    %p242 = scmp.ne.s32.totalorder %s237, %s239
    %p243 = scmp.eq.s32.totalorder %s25, 0
    %p244 = por %p242, %p243
    %p245 = scmp.ne.s32.totalorder %s237, %s239
    %p246 = scmp.eq.s32.totalorder %s30, 3
    %p247 = por %p245, %p246
    %p248 = scmp.ne.s32.totalorder %s239, %s240
    %p249 = scmp.eq.s32.totalorder %s30, 0
    %p250 = por %p248, %p249
    %p251 = scmp.ne.s32.totalorder %s239, %s240
    %p252 = scmp.eq.s32.totalorder %s31, 3
    %p253 = por %p251, %p252
    %p255 = scmp.ne.s32.totalorder %s240, %s254
    %p256 = scmp.eq.s32.totalorder %s31, 0
    %p257 = por %p255, %p256
    %s259 = sadd.s32 %s258, 1
    %p262 = scmp.eq.s32.totalorder %s25, 3
    %p263 = scmp.ne.s32.totalorder %s258, %s260
    %p264 = scmp.eq.s32.totalorder %s25, 0
    %p265 = por %p263, %p264
    %p266 = scmp.ne.s32.totalorder %s258, %s260
    %p267 = scmp.eq.s32.totalorder %s30, 3
    %p268 = por %p266, %p267
    %p269 = scmp.ne.s32.totalorder %s260, %s261
    %p270 = scmp.eq.s32.totalorder %s30, 0
    %p271 = por %p269, %p270
    %p272 = scmp.ne.s32.totalorder %s260, %s261
    %p273 = scmp.eq.s32.totalorder %s31, 3
    %p274 = por %p272, %p273
    %p276 = scmp.ne.s32.totalorder %s261, %s275
    %p277 = scmp.eq.s32.totalorder %s31, 0
    %p278 = por %p276, %p277
    %s280 = sadd.s32 %s279, 1
    %p283 = scmp.eq.s32.totalorder %s25, 3
    %p284 = scmp.ne.s32.totalorder %s279, %s281
    %p285 = scmp.eq.s32.totalorder %s25, 0
    %p286 = por %p284, %p285
    %p287 = scmp.ne.s32.totalorder %s279, %s281
    %p288 = scmp.eq.s32.totalorder %s30, 3
    %p289 = por %p287, %p288
    %p290 = scmp.ne.s32.totalorder %s281, %s282
    %p291 = scmp.eq.s32.totalorder %s30, 0
    %p292 = por %p290, %p291
    %p293 = scmp.ne.s32.totalorder %s281, %s282
    %p294 = scmp.eq.s32.totalorder %s31, 3
    %p295 = por %p293, %p294
    %p297 = scmp.ne.s32.totalorder %s282, %s296
    %p298 = scmp.eq.s32.totalorder %s31, 0
    %p299 = por %p297, %p298
    %s301 = sadd.s32 %s300, 1
    %p304 = scmp.eq.s32.totalorder %s25, 3
    %p305 = scmp.ne.s32.totalorder %s300, %s302
    %p306 = scmp.eq.s32.totalorder %s25, 0
    %p307 = por %p305, %p306
    %p308 = scmp.ne.s32.totalorder %s300, %s302
    %p309 = scmp.eq.s32.totalorder %s30, 3
    %p310 = por %p308, %p309
    %p311 = scmp.ne.s32.totalorder %s302, %s303
    %p312 = scmp.eq.s32.totalorder %s30, 0
    %p313 = por %p311, %p312
    %p314 = scmp.ne.s32.totalorder %s302, %s303
    %p315 = scmp.eq.s32.totalorder %s31, 3
    %p316 = por %p314, %p315
    %p318 = scmp.ne.s32.totalorder %s303, %s317
    %p319 = scmp.eq.s32.totalorder %s31, 0
    %p320 = por %p318, %p319
    %s322 = sadd.s32 %s321, 1
    %p325 = scmp.eq.s32.totalorder %s25, 3
    %p326 = scmp.ne.s32.totalorder %s321, %s323
    %p327 = scmp.eq.s32.totalorder %s25, 0
    %p328 = por %p326, %p327
    %p329 = scmp.ne.s32.totalorder %s321, %s323
    %p330 = scmp.eq.s32.totalorder %s30, 3
    %p331 = por %p329, %p330
    %p332 = scmp.ne.s32.totalorder %s323, %s324
    %p333 = scmp.eq.s32.totalorder %s30, 0
    %p334 = por %p332, %p333
    %p335 = scmp.ne.s32.totalorder %s323, %s324
    %p336 = scmp.eq.s32.totalorder %s31, 3
    %p337 = por %p335, %p336
    %p339 = scmp.ne.s32.totalorder %s324, %s338
    %p340 = scmp.eq.s32.totalorder %s31, 0
    %p341 = por %p339, %p340
    %s343 = sadd.s32 %s342, 1
    %p346 = scmp.eq.s32.totalorder %s25, 3
    %p347 = scmp.ne.s32.totalorder %s342, %s344
    %p348 = scmp.eq.s32.totalorder %s25, 0
    %p349 = por %p347, %p348
    %p350 = scmp.ne.s32.totalorder %s342, %s344
    %p351 = scmp.eq.s32.totalorder %s30, 3
    %p352 = por %p350, %p351
    %p353 = scmp.ne.s32.totalorder %s344, %s345
    %p354 = scmp.eq.s32.totalorder %s30, 0
    %p355 = por %p353, %p354
    %p356 = scmp.ne.s32.totalorder %s344, %s345
    %p357 = scmp.eq.s32.totalorder %s31, 3
    %p358 = por %p356, %p357
    %p360 = scmp.ne.s32.totalorder %s345, %s359
    %p361 = scmp.eq.s32.totalorder %s31, 0
    %p362 = por %p360, %p361
    %s364 = sadd.s32 %s363, 1
    %p367 = scmp.eq.s32.totalorder %s25, 3
    %p368 = scmp.ne.s32.totalorder %s363, %s365
    %p369 = scmp.eq.s32.totalorder %s25, 0
    %p370 = por %p368, %p369
    %p371 = scmp.ne.s32.totalorder %s363, %s365
    %p372 = scmp.eq.s32.totalorder %s30, 3
    %p373 = por %p371, %p372
    %p374 = scmp.ne.s32.totalorder %s365, %s366
    %p375 = scmp.eq.s32.totalorder %s30, 0
    %p376 = por %p374, %p375
    %p377 = scmp.ne.s32.totalorder %s365, %s366
    %p378 = scmp.eq.s32.totalorder %s31, 3
    %p379 = por %p377, %p378
    %p381 = scmp.ne.s32.totalorder %s366, %s380
    %p382 = scmp.eq.s32.totalorder %s31, 0
    %p383 = por %p381, %p382
    %s385 = sadd.s32 %s384, 1
    %p388 = scmp.eq.s32.totalorder %s25, 3
    %p389 = scmp.ne.s32.totalorder %s384, %s386
    %p390 = scmp.eq.s32.totalorder %s25, 0
    %p391 = por %p389, %p390
    %p392 = scmp.ne.s32.totalorder %s384, %s386
    %p393 = scmp.eq.s32.totalorder %s30, 3
    %p394 = por %p392, %p393
    %p395 = scmp.ne.s32.totalorder %s386, %s387
    %p396 = scmp.eq.s32.totalorder %s30, 0
    %p397 = por %p395, %p396
    %p398 = scmp.ne.s32.totalorder %s386, %s387
    %p399 = scmp.eq.s32.totalorder %s31, 3
    %p400 = por %p398, %p399
    %p402 = scmp.ne.s32.totalorder %s387, %s401
    %p403 = scmp.eq.s32.totalorder %s31, 0
    %p404 = por %p402, %p403
    %s406 = sadd.s32 %s405, 1
    %p409 = scmp.eq.s32.totalorder %s25, 3
    %p410 = scmp.ne.s32.totalorder %s405, %s407
    %p411 = scmp.eq.s32.totalorder %s25, 0
    %p412 = por %p410, %p411
    %p413 = scmp.ne.s32.totalorder %s405, %s407
    %p414 = scmp.eq.s32.totalorder %s30, 3
    %p415 = por %p413, %p414
    %p416 = scmp.ne.s32.totalorder %s407, %s408
    %p417 = scmp.eq.s32.totalorder %s30, 0
    %p418 = por %p416, %p417
    %p419 = scmp.ne.s32.totalorder %s407, %s408
    %p420 = scmp.eq.s32.totalorder %s31, 3
    %p421 = por %p419, %p420
    %p423 = scmp.ne.s32.totalorder %s408, %s422
    %p424 = scmp.eq.s32.totalorder %s31, 0
    %p425 = por %p423, %p424
    %s427 = sadd.s32 %s426, 1
    %p430 = scmp.eq.s32.totalorder %s25, 3
    %p431 = scmp.ne.s32.totalorder %s426, %s428
    %p432 = scmp.eq.s32.totalorder %s25, 0
    %p433 = por %p431, %p432
    %p434 = scmp.ne.s32.totalorder %s426, %s428
    %p435 = scmp.eq.s32.totalorder %s30, 3
    %p436 = por %p434, %p435
    %p437 = scmp.ne.s32.totalorder %s428, %s429
    %p438 = scmp.eq.s32.totalorder %s30, 0
    %p439 = por %p437, %p438
    %p440 = scmp.ne.s32.totalorder %s428, %s429
    %p441 = scmp.eq.s32.totalorder %s31, 3
    %p442 = por %p440, %p441
    %p444 = scmp.ne.s32.totalorder %s429, %s443
    %p445 = scmp.eq.s32.totalorder %s31, 0
    %p446 = por %p444, %p445
    %s448 = sadd.s32 %s447, 1
    %p451 = scmp.eq.s32.totalorder %s25, 3
    %p452 = scmp.ne.s32.totalorder %s447, %s449
    %p453 = scmp.eq.s32.totalorder %s25, 0
    %p454 = por %p452, %p453
    %p455 = scmp.ne.s32.totalorder %s447, %s449
    %p456 = scmp.eq.s32.totalorder %s30, 3
    %p457 = por %p455, %p456
    %p458 = scmp.ne.s32.totalorder %s449, %s450
    %p459 = scmp.eq.s32.totalorder %s30, 0
    %p460 = por %p458, %p459
    %p461 = scmp.ne.s32.totalorder %s449, %s450
    %p462 = scmp.eq.s32.totalorder %s31, 3
    %p463 = por %p461, %p462
    %p465 = scmp.ne.s32.totalorder %s450, %s464
    %p466 = scmp.eq.s32.totalorder %s31, 0
    %p467 = por %p465, %p466
    %s468 = ssub.s32 %s32, %s44
    %s469 = ssub.s32 %s33, %s40
    %s470 = sor.u32 %s468, %s469
    %p471 = scmp.eq.s32.totalorder %s470, 0
    %s473 = sadd.s32 %s472, 1
    %s474 = scalar_select %p471, %s472, %s473
    %p477 = pneg %p471
    %p478 = scmp.eq.s32.totalorder %s25, 3
    %p479 = por %p477, %p478
    %p480 = scmp.ne.s32.totalorder %s472, %s475
    %p481 = scmp.eq.s32.totalorder %s25, 0
    %p482 = por %p480, %p481
    %p483 = scmp.ne.s32.totalorder %s472, %s475
    %p484 = scmp.eq.s32.totalorder %s30, 3
    %p485 = por %p483, %p484
    %p486 = scmp.ne.s32.totalorder %s475, %s476
    %p487 = scmp.eq.s32.totalorder %s30, 0
    %p488 = por %p486, %p487
    %p489 = scmp.ne.s32.totalorder %s475, %s476
    %p490 = scmp.eq.s32.totalorder %s31, 3
    %p491 = por %p489, %p490
    %p493 = scmp.ne.s32.totalorder %s476, %s492
    %p494 = scmp.eq.s32.totalorder %s31, 0
    %p495 = por %p493, %p494
    %p496 = scmp.le.s32.totalorder 1, %s25
    %p497 = scmp.lt.s32.totalorder %s25, 5
    %p498 = pnand %p496, %p497
    %p499 = pneg %p498
    // Predicated region
    $region9: #{encoder_forward.2} parent=5 // pred_check
      _
    $region10: #{encoder_forward.2} parent=5 // pred_check_branch
      %501 = sbr.rel (%p498) target = $region12
    $region11: #{encoder_forward.2} parent=5 // pred_region
      %s502 = ssub.s32 %s25, 1
      // Predicated region
      $region13: #{encoder_forward.2} parent=11 // pred_check
        %p503 = pneg %p166
      $region14: #{encoder_forward.2} parent=11 // pred_check_branch
        %505 = sbr.rel (%p503) target = $region16
      $region15: #{encoder_forward.2} parent=11 // pred_region
        _
      $region16: #{encoder_forward.2} parent=11 // pred_fallthru
        _
      // Predicated region
      $region17: #{encoder_forward.2} parent=11 // pred_check
        %p506 = pneg %p187
      $region18: #{encoder_forward.2} parent=11 // pred_check_branch
        %508 = sbr.rel (%p506) target = $region20
      $region19: #{encoder_forward.2} parent=11 // pred_region
        _
      $region20: #{encoder_forward.2} parent=11 // pred_fallthru
        _
      // Predicated region
      $region21: #{encoder_forward.2} parent=11 // pred_check
        %p509 = pneg %p208
      $region22: #{encoder_forward.2} parent=11 // pred_check_branch
        %511 = sbr.rel (%p509) target = $region24
      $region23: #{encoder_forward.2} parent=11 // pred_region
        _
      $region24: #{encoder_forward.2} parent=11 // pred_fallthru
        _
      // Predicated region
      $region25: #{encoder_forward.2} parent=11 // pred_check
        %p512 = pneg %p229
      $region26: #{encoder_forward.2} parent=11 // pred_check_branch
        %514 = sbr.rel (%p512) target = $region28
      $region27: #{encoder_forward.2} parent=11 // pred_region
        _
      $region28: #{encoder_forward.2} parent=11 // pred_fallthru
        _
      // Predicated region
      $region29: #{encoder_forward.2} parent=11 // pred_check
        %p515 = pneg %p250
      $region30: #{encoder_forward.2} parent=11 // pred_check_branch
        %517 = sbr.rel (%p515) target = $region32
      $region31: #{encoder_forward.2} parent=11 // pred_region
        _
      $region32: #{encoder_forward.2} parent=11 // pred_fallthru
        _
      // Predicated region
      $region33: #{encoder_forward.2} parent=11 // pred_check
        %p518 = pneg %p271
      $region34: #{encoder_forward.2} parent=11 // pred_check_branch
        %520 = sbr.rel (%p518) target = $region36
      $region35: #{encoder_forward.2} parent=11 // pred_region
        _
      $region36: #{encoder_forward.2} parent=11 // pred_fallthru
        _
      // Predicated region
      $region37: #{encoder_forward.2} parent=11 // pred_check
        %p521 = pneg %p292
      $region38: #{encoder_forward.2} parent=11 // pred_check_branch
        %523 = sbr.rel (%p521) target = $region40
      $region39: #{encoder_forward.2} parent=11 // pred_region
        _
      $region40: #{encoder_forward.2} parent=11 // pred_fallthru
        _
      // Predicated region
      $region41: #{encoder_forward.2} parent=11 // pred_check
        %p524 = pneg %p313
      $region42: #{encoder_forward.2} parent=11 // pred_check_branch
        %526 = sbr.rel (%p524) target = $region44
      $region43: #{encoder_forward.2} parent=11 // pred_region
        _
      $region44: #{encoder_forward.2} parent=11 // pred_fallthru
        _
      // Predicated region
      $region45: #{encoder_forward.2} parent=11 // pred_check
        %p527 = pneg %p334
      $region46: #{encoder_forward.2} parent=11 // pred_check_branch
        %529 = sbr.rel (%p527) target = $region48
      $region47: #{encoder_forward.2} parent=11 // pred_region
        _
      $region48: #{encoder_forward.2} parent=11 // pred_fallthru
        _
      // Predicated region
      $region49: #{encoder_forward.2} parent=11 // pred_check
        %p530 = pneg %p355
      $region50: #{encoder_forward.2} parent=11 // pred_check_branch
        %532 = sbr.rel (%p530) target = $region52
      $region51: #{encoder_forward.2} parent=11 // pred_region
        _
      $region52: #{encoder_forward.2} parent=11 // pred_fallthru
        _
      // Predicated region
      $region53: #{encoder_forward.2} parent=11 // pred_check
        %p533 = pneg %p376
      $region54: #{encoder_forward.2} parent=11 // pred_check_branch
        %535 = sbr.rel (%p533) target = $region56
      $region55: #{encoder_forward.2} parent=11 // pred_region
        _
      $region56: #{encoder_forward.2} parent=11 // pred_fallthru
        _
      // Predicated region
      $region57: #{encoder_forward.2} parent=11 // pred_check
        %p536 = pneg %p397
      $region58: #{encoder_forward.2} parent=11 // pred_check_branch
        %538 = sbr.rel (%p536) target = $region60
      $region59: #{encoder_forward.2} parent=11 // pred_region
        _
      $region60: #{encoder_forward.2} parent=11 // pred_fallthru
        _
      // Predicated region
      $region61: #{encoder_forward.2} parent=11 // pred_check
        %p539 = pneg %p418
      $region62: #{encoder_forward.2} parent=11 // pred_check_branch
        %541 = sbr.rel (%p539) target = $region64
      $region63: #{encoder_forward.2} parent=11 // pred_region
        _
      $region64: #{encoder_forward.2} parent=11 // pred_fallthru
        _
      // Predicated region
      $region65: #{encoder_forward.2} parent=11 // pred_check
        %p542 = pneg %p439
      $region66: #{encoder_forward.2} parent=11 // pred_check_branch
        %544 = sbr.rel (%p542) target = $region68
      $region67: #{encoder_forward.2} parent=11 // pred_region
        _
      $region68: #{encoder_forward.2} parent=11 // pred_fallthru
        _
      // Predicated region
      $region69: #{encoder_forward.2} parent=11 // pred_check
        %p545 = pneg %p460
      $region70: #{encoder_forward.2} parent=11 // pred_check_branch
        %547 = sbr.rel (%p545) target = $region72
      $region71: #{encoder_forward.2} parent=11 // pred_region
        _
      $region72: #{encoder_forward.2} parent=11 // pred_fallthru
        _
    $region12: #{encoder_forward.2} parent=5 // pred_fallthru
      _
    %p548 = scmp.lt.s32.totalorder %s25, 4
    // Predicated region
    $region73: #{encoder_forward.2} parent=5 // pred_check
      %p549 = pneg %p548
    $region74: #{encoder_forward.2} parent=5 // pred_check_branch
      %551 = sbr.rel (%p549) target = $region76
    $region75: #{encoder_forward.2} parent=5 // pred_region
      // Predicated region
      $region77: #{encoder_forward.2} parent=75 // pred_check
        %p552 = pneg %p57
      $region78: #{encoder_forward.2} parent=75 // pred_check_branch
        %554 = sbr.rel (%p552) target = $region80
      $region79: #{encoder_forward.2} parent=75 // pred_region
        %p555 = scmp.lt.s32.totalorder %s32, 1
        %s556 = scalar_select %p555, %s32, 1
        %s557 = smul.addr %s556, 16
        %s558 = smul.addr %s557, 8
        %s559 = scalar_lea.vmem %s0, %s558
      $region80: #{encoder_forward.2} parent=75 // pred_fallthru
        _
      // Predicated region
      $region81: #{encoder_forward.2} parent=75 // pred_check
        %p560 = pneg %p85
      $region82: #{encoder_forward.2} parent=75 // pred_check_branch
        %562 = sbr.rel (%p560) target = $region84
      $region83: #{encoder_forward.2} parent=75 // pred_region
        %s563 = smul.u32 8, %s33
        %p564 = scmp.lt.s32.totalorder %s32, 1
        %s565 = scalar_select %p564, %s32, 1
        %p566 = scmp.lt.s32.totalorder %s563, 15
        %s567 = scalar_select %p566, %s563, 15
        %s568 = smul.addr %s565, 16
        %s569 = sadd.s32 %s567, %s568
        %s570 = smul.addr %s569, 8
        %s571 = scalar_lea.vmem %s1, %s570
        %s572 = smul.u32 8, %s33
      $region84: #{encoder_forward.2} parent=75 // pred_fallthru
        _
      // Predicated region
      $region85: #{encoder_forward.2} parent=75 // pred_check
        %p573 = pneg %p113
      $region86: #{encoder_forward.2} parent=75 // pred_check_branch
        %575 = sbr.rel (%p573) target = $region88
      $region87: #{encoder_forward.2} parent=75 // pred_region
        %s576 = smul.u32 8, %s33
        %p577 = scmp.lt.s32.totalorder %s32, 1
        %s578 = scalar_select %p577, %s32, 1
        %p579 = scmp.lt.s32.totalorder %s576, 15
        %s580 = scalar_select %p579, %s576, 15
        %s581 = smul.addr %s578, 16
        %s582 = sadd.s32 %s580, %s581
        %s583 = smul.addr %s582, 8
        %s584 = scalar_lea.vmem %s2, %s583
        %s585 = smul.u32 8, %s33
      $region88: #{encoder_forward.2} parent=75 // pred_fallthru
        _
      // Predicated region
      $region89: #{encoder_forward.2} parent=75 // pred_check
        %p586 = pneg %p139
      $region90: #{encoder_forward.2} parent=75 // pred_check_branch
        %588 = sbr.rel (%p586) target = $region92
      $region91: #{encoder_forward.2} parent=75 // pred_region
        %s589 = smul.u32 8, %s33
        %p590 = scmp.lt.s32.totalorder %s589, 15
        %s591 = scalar_select %p590, %s589, 15
        %s592 = smul.addr %s591, 8
        %s593 = scalar_lea.vmem %s3, %s592
        %s594 = smul.u32 8, %s33
      $region92: #{encoder_forward.2} parent=75 // pred_fallthru
        _
    $region76: #{encoder_forward.2} parent=5 // pred_fallthru
      _
    %p595 = scmp.le.s32.totalorder 1, %s25
    %p596 = scmp.lt.s32.totalorder %s25, 5
    %p597 = pnand %p595, %p596
    %p598 = pneg %p597
    // Predicated region
    $region93: #{encoder_forward.2} parent=5 // pred_check
      _
    $region94: #{encoder_forward.2} parent=5 // pred_check_branch
      %600 = sbr.rel (%p597) target = $region96
    $region95: #{encoder_forward.2} parent=5 // pred_region
      %s601 = ssub.s32 %s25, 1
      %p602 = scmp.lt.s32.totalorder %s34, 1
      %s603 = scalar_select %p602, %s34, 1
      %s604 = smul.addr %s603, 16
      %s605 = smul.addr %s604, 8
      %s606 = scalar_lea.vmem %s0, %s605
      %p607 = pneg %p63
      %p608 = pneg %p60
      %s609 = smul.u32 8, %s35
      %p610 = scmp.lt.s32.totalorder %s34, 1
      %s611 = scalar_select %p610, %s34, 1
      %p612 = scmp.lt.s32.totalorder %s609, 15
      %s613 = scalar_select %p612, %s609, 15
      %s614 = smul.addr %s611, 16
      %s615 = sadd.s32 %s613, %s614
      %s616 = smul.addr %s615, 8
      %s617 = scalar_lea.vmem %s1, %s616
      %p618 = pneg %p91
      %p619 = pneg %p88
      %s620 = smul.u32 8, %s35
      %p621 = scmp.lt.s32.totalorder %s34, 1
      %s622 = scalar_select %p621, %s34, 1
      %p623 = scmp.lt.s32.totalorder %s620, 15
      %s624 = scalar_select %p623, %s620, 15
      %s625 = smul.addr %s622, 16
      %s626 = sadd.s32 %s624, %s625
      %s627 = smul.addr %s626, 8
      %s628 = scalar_lea.vmem %s2, %s627
      %p629 = pneg %p119
      %p630 = pneg %p116
      %s631 = smul.u32 8, %s35
      %p632 = scmp.lt.s32.totalorder %s631, 15
      %s633 = scalar_select %p632, %s631, 15
      %s634 = smul.addr %s633, 8
      %s635 = scalar_lea.vmem %s3, %s634
      %p636 = pneg %p145
      %p637 = pneg %p142
      %p638 = pneg %p166
      %p639 = pneg %p163
      %p640 = pneg %p187
      %p641 = pneg %p184
      %p642 = pneg %p208
      %p643 = pneg %p205
      %p644 = pneg %p229
      %p645 = pneg %p226
      %p646 = pneg %p250
      %p647 = pneg %p247
      %p648 = pneg %p271
      %p649 = pneg %p268
      %p650 = pneg %p292
      %p651 = pneg %p289
      %p652 = pneg %p313
      %p653 = pneg %p310
      %p654 = pneg %p334
      %p655 = pneg %p331
      %p656 = pneg %p355
      %p657 = pneg %p352
      %p658 = pneg %p376
      %p659 = pneg %p373
      %p660 = pneg %p397
      %p661 = pneg %p394
      %p662 = pneg %p418
      %p663 = pneg %p415
      %p664 = pneg %p439
      %p665 = pneg %p436
      %p666 = pneg %p460
      %p667 = pneg %p457
      %p668 = pneg %p488
      %p669 = pneg %p485
      %s670 = smul.u32 8, %s35
      %p671 = scmp.lt.s32.totalorder %s34, 1
      %s672 = scalar_select %p671, %s34, 1
      %p673 = scmp.lt.s32.totalorder %s670, 15
      %s674 = scalar_select %p673, %s670, 15
      %s675 = smul.addr %s672, 16
      %s676 = sadd.s32 %s674, %s675
      %s677 = smul.addr %s676, 8
      %s678 = scalar_lea.vmem %s19, %s677
      %p679 = scmp.lt.s32.totalorder %s34, 1
      %s680 = scalar_select %p679, %s34, 1
      %s681 = smul.addr %s680, 16
      %s682 = smul.addr %s681, 8
      %s683 = scalar_lea.vmem %s0, %s682
      %s684 = smul.u32 8, %s35
      %p685 = scmp.lt.s32.totalorder %s34, 1
      %s686 = scalar_select %p685, %s34, 1
      %p687 = scmp.lt.s32.totalorder %s684, 15
      %s688 = scalar_select %p687, %s684, 15
      %s689 = smul.addr %s686, 16
      %s690 = sadd.s32 %s688, %s689
      %s691 = smul.addr %s690, 8
      %s692 = scalar_lea.vmem %s1, %s691
      %s693 = smul.u32 8, %s35
      %s694 = smul.u32 8, %s35
      %p695 = scmp.lt.s32.totalorder %s34, 1
      %s696 = scalar_select %p695, %s34, 1
      %p697 = scmp.lt.s32.totalorder %s694, 15
      %s698 = scalar_select %p697, %s694, 15
      %s699 = smul.addr %s696, 16
      %s700 = sadd.s32 %s698, %s699
      %s701 = smul.addr %s700, 8
      %s702 = scalar_lea.vmem %s2, %s701
      %s703 = smul.u32 8, %s35
      %s704 = smul.u32 8, %s35
      %p705 = scmp.lt.s32.totalorder %s704, 15
      %s706 = scalar_select %p705, %s704, 15
      %s707 = smul.addr %s706, 8
      %s708 = scalar_lea.vmem %s3, %s707
      %s709 = smul.u32 8, %s35
      %s710 = smul.u32 8, %s35
      %p711 = scmp.lt.s32.totalorder %s34, 1
      %s712 = scalar_select %p711, %s34, 1
      %p713 = scmp.lt.s32.totalorder %s710, 15
      %s714 = scalar_select %p713, %s710, 15
      %s715 = smul.addr %s712, 16
      %s716 = sadd.s32 %s714, %s715
      %s717 = smul.addr %s716, 8
      %s718 = scalar_lea.vmem %s19, %s717
      %s719 = smul.u32 8, %s35
      %p721 = scmp.eq.s32.totalorder %s35, 0
      // Predicated region
      $region97: #{encoder_forward.2} parent=95 // pred_check
        %p722 = pneg %p721
      $region98: #{encoder_forward.2} parent=95 // pred_check_branch
        %724 = sbr.rel (%p722) target = $region100
      $region99: #{encoder_forward.2} parent=95 // pred_region
        %v725 = vld [vmem:[%s683] sm:$0xff]
        %v726 = vld [vmem:[%s683 + $0x8] sm:$0xff]
        %v727 = vld [vmem:[%s683 + $0x10] sm:$0xff]
        %v728 = vld [vmem:[%s683 + $0x18] sm:$0xff]
        %v729 = vld [vmem:[%s683 + $0x20] sm:$0xff]
        %v730 = vld [vmem:[%s683 + $0x28] sm:$0xff]
        %v731 = vld [vmem:[%s683 + $0x30] sm:$0xff]
        %v732 = vld [vmem:[%s683 + $0x38] sm:$0xff]
        %v733 = vld [vmem:[%s683 + $0x40] sm:$0xff]
        %v734 = vld [vmem:[%s683 + $0x48] sm:$0xff]
        %v735 = vld [vmem:[%s683 + $0x50] sm:$0xff]
        %v736 = vld [vmem:[%s683 + $0x58] sm:$0xff]
        %v737 = vld [vmem:[%s683 + $0x60] sm:$0xff]
        %v738 = vld [vmem:[%s683 + $0x68] sm:$0xff]
        %v739 = vld [vmem:[%s683 + $0x70] sm:$0xff]
        %v740 = vld [vmem:[%s683 + $0x78] sm:$0xff]
        %v741 = vpack.c.bf16 %v726, %v725
        %v742 = vpack.c.bf16 %v728, %v727
        %v743 = vpack.c.bf16 %v730, %v729
        %v744 = vpack.c.bf16 %v732, %v731
        %v745 = vpack.c.bf16 %v734, %v733
        %v746 = vpack.c.bf16 %v736, %v735
        %v747 = vpack.c.bf16 %v738, %v737
        %v748 = vpack.c.bf16 %v740, %v739
        %v749 = vld [vmem:[%s5] sm:$0xff]
        %v750 = vld [vmem:[%s5 + $0x8] sm:$0xff]
        %v751 = vld [vmem:[%s5 + $0x10] sm:$0xff]
        %v752 = vld [vmem:[%s5 + $0x18] sm:$0xff]
        %v753 = vpack.c.bf16 %v750, %v749
        %v754 = vpack.c.bf16 %v752, %v751
        %v755 = vld [vmem:[%s6] sm:$0x1]
        %v757 = vlaneseq
        %v758 = vshrl.u32 %v757, 7
        %v759 = vsub.s32 0, %v758
        %v760 = vrot.slane %v755, %v759
        %vm762 = vcmask 261120
        %v764 = vsel %vm762, %v741, 0
        %v767 = vsel %vm762, %v742, 0
        %v770 = vsel %vm762, %v743, 0
        %v773 = vsel %vm762, %v744, 0
        %v776 = vsel %vm762, %v745, 0
        %v779 = vsel %vm762, %v746, 0
        %v782 = vsel %vm762, %v747, 0
        %v785 = vsel %vm762, %v748, 0
        %787 = vmatprep.subr.bf16.mxu0 0
        %788 = vmatpush1.bf16.msra.mxu0 0
        %789 = vmatprep.subr.bf16.mxu0 0
        %790 = vmatpush1.bf16.msra.mxu0 0
        %791 = vmatprep.subr.bf16.mxu0 0
        %792 = vmatpush1.bf16.msra.mxu0 0
        %793 = vmatprep.subr.bf16.mxu0 0
        %794 = vmatpush1.bf16.msra.mxu0 0
        %795 = vmatprep.subr.bf16.mxu0 0
        %796 = vmatpush1.bf16.msra.mxu0 0
        %797 = vmatprep.subr.bf16.mxu0 0
        %798 = vmatpush1.bf16.msra.mxu0 0
        %799 = vmatprep.subr.bf16.mxu0 0
        %800 = vmatpush1.bf16.msra.mxu0 %v754
        %801 = vmatprep.subr.bf16.mxu0 0
        %802 = vmatpush1.bf16.msra.mxu0 %v753
        %803 = vmatprep.subr.bf16.mxu0 0
        %804 = vmatpush2.bf16.msra.mxu0 0
        %805 = vmatprep.subr.bf16.mxu0 0
        %806 = vmatpush2.bf16.msra.mxu0 0
        %807 = vmatprep.subr.bf16.mxu0 0
        %808 = vmatpush2.bf16.msra.mxu0 0
        %809 = vmatprep.subr.bf16.mxu0 0
        %810 = vmatpush2.bf16.msra.mxu0 0
        %811 = vmatprep.subr.bf16.mxu0 0
        %812 = vmatpush2.bf16.msra.mxu0 0
        %813 = vmatprep.subr.bf16.mxu0 0
        %814 = vmatpush2.bf16.msra.mxu0 0
        %815 = vmatprep.subr.bf16.mxu0 0
        %816 = vmatpush2.bf16.msra.mxu0 0
        %817 = vmatprep.subr.bf16.mxu0 0
        %818 = vmatpush2.bf16.msra.mxu0 0
        %819 = vmatprep.mubr.bf16.mxu0 0
        %820 = vmatmul.mubr.bf16.gmra.mxu0 %v764
        %v821 = vpop.f32.mrf.mxu0
        %v822 = vadd.f32 %v760, %v821
        %v823 = vpop.f32.mrf.mxu0
        %v824 = vpop.f32.mrf.mxu0
        %v825 = vadd.f32 %v760, %v824
        %v826 = vpop.f32.mrf.mxu0
        %827 = vmatprep.mubr.bf16.mxu0 0
        %828 = vmatmul.mubr.bf16.gmra.mxu0 %v767
        %v829 = vpop.f32.mrf.mxu0
        %v830 = vadd.f32 %v760, %v829
        %v831 = vpop.f32.mrf.mxu0
        %v832 = vpop.f32.mrf.mxu0
        %v833 = vadd.f32 %v760, %v832
        %v834 = vpop.f32.mrf.mxu0
        %835 = vmatprep.mubr.bf16.mxu0 0
        %836 = vmatmul.mubr.bf16.gmra.mxu0 %v770
        %v837 = vpop.f32.mrf.mxu0
        %v838 = vadd.f32 %v760, %v837
        %v839 = vpop.f32.mrf.mxu0
        %v840 = vpop.f32.mrf.mxu0
        %v841 = vadd.f32 %v760, %v840
        %v842 = vpop.f32.mrf.mxu0
        %843 = vmatprep.mubr.bf16.mxu0 0
        %844 = vmatmul.mubr.bf16.gmra.mxu0 %v773
        %v845 = vpop.f32.mrf.mxu0
        %v846 = vadd.f32 %v760, %v845
        %v847 = vpop.f32.mrf.mxu0
        %v848 = vpop.f32.mrf.mxu0
        %v849 = vadd.f32 %v760, %v848
        %v850 = vpop.f32.mrf.mxu0
        %851 = vmatprep.mubr.bf16.mxu0 0
        %852 = vmatmul.mubr.bf16.gmra.mxu0 %v776
        %v853 = vpop.f32.mrf.mxu0
        %v854 = vadd.f32 %v760, %v853
        %v855 = vpop.f32.mrf.mxu0
        %v856 = vpop.f32.mrf.mxu0
        %v857 = vadd.f32 %v760, %v856
        %v858 = vpop.f32.mrf.mxu0
        %859 = vmatprep.mubr.bf16.mxu0 0
        %860 = vmatmul.mubr.bf16.gmra.mxu0 %v779
        %v861 = vpop.f32.mrf.mxu0
        %v862 = vadd.f32 %v760, %v861
        %v863 = vpop.f32.mrf.mxu0
        %v864 = vpop.f32.mrf.mxu0
        %v865 = vadd.f32 %v760, %v864
        %v866 = vpop.f32.mrf.mxu0
        %867 = vmatprep.mubr.bf16.mxu0 0
        %868 = vmatmul.mubr.bf16.gmra.mxu0 %v782
        %v869 = vpop.f32.mrf.mxu0
        %v870 = vadd.f32 %v760, %v869
        %v871 = vpop.f32.mrf.mxu0
        %v872 = vpop.f32.mrf.mxu0
        %v873 = vadd.f32 %v760, %v872
        %v874 = vpop.f32.mrf.mxu0
        %875 = vmatprep.mubr.bf16.mxu0 0
        %876 = vmatmul.mubr.bf16.gmra.mxu0 %v785
        %v877 = vpop.f32.mrf.mxu0
        %v878 = vadd.f32 %v760, %v877
        %v879 = vpop.f32.mrf.mxu0
        %v880 = vpop.f32.mrf.mxu0
        %v881 = vadd.f32 %v760, %v880
        %v882 = vpop.f32.mrf.mxu0
        %883 = vdwg.mxu0
        %v884 = vpack.c.bf16 %v825, %v822
        %v885 = vpack.c.bf16 %v833, %v830
        %v886 = vpack.c.bf16 %v841, %v838
        %v887 = vpack.c.bf16 %v849, %v846
        %v888 = vpack.c.bf16 %v857, %v854
        %v889 = vpack.c.bf16 %v865, %v862
        %v890 = vpack.c.bf16 %v873, %v870
        %v891 = vpack.c.bf16 %v881, %v878
        %v900 = vunpack.c.l.b16 %v884
        %v901 = vunpack.c.h.b16 %v884
        %v902 = vunpack.c.l.b16 %v885
        %v903 = vunpack.c.h.b16 %v885
        %v904 = vunpack.c.l.b16 %v886
        %v905 = vunpack.c.h.b16 %v886
        %v906 = vunpack.c.l.b16 %v887
        %v907 = vunpack.c.h.b16 %v887
        %v908 = vunpack.c.l.b16 %v888
        %v909 = vunpack.c.h.b16 %v888
        %v910 = vunpack.c.l.b16 %v889
        %v911 = vunpack.c.h.b16 %v889
        %v912 = vunpack.c.l.b16 %v890
        %v913 = vunpack.c.h.b16 %v890
        %v914 = vunpack.c.l.b16 %v891
        %v915 = vunpack.c.h.b16 %v891
        %v916 = vpack.c.b16 %v900, %v900
        %v917 = vpack.c.b16 %v901, %v901
        %v918 = vpack.c.b16 %v902, %v902
        %v919 = vpack.c.b16 %v903, %v903
        %v920 = vpack.c.b16 %v904, %v904
        %v921 = vpack.c.b16 %v905, %v905
        %v922 = vpack.c.b16 %v906, %v906
        %v923 = vpack.c.b16 %v907, %v907
        %v924 = vpack.c.b16 %v908, %v908
        %v925 = vpack.c.b16 %v909, %v909
        %v926 = vpack.c.b16 %v910, %v910
        %v927 = vpack.c.b16 %v911, %v911
        %v928 = vpack.c.b16 %v912, %v912
        %v929 = vpack.c.b16 %v913, %v913
        %v930 = vpack.c.b16 %v914, %v914
        %v931 = vpack.c.b16 %v915, %v915
        %vm948 = vcmask 257024
        %949 = vst.msk [vmem:[#allocation2] sm:$0xf] %vm948, %v916
        %950 = vst.msk [vmem:[#allocation2 + $0x4] sm:$0xf] %vm948, %v917
        %951 = vst.msk [vmem:[#allocation2 + $0x8] sm:$0xf] %vm948, %v918
        %952 = vst.msk [vmem:[#allocation2 + $0xc] sm:$0xf] %vm948, %v919
        %953 = vst.msk [vmem:[#allocation2 + $0x10] sm:$0xf] %vm948, %v920
        %954 = vst.msk [vmem:[#allocation2 + $0x14] sm:$0xf] %vm948, %v921
        %955 = vst.msk [vmem:[#allocation2 + $0x18] sm:$0xf] %vm948, %v922
        %956 = vst.msk [vmem:[#allocation2 + $0x1c] sm:$0xf] %vm948, %v923
        %957 = vst.msk [vmem:[#allocation2 + $0x20] sm:$0xf] %vm948, %v924
        %958 = vst.msk [vmem:[#allocation2 + $0x24] sm:$0xf] %vm948, %v925
        %959 = vst.msk [vmem:[#allocation2 + $0x28] sm:$0xf] %vm948, %v926
        %960 = vst.msk [vmem:[#allocation2 + $0x2c] sm:$0xf] %vm948, %v927
        %961 = vst.msk [vmem:[#allocation2 + $0x30] sm:$0xf] %vm948, %v928
        %962 = vst.msk [vmem:[#allocation2 + $0x34] sm:$0xf] %vm948, %v929
        %963 = vst.msk [vmem:[#allocation2 + $0x38] sm:$0xf] %vm948, %v930
        %964 = vst.msk [vmem:[#allocation2 + $0x3c] sm:$0xf] %vm948, %v931
      $region100: #{encoder_forward.2} parent=95 // pred_fallthru
        _
      %v965 = vld [vmem:[%s692] sm:$0xff]
      %v966 = vld [vmem:[%s692 + $0x8] sm:$0xff]
      %v967 = vld [vmem:[%s692 + $0x10] sm:$0xff]
      %v968 = vld [vmem:[%s692 + $0x18] sm:$0xff]
      %v969 = vld [vmem:[%s692 + $0x20] sm:$0xff]
      %v970 = vld [vmem:[%s692 + $0x28] sm:$0xff]
      %v971 = vld [vmem:[%s692 + $0x30] sm:$0xff]
      %v972 = vld [vmem:[%s692 + $0x38] sm:$0xff]
      %v973 = vld [vmem:[%s702] sm:$0xff]
      %v974 = vld [vmem:[%s702 + $0x8] sm:$0xff]
      %v975 = vld [vmem:[%s702 + $0x10] sm:$0xff]
      %v976 = vld [vmem:[%s702 + $0x18] sm:$0xff]
      %v977 = vld [vmem:[%s702 + $0x20] sm:$0xff]
      %v978 = vld [vmem:[%s702 + $0x28] sm:$0xff]
      %v979 = vld [vmem:[%s702 + $0x30] sm:$0xff]
      %v980 = vld [vmem:[%s702 + $0x38] sm:$0xff]
      %v981 = vadd.f32 %v965, %v973
      %v982 = vadd.f32 %v966, %v974
      %v983 = vadd.f32 %v967, %v975
      %v984 = vadd.f32 %v968, %v976
      %v985 = vadd.f32 %v969, %v977
      %v986 = vadd.f32 %v970, %v978
      %v987 = vadd.f32 %v971, %v979
      %v988 = vadd.f32 %v972, %v980
      %v989 = vpack.c.bf16 %v982, %v981
      %v990 = vpack.c.bf16 %v984, %v983
      %v991 = vpack.c.bf16 %v986, %v985
      %v992 = vpack.c.bf16 %v988, %v987
      %v993 = vld [vmem:[%s7] sm:$0xff]
      %v994 = vld [vmem:[%s7 + $0x8] sm:$0xff]
      %v995 = vld [vmem:[%s7 + $0x10] sm:$0xff]
      %v996 = vld [vmem:[%s7 + $0x18] sm:$0xff]
      %v997 = vpack.c.bf16 %v994, %v993
      %v998 = vpack.c.bf16 %v996, %v995
      %v999 = vld [vmem:[%s8] sm:$0x1]
      %v1001 = vlaneseq
      %v1002 = vshrl.u32 %v1001, 7
      %v1003 = vsub.s32 0, %v1002
      %v1004 = vrot.slane %v999, %v1003
      %vm1006 = vcmask 261120
      %v1008 = vsel %vm1006, %v989, 0
      %v1011 = vsel %vm1006, %v990, 0
      %v1014 = vsel %vm1006, %v991, 0
      %v1017 = vsel %vm1006, %v992, 0
      %1019 = vmatprep.subr.bf16.mxu0 0
      %1020 = vmatpush1.bf16.msra.mxu0 0
      %1021 = vmatprep.subr.bf16.mxu0 0
      %1022 = vmatpush1.bf16.msra.mxu0 0
      %1023 = vmatprep.subr.bf16.mxu0 0
      %1024 = vmatpush1.bf16.msra.mxu0 0
      %1025 = vmatprep.subr.bf16.mxu0 0
      %1026 = vmatpush1.bf16.msra.mxu0 0
      %1027 = vmatprep.subr.bf16.mxu0 0
      %1028 = vmatpush1.bf16.msra.mxu0 0
      %1029 = vmatprep.subr.bf16.mxu0 0
      %1030 = vmatpush1.bf16.msra.mxu0 0
      %1031 = vmatprep.subr.bf16.mxu0 0
      %1032 = vmatpush1.bf16.msra.mxu0 %v998
      %1033 = vmatprep.subr.bf16.mxu0 0
      %1034 = vmatpush1.bf16.msra.mxu0 %v997
      %1035 = vmatprep.subr.bf16.mxu0 0
      %1036 = vmatpush2.bf16.msra.mxu0 0
      %1037 = vmatprep.subr.bf16.mxu0 0
      %1038 = vmatpush2.bf16.msra.mxu0 0
      %1039 = vmatprep.subr.bf16.mxu0 0
      %1040 = vmatpush2.bf16.msra.mxu0 0
      %1041 = vmatprep.subr.bf16.mxu0 0
      %1042 = vmatpush2.bf16.msra.mxu0 0
      %1043 = vmatprep.subr.bf16.mxu0 0
      %1044 = vmatpush2.bf16.msra.mxu0 0
      %1045 = vmatprep.subr.bf16.mxu0 0
      %1046 = vmatpush2.bf16.msra.mxu0 0
      %1047 = vmatprep.subr.bf16.mxu0 0
      %1048 = vmatpush2.bf16.msra.mxu0 0
      %1049 = vmatprep.subr.bf16.mxu0 0
      %1050 = vmatpush2.bf16.msra.mxu0 0
      %1051 = vmatprep.mubr.bf16.mxu0 0
      %1052 = vmatmul.mubr.bf16.gmra.mxu0 %v1008
      %v1053 = vpop.f32.mrf.mxu0
      %v1054 = vadd.f32 %v1004, %v1053
      %v1055 = vpop.f32.mrf.mxu0
      %v1056 = vpop.f32.mrf.mxu0
      %v1057 = vadd.f32 %v1004, %v1056
      %v1058 = vpop.f32.mrf.mxu0
      %1059 = vmatprep.mubr.bf16.mxu0 0
      %1060 = vmatmul.mubr.bf16.gmra.mxu0 %v1011
      %v1061 = vpop.f32.mrf.mxu0
      %v1062 = vadd.f32 %v1004, %v1061
      %v1063 = vpop.f32.mrf.mxu0
      %v1064 = vpop.f32.mrf.mxu0
      %v1065 = vadd.f32 %v1004, %v1064
      %v1066 = vpop.f32.mrf.mxu0
      %1067 = vmatprep.mubr.bf16.mxu0 0
      %1068 = vmatmul.mubr.bf16.gmra.mxu0 %v1014
      %v1069 = vpop.f32.mrf.mxu0
      %v1070 = vadd.f32 %v1004, %v1069
      %v1071 = vpop.f32.mrf.mxu0
      %v1072 = vpop.f32.mrf.mxu0
      %v1073 = vadd.f32 %v1004, %v1072
      %v1074 = vpop.f32.mrf.mxu0
      %1075 = vmatprep.mubr.bf16.mxu0 0
      %1076 = vmatmul.mubr.bf16.gmra.mxu0 %v1017
      %v1077 = vpop.f32.mrf.mxu0
      %v1078 = vadd.f32 %v1004, %v1077
      %v1079 = vpop.f32.mrf.mxu0
      %v1080 = vpop.f32.mrf.mxu0
      %v1081 = vadd.f32 %v1004, %v1080
      %v1082 = vpop.f32.mrf.mxu0
      %1083 = vdwg.mxu0
      %v1084 = vld [vmem:[%s708] sm:$0xff]
      %v1085 = vld [vmem:[%s708 + $0x8] sm:$0xff]
      %v1086 = vld [vmem:[%s708 + $0x10] sm:$0xff]
      %v1087 = vld [vmem:[%s708 + $0x18] sm:$0xff]
      %v1088 = vld [vmem:[%s708 + $0x20] sm:$0xff]
      %v1089 = vld [vmem:[%s708 + $0x28] sm:$0xff]
      %v1090 = vld [vmem:[%s708 + $0x30] sm:$0xff]
      %v1091 = vld [vmem:[%s708 + $0x38] sm:$0xff]
      %v1092 = vadd.f32 %v1054, %v1084
      %v1093 = vadd.f32 %v1057, %v1085
      %v1094 = vadd.f32 %v1062, %v1086
      %v1095 = vadd.f32 %v1065, %v1087
      %v1096 = vadd.f32 %v1070, %v1088
      %v1097 = vadd.f32 %v1073, %v1089
      %v1098 = vadd.f32 %v1078, %v1090
      %v1099 = vadd.f32 %v1081, %v1091
      %v1100 = vld [vmem:[%s4] sm:$0x7]
      %v1101 = vfloor.f32 %v1092
      %v1102 = vfloor.f32 %v1093
      %v1103 = vfloor.f32 %v1094
      %v1104 = vfloor.f32 %v1095
      %v1105 = vfloor.f32 %v1096
      %v1106 = vfloor.f32 %v1097
      %v1107 = vfloor.f32 %v1098
      %v1108 = vfloor.f32 %v1099
      %v1109 = vsub.f32 %v1092, %v1101
      %v1110 = vsub.f32 %v1093, %v1102
      %v1111 = vsub.f32 %v1094, %v1103
      %v1112 = vsub.f32 %v1095, %v1104
      %v1113 = vsub.f32 %v1096, %v1105
      %v1114 = vsub.f32 %v1097, %v1106
      %v1115 = vsub.f32 %v1098, %v1107
      %v1116 = vsub.f32 %v1099, %v1108
      %v1117 = vsub.f32 1.0, %v1109
      %v1118 = vsub.f32 1.0, %v1110
      %v1119 = vsub.f32 1.0, %v1111
      %v1120 = vsub.f32 1.0, %v1112
      %v1121 = vsub.f32 1.0, %v1113
      %v1122 = vsub.f32 1.0, %v1114
      %v1123 = vsub.f32 1.0, %v1115
      %v1124 = vsub.f32 1.0, %v1116
      %v1125 = vcvt.f32.s32.to.zero.pseudo %v1101
      %v1126 = vcvt.f32.s32.to.zero.pseudo %v1102
      %v1127 = vcvt.f32.s32.to.zero.pseudo %v1103
      %v1128 = vcvt.f32.s32.to.zero.pseudo %v1104
      %v1129 = vcvt.f32.s32.to.zero.pseudo %v1105
      %v1130 = vcvt.f32.s32.to.zero.pseudo %v1106
      %v1131 = vcvt.f32.s32.to.zero.pseudo %v1107
      %v1132 = vcvt.f32.s32.to.zero.pseudo %v1108
      %v1133 = vadd.s32 %v1125, 1
      %v1134 = vadd.s32 %v1126, 1
      %v1135 = vadd.s32 %v1127, 1
      %v1136 = vadd.s32 %v1128, 1
      %v1137 = vadd.s32 %v1129, 1
      %v1138 = vadd.s32 %v1130, 1
      %v1139 = vadd.s32 %v1131, 1
      %v1140 = vadd.s32 %v1132, 1
      %vm1141 = vcmp.ge.s32.totalorder %v1125, 0
      %vm1142 = vcmp.ge.s32.totalorder %v1126, 0
      %vm1143 = vcmp.ge.s32.totalorder %v1127, 0
      %vm1144 = vcmp.ge.s32.totalorder %v1128, 0
      %vm1145 = vcmp.ge.s32.totalorder %v1129, 0
      %vm1146 = vcmp.ge.s32.totalorder %v1130, 0
      %vm1147 = vcmp.ge.s32.totalorder %v1131, 0
      %vm1148 = vcmp.ge.s32.totalorder %v1132, 0
      %v1149 = vlaneseq
      %v1150 = vshrl.u32 %v1149, 7
      %v1151 = vsub.s32 0, %v1150
      %v1152 = vrot.slane %v1100, %v1151
      %vm1153 = vcmp.lt.s32.totalorder %v1125, %v1152
      %vm1154 = vcmp.lt.s32.totalorder %v1126, %v1152
      %vm1155 = vcmp.lt.s32.totalorder %v1127, %v1152
      %vm1156 = vcmp.lt.s32.totalorder %v1128, %v1152
      %vm1157 = vcmp.lt.s32.totalorder %v1129, %v1152
      %vm1158 = vcmp.lt.s32.totalorder %v1130, %v1152
      %vm1159 = vcmp.lt.s32.totalorder %v1131, %v1152
      %vm1160 = vcmp.lt.s32.totalorder %v1132, %v1152
      %vm1161 = vmand %vm1141, %vm1153
      %vm1162 = vmand %vm1142, %vm1154
      %vm1163 = vmand %vm1143, %vm1155
      %vm1164 = vmand %vm1144, %vm1156
      %vm1165 = vmand %vm1145, %vm1157
      %vm1166 = vmand %vm1146, %vm1158
      %vm1167 = vmand %vm1147, %vm1159
      %vm1168 = vmand %vm1148, %vm1160
      %vm1169 = vcmp.ge.s32.totalorder %v1133, 0
      %vm1170 = vcmp.ge.s32.totalorder %v1134, 0
      %vm1171 = vcmp.ge.s32.totalorder %v1135, 0
      %vm1172 = vcmp.ge.s32.totalorder %v1136, 0
      %vm1173 = vcmp.ge.s32.totalorder %v1137, 0
      %vm1174 = vcmp.ge.s32.totalorder %v1138, 0
      %vm1175 = vcmp.ge.s32.totalorder %v1139, 0
      %vm1176 = vcmp.ge.s32.totalorder %v1140, 0
      %vm1177 = vcmp.lt.s32.totalorder %v1133, %v1152
      %vm1178 = vcmp.lt.s32.totalorder %v1134, %v1152
      %vm1179 = vcmp.lt.s32.totalorder %v1135, %v1152
      %vm1180 = vcmp.lt.s32.totalorder %v1136, %v1152
      %vm1181 = vcmp.lt.s32.totalorder %v1137, %v1152
      %vm1182 = vcmp.lt.s32.totalorder %v1138, %v1152
      %vm1183 = vcmp.lt.s32.totalorder %v1139, %v1152
      %vm1184 = vcmp.lt.s32.totalorder %v1140, %v1152
      %vm1185 = vmand %vm1169, %vm1177
      %vm1186 = vmand %vm1170, %vm1178
      %vm1187 = vmand %vm1171, %vm1179
      %vm1188 = vmand %vm1172, %vm1180
      %vm1189 = vmand %vm1173, %vm1181
      %vm1190 = vmand %vm1174, %vm1182
      %vm1191 = vmand %vm1175, %vm1183
      %vm1192 = vmand %vm1176, %vm1184
      %v1193 = vlaneseq
      %v1194 = vshrl.u32 %v1193, 7
      %v1195 = vsub.s32 1, %v1194
      %v1196 = vrot.slane %v1100, %v1195
      %1197 = vrot.lane.b32.xlu0 %v1196, 16
      %v1198 = vpop.permute.xlu0 %1197
      %vm1199 = vcmp.lt.s32.totalorder %v1125, %v1198
      %vm1200 = vcmp.lt.s32.totalorder %v1126, %v1198
      %vm1201 = vcmp.lt.s32.totalorder %v1127, %v1198
      %vm1202 = vcmp.lt.s32.totalorder %v1128, %v1198
      %vm1203 = vcmp.lt.s32.totalorder %v1129, %v1198
      %vm1204 = vcmp.lt.s32.totalorder %v1130, %v1198
      %vm1205 = vcmp.lt.s32.totalorder %v1131, %v1198
      %vm1206 = vcmp.lt.s32.totalorder %v1132, %v1198
      %vm1207 = vmand %vm1141, %vm1199
      %vm1208 = vmand %vm1142, %vm1200
      %vm1209 = vmand %vm1143, %vm1201
      %vm1210 = vmand %vm1144, %vm1202
      %vm1211 = vmand %vm1145, %vm1203
      %vm1212 = vmand %vm1146, %vm1204
      %vm1213 = vmand %vm1147, %vm1205
      %vm1214 = vmand %vm1148, %vm1206
      %vm1215 = vcmp.lt.s32.totalorder %v1133, %v1198
      %vm1216 = vcmp.lt.s32.totalorder %v1134, %v1198
      %vm1217 = vcmp.lt.s32.totalorder %v1135, %v1198
      %vm1218 = vcmp.lt.s32.totalorder %v1136, %v1198
      %vm1219 = vcmp.lt.s32.totalorder %v1137, %v1198
      %vm1220 = vcmp.lt.s32.totalorder %v1138, %v1198
      %vm1221 = vcmp.lt.s32.totalorder %v1139, %v1198
      %vm1222 = vcmp.lt.s32.totalorder %v1140, %v1198
      %vm1223 = vmand %vm1169, %vm1215
      %vm1224 = vmand %vm1170, %vm1216
      %vm1225 = vmand %vm1171, %vm1217
      %vm1226 = vmand %vm1172, %vm1218
      %vm1227 = vmand %vm1173, %vm1219
      %vm1228 = vmand %vm1174, %vm1220
      %vm1229 = vmand %vm1175, %vm1221
      %vm1230 = vmand %vm1176, %vm1222
      %v1231 = vsub.s32 %v1100, 1
      %vm1232 = vcmp.gt.s32.totalorder %v1125, 0
      %v1233 = vsel %vm1232, %v1125, 0
      %vm1234 = vcmp.gt.s32.totalorder %v1126, 0
      %v1235 = vsel %vm1234, %v1126, 0
      %vm1236 = vcmp.gt.s32.totalorder %v1127, 0
      %v1237 = vsel %vm1236, %v1127, 0
      %vm1238 = vcmp.gt.s32.totalorder %v1128, 0
      %v1239 = vsel %vm1238, %v1128, 0
      %vm1240 = vcmp.gt.s32.totalorder %v1129, 0
      %v1241 = vsel %vm1240, %v1129, 0
      %vm1242 = vcmp.gt.s32.totalorder %v1130, 0
      %v1243 = vsel %vm1242, %v1130, 0
      %vm1244 = vcmp.gt.s32.totalorder %v1131, 0
      %v1245 = vsel %vm1244, %v1131, 0
      %vm1246 = vcmp.gt.s32.totalorder %v1132, 0
      %v1247 = vsel %vm1246, %v1132, 0
      %v1248 = vlaneseq
      %v1249 = vshrl.u32 %v1248, 7
      %v1250 = vsub.s32 0, %v1249
      %v1251 = vrot.slane %v1231, %v1250
      %vm1252 = vcmp.lt.s32.totalorder %v1251, %v1233
      %v1253 = vsel %vm1252, %v1251, %v1233
      %vm1254 = vcmp.lt.s32.totalorder %v1251, %v1235
      %v1255 = vsel %vm1254, %v1251, %v1235
      %vm1256 = vcmp.lt.s32.totalorder %v1251, %v1237
      %v1257 = vsel %vm1256, %v1251, %v1237
      %vm1258 = vcmp.lt.s32.totalorder %v1251, %v1239
      %v1259 = vsel %vm1258, %v1251, %v1239
      %vm1260 = vcmp.lt.s32.totalorder %v1251, %v1241
      %v1261 = vsel %vm1260, %v1251, %v1241
      %vm1262 = vcmp.lt.s32.totalorder %v1251, %v1243
      %v1263 = vsel %vm1262, %v1251, %v1243
      %vm1264 = vcmp.lt.s32.totalorder %v1251, %v1245
      %v1265 = vsel %vm1264, %v1251, %v1245
      %vm1266 = vcmp.lt.s32.totalorder %v1251, %v1247
      %v1267 = vsel %vm1266, %v1251, %v1247
      %vm1268 = vcmp.gt.s32.totalorder %v1133, 0
      %v1269 = vsel %vm1268, %v1133, 0
      %vm1270 = vcmp.gt.s32.totalorder %v1134, 0
      %v1271 = vsel %vm1270, %v1134, 0
      %vm1272 = vcmp.gt.s32.totalorder %v1135, 0
      %v1273 = vsel %vm1272, %v1135, 0
      %vm1274 = vcmp.gt.s32.totalorder %v1136, 0
      %v1275 = vsel %vm1274, %v1136, 0
      %vm1276 = vcmp.gt.s32.totalorder %v1137, 0
      %v1277 = vsel %vm1276, %v1137, 0
      %vm1278 = vcmp.gt.s32.totalorder %v1138, 0
      %v1279 = vsel %vm1278, %v1138, 0
      %vm1280 = vcmp.gt.s32.totalorder %v1139, 0
      %v1281 = vsel %vm1280, %v1139, 0
      %vm1282 = vcmp.gt.s32.totalorder %v1140, 0
      %v1283 = vsel %vm1282, %v1140, 0
      %vm1284 = vcmp.lt.s32.totalorder %v1251, %v1269
      %v1285 = vsel %vm1284, %v1251, %v1269
      %vm1286 = vcmp.lt.s32.totalorder %v1251, %v1271
      %v1287 = vsel %vm1286, %v1251, %v1271
      %vm1288 = vcmp.lt.s32.totalorder %v1251, %v1273
      %v1289 = vsel %vm1288, %v1251, %v1273
      %vm1290 = vcmp.lt.s32.totalorder %v1251, %v1275
      %v1291 = vsel %vm1290, %v1251, %v1275
      %vm1292 = vcmp.lt.s32.totalorder %v1251, %v1277
      %v1293 = vsel %vm1292, %v1251, %v1277
      %vm1294 = vcmp.lt.s32.totalorder %v1251, %v1279
      %v1295 = vsel %vm1294, %v1251, %v1279
      %vm1296 = vcmp.lt.s32.totalorder %v1251, %v1281
      %v1297 = vsel %vm1296, %v1251, %v1281
      %vm1298 = vcmp.lt.s32.totalorder %v1251, %v1283
      %v1299 = vsel %vm1298, %v1251, %v1283
      %v1300 = vlaneseq
      %v1301 = vshrl.u32 %v1300, 7
      %v1302 = vsub.s32 1, %v1301
      %v1303 = vrot.slane %v1231, %v1302
      %1304 = vrot.lane.b32.xlu0 %v1233, 112
      %v1305 = vpop.permute.xlu0 %1304
      %1306 = vrot.lane.b32.xlu0 %v1235, 112
      %v1307 = vpop.permute.xlu0 %1306
      %1308 = vrot.lane.b32.xlu0 %v1237, 112
      %v1309 = vpop.permute.xlu0 %1308
      %1310 = vrot.lane.b32.xlu0 %v1239, 112
      %v1311 = vpop.permute.xlu0 %1310
      %1312 = vrot.lane.b32.xlu0 %v1241, 112
      %v1313 = vpop.permute.xlu0 %1312
      %1314 = vrot.lane.b32.xlu0 %v1243, 112
      %v1315 = vpop.permute.xlu0 %1314
      %1316 = vrot.lane.b32.xlu0 %v1245, 112
      %v1317 = vpop.permute.xlu0 %1316
      %1318 = vrot.lane.b32.xlu0 %v1247, 112
      %v1319 = vpop.permute.xlu0 %1318
      %vm1320 = vcmp.lt.s32.totalorder %v1303, %v1305
      %v1321 = vsel %vm1320, %v1303, %v1305
      %vm1322 = vcmp.lt.s32.totalorder %v1303, %v1307
      %v1323 = vsel %vm1322, %v1303, %v1307
      %vm1324 = vcmp.lt.s32.totalorder %v1303, %v1309
      %v1325 = vsel %vm1324, %v1303, %v1309
      %vm1326 = vcmp.lt.s32.totalorder %v1303, %v1311
      %v1327 = vsel %vm1326, %v1303, %v1311
      %vm1328 = vcmp.lt.s32.totalorder %v1303, %v1313
      %v1329 = vsel %vm1328, %v1303, %v1313
      %vm1330 = vcmp.lt.s32.totalorder %v1303, %v1315
      %v1331 = vsel %vm1330, %v1303, %v1315
      %vm1332 = vcmp.lt.s32.totalorder %v1303, %v1317
      %v1333 = vsel %vm1332, %v1303, %v1317
      %vm1334 = vcmp.lt.s32.totalorder %v1303, %v1319
      %v1335 = vsel %vm1334, %v1303, %v1319
      %v1336 = vmul.u32 %v1321, %v1152
      %v1337 = vmul.u32 %v1323, %v1152
      %v1338 = vmul.u32 %v1325, %v1152
      %v1339 = vmul.u32 %v1327, %v1152
      %v1340 = vmul.u32 %v1329, %v1152
      %v1341 = vmul.u32 %v1331, %v1152
      %v1342 = vmul.u32 %v1333, %v1152
      %v1343 = vmul.u32 %v1335, %v1152
      %v1344 = vlaneseq
      %v1345 = vshrl.u32 %v1344, 7
      %v1346 = vsub.s32 2, %v1345
      %v1347 = vrot.slane %v1100, %v1346
      %v1348 = vadd.s32 %v1347, %v1336
      %v1349 = vadd.s32 %v1347, %v1337
      %v1350 = vadd.s32 %v1347, %v1338
      %v1351 = vadd.s32 %v1347, %v1339
      %v1352 = vadd.s32 %v1347, %v1340
      %v1353 = vadd.s32 %v1347, %v1341
      %v1354 = vadd.s32 %v1347, %v1342
      %v1355 = vadd.s32 %v1347, %v1343
      %1356 = vrot.lane.b32.xlu0 %v1269, 112
      %v1357 = vpop.permute.xlu0 %1356
      %1358 = vrot.lane.b32.xlu0 %v1271, 112
      %v1359 = vpop.permute.xlu0 %1358
      %1360 = vrot.lane.b32.xlu0 %v1273, 112
      %v1361 = vpop.permute.xlu0 %1360
      %1362 = vrot.lane.b32.xlu0 %v1275, 112
      %v1363 = vpop.permute.xlu0 %1362
      %1364 = vrot.lane.b32.xlu0 %v1277, 112
      %v1365 = vpop.permute.xlu0 %1364
      %1366 = vrot.lane.b32.xlu0 %v1279, 112
      %v1367 = vpop.permute.xlu0 %1366
      %1368 = vrot.lane.b32.xlu0 %v1281, 112
      %v1369 = vpop.permute.xlu0 %1368
      %1370 = vrot.lane.b32.xlu0 %v1283, 112
      %v1371 = vpop.permute.xlu0 %1370
      %vm1372 = vcmp.lt.s32.totalorder %v1303, %v1357
      %v1373 = vsel %vm1372, %v1303, %v1357
      %vm1374 = vcmp.lt.s32.totalorder %v1303, %v1359
      %v1375 = vsel %vm1374, %v1303, %v1359
      %vm1376 = vcmp.lt.s32.totalorder %v1303, %v1361
      %v1377 = vsel %vm1376, %v1303, %v1361
      %vm1378 = vcmp.lt.s32.totalorder %v1303, %v1363
      %v1379 = vsel %vm1378, %v1303, %v1363
      %vm1380 = vcmp.lt.s32.totalorder %v1303, %v1365
      %v1381 = vsel %vm1380, %v1303, %v1365
      %vm1382 = vcmp.lt.s32.totalorder %v1303, %v1367
      %v1383 = vsel %vm1382, %v1303, %v1367
      %vm1384 = vcmp.lt.s32.totalorder %v1303, %v1369
      %v1385 = vsel %vm1384, %v1303, %v1369
      %vm1386 = vcmp.lt.s32.totalorder %v1303, %v1371
      %v1387 = vsel %vm1386, %v1303, %v1371
      %v1388 = vmul.u32 %v1373, %v1152
      %v1389 = vmul.u32 %v1375, %v1152
      %v1390 = vmul.u32 %v1377, %v1152
      %v1391 = vmul.u32 %v1379, %v1152
      %v1392 = vmul.u32 %v1381, %v1152
      %v1393 = vmul.u32 %v1383, %v1152
      %v1394 = vmul.u32 %v1385, %v1152
      %v1395 = vmul.u32 %v1387, %v1152
      %v1396 = vadd.s32 %v1347, %v1388
      %v1397 = vadd.s32 %v1347, %v1389
      %v1398 = vadd.s32 %v1347, %v1390
      %v1399 = vadd.s32 %v1347, %v1391
      %v1400 = vadd.s32 %v1347, %v1392
      %v1401 = vadd.s32 %v1347, %v1393
      %v1402 = vadd.s32 %v1347, %v1394
      %v1403 = vadd.s32 %v1347, %v1395
      %v1404 = vadd.s32 %v1348, %v1253
      %v1405 = vadd.s32 %v1349, %v1255
      %v1406 = vadd.s32 %v1350, %v1257
      %v1407 = vadd.s32 %v1351, %v1259
      %v1408 = vadd.s32 %v1352, %v1261
      %v1409 = vadd.s32 %v1353, %v1263
      %v1410 = vadd.s32 %v1354, %v1265
      %v1411 = vadd.s32 %v1355, %v1267
      %v1412 = vadd.s32 %v1348, %v1285
      %v1413 = vadd.s32 %v1349, %v1287
      %v1414 = vadd.s32 %v1350, %v1289
      %v1415 = vadd.s32 %v1351, %v1291
      %v1416 = vadd.s32 %v1352, %v1293
      %v1417 = vadd.s32 %v1353, %v1295
      %v1418 = vadd.s32 %v1354, %v1297
      %v1419 = vadd.s32 %v1355, %v1299
      %v1420 = vadd.s32 %v1396, %v1253
      %v1421 = vadd.s32 %v1397, %v1255
      %v1422 = vadd.s32 %v1398, %v1257
      %v1423 = vadd.s32 %v1399, %v1259
      %v1424 = vadd.s32 %v1400, %v1261
      %v1425 = vadd.s32 %v1401, %v1263
      %v1426 = vadd.s32 %v1402, %v1265
      %v1427 = vadd.s32 %v1403, %v1267
      %v1428 = vadd.s32 %v1396, %v1285
      %v1429 = vadd.s32 %v1397, %v1287
      %v1430 = vadd.s32 %v1398, %v1289
      %v1431 = vadd.s32 %v1399, %v1291
      %v1432 = vadd.s32 %v1400, %v1293
      %v1433 = vadd.s32 %v1401, %v1295
      %v1434 = vadd.s32 %v1402, %v1297
      %v1435 = vadd.s32 %v1403, %v1299
      %v1436 = vsel %vm1161, 1, 0
      %v1437 = vsel %vm1162, 1, 0
      %v1438 = vsel %vm1163, 1, 0
      %v1439 = vsel %vm1164, 1, 0
      %v1440 = vsel %vm1165, 1, 0
      %v1441 = vsel %vm1166, 1, 0
      %v1442 = vsel %vm1167, 1, 0
      %v1443 = vsel %vm1168, 1, 0
      %1444 = vrot.lane.b32.xlu0 %v1436, 16
      %v1445 = vpop.permute.xlu0 %1444
      %1446 = vrot.lane.b32.xlu0 %v1437, 16
      %v1447 = vpop.permute.xlu0 %1446
      %1448 = vrot.lane.b32.xlu0 %v1438, 16
      %v1449 = vpop.permute.xlu0 %1448
      %1450 = vrot.lane.b32.xlu0 %v1439, 16
      %v1451 = vpop.permute.xlu0 %1450
      %1452 = vrot.lane.b32.xlu0 %v1440, 16
      %v1453 = vpop.permute.xlu0 %1452
      %1454 = vrot.lane.b32.xlu0 %v1441, 16
      %v1455 = vpop.permute.xlu0 %1454
      %1456 = vrot.lane.b32.xlu0 %v1442, 16
      %v1457 = vpop.permute.xlu0 %1456
      %1458 = vrot.lane.b32.xlu0 %v1443, 16
      %v1459 = vpop.permute.xlu0 %1458
      %vm1460 = vcmp.ne.s32.totalorder %v1445, 0
      %vm1461 = vcmp.ne.s32.totalorder %v1447, 0
      %vm1462 = vcmp.ne.s32.totalorder %v1449, 0
      %vm1463 = vcmp.ne.s32.totalorder %v1451, 0
      %vm1464 = vcmp.ne.s32.totalorder %v1453, 0
      %vm1465 = vcmp.ne.s32.totalorder %v1455, 0
      %vm1466 = vcmp.ne.s32.totalorder %v1457, 0
      %vm1467 = vcmp.ne.s32.totalorder %v1459, 0
      %vm1468 = vmand %vm1207, %vm1460
      %vm1469 = vmand %vm1208, %vm1461
      %vm1470 = vmand %vm1209, %vm1462
      %vm1471 = vmand %vm1210, %vm1463
      %vm1472 = vmand %vm1211, %vm1464
      %vm1473 = vmand %vm1212, %vm1465
      %vm1474 = vmand %vm1213, %vm1466
      %vm1475 = vmand %vm1214, %vm1467
      %1484 = vrot.lane.b32.xlu0 %v1117, 16
      %v1485 = vpop.permute.xlu0 %1484
      %1486 = vrot.lane.b32.xlu0 %v1118, 16
      %v1487 = vpop.permute.xlu0 %1486
      %1488 = vrot.lane.b32.xlu0 %v1119, 16
      %v1489 = vpop.permute.xlu0 %1488
      %1490 = vrot.lane.b32.xlu0 %v1120, 16
      %v1491 = vpop.permute.xlu0 %1490
      %1492 = vrot.lane.b32.xlu0 %v1121, 16
      %v1493 = vpop.permute.xlu0 %1492
      %1494 = vrot.lane.b32.xlu0 %v1122, 16
      %v1495 = vpop.permute.xlu0 %1494
      %1496 = vrot.lane.b32.xlu0 %v1123, 16
      %v1497 = vpop.permute.xlu0 %1496
      %1498 = vrot.lane.b32.xlu0 %v1124, 16
      %v1499 = vpop.permute.xlu0 %1498
      %v1508 = vmul.f32 %v1117, %v1485
      %v1509 = vmul.f32 %v1118, %v1487
      %v1510 = vmul.f32 %v1119, %v1489
      %v1511 = vmul.f32 %v1120, %v1491
      %v1512 = vmul.f32 %v1121, %v1493
      %v1513 = vmul.f32 %v1122, %v1495
      %v1514 = vmul.f32 %v1123, %v1497
      %v1515 = vmul.f32 %v1124, %v1499
      %v1516 = vsel %vm1468, %v1508, 0.0
      %v1517 = vsel %vm1469, %v1509, 0.0
      %v1518 = vsel %vm1470, %v1510, 0.0
      %v1519 = vsel %vm1471, %v1511, 0.0
      %v1520 = vsel %vm1472, %v1512, 0.0
      %v1521 = vsel %vm1473, %v1513, 0.0
      %v1522 = vsel %vm1474, %v1514, 0.0
      %v1523 = vsel %vm1475, %v1515, 0.0
      %v1524 = vsel %vm1185, 1, 0
      %v1525 = vsel %vm1186, 1, 0
      %v1526 = vsel %vm1187, 1, 0
      %v1527 = vsel %vm1188, 1, 0
      %v1528 = vsel %vm1189, 1, 0
      %v1529 = vsel %vm1190, 1, 0
      %v1530 = vsel %vm1191, 1, 0
      %v1531 = vsel %vm1192, 1, 0
      %1532 = vrot.lane.b32.xlu0 %v1524, 16
      %v1533 = vpop.permute.xlu0 %1532
      %1534 = vrot.lane.b32.xlu0 %v1525, 16
      %v1535 = vpop.permute.xlu0 %1534
      %1536 = vrot.lane.b32.xlu0 %v1526, 16
      %v1537 = vpop.permute.xlu0 %1536
      %1538 = vrot.lane.b32.xlu0 %v1527, 16
      %v1539 = vpop.permute.xlu0 %1538
      %1540 = vrot.lane.b32.xlu0 %v1528, 16
      %v1541 = vpop.permute.xlu0 %1540
      %1542 = vrot.lane.b32.xlu0 %v1529, 16
      %v1543 = vpop.permute.xlu0 %1542
      %1544 = vrot.lane.b32.xlu0 %v1530, 16
      %v1545 = vpop.permute.xlu0 %1544
      %1546 = vrot.lane.b32.xlu0 %v1531, 16
      %v1547 = vpop.permute.xlu0 %1546
      %vm1548 = vcmp.ne.s32.totalorder %v1533, 0
      %vm1549 = vcmp.ne.s32.totalorder %v1535, 0
      %vm1550 = vcmp.ne.s32.totalorder %v1537, 0
      %vm1551 = vcmp.ne.s32.totalorder %v1539, 0
      %vm1552 = vcmp.ne.s32.totalorder %v1541, 0
      %vm1553 = vcmp.ne.s32.totalorder %v1543, 0
      %vm1554 = vcmp.ne.s32.totalorder %v1545, 0
      %vm1555 = vcmp.ne.s32.totalorder %v1547, 0
      %vm1556 = vmand %vm1207, %vm1548
      %vm1557 = vmand %vm1208, %vm1549
      %vm1558 = vmand %vm1209, %vm1550
      %vm1559 = vmand %vm1210, %vm1551
      %vm1560 = vmand %vm1211, %vm1552
      %vm1561 = vmand %vm1212, %vm1553
      %vm1562 = vmand %vm1213, %vm1554
      %vm1563 = vmand %vm1214, %vm1555
      %1572 = vrot.lane.b32.xlu0 %v1109, 16
      %v1573 = vpop.permute.xlu0 %1572
      %1574 = vrot.lane.b32.xlu0 %v1110, 16
      %v1575 = vpop.permute.xlu0 %1574
      %1576 = vrot.lane.b32.xlu0 %v1111, 16
      %v1577 = vpop.permute.xlu0 %1576
      %1578 = vrot.lane.b32.xlu0 %v1112, 16
      %v1579 = vpop.permute.xlu0 %1578
      %1580 = vrot.lane.b32.xlu0 %v1113, 16
      %v1581 = vpop.permute.xlu0 %1580
      %1582 = vrot.lane.b32.xlu0 %v1114, 16
      %v1583 = vpop.permute.xlu0 %1582
      %1584 = vrot.lane.b32.xlu0 %v1115, 16
      %v1585 = vpop.permute.xlu0 %1584
      %1586 = vrot.lane.b32.xlu0 %v1116, 16
      %v1587 = vpop.permute.xlu0 %1586
      %v1596 = vmul.f32 %v1117, %v1573
      %v1597 = vmul.f32 %v1118, %v1575
      %v1598 = vmul.f32 %v1119, %v1577
      %v1599 = vmul.f32 %v1120, %v1579
      %v1600 = vmul.f32 %v1121, %v1581
      %v1601 = vmul.f32 %v1122, %v1583
      %v1602 = vmul.f32 %v1123, %v1585
      %v1603 = vmul.f32 %v1124, %v1587
      %v1604 = vsel %vm1556, %v1596, 0.0
      %v1605 = vsel %vm1557, %v1597, 0.0
      %v1606 = vsel %vm1558, %v1598, 0.0
      %v1607 = vsel %vm1559, %v1599, 0.0
      %v1608 = vsel %vm1560, %v1600, 0.0
      %v1609 = vsel %vm1561, %v1601, 0.0
      %v1610 = vsel %vm1562, %v1602, 0.0
      %v1611 = vsel %vm1563, %v1603, 0.0
      %vm1612 = vmand %vm1223, %vm1460
      %vm1613 = vmand %vm1224, %vm1461
      %vm1614 = vmand %vm1225, %vm1462
      %vm1615 = vmand %vm1226, %vm1463
      %vm1616 = vmand %vm1227, %vm1464
      %vm1617 = vmand %vm1228, %vm1465
      %vm1618 = vmand %vm1229, %vm1466
      %vm1619 = vmand %vm1230, %vm1467
      %v1620 = vmul.f32 %v1109, %v1485
      %v1621 = vmul.f32 %v1110, %v1487
      %v1622 = vmul.f32 %v1111, %v1489
      %v1623 = vmul.f32 %v1112, %v1491
      %v1624 = vmul.f32 %v1113, %v1493
      %v1625 = vmul.f32 %v1114, %v1495
      %v1626 = vmul.f32 %v1115, %v1497
      %v1627 = vmul.f32 %v1116, %v1499
      %v1628 = vsel %vm1612, %v1620, 0.0
      %v1629 = vsel %vm1613, %v1621, 0.0
      %v1630 = vsel %vm1614, %v1622, 0.0
      %v1631 = vsel %vm1615, %v1623, 0.0
      %v1632 = vsel %vm1616, %v1624, 0.0
      %v1633 = vsel %vm1617, %v1625, 0.0
      %v1634 = vsel %vm1618, %v1626, 0.0
      %v1635 = vsel %vm1619, %v1627, 0.0
      %vm1636 = vmand %vm1223, %vm1548
      %vm1637 = vmand %vm1224, %vm1549
      %vm1638 = vmand %vm1225, %vm1550
      %vm1639 = vmand %vm1226, %vm1551
      %vm1640 = vmand %vm1227, %vm1552
      %vm1641 = vmand %vm1228, %vm1553
      %vm1642 = vmand %vm1229, %vm1554
      %vm1643 = vmand %vm1230, %vm1555
      %v1644 = vmul.f32 %v1109, %v1573
      %v1645 = vmul.f32 %v1110, %v1575
      %v1646 = vmul.f32 %v1111, %v1577
      %v1647 = vmul.f32 %v1112, %v1579
      %v1648 = vmul.f32 %v1113, %v1581
      %v1649 = vmul.f32 %v1114, %v1583
      %v1650 = vmul.f32 %v1115, %v1585
      %v1651 = vmul.f32 %v1116, %v1587
      %v1652 = vsel %vm1636, %v1644, 0.0
      %v1653 = vsel %vm1637, %v1645, 0.0
      %v1654 = vsel %vm1638, %v1646, 0.0
      %v1655 = vsel %vm1639, %v1647, 0.0
      %v1656 = vsel %vm1640, %v1648, 0.0
      %v1657 = vsel %vm1641, %v1649, 0.0
      %v1658 = vsel %vm1642, %v1650, 0.0
      %v1659 = vsel %vm1643, %v1651, 0.0
      %v1660 = vlaneseq
      %v1661 = vand.u32 %v1660, 127
      %v1662 = vld [vmem:[#allocation2] sm:$0xf]
      %v1663 = vld [vmem:[#allocation2 + $0x4] sm:$0xf]
      %v1664 = vld [vmem:[#allocation2 + $0x8] sm:$0xf]
      %v1665 = vld [vmem:[#allocation2 + $0xc] sm:$0xf]
      %v1666 = vld [vmem:[#allocation2 + $0x10] sm:$0xf]
      %v1667 = vld [vmem:[#allocation2 + $0x14] sm:$0xf]
      %v1668 = vld [vmem:[#allocation2 + $0x18] sm:$0xf]
      %v1669 = vld [vmem:[#allocation2 + $0x1c] sm:$0xf]
      %v1670 = vld [vmem:[#allocation2 + $0x20] sm:$0xf]
      %v1671 = vld [vmem:[#allocation2 + $0x24] sm:$0xf]
      %v1672 = vld [vmem:[#allocation2 + $0x28] sm:$0xf]
      %v1673 = vld [vmem:[#allocation2 + $0x2c] sm:$0xf]
      %v1674 = vld [vmem:[#allocation2 + $0x30] sm:$0xf]
      %v1675 = vld [vmem:[#allocation2 + $0x34] sm:$0xf]
      %v1676 = vld [vmem:[#allocation2 + $0x38] sm:$0xf]
      %v1677 = vld [vmem:[#allocation2 + $0x3c] sm:$0xf]
      %vm1678 = vcmask 326912
      %v1679 = vsel %vm1678, %v1054, -inf
      %1680 = vmax.xlane.f32.xlu0 %v1679
      %v1681 = vpop.xlane.xlu0 %1680
      %v1682 = vsel %vm1678, %v1057, -inf
      %1683 = vmax.xlane.f32.xlu0 %v1682
      %v1684 = vpop.xlane.xlu0 %1683
      %v1685 = vsel %vm1678, %v1062, -inf
      %1686 = vmax.xlane.f32.xlu0 %v1685
      %v1687 = vpop.xlane.xlu0 %1686
      %v1688 = vsel %vm1678, %v1065, -inf
      %1689 = vmax.xlane.f32.xlu0 %v1688
      %v1690 = vpop.xlane.xlu0 %1689
      %v1691 = vsel %vm1678, %v1070, -inf
      %1692 = vmax.xlane.f32.xlu0 %v1691
      %v1693 = vpop.xlane.xlu0 %1692
      %v1694 = vsel %vm1678, %v1073, -inf
      %1695 = vmax.xlane.f32.xlu0 %v1694
      %v1696 = vpop.xlane.xlu0 %1695
      %v1697 = vsel %vm1678, %v1078, -inf
      %1698 = vmax.xlane.f32.xlu0 %v1697
      %v1699 = vpop.xlane.xlu0 %1698
      %v1700 = vsel %vm1678, %v1081, -inf
      %1701 = vmax.xlane.f32.xlu0 %v1700
      %v1702 = vpop.xlane.xlu0 %1701
      %v1703 = vsub.f32 %v1054, %v1681
      %v1704 = vsub.f32 %v1057, %v1684
      %v1705 = vsub.f32 %v1062, %v1687
      %v1706 = vsub.f32 %v1065, %v1690
      %v1707 = vsub.f32 %v1070, %v1693
      %v1708 = vsub.f32 %v1073, %v1696
      %v1709 = vsub.f32 %v1078, %v1699
      %v1710 = vsub.f32 %v1081, %v1702
      %v1711 = vmul.f32 %v1703, 1.442695
      %v1712 = vpow.pop %v1711
      %v1713 = vmul.f32 %v1704, 1.442695
      %v1714 = vpow.pop %v1713
      %v1715 = vmul.f32 %v1705, 1.442695
      %v1716 = vpow.pop %v1715
      %v1717 = vmul.f32 %v1706, 1.442695
      %v1718 = vpow.pop %v1717
      %v1719 = vmul.f32 %v1707, 1.442695
      %v1720 = vpow.pop %v1719
      %v1721 = vmul.f32 %v1708, 1.442695
      %v1722 = vpow.pop %v1721
      %v1723 = vmul.f32 %v1709, 1.442695
      %v1724 = vpow.pop %v1723
      %v1725 = vmul.f32 %v1710, 1.442695
      %v1726 = vpow.pop %v1725
      %1735 = vrot.lane.b32.xlu0 %v1712, 96
      %v1736 = vpop.permute.xlu0 %1735
      %1737 = vrot.lane.b32.xlu0 %v1714, 96
      %v1738 = vpop.permute.xlu0 %1737
      %1739 = vrot.lane.b32.xlu0 %v1716, 96
      %v1740 = vpop.permute.xlu0 %1739
      %1741 = vrot.lane.b32.xlu0 %v1718, 96
      %v1742 = vpop.permute.xlu0 %1741
      %1743 = vrot.lane.b32.xlu0 %v1720, 96
      %v1744 = vpop.permute.xlu0 %1743
      %1745 = vrot.lane.b32.xlu0 %v1722, 96
      %v1746 = vpop.permute.xlu0 %1745
      %1747 = vrot.lane.b32.xlu0 %v1724, 96
      %v1748 = vpop.permute.xlu0 %1747
      %1749 = vrot.lane.b32.xlu0 %v1726, 96
      %v1750 = vpop.permute.xlu0 %1749
      %vm1759 = vcmask 64512
      %v1760 = vsel %vm1759, %v1736, 0.0
      %1761 = vadd.xlane.f32.xlu0 %v1760
      %v1762 = vpop.xlane.xlu0 %1761
      %v1763 = vsel %vm1759, %v1738, 0.0
      %1764 = vadd.xlane.f32.xlu0 %v1763
      %v1765 = vpop.xlane.xlu0 %1764
      %v1766 = vsel %vm1759, %v1740, 0.0
      %1767 = vadd.xlane.f32.xlu0 %v1766
      %v1768 = vpop.xlane.xlu0 %1767
      %v1769 = vsel %vm1759, %v1742, 0.0
      %1770 = vadd.xlane.f32.xlu0 %v1769
      %v1771 = vpop.xlane.xlu0 %1770
      %v1772 = vsel %vm1759, %v1744, 0.0
      %1773 = vadd.xlane.f32.xlu0 %v1772
      %v1774 = vpop.xlane.xlu0 %1773
      %v1775 = vsel %vm1759, %v1746, 0.0
      %1776 = vadd.xlane.f32.xlu0 %v1775
      %v1777 = vpop.xlane.xlu0 %1776
      %v1778 = vsel %vm1759, %v1748, 0.0
      %1779 = vadd.xlane.f32.xlu0 %v1778
      %v1780 = vpop.xlane.xlu0 %1779
      %v1781 = vsel %vm1759, %v1750, 0.0
      %1782 = vadd.xlane.f32.xlu0 %v1781
      %v1783 = vpop.xlane.xlu0 %1782
      %v1784 = vrcp.pop %v1762
      %v1785 = vrcp.pop %v1765
      %v1786 = vrcp.pop %v1768
      %v1787 = vrcp.pop %v1771
      %v1788 = vrcp.pop %v1774
      %v1789 = vrcp.pop %v1777
      %v1790 = vrcp.pop %v1780
      %v1791 = vrcp.pop %v1783
      %v1792 = vmul.f32 %v1712, %v1784
      %v1793 = vmul.f32 %v1714, %v1785
      %v1794 = vmul.f32 %v1716, %v1786
      %v1795 = vmul.f32 %v1718, %v1787
      %v1796 = vmul.f32 %v1720, %v1788
      %v1797 = vmul.f32 %v1722, %v1789
      %v1798 = vmul.f32 %v1724, %v1790
      %v1799 = vmul.f32 %v1726, %v1791
      %1808 = vrot.lane.b32.xlu0 %v1792, 112
      %v1809 = vpop.permute.xlu0 %1808
      %1810 = vrot.lane.b32.xlu0 %v1793, 112
      %v1811 = vpop.permute.xlu0 %1810
      %1812 = vrot.lane.b32.xlu0 %v1794, 112
      %v1813 = vpop.permute.xlu0 %1812
      %1814 = vrot.lane.b32.xlu0 %v1795, 112
      %v1815 = vpop.permute.xlu0 %1814
      %1816 = vrot.lane.b32.xlu0 %v1796, 112
      %v1817 = vpop.permute.xlu0 %1816
      %1818 = vrot.lane.b32.xlu0 %v1797, 112
      %v1819 = vpop.permute.xlu0 %1818
      %1820 = vrot.lane.b32.xlu0 %v1798, 112
      %v1821 = vpop.permute.xlu0 %1820
      %1822 = vrot.lane.b32.xlu0 %v1799, 112
      %v1823 = vpop.permute.xlu0 %1822
      %v1832 = vmul.f32 %v1516, %v1809
      %v1833 = vmul.f32 %v1517, %v1811
      %v1834 = vmul.f32 %v1518, %v1813
      %v1835 = vmul.f32 %v1519, %v1815
      %v1836 = vmul.f32 %v1520, %v1817
      %v1837 = vmul.f32 %v1521, %v1819
      %v1838 = vmul.f32 %v1522, %v1821
      %v1839 = vmul.f32 %v1523, %v1823
      %v1840 = vmul.f32 %v1604, %v1809
      %v1841 = vmul.f32 %v1605, %v1811
      %v1842 = vmul.f32 %v1606, %v1813
      %v1843 = vmul.f32 %v1607, %v1815
      %v1844 = vmul.f32 %v1608, %v1817
      %v1845 = vmul.f32 %v1609, %v1819
      %v1846 = vmul.f32 %v1610, %v1821
      %v1847 = vmul.f32 %v1611, %v1823
      %v1848 = vmul.f32 %v1628, %v1809
      %v1849 = vmul.f32 %v1629, %v1811
      %v1850 = vmul.f32 %v1630, %v1813
      %v1851 = vmul.f32 %v1631, %v1815
      %v1852 = vmul.f32 %v1632, %v1817
      %v1853 = vmul.f32 %v1633, %v1819
      %v1854 = vmul.f32 %v1634, %v1821
      %v1855 = vmul.f32 %v1635, %v1823
      %v1856 = vmul.f32 %v1652, %v1809
      %v1857 = vmul.f32 %v1653, %v1811
      %v1858 = vmul.f32 %v1654, %v1813
      %v1859 = vmul.f32 %v1655, %v1815
      %v1860 = vmul.f32 %v1656, %v1817
      %v1861 = vmul.f32 %v1657, %v1819
      %v1862 = vmul.f32 %v1658, %v1821
      %v1863 = vmul.f32 %v1659, %v1823
      %1864 = vset.pattern.permute.xlu0 0
      %1865 = vperm.xlu0 %1864, %v1404
      %v1866 = vpop.permute.xlu0 %1865
      %1867 = vset.pattern.permute.xlu0 0
      %1868 = vperm.xlu0 %1867, %v1405
      %v1869 = vpop.permute.xlu0 %1868
      %1870 = vset.pattern.permute.xlu0 0
      %1871 = vperm.xlu0 %1870, %v1406
      %v1872 = vpop.permute.xlu0 %1871
      %1873 = vset.pattern.permute.xlu0 0
      %1874 = vperm.xlu0 %1873, %v1407
      %v1875 = vpop.permute.xlu0 %1874
      %1876 = vset.pattern.permute.xlu0 0
      %1877 = vperm.xlu0 %1876, %v1408
      %v1878 = vpop.permute.xlu0 %1877
      %1879 = vset.pattern.permute.xlu0 0
      %1880 = vperm.xlu0 %1879, %v1409
      %v1881 = vpop.permute.xlu0 %1880
      %1882 = vset.pattern.permute.xlu0 0
      %1883 = vperm.xlu0 %1882, %v1410
      %v1884 = vpop.permute.xlu0 %1883
      %1885 = vset.pattern.permute.xlu0 0
      %1886 = vperm.xlu0 %1885, %v1411
      %v1887 = vpop.permute.xlu0 %1886
      %vm1888 = vcmp.eq.s32.totalorder %v1866, %v1661
      %vm1889 = vcmp.eq.s32.totalorder %v1869, %v1661
      %vm1890 = vcmp.eq.s32.totalorder %v1872, %v1661
      %vm1891 = vcmp.eq.s32.totalorder %v1875, %v1661
      %vm1892 = vcmp.eq.s32.totalorder %v1878, %v1661
      %vm1893 = vcmp.eq.s32.totalorder %v1881, %v1661
      %vm1894 = vcmp.eq.s32.totalorder %v1884, %v1661
      %vm1895 = vcmp.eq.s32.totalorder %v1887, %v1661
      %1897 = vset.pattern.permute.xlu0 16
      %1898 = vperm.xlu0 %1897, %v1832
      %v1899 = vpop.permute.xlu0 %1898
      %1902 = vset.pattern.permute.xlu0 16
      %1903 = vperm.xlu0 %1902, %v1833
      %v1904 = vpop.permute.xlu0 %1903
      %1907 = vset.pattern.permute.xlu0 16
      %1908 = vperm.xlu0 %1907, %v1834
      %v1909 = vpop.permute.xlu0 %1908
      %1912 = vset.pattern.permute.xlu0 16
      %1913 = vperm.xlu0 %1912, %v1835
      %v1914 = vpop.permute.xlu0 %1913
      %1917 = vset.pattern.permute.xlu0 16
      %1918 = vperm.xlu0 %1917, %v1836
      %v1919 = vpop.permute.xlu0 %1918
      %1922 = vset.pattern.permute.xlu0 16
      %1923 = vperm.xlu0 %1922, %v1837
      %v1924 = vpop.permute.xlu0 %1923
      %1927 = vset.pattern.permute.xlu0 16
      %1928 = vperm.xlu0 %1927, %v1838
      %v1929 = vpop.permute.xlu0 %1928
      %1932 = vset.pattern.permute.xlu0 16
      %1933 = vperm.xlu0 %1932, %v1839
      %v1934 = vpop.permute.xlu0 %1933
      %v1936 = vsel %vm1888, %v1899, 0.0
      %v1937 = vsel %vm1889, %v1904, 0.0
      %v1938 = vsel %vm1890, %v1909, 0.0
      %v1939 = vsel %vm1891, %v1914, 0.0
      %v1940 = vsel %vm1892, %v1919, 0.0
      %v1941 = vsel %vm1893, %v1924, 0.0
      %v1942 = vsel %vm1894, %v1929, 0.0
      %v1943 = vsel %vm1895, %v1934, 0.0
      %1944 = vset.pattern.permute.xlu0 0
      %1945 = vperm.xlu0 %1944, %v1412
      %v1946 = vpop.permute.xlu0 %1945
      %1947 = vset.pattern.permute.xlu0 0
      %1948 = vperm.xlu0 %1947, %v1413
      %v1949 = vpop.permute.xlu0 %1948
      %1950 = vset.pattern.permute.xlu0 0
      %1951 = vperm.xlu0 %1950, %v1414
      %v1952 = vpop.permute.xlu0 %1951
      %1953 = vset.pattern.permute.xlu0 0
      %1954 = vperm.xlu0 %1953, %v1415
      %v1955 = vpop.permute.xlu0 %1954
      %1956 = vset.pattern.permute.xlu0 0
      %1957 = vperm.xlu0 %1956, %v1416
      %v1958 = vpop.permute.xlu0 %1957
      %1959 = vset.pattern.permute.xlu0 0
      %1960 = vperm.xlu0 %1959, %v1417
      %v1961 = vpop.permute.xlu0 %1960
      %1962 = vset.pattern.permute.xlu0 0
      %1963 = vperm.xlu0 %1962, %v1418
      %v1964 = vpop.permute.xlu0 %1963
      %1965 = vset.pattern.permute.xlu0 0
      %1966 = vperm.xlu0 %1965, %v1419
      %v1967 = vpop.permute.xlu0 %1966
      %vm1968 = vcmp.eq.s32.totalorder %v1946, %v1661
      %vm1969 = vcmp.eq.s32.totalorder %v1949, %v1661
      %vm1970 = vcmp.eq.s32.totalorder %v1952, %v1661
      %vm1971 = vcmp.eq.s32.totalorder %v1955, %v1661
      %vm1972 = vcmp.eq.s32.totalorder %v1958, %v1661
      %vm1973 = vcmp.eq.s32.totalorder %v1961, %v1661
      %vm1974 = vcmp.eq.s32.totalorder %v1964, %v1661
      %vm1975 = vcmp.eq.s32.totalorder %v1967, %v1661
      %1977 = vset.pattern.permute.xlu0 16
      %1978 = vperm.xlu0 %1977, %v1840
      %v1979 = vpop.permute.xlu0 %1978
      %1982 = vset.pattern.permute.xlu0 16
      %1983 = vperm.xlu0 %1982, %v1841
      %v1984 = vpop.permute.xlu0 %1983
      %1987 = vset.pattern.permute.xlu0 16
      %1988 = vperm.xlu0 %1987, %v1842
      %v1989 = vpop.permute.xlu0 %1988
      %1992 = vset.pattern.permute.xlu0 16
      %1993 = vperm.xlu0 %1992, %v1843
      %v1994 = vpop.permute.xlu0 %1993
      %1997 = vset.pattern.permute.xlu0 16
      %1998 = vperm.xlu0 %1997, %v1844
      %v1999 = vpop.permute.xlu0 %1998
      %2002 = vset.pattern.permute.xlu0 16
      %2003 = vperm.xlu0 %2002, %v1845
      %v2004 = vpop.permute.xlu0 %2003
      %2007 = vset.pattern.permute.xlu0 16
      %2008 = vperm.xlu0 %2007, %v1846
      %v2009 = vpop.permute.xlu0 %2008
      %2012 = vset.pattern.permute.xlu0 16
      %2013 = vperm.xlu0 %2012, %v1847
      %v2014 = vpop.permute.xlu0 %2013
      %v2016 = vsel %vm1968, %v1979, 0.0
      %v2017 = vsel %vm1969, %v1984, 0.0
      %v2018 = vsel %vm1970, %v1989, 0.0
      %v2019 = vsel %vm1971, %v1994, 0.0
      %v2020 = vsel %vm1972, %v1999, 0.0
      %v2021 = vsel %vm1973, %v2004, 0.0
      %v2022 = vsel %vm1974, %v2009, 0.0
      %v2023 = vsel %vm1975, %v2014, 0.0
      %v2024 = vadd.f32 %v1936, %v2016
      %v2025 = vadd.f32 %v1937, %v2017
      %v2026 = vadd.f32 %v1938, %v2018
      %v2027 = vadd.f32 %v1939, %v2019
      %v2028 = vadd.f32 %v1940, %v2020
      %v2029 = vadd.f32 %v1941, %v2021
      %v2030 = vadd.f32 %v1942, %v2022
      %v2031 = vadd.f32 %v1943, %v2023
      %2032 = vset.pattern.permute.xlu0 0
      %2033 = vperm.xlu0 %2032, %v1420
      %v2034 = vpop.permute.xlu0 %2033
      %2035 = vset.pattern.permute.xlu0 0
      %2036 = vperm.xlu0 %2035, %v1421
      %v2037 = vpop.permute.xlu0 %2036
      %2038 = vset.pattern.permute.xlu0 0
      %2039 = vperm.xlu0 %2038, %v1422
      %v2040 = vpop.permute.xlu0 %2039
      %2041 = vset.pattern.permute.xlu0 0
      %2042 = vperm.xlu0 %2041, %v1423
      %v2043 = vpop.permute.xlu0 %2042
      %2044 = vset.pattern.permute.xlu0 0
      %2045 = vperm.xlu0 %2044, %v1424
      %v2046 = vpop.permute.xlu0 %2045
      %2047 = vset.pattern.permute.xlu0 0
      %2048 = vperm.xlu0 %2047, %v1425
      %v2049 = vpop.permute.xlu0 %2048
      %2050 = vset.pattern.permute.xlu0 0
      %2051 = vperm.xlu0 %2050, %v1426
      %v2052 = vpop.permute.xlu0 %2051
      %2053 = vset.pattern.permute.xlu0 0
      %2054 = vperm.xlu0 %2053, %v1427
      %v2055 = vpop.permute.xlu0 %2054
      %vm2056 = vcmp.eq.s32.totalorder %v2034, %v1661
      %vm2057 = vcmp.eq.s32.totalorder %v2037, %v1661
      %vm2058 = vcmp.eq.s32.totalorder %v2040, %v1661
      %vm2059 = vcmp.eq.s32.totalorder %v2043, %v1661
      %vm2060 = vcmp.eq.s32.totalorder %v2046, %v1661
      %vm2061 = vcmp.eq.s32.totalorder %v2049, %v1661
      %vm2062 = vcmp.eq.s32.totalorder %v2052, %v1661
      %vm2063 = vcmp.eq.s32.totalorder %v2055, %v1661
      %2065 = vset.pattern.permute.xlu0 16
      %2066 = vperm.xlu0 %2065, %v1848
      %v2067 = vpop.permute.xlu0 %2066
      %2070 = vset.pattern.permute.xlu0 16
      %2071 = vperm.xlu0 %2070, %v1849
      %v2072 = vpop.permute.xlu0 %2071
      %2075 = vset.pattern.permute.xlu0 16
      %2076 = vperm.xlu0 %2075, %v1850
      %v2077 = vpop.permute.xlu0 %2076
      %2080 = vset.pattern.permute.xlu0 16
      %2081 = vperm.xlu0 %2080, %v1851
      %v2082 = vpop.permute.xlu0 %2081
      %2085 = vset.pattern.permute.xlu0 16
      %2086 = vperm.xlu0 %2085, %v1852
      %v2087 = vpop.permute.xlu0 %2086
      %2090 = vset.pattern.permute.xlu0 16
      %2091 = vperm.xlu0 %2090, %v1853
      %v2092 = vpop.permute.xlu0 %2091
      %2095 = vset.pattern.permute.xlu0 16
      %2096 = vperm.xlu0 %2095, %v1854
      %v2097 = vpop.permute.xlu0 %2096
      %2100 = vset.pattern.permute.xlu0 16
      %2101 = vperm.xlu0 %2100, %v1855
      %v2102 = vpop.permute.xlu0 %2101
      %v2104 = vsel %vm2056, %v2067, 0.0
      %v2105 = vsel %vm2057, %v2072, 0.0
      %v2106 = vsel %vm2058, %v2077, 0.0
      %v2107 = vsel %vm2059, %v2082, 0.0
      %v2108 = vsel %vm2060, %v2087, 0.0
      %v2109 = vsel %vm2061, %v2092, 0.0
      %v2110 = vsel %vm2062, %v2097, 0.0
      %v2111 = vsel %vm2063, %v2102, 0.0
      %v2112 = vadd.f32 %v2024, %v2104
      %v2113 = vadd.f32 %v2025, %v2105
      %v2114 = vadd.f32 %v2026, %v2106
      %v2115 = vadd.f32 %v2027, %v2107
      %v2116 = vadd.f32 %v2028, %v2108
      %v2117 = vadd.f32 %v2029, %v2109
      %v2118 = vadd.f32 %v2030, %v2110
      %v2119 = vadd.f32 %v2031, %v2111
      %2120 = vset.pattern.permute.xlu0 0
      %2121 = vperm.xlu0 %2120, %v1428
      %v2122 = vpop.permute.xlu0 %2121
      %2123 = vset.pattern.permute.xlu0 0
      %2124 = vperm.xlu0 %2123, %v1429
      %v2125 = vpop.permute.xlu0 %2124
      %2126 = vset.pattern.permute.xlu0 0
      %2127 = vperm.xlu0 %2126, %v1430
      %v2128 = vpop.permute.xlu0 %2127
      %2129 = vset.pattern.permute.xlu0 0
      %2130 = vperm.xlu0 %2129, %v1431
      %v2131 = vpop.permute.xlu0 %2130
      %2132 = vset.pattern.permute.xlu0 0
      %2133 = vperm.xlu0 %2132, %v1432
      %v2134 = vpop.permute.xlu0 %2133
      %2135 = vset.pattern.permute.xlu0 0
      %2136 = vperm.xlu0 %2135, %v1433
      %v2137 = vpop.permute.xlu0 %2136
      %2138 = vset.pattern.permute.xlu0 0
      %2139 = vperm.xlu0 %2138, %v1434
      %v2140 = vpop.permute.xlu0 %2139
      %2141 = vset.pattern.permute.xlu0 0
      %2142 = vperm.xlu0 %2141, %v1435
      %v2143 = vpop.permute.xlu0 %2142
      %vm2144 = vcmp.eq.s32.totalorder %v2122, %v1661
      %vm2145 = vcmp.eq.s32.totalorder %v2125, %v1661
      %vm2146 = vcmp.eq.s32.totalorder %v2128, %v1661
      %vm2147 = vcmp.eq.s32.totalorder %v2131, %v1661
      %vm2148 = vcmp.eq.s32.totalorder %v2134, %v1661
      %vm2149 = vcmp.eq.s32.totalorder %v2137, %v1661
      %vm2150 = vcmp.eq.s32.totalorder %v2140, %v1661
      %vm2151 = vcmp.eq.s32.totalorder %v2143, %v1661
      %2153 = vset.pattern.permute.xlu0 16
      %2154 = vperm.xlu0 %2153, %v1856
      %v2155 = vpop.permute.xlu0 %2154
      %2158 = vset.pattern.permute.xlu0 16
      %2159 = vperm.xlu0 %2158, %v1857
      %v2160 = vpop.permute.xlu0 %2159
      %2163 = vset.pattern.permute.xlu0 16
      %2164 = vperm.xlu0 %2163, %v1858
      %v2165 = vpop.permute.xlu0 %2164
      %2168 = vset.pattern.permute.xlu0 16
      %2169 = vperm.xlu0 %2168, %v1859
      %v2170 = vpop.permute.xlu0 %2169
      %2173 = vset.pattern.permute.xlu0 16
      %2174 = vperm.xlu0 %2173, %v1860
      %v2175 = vpop.permute.xlu0 %2174
      %2178 = vset.pattern.permute.xlu0 16
      %2179 = vperm.xlu0 %2178, %v1861
      %v2180 = vpop.permute.xlu0 %2179
      %2183 = vset.pattern.permute.xlu0 16
      %2184 = vperm.xlu0 %2183, %v1862
      %v2185 = vpop.permute.xlu0 %2184
      %2188 = vset.pattern.permute.xlu0 16
      %2189 = vperm.xlu0 %2188, %v1863
      %v2190 = vpop.permute.xlu0 %2189
      %v2192 = vsel %vm2144, %v2155, 0.0
      %v2193 = vsel %vm2145, %v2160, 0.0
      %v2194 = vsel %vm2146, %v2165, 0.0
      %v2195 = vsel %vm2147, %v2170, 0.0
      %v2196 = vsel %vm2148, %v2175, 0.0
      %v2197 = vsel %vm2149, %v2180, 0.0
      %v2198 = vsel %vm2150, %v2185, 0.0
      %v2199 = vsel %vm2151, %v2190, 0.0
      %v2200 = vadd.f32 %v2112, %v2192
      %v2201 = vadd.f32 %v2113, %v2193
      %v2202 = vadd.f32 %v2114, %v2194
      %v2203 = vadd.f32 %v2115, %v2195
      %v2204 = vadd.f32 %v2116, %v2196
      %v2205 = vadd.f32 %v2117, %v2197
      %v2206 = vadd.f32 %v2118, %v2198
      %v2207 = vadd.f32 %v2119, %v2199
      %v2208 = vadd.f32 %v2200, 0.0
      %v2209 = vadd.f32 %v2201, 0.0
      %v2210 = vadd.f32 %v2202, 0.0
      %v2211 = vadd.f32 %v2203, 0.0
      %v2212 = vadd.f32 %v2204, 0.0
      %v2213 = vadd.f32 %v2205, 0.0
      %v2214 = vadd.f32 %v2206, 0.0
      %v2215 = vadd.f32 %v2207, 0.0
      %2216 = vset.pattern.permute.xlu0 1
      %2217 = vperm.xlu0 %2216, %v1404
      %v2218 = vpop.permute.xlu0 %2217
      %2219 = vset.pattern.permute.xlu0 1
      %2220 = vperm.xlu0 %2219, %v1405
      %v2221 = vpop.permute.xlu0 %2220
      %2222 = vset.pattern.permute.xlu0 1
      %2223 = vperm.xlu0 %2222, %v1406
      %v2224 = vpop.permute.xlu0 %2223
      %2225 = vset.pattern.permute.xlu0 1
      %2226 = vperm.xlu0 %2225, %v1407
      %v2227 = vpop.permute.xlu0 %2226
      %2228 = vset.pattern.permute.xlu0 1
      %2229 = vperm.xlu0 %2228, %v1408
      %v2230 = vpop.permute.xlu0 %2229
      %2231 = vset.pattern.permute.xlu0 1
      %2232 = vperm.xlu0 %2231, %v1409
      %v2233 = vpop.permute.xlu0 %2232
      %2234 = vset.pattern.permute.xlu0 1
      %2235 = vperm.xlu0 %2234, %v1410
      %v2236 = vpop.permute.xlu0 %2235
      %2237 = vset.pattern.permute.xlu0 1
      %2238 = vperm.xlu0 %2237, %v1411
      %v2239 = vpop.permute.xlu0 %2238
      %vm2240 = vcmp.eq.s32.totalorder %v2218, %v1661
      %vm2241 = vcmp.eq.s32.totalorder %v2221, %v1661
      %vm2242 = vcmp.eq.s32.totalorder %v2224, %v1661
      %vm2243 = vcmp.eq.s32.totalorder %v2227, %v1661
      %vm2244 = vcmp.eq.s32.totalorder %v2230, %v1661
      %vm2245 = vcmp.eq.s32.totalorder %v2233, %v1661
      %vm2246 = vcmp.eq.s32.totalorder %v2236, %v1661
      %vm2247 = vcmp.eq.s32.totalorder %v2239, %v1661
      %2248 = vset.pattern.permute.xlu0 17
      %2249 = vperm.xlu0 %2248, %v1832
      %v2250 = vpop.permute.xlu0 %2249
      %2252 = vset.pattern.permute.xlu0 17
      %2253 = vperm.xlu0 %2252, %v1833
      %v2254 = vpop.permute.xlu0 %2253
      %2256 = vset.pattern.permute.xlu0 17
      %2257 = vperm.xlu0 %2256, %v1834
      %v2258 = vpop.permute.xlu0 %2257
      %2260 = vset.pattern.permute.xlu0 17
      %2261 = vperm.xlu0 %2260, %v1835
      %v2262 = vpop.permute.xlu0 %2261
      %2264 = vset.pattern.permute.xlu0 17
      %2265 = vperm.xlu0 %2264, %v1836
      %v2266 = vpop.permute.xlu0 %2265
      %2268 = vset.pattern.permute.xlu0 17
      %2269 = vperm.xlu0 %2268, %v1837
      %v2270 = vpop.permute.xlu0 %2269
      %2272 = vset.pattern.permute.xlu0 17
      %2273 = vperm.xlu0 %2272, %v1838
      %v2274 = vpop.permute.xlu0 %2273
      %2276 = vset.pattern.permute.xlu0 17
      %2277 = vperm.xlu0 %2276, %v1839
      %v2278 = vpop.permute.xlu0 %2277
      %v2280 = vsel %vm2240, %v2250, 0.0
      %v2281 = vsel %vm2241, %v2254, 0.0
      %v2282 = vsel %vm2242, %v2258, 0.0
      %v2283 = vsel %vm2243, %v2262, 0.0
      %v2284 = vsel %vm2244, %v2266, 0.0
      %v2285 = vsel %vm2245, %v2270, 0.0
      %v2286 = vsel %vm2246, %v2274, 0.0
      %v2287 = vsel %vm2247, %v2278, 0.0
      %2288 = vset.pattern.permute.xlu0 1
      %2289 = vperm.xlu0 %2288, %v1412
      %v2290 = vpop.permute.xlu0 %2289
      %2291 = vset.pattern.permute.xlu0 1
      %2292 = vperm.xlu0 %2291, %v1413
      %v2293 = vpop.permute.xlu0 %2292
      %2294 = vset.pattern.permute.xlu0 1
      %2295 = vperm.xlu0 %2294, %v1414
      %v2296 = vpop.permute.xlu0 %2295
      %2297 = vset.pattern.permute.xlu0 1
      %2298 = vperm.xlu0 %2297, %v1415
      %v2299 = vpop.permute.xlu0 %2298
      %2300 = vset.pattern.permute.xlu0 1
      %2301 = vperm.xlu0 %2300, %v1416
      %v2302 = vpop.permute.xlu0 %2301
      %2303 = vset.pattern.permute.xlu0 1
      %2304 = vperm.xlu0 %2303, %v1417
      %v2305 = vpop.permute.xlu0 %2304
      %2306 = vset.pattern.permute.xlu0 1
      %2307 = vperm.xlu0 %2306, %v1418
      %v2308 = vpop.permute.xlu0 %2307
      %2309 = vset.pattern.permute.xlu0 1
      %2310 = vperm.xlu0 %2309, %v1419
      %v2311 = vpop.permute.xlu0 %2310
      %vm2312 = vcmp.eq.s32.totalorder %v2290, %v1661
      %vm2313 = vcmp.eq.s32.totalorder %v2293, %v1661
      %vm2314 = vcmp.eq.s32.totalorder %v2296, %v1661
      %vm2315 = vcmp.eq.s32.totalorder %v2299, %v1661
      %vm2316 = vcmp.eq.s32.totalorder %v2302, %v1661
      %vm2317 = vcmp.eq.s32.totalorder %v2305, %v1661
      %vm2318 = vcmp.eq.s32.totalorder %v2308, %v1661
      %vm2319 = vcmp.eq.s32.totalorder %v2311, %v1661
      %2320 = vset.pattern.permute.xlu0 17
      %2321 = vperm.xlu0 %2320, %v1840
      %v2322 = vpop.permute.xlu0 %2321
      %2324 = vset.pattern.permute.xlu0 17
      %2325 = vperm.xlu0 %2324, %v1841
      %v2326 = vpop.permute.xlu0 %2325
      %2328 = vset.pattern.permute.xlu0 17
      %2329 = vperm.xlu0 %2328, %v1842
      %v2330 = vpop.permute.xlu0 %2329
      %2332 = vset.pattern.permute.xlu0 17
      %2333 = vperm.xlu0 %2332, %v1843
      %v2334 = vpop.permute.xlu0 %2333
      %2336 = vset.pattern.permute.xlu0 17
      %2337 = vperm.xlu0 %2336, %v1844
      %v2338 = vpop.permute.xlu0 %2337
      %2340 = vset.pattern.permute.xlu0 17
      %2341 = vperm.xlu0 %2340, %v1845
      %v2342 = vpop.permute.xlu0 %2341
      %2344 = vset.pattern.permute.xlu0 17
      %2345 = vperm.xlu0 %2344, %v1846
      %v2346 = vpop.permute.xlu0 %2345
      %2348 = vset.pattern.permute.xlu0 17
      %2349 = vperm.xlu0 %2348, %v1847
      %v2350 = vpop.permute.xlu0 %2349
      %v2352 = vsel %vm2312, %v2322, 0.0
      %v2353 = vsel %vm2313, %v2326, 0.0
      %v2354 = vsel %vm2314, %v2330, 0.0
      %v2355 = vsel %vm2315, %v2334, 0.0
      %v2356 = vsel %vm2316, %v2338, 0.0
      %v2357 = vsel %vm2317, %v2342, 0.0
      %v2358 = vsel %vm2318, %v2346, 0.0
      %v2359 = vsel %vm2319, %v2350, 0.0
      %v2360 = vadd.f32 %v2280, %v2352
      %v2361 = vadd.f32 %v2281, %v2353
      %v2362 = vadd.f32 %v2282, %v2354
      %v2363 = vadd.f32 %v2283, %v2355
      %v2364 = vadd.f32 %v2284, %v2356
      %v2365 = vadd.f32 %v2285, %v2357
      %v2366 = vadd.f32 %v2286, %v2358
      %v2367 = vadd.f32 %v2287, %v2359
      %2368 = vset.pattern.permute.xlu0 1
      %2369 = vperm.xlu0 %2368, %v1420
      %v2370 = vpop.permute.xlu0 %2369
      %2371 = vset.pattern.permute.xlu0 1
      %2372 = vperm.xlu0 %2371, %v1421
      %v2373 = vpop.permute.xlu0 %2372
      %2374 = vset.pattern.permute.xlu0 1
      %2375 = vperm.xlu0 %2374, %v1422
      %v2376 = vpop.permute.xlu0 %2375
      %2377 = vset.pattern.permute.xlu0 1
      %2378 = vperm.xlu0 %2377, %v1423
      %v2379 = vpop.permute.xlu0 %2378
      %2380 = vset.pattern.permute.xlu0 1
      %2381 = vperm.xlu0 %2380, %v1424
      %v2382 = vpop.permute.xlu0 %2381
      %2383 = vset.pattern.permute.xlu0 1
      %2384 = vperm.xlu0 %2383, %v1425
      %v2385 = vpop.permute.xlu0 %2384
      %2386 = vset.pattern.permute.xlu0 1
      %2387 = vperm.xlu0 %2386, %v1426
      %v2388 = vpop.permute.xlu0 %2387
      %2389 = vset.pattern.permute.xlu0 1
      %2390 = vperm.xlu0 %2389, %v1427
      %v2391 = vpop.permute.xlu0 %2390
      %vm2392 = vcmp.eq.s32.totalorder %v2370, %v1661
      %vm2393 = vcmp.eq.s32.totalorder %v2373, %v1661
      %vm2394 = vcmp.eq.s32.totalorder %v2376, %v1661
      %vm2395 = vcmp.eq.s32.totalorder %v2379, %v1661
      %vm2396 = vcmp.eq.s32.totalorder %v2382, %v1661
      %vm2397 = vcmp.eq.s32.totalorder %v2385, %v1661
      %vm2398 = vcmp.eq.s32.totalorder %v2388, %v1661
      %vm2399 = vcmp.eq.s32.totalorder %v2391, %v1661
      %2400 = vset.pattern.permute.xlu0 17
      %2401 = vperm.xlu0 %2400, %v1848
      %v2402 = vpop.permute.xlu0 %2401
      %2404 = vset.pattern.permute.xlu0 17
      %2405 = vperm.xlu0 %2404, %v1849
      %v2406 = vpop.permute.xlu0 %2405
      %2408 = vset.pattern.permute.xlu0 17
      %2409 = vperm.xlu0 %2408, %v1850
      %v2410 = vpop.permute.xlu0 %2409
      %2412 = vset.pattern.permute.xlu0 17
      %2413 = vperm.xlu0 %2412, %v1851
      %v2414 = vpop.permute.xlu0 %2413
      %2416 = vset.pattern.permute.xlu0 17
      %2417 = vperm.xlu0 %2416, %v1852
      %v2418 = vpop.permute.xlu0 %2417
      %2420 = vset.pattern.permute.xlu0 17
      %2421 = vperm.xlu0 %2420, %v1853
      %v2422 = vpop.permute.xlu0 %2421
      %2424 = vset.pattern.permute.xlu0 17
      %2425 = vperm.xlu0 %2424, %v1854
      %v2426 = vpop.permute.xlu0 %2425
      %2428 = vset.pattern.permute.xlu0 17
      %2429 = vperm.xlu0 %2428, %v1855
      %v2430 = vpop.permute.xlu0 %2429
      %v2432 = vsel %vm2392, %v2402, 0.0
      %v2433 = vsel %vm2393, %v2406, 0.0
      %v2434 = vsel %vm2394, %v2410, 0.0
      %v2435 = vsel %vm2395, %v2414, 0.0
      %v2436 = vsel %vm2396, %v2418, 0.0
      %v2437 = vsel %vm2397, %v2422, 0.0
      %v2438 = vsel %vm2398, %v2426, 0.0
      %v2439 = vsel %vm2399, %v2430, 0.0
      %v2440 = vadd.f32 %v2360, %v2432
      %v2441 = vadd.f32 %v2361, %v2433
      %v2442 = vadd.f32 %v2362, %v2434
      %v2443 = vadd.f32 %v2363, %v2435
      %v2444 = vadd.f32 %v2364, %v2436
      %v2445 = vadd.f32 %v2365, %v2437
      %v2446 = vadd.f32 %v2366, %v2438
      %v2447 = vadd.f32 %v2367, %v2439
      %2448 = vset.pattern.permute.xlu0 1
      %2449 = vperm.xlu0 %2448, %v1428
      %v2450 = vpop.permute.xlu0 %2449
      %2451 = vset.pattern.permute.xlu0 1
      %2452 = vperm.xlu0 %2451, %v1429
      %v2453 = vpop.permute.xlu0 %2452
      %2454 = vset.pattern.permute.xlu0 1
      %2455 = vperm.xlu0 %2454, %v1430
      %v2456 = vpop.permute.xlu0 %2455
      %2457 = vset.pattern.permute.xlu0 1
      %2458 = vperm.xlu0 %2457, %v1431
      %v2459 = vpop.permute.xlu0 %2458
      %2460 = vset.pattern.permute.xlu0 1
      %2461 = vperm.xlu0 %2460, %v1432
      %v2462 = vpop.permute.xlu0 %2461
      %2463 = vset.pattern.permute.xlu0 1
      %2464 = vperm.xlu0 %2463, %v1433
      %v2465 = vpop.permute.xlu0 %2464
      %2466 = vset.pattern.permute.xlu0 1
      %2467 = vperm.xlu0 %2466, %v1434
      %v2468 = vpop.permute.xlu0 %2467
      %2469 = vset.pattern.permute.xlu0 1
      %2470 = vperm.xlu0 %2469, %v1435
      %v2471 = vpop.permute.xlu0 %2470
      %vm2472 = vcmp.eq.s32.totalorder %v2450, %v1661
      %vm2473 = vcmp.eq.s32.totalorder %v2453, %v1661
      %vm2474 = vcmp.eq.s32.totalorder %v2456, %v1661
      %vm2475 = vcmp.eq.s32.totalorder %v2459, %v1661
      %vm2476 = vcmp.eq.s32.totalorder %v2462, %v1661
      %vm2477 = vcmp.eq.s32.totalorder %v2465, %v1661
      %vm2478 = vcmp.eq.s32.totalorder %v2468, %v1661
      %vm2479 = vcmp.eq.s32.totalorder %v2471, %v1661
      %2480 = vset.pattern.permute.xlu0 17
      %2481 = vperm.xlu0 %2480, %v1856
      %v2482 = vpop.permute.xlu0 %2481
      %2484 = vset.pattern.permute.xlu0 17
      %2485 = vperm.xlu0 %2484, %v1857
      %v2486 = vpop.permute.xlu0 %2485
      %2488 = vset.pattern.permute.xlu0 17
      %2489 = vperm.xlu0 %2488, %v1858
      %v2490 = vpop.permute.xlu0 %2489
      %2492 = vset.pattern.permute.xlu0 17
      %2493 = vperm.xlu0 %2492, %v1859
      %v2494 = vpop.permute.xlu0 %2493
      %2496 = vset.pattern.permute.xlu0 17
      %2497 = vperm.xlu0 %2496, %v1860
      %v2498 = vpop.permute.xlu0 %2497
      %2500 = vset.pattern.permute.xlu0 17
      %2501 = vperm.xlu0 %2500, %v1861
      %v2502 = vpop.permute.xlu0 %2501
      %2504 = vset.pattern.permute.xlu0 17
      %2505 = vperm.xlu0 %2504, %v1862
      %v2506 = vpop.permute.xlu0 %2505
      %2508 = vset.pattern.permute.xlu0 17
      %2509 = vperm.xlu0 %2508, %v1863
      %v2510 = vpop.permute.xlu0 %2509
      %v2512 = vsel %vm2472, %v2482, 0.0
      %v2513 = vsel %vm2473, %v2486, 0.0
      %v2514 = vsel %vm2474, %v2490, 0.0
      %v2515 = vsel %vm2475, %v2494, 0.0
      %v2516 = vsel %vm2476, %v2498, 0.0
      %v2517 = vsel %vm2477, %v2502, 0.0
      %v2518 = vsel %vm2478, %v2506, 0.0
      %v2519 = vsel %vm2479, %v2510, 0.0
      %v2520 = vadd.f32 %v2440, %v2512
      %v2521 = vadd.f32 %v2441, %v2513
      %v2522 = vadd.f32 %v2442, %v2514
      %v2523 = vadd.f32 %v2443, %v2515
      %v2524 = vadd.f32 %v2444, %v2516
      %v2525 = vadd.f32 %v2445, %v2517
      %v2526 = vadd.f32 %v2446, %v2518
      %v2527 = vadd.f32 %v2447, %v2519
      %v2528 = vadd.f32 %v2208, %v2520
      %v2529 = vadd.f32 %v2209, %v2521
      %v2530 = vadd.f32 %v2210, %v2522
      %v2531 = vadd.f32 %v2211, %v2523
      %v2532 = vadd.f32 %v2212, %v2524
      %v2533 = vadd.f32 %v2213, %v2525
      %v2534 = vadd.f32 %v2214, %v2526
      %v2535 = vadd.f32 %v2215, %v2527
      %2536 = vset.pattern.permute.xlu0 2
      %2537 = vperm.xlu0 %2536, %v1404
      %v2538 = vpop.permute.xlu0 %2537
      %2539 = vset.pattern.permute.xlu0 2
      %2540 = vperm.xlu0 %2539, %v1405
      %v2541 = vpop.permute.xlu0 %2540
      %2542 = vset.pattern.permute.xlu0 2
      %2543 = vperm.xlu0 %2542, %v1406
      %v2544 = vpop.permute.xlu0 %2543
      %2545 = vset.pattern.permute.xlu0 2
      %2546 = vperm.xlu0 %2545, %v1407
      %v2547 = vpop.permute.xlu0 %2546
      %2548 = vset.pattern.permute.xlu0 2
      %2549 = vperm.xlu0 %2548, %v1408
      %v2550 = vpop.permute.xlu0 %2549
      %2551 = vset.pattern.permute.xlu0 2
      %2552 = vperm.xlu0 %2551, %v1409
      %v2553 = vpop.permute.xlu0 %2552
      %2554 = vset.pattern.permute.xlu0 2
      %2555 = vperm.xlu0 %2554, %v1410
      %v2556 = vpop.permute.xlu0 %2555
      %2557 = vset.pattern.permute.xlu0 2
      %2558 = vperm.xlu0 %2557, %v1411
      %v2559 = vpop.permute.xlu0 %2558
      %vm2560 = vcmp.eq.s32.totalorder %v2538, %v1661
      %vm2561 = vcmp.eq.s32.totalorder %v2541, %v1661
      %vm2562 = vcmp.eq.s32.totalorder %v2544, %v1661
      %vm2563 = vcmp.eq.s32.totalorder %v2547, %v1661
      %vm2564 = vcmp.eq.s32.totalorder %v2550, %v1661
      %vm2565 = vcmp.eq.s32.totalorder %v2553, %v1661
      %vm2566 = vcmp.eq.s32.totalorder %v2556, %v1661
      %vm2567 = vcmp.eq.s32.totalorder %v2559, %v1661
      %2568 = vset.pattern.permute.xlu0 18
      %2569 = vperm.xlu0 %2568, %v1832
      %v2570 = vpop.permute.xlu0 %2569
      %2572 = vset.pattern.permute.xlu0 18
      %2573 = vperm.xlu0 %2572, %v1833
      %v2574 = vpop.permute.xlu0 %2573
      %2576 = vset.pattern.permute.xlu0 18
      %2577 = vperm.xlu0 %2576, %v1834
      %v2578 = vpop.permute.xlu0 %2577
      %2580 = vset.pattern.permute.xlu0 18
      %2581 = vperm.xlu0 %2580, %v1835
      %v2582 = vpop.permute.xlu0 %2581
      %2584 = vset.pattern.permute.xlu0 18
      %2585 = vperm.xlu0 %2584, %v1836
      %v2586 = vpop.permute.xlu0 %2585
      %2588 = vset.pattern.permute.xlu0 18
      %2589 = vperm.xlu0 %2588, %v1837
      %v2590 = vpop.permute.xlu0 %2589
      %2592 = vset.pattern.permute.xlu0 18
      %2593 = vperm.xlu0 %2592, %v1838
      %v2594 = vpop.permute.xlu0 %2593
      %2596 = vset.pattern.permute.xlu0 18
      %2597 = vperm.xlu0 %2596, %v1839
      %v2598 = vpop.permute.xlu0 %2597
      %v2600 = vsel %vm2560, %v2570, 0.0
      %v2601 = vsel %vm2561, %v2574, 0.0
      %v2602 = vsel %vm2562, %v2578, 0.0
      %v2603 = vsel %vm2563, %v2582, 0.0
      %v2604 = vsel %vm2564, %v2586, 0.0
      %v2605 = vsel %vm2565, %v2590, 0.0
      %v2606 = vsel %vm2566, %v2594, 0.0
      %v2607 = vsel %vm2567, %v2598, 0.0
      %2608 = vset.pattern.permute.xlu0 2
      %2609 = vperm.xlu0 %2608, %v1412
      %v2610 = vpop.permute.xlu0 %2609
      %2611 = vset.pattern.permute.xlu0 2
      %2612 = vperm.xlu0 %2611, %v1413
      %v2613 = vpop.permute.xlu0 %2612
      %2614 = vset.pattern.permute.xlu0 2
      %2615 = vperm.xlu0 %2614, %v1414
      %v2616 = vpop.permute.xlu0 %2615
      %2617 = vset.pattern.permute.xlu0 2
      %2618 = vperm.xlu0 %2617, %v1415
      %v2619 = vpop.permute.xlu0 %2618
      %2620 = vset.pattern.permute.xlu0 2
      %2621 = vperm.xlu0 %2620, %v1416
      %v2622 = vpop.permute.xlu0 %2621
      %2623 = vset.pattern.permute.xlu0 2
      %2624 = vperm.xlu0 %2623, %v1417
      %v2625 = vpop.permute.xlu0 %2624
      %2626 = vset.pattern.permute.xlu0 2
      %2627 = vperm.xlu0 %2626, %v1418
      %v2628 = vpop.permute.xlu0 %2627
      %2629 = vset.pattern.permute.xlu0 2
      %2630 = vperm.xlu0 %2629, %v1419
      %v2631 = vpop.permute.xlu0 %2630
      %vm2632 = vcmp.eq.s32.totalorder %v2610, %v1661
      %vm2633 = vcmp.eq.s32.totalorder %v2613, %v1661
      %vm2634 = vcmp.eq.s32.totalorder %v2616, %v1661
      %vm2635 = vcmp.eq.s32.totalorder %v2619, %v1661
      %vm2636 = vcmp.eq.s32.totalorder %v2622, %v1661
      %vm2637 = vcmp.eq.s32.totalorder %v2625, %v1661
      %vm2638 = vcmp.eq.s32.totalorder %v2628, %v1661
      %vm2639 = vcmp.eq.s32.totalorder %v2631, %v1661
      %2640 = vset.pattern.permute.xlu0 18
      %2641 = vperm.xlu0 %2640, %v1840
      %v2642 = vpop.permute.xlu0 %2641
      %2644 = vset.pattern.permute.xlu0 18
      %2645 = vperm.xlu0 %2644, %v1841
      %v2646 = vpop.permute.xlu0 %2645
      %2648 = vset.pattern.permute.xlu0 18
      %2649 = vperm.xlu0 %2648, %v1842
      %v2650 = vpop.permute.xlu0 %2649
      %2652 = vset.pattern.permute.xlu0 18
      %2653 = vperm.xlu0 %2652, %v1843
      %v2654 = vpop.permute.xlu0 %2653
      %2656 = vset.pattern.permute.xlu0 18
      %2657 = vperm.xlu0 %2656, %v1844
      %v2658 = vpop.permute.xlu0 %2657
      %2660 = vset.pattern.permute.xlu0 18
      %2661 = vperm.xlu0 %2660, %v1845
      %v2662 = vpop.permute.xlu0 %2661
      %2664 = vset.pattern.permute.xlu0 18
      %2665 = vperm.xlu0 %2664, %v1846
      %v2666 = vpop.permute.xlu0 %2665
      %2668 = vset.pattern.permute.xlu0 18
      %2669 = vperm.xlu0 %2668, %v1847
      %v2670 = vpop.permute.xlu0 %2669
      %v2672 = vsel %vm2632, %v2642, 0.0
      %v2673 = vsel %vm2633, %v2646, 0.0
      %v2674 = vsel %vm2634, %v2650, 0.0
      %v2675 = vsel %vm2635, %v2654, 0.0
      %v2676 = vsel %vm2636, %v2658, 0.0
      %v2677 = vsel %vm2637, %v2662, 0.0
      %v2678 = vsel %vm2638, %v2666, 0.0
      %v2679 = vsel %vm2639, %v2670, 0.0
      %v2680 = vadd.f32 %v2600, %v2672
      %v2681 = vadd.f32 %v2601, %v2673
      %v2682 = vadd.f32 %v2602, %v2674
      %v2683 = vadd.f32 %v2603, %v2675
      %v2684 = vadd.f32 %v2604, %v2676
      %v2685 = vadd.f32 %v2605, %v2677
      %v2686 = vadd.f32 %v2606, %v2678
      %v2687 = vadd.f32 %v2607, %v2679
      %2688 = vset.pattern.permute.xlu0 2
      %2689 = vperm.xlu0 %2688, %v1420
      %v2690 = vpop.permute.xlu0 %2689
      %2691 = vset.pattern.permute.xlu0 2
      %2692 = vperm.xlu0 %2691, %v1421
      %v2693 = vpop.permute.xlu0 %2692
      %2694 = vset.pattern.permute.xlu0 2
      %2695 = vperm.xlu0 %2694, %v1422
      %v2696 = vpop.permute.xlu0 %2695
      %2697 = vset.pattern.permute.xlu0 2
      %2698 = vperm.xlu0 %2697, %v1423
      %v2699 = vpop.permute.xlu0 %2698
      %2700 = vset.pattern.permute.xlu0 2
      %2701 = vperm.xlu0 %2700, %v1424
      %v2702 = vpop.permute.xlu0 %2701
      %2703 = vset.pattern.permute.xlu0 2
      %2704 = vperm.xlu0 %2703, %v1425
      %v2705 = vpop.permute.xlu0 %2704
      %2706 = vset.pattern.permute.xlu0 2
      %2707 = vperm.xlu0 %2706, %v1426
      %v2708 = vpop.permute.xlu0 %2707
      %2709 = vset.pattern.permute.xlu0 2
      %2710 = vperm.xlu0 %2709, %v1427
      %v2711 = vpop.permute.xlu0 %2710
      %vm2712 = vcmp.eq.s32.totalorder %v2690, %v1661
      %vm2713 = vcmp.eq.s32.totalorder %v2693, %v1661
      %vm2714 = vcmp.eq.s32.totalorder %v2696, %v1661
      %vm2715 = vcmp.eq.s32.totalorder %v2699, %v1661
      %vm2716 = vcmp.eq.s32.totalorder %v2702, %v1661
      %vm2717 = vcmp.eq.s32.totalorder %v2705, %v1661
      %vm2718 = vcmp.eq.s32.totalorder %v2708, %v1661
      %vm2719 = vcmp.eq.s32.totalorder %v2711, %v1661
      %2720 = vset.pattern.permute.xlu0 18
      %2721 = vperm.xlu0 %2720, %v1848
      %v2722 = vpop.permute.xlu0 %2721
      %2724 = vset.pattern.permute.xlu0 18
      %2725 = vperm.xlu0 %2724, %v1849
      %v2726 = vpop.permute.xlu0 %2725
      %2728 = vset.pattern.permute.xlu0 18
      %2729 = vperm.xlu0 %2728, %v1850
      %v2730 = vpop.permute.xlu0 %2729
      %2732 = vset.pattern.permute.xlu0 18
      %2733 = vperm.xlu0 %2732, %v1851
      %v2734 = vpop.permute.xlu0 %2733
      %2736 = vset.pattern.permute.xlu0 18
      %2737 = vperm.xlu0 %2736, %v1852
      %v2738 = vpop.permute.xlu0 %2737
      %2740 = vset.pattern.permute.xlu0 18
      %2741 = vperm.xlu0 %2740, %v1853
      %v2742 = vpop.permute.xlu0 %2741
      %2744 = vset.pattern.permute.xlu0 18
      %2745 = vperm.xlu0 %2744, %v1854
      %v2746 = vpop.permute.xlu0 %2745
      %2748 = vset.pattern.permute.xlu0 18
      %2749 = vperm.xlu0 %2748, %v1855
      %v2750 = vpop.permute.xlu0 %2749
      %v2752 = vsel %vm2712, %v2722, 0.0
      %v2753 = vsel %vm2713, %v2726, 0.0
      %v2754 = vsel %vm2714, %v2730, 0.0
      %v2755 = vsel %vm2715, %v2734, 0.0
      %v2756 = vsel %vm2716, %v2738, 0.0
      %v2757 = vsel %vm2717, %v2742, 0.0
      %v2758 = vsel %vm2718, %v2746, 0.0
      %v2759 = vsel %vm2719, %v2750, 0.0
      %v2760 = vadd.f32 %v2680, %v2752
      %v2761 = vadd.f32 %v2681, %v2753
      %v2762 = vadd.f32 %v2682, %v2754
      %v2763 = vadd.f32 %v2683, %v2755
      %v2764 = vadd.f32 %v2684, %v2756
      %v2765 = vadd.f32 %v2685, %v2757
      %v2766 = vadd.f32 %v2686, %v2758
      %v2767 = vadd.f32 %v2687, %v2759
      %2768 = vset.pattern.permute.xlu0 2
      %2769 = vperm.xlu0 %2768, %v1428
      %v2770 = vpop.permute.xlu0 %2769
      %2771 = vset.pattern.permute.xlu0 2
      %2772 = vperm.xlu0 %2771, %v1429
      %v2773 = vpop.permute.xlu0 %2772
      %2774 = vset.pattern.permute.xlu0 2
      %2775 = vperm.xlu0 %2774, %v1430
      %v2776 = vpop.permute.xlu0 %2775
      %2777 = vset.pattern.permute.xlu0 2
      %2778 = vperm.xlu0 %2777, %v1431
      %v2779 = vpop.permute.xlu0 %2778
      %2780 = vset.pattern.permute.xlu0 2
      %2781 = vperm.xlu0 %2780, %v1432
      %v2782 = vpop.permute.xlu0 %2781
      %2783 = vset.pattern.permute.xlu0 2
      %2784 = vperm.xlu0 %2783, %v1433
      %v2785 = vpop.permute.xlu0 %2784
      %2786 = vset.pattern.permute.xlu0 2
      %2787 = vperm.xlu0 %2786, %v1434
      %v2788 = vpop.permute.xlu0 %2787
      %2789 = vset.pattern.permute.xlu0 2
      %2790 = vperm.xlu0 %2789, %v1435
      %v2791 = vpop.permute.xlu0 %2790
      %vm2792 = vcmp.eq.s32.totalorder %v2770, %v1661
      %vm2793 = vcmp.eq.s32.totalorder %v2773, %v1661
      %vm2794 = vcmp.eq.s32.totalorder %v2776, %v1661
      %vm2795 = vcmp.eq.s32.totalorder %v2779, %v1661
      %vm2796 = vcmp.eq.s32.totalorder %v2782, %v1661
      %vm2797 = vcmp.eq.s32.totalorder %v2785, %v1661
      %vm2798 = vcmp.eq.s32.totalorder %v2788, %v1661
      %vm2799 = vcmp.eq.s32.totalorder %v2791, %v1661
      %2800 = vset.pattern.permute.xlu0 18
      %2801 = vperm.xlu0 %2800, %v1856
      %v2802 = vpop.permute.xlu0 %2801
      %2804 = vset.pattern.permute.xlu0 18
      %2805 = vperm.xlu0 %2804, %v1857
      %v2806 = vpop.permute.xlu0 %2805
      %2808 = vset.pattern.permute.xlu0 18
      %2809 = vperm.xlu0 %2808, %v1858
      %v2810 = vpop.permute.xlu0 %2809
      %2812 = vset.pattern.permute.xlu0 18
      %2813 = vperm.xlu0 %2812, %v1859
      %v2814 = vpop.permute.xlu0 %2813
      %2816 = vset.pattern.permute.xlu0 18
      %2817 = vperm.xlu0 %2816, %v1860
      %v2818 = vpop.permute.xlu0 %2817
      %2820 = vset.pattern.permute.xlu0 18
      %2821 = vperm.xlu0 %2820, %v1861
      %v2822 = vpop.permute.xlu0 %2821
      %2824 = vset.pattern.permute.xlu0 18
      %2825 = vperm.xlu0 %2824, %v1862
      %v2826 = vpop.permute.xlu0 %2825
      %2828 = vset.pattern.permute.xlu0 18
      %2829 = vperm.xlu0 %2828, %v1863
      %v2830 = vpop.permute.xlu0 %2829
      %v2832 = vsel %vm2792, %v2802, 0.0
      %v2833 = vsel %vm2793, %v2806, 0.0
      %v2834 = vsel %vm2794, %v2810, 0.0
      %v2835 = vsel %vm2795, %v2814, 0.0
      %v2836 = vsel %vm2796, %v2818, 0.0
      %v2837 = vsel %vm2797, %v2822, 0.0
      %v2838 = vsel %vm2798, %v2826, 0.0
      %v2839 = vsel %vm2799, %v2830, 0.0
      %v2840 = vadd.f32 %v2760, %v2832
      %v2841 = vadd.f32 %v2761, %v2833
      %v2842 = vadd.f32 %v2762, %v2834
      %v2843 = vadd.f32 %v2763, %v2835
      %v2844 = vadd.f32 %v2764, %v2836
      %v2845 = vadd.f32 %v2765, %v2837
      %v2846 = vadd.f32 %v2766, %v2838
      %v2847 = vadd.f32 %v2767, %v2839
      %v2848 = vadd.f32 %v2528, %v2840
      %v2849 = vadd.f32 %v2529, %v2841
      %v2850 = vadd.f32 %v2530, %v2842
      %v2851 = vadd.f32 %v2531, %v2843
      %v2852 = vadd.f32 %v2532, %v2844
      %v2853 = vadd.f32 %v2533, %v2845
      %v2854 = vadd.f32 %v2534, %v2846
      %v2855 = vadd.f32 %v2535, %v2847
      %2856 = vset.pattern.permute.xlu0 3
      %2857 = vperm.xlu0 %2856, %v1404
      %v2858 = vpop.permute.xlu0 %2857
      %2859 = vset.pattern.permute.xlu0 3
      %2860 = vperm.xlu0 %2859, %v1405
      %v2861 = vpop.permute.xlu0 %2860
      %2862 = vset.pattern.permute.xlu0 3
      %2863 = vperm.xlu0 %2862, %v1406
      %v2864 = vpop.permute.xlu0 %2863
      %2865 = vset.pattern.permute.xlu0 3
      %2866 = vperm.xlu0 %2865, %v1407
      %v2867 = vpop.permute.xlu0 %2866
      %2868 = vset.pattern.permute.xlu0 3
      %2869 = vperm.xlu0 %2868, %v1408
      %v2870 = vpop.permute.xlu0 %2869
      %2871 = vset.pattern.permute.xlu0 3
      %2872 = vperm.xlu0 %2871, %v1409
      %v2873 = vpop.permute.xlu0 %2872
      %2874 = vset.pattern.permute.xlu0 3
      %2875 = vperm.xlu0 %2874, %v1410
      %v2876 = vpop.permute.xlu0 %2875
      %2877 = vset.pattern.permute.xlu0 3
      %2878 = vperm.xlu0 %2877, %v1411
      %v2879 = vpop.permute.xlu0 %2878
      %vm2880 = vcmp.eq.s32.totalorder %v2858, %v1661
      %vm2881 = vcmp.eq.s32.totalorder %v2861, %v1661
      %vm2882 = vcmp.eq.s32.totalorder %v2864, %v1661
      %vm2883 = vcmp.eq.s32.totalorder %v2867, %v1661
      %vm2884 = vcmp.eq.s32.totalorder %v2870, %v1661
      %vm2885 = vcmp.eq.s32.totalorder %v2873, %v1661
      %vm2886 = vcmp.eq.s32.totalorder %v2876, %v1661
      %vm2887 = vcmp.eq.s32.totalorder %v2879, %v1661
      %2888 = vset.pattern.permute.xlu0 19
      %2889 = vperm.xlu0 %2888, %v1832
      %v2890 = vpop.permute.xlu0 %2889
      %2892 = vset.pattern.permute.xlu0 19
      %2893 = vperm.xlu0 %2892, %v1833
      %v2894 = vpop.permute.xlu0 %2893
      %2896 = vset.pattern.permute.xlu0 19
      %2897 = vperm.xlu0 %2896, %v1834
      %v2898 = vpop.permute.xlu0 %2897
      %2900 = vset.pattern.permute.xlu0 19
      %2901 = vperm.xlu0 %2900, %v1835
      %v2902 = vpop.permute.xlu0 %2901
      %2904 = vset.pattern.permute.xlu0 19
      %2905 = vperm.xlu0 %2904, %v1836
      %v2906 = vpop.permute.xlu0 %2905
      %2908 = vset.pattern.permute.xlu0 19
      %2909 = vperm.xlu0 %2908, %v1837
      %v2910 = vpop.permute.xlu0 %2909
      %2912 = vset.pattern.permute.xlu0 19
      %2913 = vperm.xlu0 %2912, %v1838
      %v2914 = vpop.permute.xlu0 %2913
      %2916 = vset.pattern.permute.xlu0 19
      %2917 = vperm.xlu0 %2916, %v1839
      %v2918 = vpop.permute.xlu0 %2917
      %v2920 = vsel %vm2880, %v2890, 0.0
      %v2921 = vsel %vm2881, %v2894, 0.0
      %v2922 = vsel %vm2882, %v2898, 0.0
      %v2923 = vsel %vm2883, %v2902, 0.0
      %v2924 = vsel %vm2884, %v2906, 0.0
      %v2925 = vsel %vm2885, %v2910, 0.0
      %v2926 = vsel %vm2886, %v2914, 0.0
      %v2927 = vsel %vm2887, %v2918, 0.0
      %2928 = vset.pattern.permute.xlu0 3
      %2929 = vperm.xlu0 %2928, %v1412
      %v2930 = vpop.permute.xlu0 %2929
      %2931 = vset.pattern.permute.xlu0 3
      %2932 = vperm.xlu0 %2931, %v1413
      %v2933 = vpop.permute.xlu0 %2932
      %2934 = vset.pattern.permute.xlu0 3
      %2935 = vperm.xlu0 %2934, %v1414
      %v2936 = vpop.permute.xlu0 %2935
      %2937 = vset.pattern.permute.xlu0 3
      %2938 = vperm.xlu0 %2937, %v1415
      %v2939 = vpop.permute.xlu0 %2938
      %2940 = vset.pattern.permute.xlu0 3
      %2941 = vperm.xlu0 %2940, %v1416
      %v2942 = vpop.permute.xlu0 %2941
      %2943 = vset.pattern.permute.xlu0 3
      %2944 = vperm.xlu0 %2943, %v1417
      %v2945 = vpop.permute.xlu0 %2944
      %2946 = vset.pattern.permute.xlu0 3
      %2947 = vperm.xlu0 %2946, %v1418
      %v2948 = vpop.permute.xlu0 %2947
      %2949 = vset.pattern.permute.xlu0 3
      %2950 = vperm.xlu0 %2949, %v1419
      %v2951 = vpop.permute.xlu0 %2950
      %vm2952 = vcmp.eq.s32.totalorder %v2930, %v1661
      %vm2953 = vcmp.eq.s32.totalorder %v2933, %v1661
      %vm2954 = vcmp.eq.s32.totalorder %v2936, %v1661
      %vm2955 = vcmp.eq.s32.totalorder %v2939, %v1661
      %vm2956 = vcmp.eq.s32.totalorder %v2942, %v1661
      %vm2957 = vcmp.eq.s32.totalorder %v2945, %v1661
      %vm2958 = vcmp.eq.s32.totalorder %v2948, %v1661
      %vm2959 = vcmp.eq.s32.totalorder %v2951, %v1661
      %2960 = vset.pattern.permute.xlu0 19
      %2961 = vperm.xlu0 %2960, %v1840
      %v2962 = vpop.permute.xlu0 %2961
      %2964 = vset.pattern.permute.xlu0 19
      %2965 = vperm.xlu0 %2964, %v1841
      %v2966 = vpop.permute.xlu0 %2965
      %2968 = vset.pattern.permute.xlu0 19
      %2969 = vperm.xlu0 %2968, %v1842
      %v2970 = vpop.permute.xlu0 %2969
      %2972 = vset.pattern.permute.xlu0 19
      %2973 = vperm.xlu0 %2972, %v1843
      %v2974 = vpop.permute.xlu0 %2973
      %2976 = vset.pattern.permute.xlu0 19
      %2977 = vperm.xlu0 %2976, %v1844
      %v2978 = vpop.permute.xlu0 %2977
      %2980 = vset.pattern.permute.xlu0 19
      %2981 = vperm.xlu0 %2980, %v1845
      %v2982 = vpop.permute.xlu0 %2981
      %2984 = vset.pattern.permute.xlu0 19
      %2985 = vperm.xlu0 %2984, %v1846
      %v2986 = vpop.permute.xlu0 %2985
      %2988 = vset.pattern.permute.xlu0 19
      %2989 = vperm.xlu0 %2988, %v1847
      %v2990 = vpop.permute.xlu0 %2989
      %v2992 = vsel %vm2952, %v2962, 0.0
      %v2993 = vsel %vm2953, %v2966, 0.0
      %v2994 = vsel %vm2954, %v2970, 0.0
      %v2995 = vsel %vm2955, %v2974, 0.0
      %v2996 = vsel %vm2956, %v2978, 0.0
      %v2997 = vsel %vm2957, %v2982, 0.0
      %v2998 = vsel %vm2958, %v2986, 0.0
      %v2999 = vsel %vm2959, %v2990, 0.0
      %v3000 = vadd.f32 %v2920, %v2992
      %v3001 = vadd.f32 %v2921, %v2993
      %v3002 = vadd.f32 %v2922, %v2994
      %v3003 = vadd.f32 %v2923, %v2995
      %v3004 = vadd.f32 %v2924, %v2996
      %v3005 = vadd.f32 %v2925, %v2997
      %v3006 = vadd.f32 %v2926, %v2998
      %v3007 = vadd.f32 %v2927, %v2999
      %3008 = vset.pattern.permute.xlu0 3
      %3009 = vperm.xlu0 %3008, %v1420
      %v3010 = vpop.permute.xlu0 %3009
      %3011 = vset.pattern.permute.xlu0 3
      %3012 = vperm.xlu0 %3011, %v1421
      %v3013 = vpop.permute.xlu0 %3012
      %3014 = vset.pattern.permute.xlu0 3
      %3015 = vperm.xlu0 %3014, %v1422
      %v3016 = vpop.permute.xlu0 %3015
      %3017 = vset.pattern.permute.xlu0 3
      %3018 = vperm.xlu0 %3017, %v1423
      %v3019 = vpop.permute.xlu0 %3018
      %3020 = vset.pattern.permute.xlu0 3
      %3021 = vperm.xlu0 %3020, %v1424
      %v3022 = vpop.permute.xlu0 %3021
      %3023 = vset.pattern.permute.xlu0 3
      %3024 = vperm.xlu0 %3023, %v1425
      %v3025 = vpop.permute.xlu0 %3024
      %3026 = vset.pattern.permute.xlu0 3
      %3027 = vperm.xlu0 %3026, %v1426
      %v3028 = vpop.permute.xlu0 %3027
      %3029 = vset.pattern.permute.xlu0 3
      %3030 = vperm.xlu0 %3029, %v1427
      %v3031 = vpop.permute.xlu0 %3030
      %vm3032 = vcmp.eq.s32.totalorder %v3010, %v1661
      %vm3033 = vcmp.eq.s32.totalorder %v3013, %v1661
      %vm3034 = vcmp.eq.s32.totalorder %v3016, %v1661
      %vm3035 = vcmp.eq.s32.totalorder %v3019, %v1661
      %vm3036 = vcmp.eq.s32.totalorder %v3022, %v1661
      %vm3037 = vcmp.eq.s32.totalorder %v3025, %v1661
      %vm3038 = vcmp.eq.s32.totalorder %v3028, %v1661
      %vm3039 = vcmp.eq.s32.totalorder %v3031, %v1661
      %3040 = vset.pattern.permute.xlu0 19
      %3041 = vperm.xlu0 %3040, %v1848
      %v3042 = vpop.permute.xlu0 %3041
      %3044 = vset.pattern.permute.xlu0 19
      %3045 = vperm.xlu0 %3044, %v1849
      %v3046 = vpop.permute.xlu0 %3045
      %3048 = vset.pattern.permute.xlu0 19
      %3049 = vperm.xlu0 %3048, %v1850
      %v3050 = vpop.permute.xlu0 %3049
      %3052 = vset.pattern.permute.xlu0 19
      %3053 = vperm.xlu0 %3052, %v1851
      %v3054 = vpop.permute.xlu0 %3053
      %3056 = vset.pattern.permute.xlu0 19
      %3057 = vperm.xlu0 %3056, %v1852
      %v3058 = vpop.permute.xlu0 %3057
      %3060 = vset.pattern.permute.xlu0 19
      %3061 = vperm.xlu0 %3060, %v1853
      %v3062 = vpop.permute.xlu0 %3061
      %3064 = vset.pattern.permute.xlu0 19
      %3065 = vperm.xlu0 %3064, %v1854
      %v3066 = vpop.permute.xlu0 %3065
      %3068 = vset.pattern.permute.xlu0 19
      %3069 = vperm.xlu0 %3068, %v1855
      %v3070 = vpop.permute.xlu0 %3069
      %v3072 = vsel %vm3032, %v3042, 0.0
      %v3073 = vsel %vm3033, %v3046, 0.0
      %v3074 = vsel %vm3034, %v3050, 0.0
      %v3075 = vsel %vm3035, %v3054, 0.0
      %v3076 = vsel %vm3036, %v3058, 0.0
      %v3077 = vsel %vm3037, %v3062, 0.0
      %v3078 = vsel %vm3038, %v3066, 0.0
      %v3079 = vsel %vm3039, %v3070, 0.0
      %v3080 = vadd.f32 %v3000, %v3072
      %v3081 = vadd.f32 %v3001, %v3073
      %v3082 = vadd.f32 %v3002, %v3074
      %v3083 = vadd.f32 %v3003, %v3075
      %v3084 = vadd.f32 %v3004, %v3076
      %v3085 = vadd.f32 %v3005, %v3077
      %v3086 = vadd.f32 %v3006, %v3078
      %v3087 = vadd.f32 %v3007, %v3079
      %3088 = vset.pattern.permute.xlu0 3
      %3089 = vperm.xlu0 %3088, %v1428
      %v3090 = vpop.permute.xlu0 %3089
      %3091 = vset.pattern.permute.xlu0 3
      %3092 = vperm.xlu0 %3091, %v1429
      %v3093 = vpop.permute.xlu0 %3092
      %3094 = vset.pattern.permute.xlu0 3
      %3095 = vperm.xlu0 %3094, %v1430
      %v3096 = vpop.permute.xlu0 %3095
      %3097 = vset.pattern.permute.xlu0 3
      %3098 = vperm.xlu0 %3097, %v1431
      %v3099 = vpop.permute.xlu0 %3098
      %3100 = vset.pattern.permute.xlu0 3
      %3101 = vperm.xlu0 %3100, %v1432
      %v3102 = vpop.permute.xlu0 %3101
      %3103 = vset.pattern.permute.xlu0 3
      %3104 = vperm.xlu0 %3103, %v1433
      %v3105 = vpop.permute.xlu0 %3104
      %3106 = vset.pattern.permute.xlu0 3
      %3107 = vperm.xlu0 %3106, %v1434
      %v3108 = vpop.permute.xlu0 %3107
      %3109 = vset.pattern.permute.xlu0 3
      %3110 = vperm.xlu0 %3109, %v1435
      %v3111 = vpop.permute.xlu0 %3110
      %vm3112 = vcmp.eq.s32.totalorder %v3090, %v1661
      %vm3113 = vcmp.eq.s32.totalorder %v3093, %v1661
      %vm3114 = vcmp.eq.s32.totalorder %v3096, %v1661
      %vm3115 = vcmp.eq.s32.totalorder %v3099, %v1661
      %vm3116 = vcmp.eq.s32.totalorder %v3102, %v1661
      %vm3117 = vcmp.eq.s32.totalorder %v3105, %v1661
      %vm3118 = vcmp.eq.s32.totalorder %v3108, %v1661
      %vm3119 = vcmp.eq.s32.totalorder %v3111, %v1661
      %3120 = vset.pattern.permute.xlu0 19
      %3121 = vperm.xlu0 %3120, %v1856
      %v3122 = vpop.permute.xlu0 %3121
      %3124 = vset.pattern.permute.xlu0 19
      %3125 = vperm.xlu0 %3124, %v1857
      %v3126 = vpop.permute.xlu0 %3125
      %3128 = vset.pattern.permute.xlu0 19
      %3129 = vperm.xlu0 %3128, %v1858
      %v3130 = vpop.permute.xlu0 %3129
      %3132 = vset.pattern.permute.xlu0 19
      %3133 = vperm.xlu0 %3132, %v1859
      %v3134 = vpop.permute.xlu0 %3133
      %3136 = vset.pattern.permute.xlu0 19
      %3137 = vperm.xlu0 %3136, %v1860
      %v3138 = vpop.permute.xlu0 %3137
      %3140 = vset.pattern.permute.xlu0 19
      %3141 = vperm.xlu0 %3140, %v1861
      %v3142 = vpop.permute.xlu0 %3141
      %3144 = vset.pattern.permute.xlu0 19
      %3145 = vperm.xlu0 %3144, %v1862
      %v3146 = vpop.permute.xlu0 %3145
      %3148 = vset.pattern.permute.xlu0 19
      %3149 = vperm.xlu0 %3148, %v1863
      %v3150 = vpop.permute.xlu0 %3149
      %v3152 = vsel %vm3112, %v3122, 0.0
      %v3153 = vsel %vm3113, %v3126, 0.0
      %v3154 = vsel %vm3114, %v3130, 0.0
      %v3155 = vsel %vm3115, %v3134, 0.0
      %v3156 = vsel %vm3116, %v3138, 0.0
      %v3157 = vsel %vm3117, %v3142, 0.0
      %v3158 = vsel %vm3118, %v3146, 0.0
      %v3159 = vsel %vm3119, %v3150, 0.0
      %v3160 = vadd.f32 %v3080, %v3152
      %v3161 = vadd.f32 %v3081, %v3153
      %v3162 = vadd.f32 %v3082, %v3154
      %v3163 = vadd.f32 %v3083, %v3155
      %v3164 = vadd.f32 %v3084, %v3156
      %v3165 = vadd.f32 %v3085, %v3157
      %v3166 = vadd.f32 %v3086, %v3158
      %v3167 = vadd.f32 %v3087, %v3159
      %v3168 = vadd.f32 %v2848, %v3160
      %v3169 = vadd.f32 %v2849, %v3161
      %v3170 = vadd.f32 %v2850, %v3162
      %v3171 = vadd.f32 %v2851, %v3163
      %v3172 = vadd.f32 %v2852, %v3164
      %v3173 = vadd.f32 %v2853, %v3165
      %v3174 = vadd.f32 %v2854, %v3166
      %v3175 = vadd.f32 %v2855, %v3167
      %3176 = vset.pattern.permute.xlu0 4
      %3177 = vperm.xlu0 %3176, %v1404
      %v3178 = vpop.permute.xlu0 %3177
      %3179 = vset.pattern.permute.xlu0 4
      %3180 = vperm.xlu0 %3179, %v1405
      %v3181 = vpop.permute.xlu0 %3180
      %3182 = vset.pattern.permute.xlu0 4
      %3183 = vperm.xlu0 %3182, %v1406
      %v3184 = vpop.permute.xlu0 %3183
      %3185 = vset.pattern.permute.xlu0 4
      %3186 = vperm.xlu0 %3185, %v1407
      %v3187 = vpop.permute.xlu0 %3186
      %3188 = vset.pattern.permute.xlu0 4
      %3189 = vperm.xlu0 %3188, %v1408
      %v3190 = vpop.permute.xlu0 %3189
      %3191 = vset.pattern.permute.xlu0 4
      %3192 = vperm.xlu0 %3191, %v1409
      %v3193 = vpop.permute.xlu0 %3192
      %3194 = vset.pattern.permute.xlu0 4
      %3195 = vperm.xlu0 %3194, %v1410
      %v3196 = vpop.permute.xlu0 %3195
      %3197 = vset.pattern.permute.xlu0 4
      %3198 = vperm.xlu0 %3197, %v1411
      %v3199 = vpop.permute.xlu0 %3198
      %vm3200 = vcmp.eq.s32.totalorder %v3178, %v1661
      %vm3201 = vcmp.eq.s32.totalorder %v3181, %v1661
      %vm3202 = vcmp.eq.s32.totalorder %v3184, %v1661
      %vm3203 = vcmp.eq.s32.totalorder %v3187, %v1661
      %vm3204 = vcmp.eq.s32.totalorder %v3190, %v1661
      %vm3205 = vcmp.eq.s32.totalorder %v3193, %v1661
      %vm3206 = vcmp.eq.s32.totalorder %v3196, %v1661
      %vm3207 = vcmp.eq.s32.totalorder %v3199, %v1661
      %3208 = vset.pattern.permute.xlu0 20
      %3209 = vperm.xlu0 %3208, %v1832
      %v3210 = vpop.permute.xlu0 %3209
      %3212 = vset.pattern.permute.xlu0 20
      %3213 = vperm.xlu0 %3212, %v1833
      %v3214 = vpop.permute.xlu0 %3213
      %3216 = vset.pattern.permute.xlu0 20
      %3217 = vperm.xlu0 %3216, %v1834
      %v3218 = vpop.permute.xlu0 %3217
      %3220 = vset.pattern.permute.xlu0 20
      %3221 = vperm.xlu0 %3220, %v1835
      %v3222 = vpop.permute.xlu0 %3221
      %3224 = vset.pattern.permute.xlu0 20
      %3225 = vperm.xlu0 %3224, %v1836
      %v3226 = vpop.permute.xlu0 %3225
      %3228 = vset.pattern.permute.xlu0 20
      %3229 = vperm.xlu0 %3228, %v1837
      %v3230 = vpop.permute.xlu0 %3229
      %3232 = vset.pattern.permute.xlu0 20
      %3233 = vperm.xlu0 %3232, %v1838
      %v3234 = vpop.permute.xlu0 %3233
      %3236 = vset.pattern.permute.xlu0 20
      %3237 = vperm.xlu0 %3236, %v1839
      %v3238 = vpop.permute.xlu0 %3237
      %v3240 = vsel %vm3200, %v3210, 0.0
      %v3241 = vsel %vm3201, %v3214, 0.0
      %v3242 = vsel %vm3202, %v3218, 0.0
      %v3243 = vsel %vm3203, %v3222, 0.0
      %v3244 = vsel %vm3204, %v3226, 0.0
      %v3245 = vsel %vm3205, %v3230, 0.0
      %v3246 = vsel %vm3206, %v3234, 0.0
      %v3247 = vsel %vm3207, %v3238, 0.0
      %3248 = vset.pattern.permute.xlu0 4
      %3249 = vperm.xlu0 %3248, %v1412
      %v3250 = vpop.permute.xlu0 %3249
      %3251 = vset.pattern.permute.xlu0 4
      %3252 = vperm.xlu0 %3251, %v1413
      %v3253 = vpop.permute.xlu0 %3252
      %3254 = vset.pattern.permute.xlu0 4
      %3255 = vperm.xlu0 %3254, %v1414
      %v3256 = vpop.permute.xlu0 %3255
      %3257 = vset.pattern.permute.xlu0 4
      %3258 = vperm.xlu0 %3257, %v1415
      %v3259 = vpop.permute.xlu0 %3258
      %3260 = vset.pattern.permute.xlu0 4
      %3261 = vperm.xlu0 %3260, %v1416
      %v3262 = vpop.permute.xlu0 %3261
      %3263 = vset.pattern.permute.xlu0 4
      %3264 = vperm.xlu0 %3263, %v1417
      %v3265 = vpop.permute.xlu0 %3264
      %3266 = vset.pattern.permute.xlu0 4
      %3267 = vperm.xlu0 %3266, %v1418
      %v3268 = vpop.permute.xlu0 %3267
      %3269 = vset.pattern.permute.xlu0 4
      %3270 = vperm.xlu0 %3269, %v1419
      %v3271 = vpop.permute.xlu0 %3270
      %vm3272 = vcmp.eq.s32.totalorder %v3250, %v1661
      %vm3273 = vcmp.eq.s32.totalorder %v3253, %v1661
      %vm3274 = vcmp.eq.s32.totalorder %v3256, %v1661
      %vm3275 = vcmp.eq.s32.totalorder %v3259, %v1661
      %vm3276 = vcmp.eq.s32.totalorder %v3262, %v1661
      %vm3277 = vcmp.eq.s32.totalorder %v3265, %v1661
      %vm3278 = vcmp.eq.s32.totalorder %v3268, %v1661
      %vm3279 = vcmp.eq.s32.totalorder %v3271, %v1661
      %3280 = vset.pattern.permute.xlu0 20
      %3281 = vperm.xlu0 %3280, %v1840
      %v3282 = vpop.permute.xlu0 %3281
      %3284 = vset.pattern.permute.xlu0 20
      %3285 = vperm.xlu0 %3284, %v1841
      %v3286 = vpop.permute.xlu0 %3285
      %3288 = vset.pattern.permute.xlu0 20
      %3289 = vperm.xlu0 %3288, %v1842
      %v3290 = vpop.permute.xlu0 %3289
      %3292 = vset.pattern.permute.xlu0 20
      %3293 = vperm.xlu0 %3292, %v1843
      %v3294 = vpop.permute.xlu0 %3293
      %3296 = vset.pattern.permute.xlu0 20
      %3297 = vperm.xlu0 %3296, %v1844
      %v3298 = vpop.permute.xlu0 %3297
      %3300 = vset.pattern.permute.xlu0 20
      %3301 = vperm.xlu0 %3300, %v1845
      %v3302 = vpop.permute.xlu0 %3301
      %3304 = vset.pattern.permute.xlu0 20
      %3305 = vperm.xlu0 %3304, %v1846
      %v3306 = vpop.permute.xlu0 %3305
      %3308 = vset.pattern.permute.xlu0 20
      %3309 = vperm.xlu0 %3308, %v1847
      %v3310 = vpop.permute.xlu0 %3309
      %v3312 = vsel %vm3272, %v3282, 0.0
      %v3313 = vsel %vm3273, %v3286, 0.0
      %v3314 = vsel %vm3274, %v3290, 0.0
      %v3315 = vsel %vm3275, %v3294, 0.0
      %v3316 = vsel %vm3276, %v3298, 0.0
      %v3317 = vsel %vm3277, %v3302, 0.0
      %v3318 = vsel %vm3278, %v3306, 0.0
      %v3319 = vsel %vm3279, %v3310, 0.0
      %v3320 = vadd.f32 %v3240, %v3312
      %v3321 = vadd.f32 %v3241, %v3313
      %v3322 = vadd.f32 %v3242, %v3314
      %v3323 = vadd.f32 %v3243, %v3315
      %v3324 = vadd.f32 %v3244, %v3316
      %v3325 = vadd.f32 %v3245, %v3317
      %v3326 = vadd.f32 %v3246, %v3318
      %v3327 = vadd.f32 %v3247, %v3319
      %3328 = vset.pattern.permute.xlu0 4
      %3329 = vperm.xlu0 %3328, %v1420
      %v3330 = vpop.permute.xlu0 %3329
      %3331 = vset.pattern.permute.xlu0 4
      %3332 = vperm.xlu0 %3331, %v1421
      %v3333 = vpop.permute.xlu0 %3332
      %3334 = vset.pattern.permute.xlu0 4
      %3335 = vperm.xlu0 %3334, %v1422
      %v3336 = vpop.permute.xlu0 %3335
      %3337 = vset.pattern.permute.xlu0 4
      %3338 = vperm.xlu0 %3337, %v1423
      %v3339 = vpop.permute.xlu0 %3338
      %3340 = vset.pattern.permute.xlu0 4
      %3341 = vperm.xlu0 %3340, %v1424
      %v3342 = vpop.permute.xlu0 %3341
      %3343 = vset.pattern.permute.xlu0 4
      %3344 = vperm.xlu0 %3343, %v1425
      %v3345 = vpop.permute.xlu0 %3344
      %3346 = vset.pattern.permute.xlu0 4
      %3347 = vperm.xlu0 %3346, %v1426
      %v3348 = vpop.permute.xlu0 %3347
      %3349 = vset.pattern.permute.xlu0 4
      %3350 = vperm.xlu0 %3349, %v1427
      %v3351 = vpop.permute.xlu0 %3350
      %vm3352 = vcmp.eq.s32.totalorder %v3330, %v1661
      %vm3353 = vcmp.eq.s32.totalorder %v3333, %v1661
      %vm3354 = vcmp.eq.s32.totalorder %v3336, %v1661
      %vm3355 = vcmp.eq.s32.totalorder %v3339, %v1661
      %vm3356 = vcmp.eq.s32.totalorder %v3342, %v1661
      %vm3357 = vcmp.eq.s32.totalorder %v3345, %v1661
      %vm3358 = vcmp.eq.s32.totalorder %v3348, %v1661
      %vm3359 = vcmp.eq.s32.totalorder %v3351, %v1661
      %3360 = vset.pattern.permute.xlu0 20
      %3361 = vperm.xlu0 %3360, %v1848
      %v3362 = vpop.permute.xlu0 %3361
      %3364 = vset.pattern.permute.xlu0 20
      %3365 = vperm.xlu0 %3364, %v1849
      %v3366 = vpop.permute.xlu0 %3365
      %3368 = vset.pattern.permute.xlu0 20
      %3369 = vperm.xlu0 %3368, %v1850
      %v3370 = vpop.permute.xlu0 %3369
      %3372 = vset.pattern.permute.xlu0 20
      %3373 = vperm.xlu0 %3372, %v1851
      %v3374 = vpop.permute.xlu0 %3373
      %3376 = vset.pattern.permute.xlu0 20
      %3377 = vperm.xlu0 %3376, %v1852
      %v3378 = vpop.permute.xlu0 %3377
      %3380 = vset.pattern.permute.xlu0 20
      %3381 = vperm.xlu0 %3380, %v1853
      %v3382 = vpop.permute.xlu0 %3381
      %3384 = vset.pattern.permute.xlu0 20
      %3385 = vperm.xlu0 %3384, %v1854
      %v3386 = vpop.permute.xlu0 %3385
      %3388 = vset.pattern.permute.xlu0 20
      %3389 = vperm.xlu0 %3388, %v1855
      %v3390 = vpop.permute.xlu0 %3389
      %v3392 = vsel %vm3352, %v3362, 0.0
      %v3393 = vsel %vm3353, %v3366, 0.0
      %v3394 = vsel %vm3354, %v3370, 0.0
      %v3395 = vsel %vm3355, %v3374, 0.0
      %v3396 = vsel %vm3356, %v3378, 0.0
      %v3397 = vsel %vm3357, %v3382, 0.0
      %v3398 = vsel %vm3358, %v3386, 0.0
      %v3399 = vsel %vm3359, %v3390, 0.0
      %v3400 = vadd.f32 %v3320, %v3392
      %v3401 = vadd.f32 %v3321, %v3393
      %v3402 = vadd.f32 %v3322, %v3394
      %v3403 = vadd.f32 %v3323, %v3395
      %v3404 = vadd.f32 %v3324, %v3396
      %v3405 = vadd.f32 %v3325, %v3397
      %v3406 = vadd.f32 %v3326, %v3398
      %v3407 = vadd.f32 %v3327, %v3399
      %3408 = vset.pattern.permute.xlu0 4
      %3409 = vperm.xlu0 %3408, %v1428
      %v3410 = vpop.permute.xlu0 %3409
      %3411 = vset.pattern.permute.xlu0 4
      %3412 = vperm.xlu0 %3411, %v1429
      %v3413 = vpop.permute.xlu0 %3412
      %3414 = vset.pattern.permute.xlu0 4
      %3415 = vperm.xlu0 %3414, %v1430
      %v3416 = vpop.permute.xlu0 %3415
      %3417 = vset.pattern.permute.xlu0 4
      %3418 = vperm.xlu0 %3417, %v1431
      %v3419 = vpop.permute.xlu0 %3418
      %3420 = vset.pattern.permute.xlu0 4
      %3421 = vperm.xlu0 %3420, %v1432
      %v3422 = vpop.permute.xlu0 %3421
      %3423 = vset.pattern.permute.xlu0 4
      %3424 = vperm.xlu0 %3423, %v1433
      %v3425 = vpop.permute.xlu0 %3424
      %3426 = vset.pattern.permute.xlu0 4
      %3427 = vperm.xlu0 %3426, %v1434
      %v3428 = vpop.permute.xlu0 %3427
      %3429 = vset.pattern.permute.xlu0 4
      %3430 = vperm.xlu0 %3429, %v1435
      %v3431 = vpop.permute.xlu0 %3430
      %vm3432 = vcmp.eq.s32.totalorder %v3410, %v1661
      %vm3433 = vcmp.eq.s32.totalorder %v3413, %v1661
      %vm3434 = vcmp.eq.s32.totalorder %v3416, %v1661
      %vm3435 = vcmp.eq.s32.totalorder %v3419, %v1661
      %vm3436 = vcmp.eq.s32.totalorder %v3422, %v1661
      %vm3437 = vcmp.eq.s32.totalorder %v3425, %v1661
      %vm3438 = vcmp.eq.s32.totalorder %v3428, %v1661
      %vm3439 = vcmp.eq.s32.totalorder %v3431, %v1661
      %3440 = vset.pattern.permute.xlu0 20
      %3441 = vperm.xlu0 %3440, %v1856
      %v3442 = vpop.permute.xlu0 %3441
      %3444 = vset.pattern.permute.xlu0 20
      %3445 = vperm.xlu0 %3444, %v1857
      %v3446 = vpop.permute.xlu0 %3445
      %3448 = vset.pattern.permute.xlu0 20
      %3449 = vperm.xlu0 %3448, %v1858
      %v3450 = vpop.permute.xlu0 %3449
      %3452 = vset.pattern.permute.xlu0 20
      %3453 = vperm.xlu0 %3452, %v1859
      %v3454 = vpop.permute.xlu0 %3453
      %3456 = vset.pattern.permute.xlu0 20
      %3457 = vperm.xlu0 %3456, %v1860
      %v3458 = vpop.permute.xlu0 %3457
      %3460 = vset.pattern.permute.xlu0 20
      %3461 = vperm.xlu0 %3460, %v1861
      %v3462 = vpop.permute.xlu0 %3461
      %3464 = vset.pattern.permute.xlu0 20
      %3465 = vperm.xlu0 %3464, %v1862
      %v3466 = vpop.permute.xlu0 %3465
      %3468 = vset.pattern.permute.xlu0 20
      %3469 = vperm.xlu0 %3468, %v1863
      %v3470 = vpop.permute.xlu0 %3469
      %v3472 = vsel %vm3432, %v3442, 0.0
      %v3473 = vsel %vm3433, %v3446, 0.0
      %v3474 = vsel %vm3434, %v3450, 0.0
      %v3475 = vsel %vm3435, %v3454, 0.0
      %v3476 = vsel %vm3436, %v3458, 0.0
      %v3477 = vsel %vm3437, %v3462, 0.0
      %v3478 = vsel %vm3438, %v3466, 0.0
      %v3479 = vsel %vm3439, %v3470, 0.0
      %v3480 = vadd.f32 %v3400, %v3472
      %v3481 = vadd.f32 %v3401, %v3473
      %v3482 = vadd.f32 %v3402, %v3474
      %v3483 = vadd.f32 %v3403, %v3475
      %v3484 = vadd.f32 %v3404, %v3476
      %v3485 = vadd.f32 %v3405, %v3477
      %v3486 = vadd.f32 %v3406, %v3478
      %v3487 = vadd.f32 %v3407, %v3479
      %v3488 = vadd.f32 %v3168, %v3480
      %v3489 = vadd.f32 %v3169, %v3481
      %v3490 = vadd.f32 %v3170, %v3482
      %v3491 = vadd.f32 %v3171, %v3483
      %v3492 = vadd.f32 %v3172, %v3484
      %v3493 = vadd.f32 %v3173, %v3485
      %v3494 = vadd.f32 %v3174, %v3486
      %v3495 = vadd.f32 %v3175, %v3487
      %3496 = vset.pattern.permute.xlu0 5
      %3497 = vperm.xlu0 %3496, %v1404
      %v3498 = vpop.permute.xlu0 %3497
      %3499 = vset.pattern.permute.xlu0 5
      %3500 = vperm.xlu0 %3499, %v1405
      %v3501 = vpop.permute.xlu0 %3500
      %3502 = vset.pattern.permute.xlu0 5
      %3503 = vperm.xlu0 %3502, %v1406
      %v3504 = vpop.permute.xlu0 %3503
      %3505 = vset.pattern.permute.xlu0 5
      %3506 = vperm.xlu0 %3505, %v1407
      %v3507 = vpop.permute.xlu0 %3506
      %3508 = vset.pattern.permute.xlu0 5
      %3509 = vperm.xlu0 %3508, %v1408
      %v3510 = vpop.permute.xlu0 %3509
      %3511 = vset.pattern.permute.xlu0 5
      %3512 = vperm.xlu0 %3511, %v1409
      %v3513 = vpop.permute.xlu0 %3512
      %3514 = vset.pattern.permute.xlu0 5
      %3515 = vperm.xlu0 %3514, %v1410
      %v3516 = vpop.permute.xlu0 %3515
      %3517 = vset.pattern.permute.xlu0 5
      %3518 = vperm.xlu0 %3517, %v1411
      %v3519 = vpop.permute.xlu0 %3518
      %vm3520 = vcmp.eq.s32.totalorder %v3498, %v1661
      %vm3521 = vcmp.eq.s32.totalorder %v3501, %v1661
      %vm3522 = vcmp.eq.s32.totalorder %v3504, %v1661
      %vm3523 = vcmp.eq.s32.totalorder %v3507, %v1661
      %vm3524 = vcmp.eq.s32.totalorder %v3510, %v1661
      %vm3525 = vcmp.eq.s32.totalorder %v3513, %v1661
      %vm3526 = vcmp.eq.s32.totalorder %v3516, %v1661
      %vm3527 = vcmp.eq.s32.totalorder %v3519, %v1661
      %3528 = vset.pattern.permute.xlu0 21
      %3529 = vperm.xlu0 %3528, %v1832
      %v3530 = vpop.permute.xlu0 %3529
      %3532 = vset.pattern.permute.xlu0 21
      %3533 = vperm.xlu0 %3532, %v1833
      %v3534 = vpop.permute.xlu0 %3533
      %3536 = vset.pattern.permute.xlu0 21
      %3537 = vperm.xlu0 %3536, %v1834
      %v3538 = vpop.permute.xlu0 %3537
      %3540 = vset.pattern.permute.xlu0 21
      %3541 = vperm.xlu0 %3540, %v1835
      %v3542 = vpop.permute.xlu0 %3541
      %3544 = vset.pattern.permute.xlu0 21
      %3545 = vperm.xlu0 %3544, %v1836
      %v3546 = vpop.permute.xlu0 %3545
      %3548 = vset.pattern.permute.xlu0 21
      %3549 = vperm.xlu0 %3548, %v1837
      %v3550 = vpop.permute.xlu0 %3549
      %3552 = vset.pattern.permute.xlu0 21
      %3553 = vperm.xlu0 %3552, %v1838
      %v3554 = vpop.permute.xlu0 %3553
      %3556 = vset.pattern.permute.xlu0 21
      %3557 = vperm.xlu0 %3556, %v1839
      %v3558 = vpop.permute.xlu0 %3557
      %v3560 = vsel %vm3520, %v3530, 0.0
      %v3561 = vsel %vm3521, %v3534, 0.0
      %v3562 = vsel %vm3522, %v3538, 0.0
      %v3563 = vsel %vm3523, %v3542, 0.0
      %v3564 = vsel %vm3524, %v3546, 0.0
      %v3565 = vsel %vm3525, %v3550, 0.0
      %v3566 = vsel %vm3526, %v3554, 0.0
      %v3567 = vsel %vm3527, %v3558, 0.0
      %3568 = vset.pattern.permute.xlu0 5
      %3569 = vperm.xlu0 %3568, %v1412
      %v3570 = vpop.permute.xlu0 %3569
      %3571 = vset.pattern.permute.xlu0 5
      %3572 = vperm.xlu0 %3571, %v1413
      %v3573 = vpop.permute.xlu0 %3572
      %3574 = vset.pattern.permute.xlu0 5
      %3575 = vperm.xlu0 %3574, %v1414
      %v3576 = vpop.permute.xlu0 %3575
      %3577 = vset.pattern.permute.xlu0 5
      %3578 = vperm.xlu0 %3577, %v1415
      %v3579 = vpop.permute.xlu0 %3578
      %3580 = vset.pattern.permute.xlu0 5
      %3581 = vperm.xlu0 %3580, %v1416
      %v3582 = vpop.permute.xlu0 %3581
      %3583 = vset.pattern.permute.xlu0 5
      %3584 = vperm.xlu0 %3583, %v1417
      %v3585 = vpop.permute.xlu0 %3584
      %3586 = vset.pattern.permute.xlu0 5
      %3587 = vperm.xlu0 %3586, %v1418
      %v3588 = vpop.permute.xlu0 %3587
      %3589 = vset.pattern.permute.xlu0 5
      %3590 = vperm.xlu0 %3589, %v1419
      %v3591 = vpop.permute.xlu0 %3590
      %vm3592 = vcmp.eq.s32.totalorder %v3570, %v1661
      %vm3593 = vcmp.eq.s32.totalorder %v3573, %v1661
      %vm3594 = vcmp.eq.s32.totalorder %v3576, %v1661
      %vm3595 = vcmp.eq.s32.totalorder %v3579, %v1661
      %vm3596 = vcmp.eq.s32.totalorder %v3582, %v1661
      %vm3597 = vcmp.eq.s32.totalorder %v3585, %v1661
      %vm3598 = vcmp.eq.s32.totalorder %v3588, %v1661
      %vm3599 = vcmp.eq.s32.totalorder %v3591, %v1661
      %3600 = vset.pattern.permute.xlu0 21
      %3601 = vperm.xlu0 %3600, %v1840
      %v3602 = vpop.permute.xlu0 %3601
      %3604 = vset.pattern.permute.xlu0 21
      %3605 = vperm.xlu0 %3604, %v1841
      %v3606 = vpop.permute.xlu0 %3605
      %3608 = vset.pattern.permute.xlu0 21
      %3609 = vperm.xlu0 %3608, %v1842
      %v3610 = vpop.permute.xlu0 %3609
      %3612 = vset.pattern.permute.xlu0 21
      %3613 = vperm.xlu0 %3612, %v1843
      %v3614 = vpop.permute.xlu0 %3613
      %3616 = vset.pattern.permute.xlu0 21
      %3617 = vperm.xlu0 %3616, %v1844
      %v3618 = vpop.permute.xlu0 %3617
      %3620 = vset.pattern.permute.xlu0 21
      %3621 = vperm.xlu0 %3620, %v1845
      %v3622 = vpop.permute.xlu0 %3621
      %3624 = vset.pattern.permute.xlu0 21
      %3625 = vperm.xlu0 %3624, %v1846
      %v3626 = vpop.permute.xlu0 %3625
      %3628 = vset.pattern.permute.xlu0 21
      %3629 = vperm.xlu0 %3628, %v1847
      %v3630 = vpop.permute.xlu0 %3629
      %v3632 = vsel %vm3592, %v3602, 0.0
      %v3633 = vsel %vm3593, %v3606, 0.0
      %v3634 = vsel %vm3594, %v3610, 0.0
      %v3635 = vsel %vm3595, %v3614, 0.0
      %v3636 = vsel %vm3596, %v3618, 0.0
      %v3637 = vsel %vm3597, %v3622, 0.0
      %v3638 = vsel %vm3598, %v3626, 0.0
      %v3639 = vsel %vm3599, %v3630, 0.0
      %v3640 = vadd.f32 %v3560, %v3632
      %v3641 = vadd.f32 %v3561, %v3633
      %v3642 = vadd.f32 %v3562, %v3634
      %v3643 = vadd.f32 %v3563, %v3635
      %v3644 = vadd.f32 %v3564, %v3636
      %v3645 = vadd.f32 %v3565, %v3637
      %v3646 = vadd.f32 %v3566, %v3638
      %v3647 = vadd.f32 %v3567, %v3639
      %3648 = vset.pattern.permute.xlu0 5
      %3649 = vperm.xlu0 %3648, %v1420
      %v3650 = vpop.permute.xlu0 %3649
      %3651 = vset.pattern.permute.xlu0 5
      %3652 = vperm.xlu0 %3651, %v1421
      %v3653 = vpop.permute.xlu0 %3652
      %3654 = vset.pattern.permute.xlu0 5
      %3655 = vperm.xlu0 %3654, %v1422
      %v3656 = vpop.permute.xlu0 %3655
      %3657 = vset.pattern.permute.xlu0 5
      %3658 = vperm.xlu0 %3657, %v1423
      %v3659 = vpop.permute.xlu0 %3658
      %3660 = vset.pattern.permute.xlu0 5
      %3661 = vperm.xlu0 %3660, %v1424
      %v3662 = vpop.permute.xlu0 %3661
      %3663 = vset.pattern.permute.xlu0 5
      %3664 = vperm.xlu0 %3663, %v1425
      %v3665 = vpop.permute.xlu0 %3664
      %3666 = vset.pattern.permute.xlu0 5
      %3667 = vperm.xlu0 %3666, %v1426
      %v3668 = vpop.permute.xlu0 %3667
      %3669 = vset.pattern.permute.xlu0 5
      %3670 = vperm.xlu0 %3669, %v1427
      %v3671 = vpop.permute.xlu0 %3670
      %vm3672 = vcmp.eq.s32.totalorder %v3650, %v1661
      %vm3673 = vcmp.eq.s32.totalorder %v3653, %v1661
      %vm3674 = vcmp.eq.s32.totalorder %v3656, %v1661
      %vm3675 = vcmp.eq.s32.totalorder %v3659, %v1661
      %vm3676 = vcmp.eq.s32.totalorder %v3662, %v1661
      %vm3677 = vcmp.eq.s32.totalorder %v3665, %v1661
      %vm3678 = vcmp.eq.s32.totalorder %v3668, %v1661
      %vm3679 = vcmp.eq.s32.totalorder %v3671, %v1661
      %3680 = vset.pattern.permute.xlu0 21
      %3681 = vperm.xlu0 %3680, %v1848
      %v3682 = vpop.permute.xlu0 %3681
      %3684 = vset.pattern.permute.xlu0 21
      %3685 = vperm.xlu0 %3684, %v1849
      %v3686 = vpop.permute.xlu0 %3685
      %3688 = vset.pattern.permute.xlu0 21
      %3689 = vperm.xlu0 %3688, %v1850
      %v3690 = vpop.permute.xlu0 %3689
      %3692 = vset.pattern.permute.xlu0 21
      %3693 = vperm.xlu0 %3692, %v1851
      %v3694 = vpop.permute.xlu0 %3693
      %3696 = vset.pattern.permute.xlu0 21
      %3697 = vperm.xlu0 %3696, %v1852
      %v3698 = vpop.permute.xlu0 %3697
      %3700 = vset.pattern.permute.xlu0 21
      %3701 = vperm.xlu0 %3700, %v1853
      %v3702 = vpop.permute.xlu0 %3701
      %3704 = vset.pattern.permute.xlu0 21
      %3705 = vperm.xlu0 %3704, %v1854
      %v3706 = vpop.permute.xlu0 %3705
      %3708 = vset.pattern.permute.xlu0 21
      %3709 = vperm.xlu0 %3708, %v1855
      %v3710 = vpop.permute.xlu0 %3709
      %v3712 = vsel %vm3672, %v3682, 0.0
      %v3713 = vsel %vm3673, %v3686, 0.0
      %v3714 = vsel %vm3674, %v3690, 0.0
      %v3715 = vsel %vm3675, %v3694, 0.0
      %v3716 = vsel %vm3676, %v3698, 0.0
      %v3717 = vsel %vm3677, %v3702, 0.0
      %v3718 = vsel %vm3678, %v3706, 0.0
      %v3719 = vsel %vm3679, %v3710, 0.0
      %v3720 = vadd.f32 %v3640, %v3712
      %v3721 = vadd.f32 %v3641, %v3713
      %v3722 = vadd.f32 %v3642, %v3714
      %v3723 = vadd.f32 %v3643, %v3715
      %v3724 = vadd.f32 %v3644, %v3716
      %v3725 = vadd.f32 %v3645, %v3717
      %v3726 = vadd.f32 %v3646, %v3718
      %v3727 = vadd.f32 %v3647, %v3719
      %3728 = vset.pattern.permute.xlu0 5
      %3729 = vperm.xlu0 %3728, %v1428
      %v3730 = vpop.permute.xlu0 %3729
      %3731 = vset.pattern.permute.xlu0 5
      %3732 = vperm.xlu0 %3731, %v1429
      %v3733 = vpop.permute.xlu0 %3732
      %3734 = vset.pattern.permute.xlu0 5
      %3735 = vperm.xlu0 %3734, %v1430
      %v3736 = vpop.permute.xlu0 %3735
      %3737 = vset.pattern.permute.xlu0 5
      %3738 = vperm.xlu0 %3737, %v1431
      %v3739 = vpop.permute.xlu0 %3738
      %3740 = vset.pattern.permute.xlu0 5
      %3741 = vperm.xlu0 %3740, %v1432
      %v3742 = vpop.permute.xlu0 %3741
      %3743 = vset.pattern.permute.xlu0 5
      %3744 = vperm.xlu0 %3743, %v1433
      %v3745 = vpop.permute.xlu0 %3744
      %3746 = vset.pattern.permute.xlu0 5
      %3747 = vperm.xlu0 %3746, %v1434
      %v3748 = vpop.permute.xlu0 %3747
      %3749 = vset.pattern.permute.xlu0 5
      %3750 = vperm.xlu0 %3749, %v1435
      %v3751 = vpop.permute.xlu0 %3750
      %vm3752 = vcmp.eq.s32.totalorder %v3730, %v1661
      %vm3753 = vcmp.eq.s32.totalorder %v3733, %v1661
      %vm3754 = vcmp.eq.s32.totalorder %v3736, %v1661
      %vm3755 = vcmp.eq.s32.totalorder %v3739, %v1661
      %vm3756 = vcmp.eq.s32.totalorder %v3742, %v1661
      %vm3757 = vcmp.eq.s32.totalorder %v3745, %v1661
      %vm3758 = vcmp.eq.s32.totalorder %v3748, %v1661
      %vm3759 = vcmp.eq.s32.totalorder %v3751, %v1661
      %3760 = vset.pattern.permute.xlu0 21
      %3761 = vperm.xlu0 %3760, %v1856
      %v3762 = vpop.permute.xlu0 %3761
      %3764 = vset.pattern.permute.xlu0 21
      %3765 = vperm.xlu0 %3764, %v1857
      %v3766 = vpop.permute.xlu0 %3765
      %3768 = vset.pattern.permute.xlu0 21
      %3769 = vperm.xlu0 %3768, %v1858
      %v3770 = vpop.permute.xlu0 %3769
      %3772 = vset.pattern.permute.xlu0 21
      %3773 = vperm.xlu0 %3772, %v1859
      %v3774 = vpop.permute.xlu0 %3773
      %3776 = vset.pattern.permute.xlu0 21
      %3777 = vperm.xlu0 %3776, %v1860
      %v3778 = vpop.permute.xlu0 %3777
      %3780 = vset.pattern.permute.xlu0 21
      %3781 = vperm.xlu0 %3780, %v1861
      %v3782 = vpop.permute.xlu0 %3781
      %3784 = vset.pattern.permute.xlu0 21
      %3785 = vperm.xlu0 %3784, %v1862
      %v3786 = vpop.permute.xlu0 %3785
      %3788 = vset.pattern.permute.xlu0 21
      %3789 = vperm.xlu0 %3788, %v1863
      %v3790 = vpop.permute.xlu0 %3789
      %v3792 = vsel %vm3752, %v3762, 0.0
      %v3793 = vsel %vm3753, %v3766, 0.0
      %v3794 = vsel %vm3754, %v3770, 0.0
      %v3795 = vsel %vm3755, %v3774, 0.0
      %v3796 = vsel %vm3756, %v3778, 0.0
      %v3797 = vsel %vm3757, %v3782, 0.0
      %v3798 = vsel %vm3758, %v3786, 0.0
      %v3799 = vsel %vm3759, %v3790, 0.0
      %v3800 = vadd.f32 %v3720, %v3792
      %v3801 = vadd.f32 %v3721, %v3793
      %v3802 = vadd.f32 %v3722, %v3794
      %v3803 = vadd.f32 %v3723, %v3795
      %v3804 = vadd.f32 %v3724, %v3796
      %v3805 = vadd.f32 %v3725, %v3797
      %v3806 = vadd.f32 %v3726, %v3798
      %v3807 = vadd.f32 %v3727, %v3799
      %v3808 = vadd.f32 %v3488, %v3800
      %v3809 = vadd.f32 %v3489, %v3801
      %v3810 = vadd.f32 %v3490, %v3802
      %v3811 = vadd.f32 %v3491, %v3803
      %v3812 = vadd.f32 %v3492, %v3804
      %v3813 = vadd.f32 %v3493, %v3805
      %v3814 = vadd.f32 %v3494, %v3806
      %v3815 = vadd.f32 %v3495, %v3807
      %3816 = vset.pattern.permute.xlu0 6
      %3817 = vperm.xlu0 %3816, %v1404
      %v3818 = vpop.permute.xlu0 %3817
      %3819 = vset.pattern.permute.xlu0 6
      %3820 = vperm.xlu0 %3819, %v1405
      %v3821 = vpop.permute.xlu0 %3820
      %3822 = vset.pattern.permute.xlu0 6
      %3823 = vperm.xlu0 %3822, %v1406
      %v3824 = vpop.permute.xlu0 %3823
      %3825 = vset.pattern.permute.xlu0 6
      %3826 = vperm.xlu0 %3825, %v1407
      %v3827 = vpop.permute.xlu0 %3826
      %3828 = vset.pattern.permute.xlu0 6
      %3829 = vperm.xlu0 %3828, %v1408
      %v3830 = vpop.permute.xlu0 %3829
      %3831 = vset.pattern.permute.xlu0 6
      %3832 = vperm.xlu0 %3831, %v1409
      %v3833 = vpop.permute.xlu0 %3832
      %3834 = vset.pattern.permute.xlu0 6
      %3835 = vperm.xlu0 %3834, %v1410
      %v3836 = vpop.permute.xlu0 %3835
      %3837 = vset.pattern.permute.xlu0 6
      %3838 = vperm.xlu0 %3837, %v1411
      %v3839 = vpop.permute.xlu0 %3838
      %vm3840 = vcmp.eq.s32.totalorder %v3818, %v1661
      %vm3841 = vcmp.eq.s32.totalorder %v3821, %v1661
      %vm3842 = vcmp.eq.s32.totalorder %v3824, %v1661
      %vm3843 = vcmp.eq.s32.totalorder %v3827, %v1661
      %vm3844 = vcmp.eq.s32.totalorder %v3830, %v1661
      %vm3845 = vcmp.eq.s32.totalorder %v3833, %v1661
      %vm3846 = vcmp.eq.s32.totalorder %v3836, %v1661
      %vm3847 = vcmp.eq.s32.totalorder %v3839, %v1661
      %3848 = vset.pattern.permute.xlu0 22
      %3849 = vperm.xlu0 %3848, %v1832
      %v3850 = vpop.permute.xlu0 %3849
      %3852 = vset.pattern.permute.xlu0 22
      %3853 = vperm.xlu0 %3852, %v1833
      %v3854 = vpop.permute.xlu0 %3853
      %3856 = vset.pattern.permute.xlu0 22
      %3857 = vperm.xlu0 %3856, %v1834
      %v3858 = vpop.permute.xlu0 %3857
      %3860 = vset.pattern.permute.xlu0 22
      %3861 = vperm.xlu0 %3860, %v1835
      %v3862 = vpop.permute.xlu0 %3861
      %3864 = vset.pattern.permute.xlu0 22
      %3865 = vperm.xlu0 %3864, %v1836
      %v3866 = vpop.permute.xlu0 %3865
      %3868 = vset.pattern.permute.xlu0 22
      %3869 = vperm.xlu0 %3868, %v1837
      %v3870 = vpop.permute.xlu0 %3869
      %3872 = vset.pattern.permute.xlu0 22
      %3873 = vperm.xlu0 %3872, %v1838
      %v3874 = vpop.permute.xlu0 %3873
      %3876 = vset.pattern.permute.xlu0 22
      %3877 = vperm.xlu0 %3876, %v1839
      %v3878 = vpop.permute.xlu0 %3877
      %v3880 = vsel %vm3840, %v3850, 0.0
      %v3881 = vsel %vm3841, %v3854, 0.0
      %v3882 = vsel %vm3842, %v3858, 0.0
      %v3883 = vsel %vm3843, %v3862, 0.0
      %v3884 = vsel %vm3844, %v3866, 0.0
      %v3885 = vsel %vm3845, %v3870, 0.0
      %v3886 = vsel %vm3846, %v3874, 0.0
      %v3887 = vsel %vm3847, %v3878, 0.0
      %3888 = vset.pattern.permute.xlu0 6
      %3889 = vperm.xlu0 %3888, %v1412
      %v3890 = vpop.permute.xlu0 %3889
      %3891 = vset.pattern.permute.xlu0 6
      %3892 = vperm.xlu0 %3891, %v1413
      %v3893 = vpop.permute.xlu0 %3892
      %3894 = vset.pattern.permute.xlu0 6
      %3895 = vperm.xlu0 %3894, %v1414
      %v3896 = vpop.permute.xlu0 %3895
      %3897 = vset.pattern.permute.xlu0 6
      %3898 = vperm.xlu0 %3897, %v1415
      %v3899 = vpop.permute.xlu0 %3898
      %3900 = vset.pattern.permute.xlu0 6
      %3901 = vperm.xlu0 %3900, %v1416
      %v3902 = vpop.permute.xlu0 %3901
      %3903 = vset.pattern.permute.xlu0 6
      %3904 = vperm.xlu0 %3903, %v1417
      %v3905 = vpop.permute.xlu0 %3904
      %3906 = vset.pattern.permute.xlu0 6
      %3907 = vperm.xlu0 %3906, %v1418
      %v3908 = vpop.permute.xlu0 %3907
      %3909 = vset.pattern.permute.xlu0 6
      %3910 = vperm.xlu0 %3909, %v1419
      %v3911 = vpop.permute.xlu0 %3910
      %vm3912 = vcmp.eq.s32.totalorder %v3890, %v1661
      %vm3913 = vcmp.eq.s32.totalorder %v3893, %v1661
      %vm3914 = vcmp.eq.s32.totalorder %v3896, %v1661
      %vm3915 = vcmp.eq.s32.totalorder %v3899, %v1661
      %vm3916 = vcmp.eq.s32.totalorder %v3902, %v1661
      %vm3917 = vcmp.eq.s32.totalorder %v3905, %v1661
      %vm3918 = vcmp.eq.s32.totalorder %v3908, %v1661
      %vm3919 = vcmp.eq.s32.totalorder %v3911, %v1661
      %3920 = vset.pattern.permute.xlu0 22
      %3921 = vperm.xlu0 %3920, %v1840
      %v3922 = vpop.permute.xlu0 %3921
      %3924 = vset.pattern.permute.xlu0 22
      %3925 = vperm.xlu0 %3924, %v1841
      %v3926 = vpop.permute.xlu0 %3925
      %3928 = vset.pattern.permute.xlu0 22
      %3929 = vperm.xlu0 %3928, %v1842
      %v3930 = vpop.permute.xlu0 %3929
      %3932 = vset.pattern.permute.xlu0 22
      %3933 = vperm.xlu0 %3932, %v1843
      %v3934 = vpop.permute.xlu0 %3933
      %3936 = vset.pattern.permute.xlu0 22
      %3937 = vperm.xlu0 %3936, %v1844
      %v3938 = vpop.permute.xlu0 %3937
      %3940 = vset.pattern.permute.xlu0 22
      %3941 = vperm.xlu0 %3940, %v1845
      %v3942 = vpop.permute.xlu0 %3941
      %3944 = vset.pattern.permute.xlu0 22
      %3945 = vperm.xlu0 %3944, %v1846
      %v3946 = vpop.permute.xlu0 %3945
      %3948 = vset.pattern.permute.xlu0 22
      %3949 = vperm.xlu0 %3948, %v1847
      %v3950 = vpop.permute.xlu0 %3949
      %v3952 = vsel %vm3912, %v3922, 0.0
      %v3953 = vsel %vm3913, %v3926, 0.0
      %v3954 = vsel %vm3914, %v3930, 0.0
      %v3955 = vsel %vm3915, %v3934, 0.0
      %v3956 = vsel %vm3916, %v3938, 0.0
      %v3957 = vsel %vm3917, %v3942, 0.0
      %v3958 = vsel %vm3918, %v3946, 0.0
      %v3959 = vsel %vm3919, %v3950, 0.0
      %v3960 = vadd.f32 %v3880, %v3952
      %v3961 = vadd.f32 %v3881, %v3953
      %v3962 = vadd.f32 %v3882, %v3954
      %v3963 = vadd.f32 %v3883, %v3955
      %v3964 = vadd.f32 %v3884, %v3956
      %v3965 = vadd.f32 %v3885, %v3957
      %v3966 = vadd.f32 %v3886, %v3958
      %v3967 = vadd.f32 %v3887, %v3959
      %3968 = vset.pattern.permute.xlu0 6
      %3969 = vperm.xlu0 %3968, %v1420
      %v3970 = vpop.permute.xlu0 %3969
      %3971 = vset.pattern.permute.xlu0 6
      %3972 = vperm.xlu0 %3971, %v1421
      %v3973 = vpop.permute.xlu0 %3972
      %3974 = vset.pattern.permute.xlu0 6
      %3975 = vperm.xlu0 %3974, %v1422
      %v3976 = vpop.permute.xlu0 %3975
      %3977 = vset.pattern.permute.xlu0 6
      %3978 = vperm.xlu0 %3977, %v1423
      %v3979 = vpop.permute.xlu0 %3978
      %3980 = vset.pattern.permute.xlu0 6
      %3981 = vperm.xlu0 %3980, %v1424
      %v3982 = vpop.permute.xlu0 %3981
      %3983 = vset.pattern.permute.xlu0 6
      %3984 = vperm.xlu0 %3983, %v1425
      %v3985 = vpop.permute.xlu0 %3984
      %3986 = vset.pattern.permute.xlu0 6
      %3987 = vperm.xlu0 %3986, %v1426
      %v3988 = vpop.permute.xlu0 %3987
      %3989 = vset.pattern.permute.xlu0 6
      %3990 = vperm.xlu0 %3989, %v1427
      %v3991 = vpop.permute.xlu0 %3990
      %vm3992 = vcmp.eq.s32.totalorder %v3970, %v1661
      %vm3993 = vcmp.eq.s32.totalorder %v3973, %v1661
      %vm3994 = vcmp.eq.s32.totalorder %v3976, %v1661
      %vm3995 = vcmp.eq.s32.totalorder %v3979, %v1661
      %vm3996 = vcmp.eq.s32.totalorder %v3982, %v1661
      %vm3997 = vcmp.eq.s32.totalorder %v3985, %v1661
      %vm3998 = vcmp.eq.s32.totalorder %v3988, %v1661
      %vm3999 = vcmp.eq.s32.totalorder %v3991, %v1661
      %4000 = vset.pattern.permute.xlu0 22
      %4001 = vperm.xlu0 %4000, %v1848
      %v4002 = vpop.permute.xlu0 %4001
      %4004 = vset.pattern.permute.xlu0 22
      %4005 = vperm.xlu0 %4004, %v1849
      %v4006 = vpop.permute.xlu0 %4005
      %4008 = vset.pattern.permute.xlu0 22
      %4009 = vperm.xlu0 %4008, %v1850
      %v4010 = vpop.permute.xlu0 %4009
      %4012 = vset.pattern.permute.xlu0 22
      %4013 = vperm.xlu0 %4012, %v1851
      %v4014 = vpop.permute.xlu0 %4013
      %4016 = vset.pattern.permute.xlu0 22
      %4017 = vperm.xlu0 %4016, %v1852
      %v4018 = vpop.permute.xlu0 %4017
      %4020 = vset.pattern.permute.xlu0 22
      %4021 = vperm.xlu0 %4020, %v1853
      %v4022 = vpop.permute.xlu0 %4021
      %4024 = vset.pattern.permute.xlu0 22
      %4025 = vperm.xlu0 %4024, %v1854
      %v4026 = vpop.permute.xlu0 %4025
      %4028 = vset.pattern.permute.xlu0 22
      %4029 = vperm.xlu0 %4028, %v1855
      %v4030 = vpop.permute.xlu0 %4029
      %v4032 = vsel %vm3992, %v4002, 0.0
      %v4033 = vsel %vm3993, %v4006, 0.0
      %v4034 = vsel %vm3994, %v4010, 0.0
      %v4035 = vsel %vm3995, %v4014, 0.0
      %v4036 = vsel %vm3996, %v4018, 0.0
      %v4037 = vsel %vm3997, %v4022, 0.0
      %v4038 = vsel %vm3998, %v4026, 0.0
      %v4039 = vsel %vm3999, %v4030, 0.0
      %v4040 = vadd.f32 %v3960, %v4032
      %v4041 = vadd.f32 %v3961, %v4033
      %v4042 = vadd.f32 %v3962, %v4034
      %v4043 = vadd.f32 %v3963, %v4035
      %v4044 = vadd.f32 %v3964, %v4036
      %v4045 = vadd.f32 %v3965, %v4037
      %v4046 = vadd.f32 %v3966, %v4038
      %v4047 = vadd.f32 %v3967, %v4039
      %4048 = vset.pattern.permute.xlu0 6
      %4049 = vperm.xlu0 %4048, %v1428
      %v4050 = vpop.permute.xlu0 %4049
      %4051 = vset.pattern.permute.xlu0 6
      %4052 = vperm.xlu0 %4051, %v1429
      %v4053 = vpop.permute.xlu0 %4052
      %4054 = vset.pattern.permute.xlu0 6
      %4055 = vperm.xlu0 %4054, %v1430
      %v4056 = vpop.permute.xlu0 %4055
      %4057 = vset.pattern.permute.xlu0 6
      %4058 = vperm.xlu0 %4057, %v1431
      %v4059 = vpop.permute.xlu0 %4058
      %4060 = vset.pattern.permute.xlu0 6
      %4061 = vperm.xlu0 %4060, %v1432
      %v4062 = vpop.permute.xlu0 %4061
      %4063 = vset.pattern.permute.xlu0 6
      %4064 = vperm.xlu0 %4063, %v1433
      %v4065 = vpop.permute.xlu0 %4064
      %4066 = vset.pattern.permute.xlu0 6
      %4067 = vperm.xlu0 %4066, %v1434
      %v4068 = vpop.permute.xlu0 %4067
      %4069 = vset.pattern.permute.xlu0 6
      %4070 = vperm.xlu0 %4069, %v1435
      %v4071 = vpop.permute.xlu0 %4070
      %vm4072 = vcmp.eq.s32.totalorder %v4050, %v1661
      %vm4073 = vcmp.eq.s32.totalorder %v4053, %v1661
      %vm4074 = vcmp.eq.s32.totalorder %v4056, %v1661
      %vm4075 = vcmp.eq.s32.totalorder %v4059, %v1661
      %vm4076 = vcmp.eq.s32.totalorder %v4062, %v1661
      %vm4077 = vcmp.eq.s32.totalorder %v4065, %v1661
      %vm4078 = vcmp.eq.s32.totalorder %v4068, %v1661
      %vm4079 = vcmp.eq.s32.totalorder %v4071, %v1661
      %4080 = vset.pattern.permute.xlu0 22
      %4081 = vperm.xlu0 %4080, %v1856
      %v4082 = vpop.permute.xlu0 %4081
      %4084 = vset.pattern.permute.xlu0 22
      %4085 = vperm.xlu0 %4084, %v1857
      %v4086 = vpop.permute.xlu0 %4085
      %4088 = vset.pattern.permute.xlu0 22
      %4089 = vperm.xlu0 %4088, %v1858
      %v4090 = vpop.permute.xlu0 %4089
      %4092 = vset.pattern.permute.xlu0 22
      %4093 = vperm.xlu0 %4092, %v1859
      %v4094 = vpop.permute.xlu0 %4093
      %4096 = vset.pattern.permute.xlu0 22
      %4097 = vperm.xlu0 %4096, %v1860
      %v4098 = vpop.permute.xlu0 %4097
      %4100 = vset.pattern.permute.xlu0 22
      %4101 = vperm.xlu0 %4100, %v1861
      %v4102 = vpop.permute.xlu0 %4101
      %4104 = vset.pattern.permute.xlu0 22
      %4105 = vperm.xlu0 %4104, %v1862
      %v4106 = vpop.permute.xlu0 %4105
      %4108 = vset.pattern.permute.xlu0 22
      %4109 = vperm.xlu0 %4108, %v1863
      %v4110 = vpop.permute.xlu0 %4109
      %v4112 = vsel %vm4072, %v4082, 0.0
      %v4113 = vsel %vm4073, %v4086, 0.0
      %v4114 = vsel %vm4074, %v4090, 0.0
      %v4115 = vsel %vm4075, %v4094, 0.0
      %v4116 = vsel %vm4076, %v4098, 0.0
      %v4117 = vsel %vm4077, %v4102, 0.0
      %v4118 = vsel %vm4078, %v4106, 0.0
      %v4119 = vsel %vm4079, %v4110, 0.0
      %v4120 = vadd.f32 %v4040, %v4112
      %v4121 = vadd.f32 %v4041, %v4113
      %v4122 = vadd.f32 %v4042, %v4114
      %v4123 = vadd.f32 %v4043, %v4115
      %v4124 = vadd.f32 %v4044, %v4116
      %v4125 = vadd.f32 %v4045, %v4117
      %v4126 = vadd.f32 %v4046, %v4118
      %v4127 = vadd.f32 %v4047, %v4119
      %v4128 = vadd.f32 %v3808, %v4120
      %v4129 = vadd.f32 %v3809, %v4121
      %v4130 = vadd.f32 %v3810, %v4122
      %v4131 = vadd.f32 %v3811, %v4123
      %v4132 = vadd.f32 %v3812, %v4124
      %v4133 = vadd.f32 %v3813, %v4125
      %v4134 = vadd.f32 %v3814, %v4126
      %v4135 = vadd.f32 %v3815, %v4127
      %4136 = vset.pattern.permute.xlu0 7
      %4137 = vperm.xlu0 %4136, %v1404
      %v4138 = vpop.permute.xlu0 %4137
      %4139 = vset.pattern.permute.xlu0 7
      %4140 = vperm.xlu0 %4139, %v1405
      %v4141 = vpop.permute.xlu0 %4140
      %4142 = vset.pattern.permute.xlu0 7
      %4143 = vperm.xlu0 %4142, %v1406
      %v4144 = vpop.permute.xlu0 %4143
      %4145 = vset.pattern.permute.xlu0 7
      %4146 = vperm.xlu0 %4145, %v1407
      %v4147 = vpop.permute.xlu0 %4146
      %4148 = vset.pattern.permute.xlu0 7
      %4149 = vperm.xlu0 %4148, %v1408
      %v4150 = vpop.permute.xlu0 %4149
      %4151 = vset.pattern.permute.xlu0 7
      %4152 = vperm.xlu0 %4151, %v1409
      %v4153 = vpop.permute.xlu0 %4152
      %4154 = vset.pattern.permute.xlu0 7
      %4155 = vperm.xlu0 %4154, %v1410
      %v4156 = vpop.permute.xlu0 %4155
      %4157 = vset.pattern.permute.xlu0 7
      %4158 = vperm.xlu0 %4157, %v1411
      %v4159 = vpop.permute.xlu0 %4158
      %vm4160 = vcmp.eq.s32.totalorder %v4138, %v1661
      %vm4161 = vcmp.eq.s32.totalorder %v4141, %v1661
      %vm4162 = vcmp.eq.s32.totalorder %v4144, %v1661
      %vm4163 = vcmp.eq.s32.totalorder %v4147, %v1661
      %vm4164 = vcmp.eq.s32.totalorder %v4150, %v1661
      %vm4165 = vcmp.eq.s32.totalorder %v4153, %v1661
      %vm4166 = vcmp.eq.s32.totalorder %v4156, %v1661
      %vm4167 = vcmp.eq.s32.totalorder %v4159, %v1661
      %4168 = vset.pattern.permute.xlu0 23
      %4169 = vperm.xlu0 %4168, %v1832
      %v4170 = vpop.permute.xlu0 %4169
      %4172 = vset.pattern.permute.xlu0 23
      %4173 = vperm.xlu0 %4172, %v1833
      %v4174 = vpop.permute.xlu0 %4173
      %4176 = vset.pattern.permute.xlu0 23
      %4177 = vperm.xlu0 %4176, %v1834
      %v4178 = vpop.permute.xlu0 %4177
      %4180 = vset.pattern.permute.xlu0 23
      %4181 = vperm.xlu0 %4180, %v1835
      %v4182 = vpop.permute.xlu0 %4181
      %4184 = vset.pattern.permute.xlu0 23
      %4185 = vperm.xlu0 %4184, %v1836
      %v4186 = vpop.permute.xlu0 %4185
      %4188 = vset.pattern.permute.xlu0 23
      %4189 = vperm.xlu0 %4188, %v1837
      %v4190 = vpop.permute.xlu0 %4189
      %4192 = vset.pattern.permute.xlu0 23
      %4193 = vperm.xlu0 %4192, %v1838
      %v4194 = vpop.permute.xlu0 %4193
      %4196 = vset.pattern.permute.xlu0 23
      %4197 = vperm.xlu0 %4196, %v1839
      %v4198 = vpop.permute.xlu0 %4197
      %v4200 = vsel %vm4160, %v4170, 0.0
      %v4201 = vsel %vm4161, %v4174, 0.0
      %v4202 = vsel %vm4162, %v4178, 0.0
      %v4203 = vsel %vm4163, %v4182, 0.0
      %v4204 = vsel %vm4164, %v4186, 0.0
      %v4205 = vsel %vm4165, %v4190, 0.0
      %v4206 = vsel %vm4166, %v4194, 0.0
      %v4207 = vsel %vm4167, %v4198, 0.0
      %4208 = vset.pattern.permute.xlu0 7
      %4209 = vperm.xlu0 %4208, %v1412
      %v4210 = vpop.permute.xlu0 %4209
      %4211 = vset.pattern.permute.xlu0 7
      %4212 = vperm.xlu0 %4211, %v1413
      %v4213 = vpop.permute.xlu0 %4212
      %4214 = vset.pattern.permute.xlu0 7
      %4215 = vperm.xlu0 %4214, %v1414
      %v4216 = vpop.permute.xlu0 %4215
      %4217 = vset.pattern.permute.xlu0 7
      %4218 = vperm.xlu0 %4217, %v1415
      %v4219 = vpop.permute.xlu0 %4218
      %4220 = vset.pattern.permute.xlu0 7
      %4221 = vperm.xlu0 %4220, %v1416
      %v4222 = vpop.permute.xlu0 %4221
      %4223 = vset.pattern.permute.xlu0 7
      %4224 = vperm.xlu0 %4223, %v1417
      %v4225 = vpop.permute.xlu0 %4224
      %4226 = vset.pattern.permute.xlu0 7
      %4227 = vperm.xlu0 %4226, %v1418
      %v4228 = vpop.permute.xlu0 %4227
      %4229 = vset.pattern.permute.xlu0 7
      %4230 = vperm.xlu0 %4229, %v1419
      %v4231 = vpop.permute.xlu0 %4230
      %vm4232 = vcmp.eq.s32.totalorder %v4210, %v1661
      %vm4233 = vcmp.eq.s32.totalorder %v4213, %v1661
      %vm4234 = vcmp.eq.s32.totalorder %v4216, %v1661
      %vm4235 = vcmp.eq.s32.totalorder %v4219, %v1661
      %vm4236 = vcmp.eq.s32.totalorder %v4222, %v1661
      %vm4237 = vcmp.eq.s32.totalorder %v4225, %v1661
      %vm4238 = vcmp.eq.s32.totalorder %v4228, %v1661
      %vm4239 = vcmp.eq.s32.totalorder %v4231, %v1661
      %4240 = vset.pattern.permute.xlu0 23
      %4241 = vperm.xlu0 %4240, %v1840
      %v4242 = vpop.permute.xlu0 %4241
      %4244 = vset.pattern.permute.xlu0 23
      %4245 = vperm.xlu0 %4244, %v1841
      %v4246 = vpop.permute.xlu0 %4245
      %4248 = vset.pattern.permute.xlu0 23
      %4249 = vperm.xlu0 %4248, %v1842
      %v4250 = vpop.permute.xlu0 %4249
      %4252 = vset.pattern.permute.xlu0 23
      %4253 = vperm.xlu0 %4252, %v1843
      %v4254 = vpop.permute.xlu0 %4253
      %4256 = vset.pattern.permute.xlu0 23
      %4257 = vperm.xlu0 %4256, %v1844
      %v4258 = vpop.permute.xlu0 %4257
      %4260 = vset.pattern.permute.xlu0 23
      %4261 = vperm.xlu0 %4260, %v1845
      %v4262 = vpop.permute.xlu0 %4261
      %4264 = vset.pattern.permute.xlu0 23
      %4265 = vperm.xlu0 %4264, %v1846
      %v4266 = vpop.permute.xlu0 %4265
      %4268 = vset.pattern.permute.xlu0 23
      %4269 = vperm.xlu0 %4268, %v1847
      %v4270 = vpop.permute.xlu0 %4269
      %v4272 = vsel %vm4232, %v4242, 0.0
      %v4273 = vsel %vm4233, %v4246, 0.0
      %v4274 = vsel %vm4234, %v4250, 0.0
      %v4275 = vsel %vm4235, %v4254, 0.0
      %v4276 = vsel %vm4236, %v4258, 0.0
      %v4277 = vsel %vm4237, %v4262, 0.0
      %v4278 = vsel %vm4238, %v4266, 0.0
      %v4279 = vsel %vm4239, %v4270, 0.0
      %v4280 = vadd.f32 %v4200, %v4272
      %v4281 = vadd.f32 %v4201, %v4273
      %v4282 = vadd.f32 %v4202, %v4274
      %v4283 = vadd.f32 %v4203, %v4275
      %v4284 = vadd.f32 %v4204, %v4276
      %v4285 = vadd.f32 %v4205, %v4277
      %v4286 = vadd.f32 %v4206, %v4278
      %v4287 = vadd.f32 %v4207, %v4279
      %4288 = vset.pattern.permute.xlu0 7
      %4289 = vperm.xlu0 %4288, %v1420
      %v4290 = vpop.permute.xlu0 %4289
      %4291 = vset.pattern.permute.xlu0 7
      %4292 = vperm.xlu0 %4291, %v1421
      %v4293 = vpop.permute.xlu0 %4292
      %4294 = vset.pattern.permute.xlu0 7
      %4295 = vperm.xlu0 %4294, %v1422
      %v4296 = vpop.permute.xlu0 %4295
      %4297 = vset.pattern.permute.xlu0 7
      %4298 = vperm.xlu0 %4297, %v1423
      %v4299 = vpop.permute.xlu0 %4298
      %4300 = vset.pattern.permute.xlu0 7
      %4301 = vperm.xlu0 %4300, %v1424
      %v4302 = vpop.permute.xlu0 %4301
      %4303 = vset.pattern.permute.xlu0 7
      %4304 = vperm.xlu0 %4303, %v1425
      %v4305 = vpop.permute.xlu0 %4304
      %4306 = vset.pattern.permute.xlu0 7
      %4307 = vperm.xlu0 %4306, %v1426
      %v4308 = vpop.permute.xlu0 %4307
      %4309 = vset.pattern.permute.xlu0 7
      %4310 = vperm.xlu0 %4309, %v1427
      %v4311 = vpop.permute.xlu0 %4310
      %vm4312 = vcmp.eq.s32.totalorder %v4290, %v1661
      %vm4313 = vcmp.eq.s32.totalorder %v4293, %v1661
      %vm4314 = vcmp.eq.s32.totalorder %v4296, %v1661
      %vm4315 = vcmp.eq.s32.totalorder %v4299, %v1661
      %vm4316 = vcmp.eq.s32.totalorder %v4302, %v1661
      %vm4317 = vcmp.eq.s32.totalorder %v4305, %v1661
      %vm4318 = vcmp.eq.s32.totalorder %v4308, %v1661
      %vm4319 = vcmp.eq.s32.totalorder %v4311, %v1661
      %4320 = vset.pattern.permute.xlu0 23
      %4321 = vperm.xlu0 %4320, %v1848
      %v4322 = vpop.permute.xlu0 %4321
      %4324 = vset.pattern.permute.xlu0 23
      %4325 = vperm.xlu0 %4324, %v1849
      %v4326 = vpop.permute.xlu0 %4325
      %4328 = vset.pattern.permute.xlu0 23
      %4329 = vperm.xlu0 %4328, %v1850
      %v4330 = vpop.permute.xlu0 %4329
      %4332 = vset.pattern.permute.xlu0 23
      %4333 = vperm.xlu0 %4332, %v1851
      %v4334 = vpop.permute.xlu0 %4333
      %4336 = vset.pattern.permute.xlu0 23
      %4337 = vperm.xlu0 %4336, %v1852
      %v4338 = vpop.permute.xlu0 %4337
      %4340 = vset.pattern.permute.xlu0 23
      %4341 = vperm.xlu0 %4340, %v1853
      %v4342 = vpop.permute.xlu0 %4341
      %4344 = vset.pattern.permute.xlu0 23
      %4345 = vperm.xlu0 %4344, %v1854
      %v4346 = vpop.permute.xlu0 %4345
      %4348 = vset.pattern.permute.xlu0 23
      %4349 = vperm.xlu0 %4348, %v1855
      %v4350 = vpop.permute.xlu0 %4349
      %v4352 = vsel %vm4312, %v4322, 0.0
      %v4353 = vsel %vm4313, %v4326, 0.0
      %v4354 = vsel %vm4314, %v4330, 0.0
      %v4355 = vsel %vm4315, %v4334, 0.0
      %v4356 = vsel %vm4316, %v4338, 0.0
      %v4357 = vsel %vm4317, %v4342, 0.0
      %v4358 = vsel %vm4318, %v4346, 0.0
      %v4359 = vsel %vm4319, %v4350, 0.0
      %v4360 = vadd.f32 %v4280, %v4352
      %v4361 = vadd.f32 %v4281, %v4353
      %v4362 = vadd.f32 %v4282, %v4354
      %v4363 = vadd.f32 %v4283, %v4355
      %v4364 = vadd.f32 %v4284, %v4356
      %v4365 = vadd.f32 %v4285, %v4357
      %v4366 = vadd.f32 %v4286, %v4358
      %v4367 = vadd.f32 %v4287, %v4359
      %4368 = vset.pattern.permute.xlu0 7
      %4369 = vperm.xlu0 %4368, %v1428
      %v4370 = vpop.permute.xlu0 %4369
      %4371 = vset.pattern.permute.xlu0 7
      %4372 = vperm.xlu0 %4371, %v1429
      %v4373 = vpop.permute.xlu0 %4372
      %4374 = vset.pattern.permute.xlu0 7
      %4375 = vperm.xlu0 %4374, %v1430
      %v4376 = vpop.permute.xlu0 %4375
      %4377 = vset.pattern.permute.xlu0 7
      %4378 = vperm.xlu0 %4377, %v1431
      %v4379 = vpop.permute.xlu0 %4378
      %4380 = vset.pattern.permute.xlu0 7
      %4381 = vperm.xlu0 %4380, %v1432
      %v4382 = vpop.permute.xlu0 %4381
      %4383 = vset.pattern.permute.xlu0 7
      %4384 = vperm.xlu0 %4383, %v1433
      %v4385 = vpop.permute.xlu0 %4384
      %4386 = vset.pattern.permute.xlu0 7
      %4387 = vperm.xlu0 %4386, %v1434
      %v4388 = vpop.permute.xlu0 %4387
      %4389 = vset.pattern.permute.xlu0 7
      %4390 = vperm.xlu0 %4389, %v1435
      %v4391 = vpop.permute.xlu0 %4390
      %vm4392 = vcmp.eq.s32.totalorder %v4370, %v1661
      %vm4393 = vcmp.eq.s32.totalorder %v4373, %v1661
      %vm4394 = vcmp.eq.s32.totalorder %v4376, %v1661
      %vm4395 = vcmp.eq.s32.totalorder %v4379, %v1661
      %vm4396 = vcmp.eq.s32.totalorder %v4382, %v1661
      %vm4397 = vcmp.eq.s32.totalorder %v4385, %v1661
      %vm4398 = vcmp.eq.s32.totalorder %v4388, %v1661
      %vm4399 = vcmp.eq.s32.totalorder %v4391, %v1661
      %4400 = vset.pattern.permute.xlu0 23
      %4401 = vperm.xlu0 %4400, %v1856
      %v4402 = vpop.permute.xlu0 %4401
      %4404 = vset.pattern.permute.xlu0 23
      %4405 = vperm.xlu0 %4404, %v1857
      %v4406 = vpop.permute.xlu0 %4405
      %4408 = vset.pattern.permute.xlu0 23
      %4409 = vperm.xlu0 %4408, %v1858
      %v4410 = vpop.permute.xlu0 %4409
      %4412 = vset.pattern.permute.xlu0 23
      %4413 = vperm.xlu0 %4412, %v1859
      %v4414 = vpop.permute.xlu0 %4413
      %4416 = vset.pattern.permute.xlu0 23
      %4417 = vperm.xlu0 %4416, %v1860
      %v4418 = vpop.permute.xlu0 %4417
      %4420 = vset.pattern.permute.xlu0 23
      %4421 = vperm.xlu0 %4420, %v1861
      %v4422 = vpop.permute.xlu0 %4421
      %4424 = vset.pattern.permute.xlu0 23
      %4425 = vperm.xlu0 %4424, %v1862
      %v4426 = vpop.permute.xlu0 %4425
      %4428 = vset.pattern.permute.xlu0 23
      %4429 = vperm.xlu0 %4428, %v1863
      %v4430 = vpop.permute.xlu0 %4429
      %v4432 = vsel %vm4392, %v4402, 0.0
      %v4433 = vsel %vm4393, %v4406, 0.0
      %v4434 = vsel %vm4394, %v4410, 0.0
      %v4435 = vsel %vm4395, %v4414, 0.0
      %v4436 = vsel %vm4396, %v4418, 0.0
      %v4437 = vsel %vm4397, %v4422, 0.0
      %v4438 = vsel %vm4398, %v4426, 0.0
      %v4439 = vsel %vm4399, %v4430, 0.0
      %v4440 = vadd.f32 %v4360, %v4432
      %v4441 = vadd.f32 %v4361, %v4433
      %v4442 = vadd.f32 %v4362, %v4434
      %v4443 = vadd.f32 %v4363, %v4435
      %v4444 = vadd.f32 %v4364, %v4436
      %v4445 = vadd.f32 %v4365, %v4437
      %v4446 = vadd.f32 %v4366, %v4438
      %v4447 = vadd.f32 %v4367, %v4439
      %v4448 = vadd.f32 %v4128, %v4440
      %v4449 = vadd.f32 %v4129, %v4441
      %v4450 = vadd.f32 %v4130, %v4442
      %v4451 = vadd.f32 %v4131, %v4443
      %v4452 = vadd.f32 %v4132, %v4444
      %v4453 = vadd.f32 %v4133, %v4445
      %v4454 = vadd.f32 %v4134, %v4446
      %v4455 = vadd.f32 %v4135, %v4447
      %v4456 = vpack.c.bf16 %v4449, %v4448
      %v4457 = vpack.c.bf16 %v4451, %v4450
      %v4458 = vpack.c.bf16 %v4453, %v4452
      %v4459 = vpack.c.bf16 %v4455, %v4454
      %v4476 = vunpack.c.l.b16 %v1662
      %v4477 = vunpack.c.l.b16 %v1663
      %v4478 = vunpack.c.l.b16 %v1664
      %v4479 = vunpack.c.l.b16 %v1665
      %v4480 = vunpack.c.l.b16 %v1666
      %v4481 = vunpack.c.l.b16 %v1667
      %v4482 = vunpack.c.l.b16 %v1668
      %v4483 = vunpack.c.l.b16 %v1669
      %v4484 = vunpack.c.l.b16 %v1670
      %v4485 = vunpack.c.l.b16 %v1671
      %v4486 = vunpack.c.l.b16 %v1672
      %v4487 = vunpack.c.l.b16 %v1673
      %v4488 = vunpack.c.l.b16 %v1674
      %v4489 = vunpack.c.l.b16 %v1675
      %v4490 = vunpack.c.l.b16 %v1676
      %v4491 = vunpack.c.l.b16 %v1677
      %v4492 = vpack.c.b16 %v4477, %v4476
      %v4493 = vpack.c.b16 %v4479, %v4478
      %v4494 = vpack.c.b16 %v4481, %v4480
      %v4495 = vpack.c.b16 %v4483, %v4482
      %v4496 = vpack.c.b16 %v4485, %v4484
      %v4497 = vpack.c.b16 %v4487, %v4486
      %v4498 = vpack.c.b16 %v4489, %v4488
      %v4499 = vpack.c.b16 %v4491, %v4490
      %4508 = vmatprep.subr.bf16.mxu0 0
      %4509 = vmatpush1.bf16.msra.mxu0 %v4499
      %4510 = vmatprep.subr.bf16.mxu0 0
      %4511 = vmatpush1.bf16.msra.mxu0 %v4498
      %4512 = vmatprep.subr.bf16.mxu0 0
      %4513 = vmatpush1.bf16.msra.mxu0 %v4497
      %4514 = vmatprep.subr.bf16.mxu0 0
      %4515 = vmatpush1.bf16.msra.mxu0 %v4496
      %4516 = vmatprep.subr.bf16.mxu0 0
      %4517 = vmatpush1.bf16.msra.mxu0 %v4495
      %4518 = vmatprep.subr.bf16.mxu0 0
      %4519 = vmatpush1.bf16.msra.mxu0 %v4494
      %4520 = vmatprep.subr.bf16.mxu0 0
      %4521 = vmatpush1.bf16.msra.mxu0 %v4493
      %4522 = vmatprep.subr.bf16.mxu0 0
      %4523 = vmatpush1.bf16.msra.mxu0 %v4492
      %4524 = vmatprep.subr.bf16.mxu0 0
      %4525 = vmatpush2.bf16.msra.mxu0 0
      %4526 = vmatprep.subr.bf16.mxu0 0
      %4527 = vmatpush2.bf16.msra.mxu0 0
      %4528 = vmatprep.subr.bf16.mxu0 0
      %4529 = vmatpush2.bf16.msra.mxu0 0
      %4530 = vmatprep.subr.bf16.mxu0 0
      %4531 = vmatpush2.bf16.msra.mxu0 0
      %4532 = vmatprep.subr.bf16.mxu0 0
      %4533 = vmatpush2.bf16.msra.mxu0 0
      %4534 = vmatprep.subr.bf16.mxu0 0
      %4535 = vmatpush2.bf16.msra.mxu0 0
      %4536 = vmatprep.subr.bf16.mxu0 0
      %4537 = vmatpush2.bf16.msra.mxu0 0
      %4538 = vmatprep.subr.bf16.mxu0 0
      %4539 = vmatpush2.bf16.msra.mxu0 0
      %4540 = vmatprep.mubr.bf16.mxu0 0
      %4541 = vmatmul.mubr.bf16.gmra.mxu0 %v4456
      %v4542 = vpop.f32.mrf.mxu0
      %v4543 = vadd.f32 0.0, %v4542
      %v4544 = vpop.f32.mrf.mxu0
      %v4545 = vpop.f32.mrf.mxu0
      %v4546 = vadd.f32 0.0, %v4545
      %v4547 = vpop.f32.mrf.mxu0
      %4548 = vmatprep.mubr.bf16.mxu0 0
      %4549 = vmatmul.mubr.bf16.gmra.mxu0 %v4457
      %v4550 = vpop.f32.mrf.mxu0
      %v4551 = vadd.f32 0.0, %v4550
      %v4552 = vpop.f32.mrf.mxu0
      %v4553 = vpop.f32.mrf.mxu0
      %v4554 = vadd.f32 0.0, %v4553
      %v4555 = vpop.f32.mrf.mxu0
      %4556 = vmatprep.mubr.bf16.mxu0 0
      %4557 = vmatmul.mubr.bf16.gmra.mxu0 %v4458
      %v4558 = vpop.f32.mrf.mxu0
      %v4559 = vadd.f32 0.0, %v4558
      %v4560 = vpop.f32.mrf.mxu0
      %v4561 = vpop.f32.mrf.mxu0
      %v4562 = vadd.f32 0.0, %v4561
      %v4563 = vpop.f32.mrf.mxu0
      %4564 = vmatprep.mubr.bf16.mxu0 0
      %4565 = vmatmul.mubr.bf16.gmra.mxu0 %v4459
      %v4566 = vpop.f32.mrf.mxu0
      %v4567 = vadd.f32 0.0, %v4566
      %v4568 = vpop.f32.mrf.mxu0
      %v4569 = vpop.f32.mrf.mxu0
      %v4570 = vadd.f32 0.0, %v4569
      %v4571 = vpop.f32.mrf.mxu0
      %4572 = vdwg.mxu0
      %v4573 = vpack.c.bf16 %v4546, %v4543
      %v4574 = vpack.c.bf16 %v4554, %v4551
      %v4575 = vpack.c.bf16 %v4562, %v4559
      %v4576 = vpack.c.bf16 %v4570, %v4567
      %v4577 = vld [vmem:[%s9] sm:$0xff]
      %v4578 = vld [vmem:[%s9 + $0x8] sm:$0xff]
      %v4579 = vld [vmem:[%s9 + $0x10] sm:$0xff]
      %v4580 = vld [vmem:[%s9 + $0x18] sm:$0xff]
      %v4581 = vpack.c.bf16 %v4578, %v4577
      %v4582 = vpack.c.bf16 %v4580, %v4579
      %vm4583 = vcmask 392512
      %v4584 = vsel %vm4583, %v1054, -inf
      %4585 = vmax.xlane.f32.xlu0 %v4584
      %v4586 = vpop.xlane.xlu0 %4585
      %v4587 = vsel %vm4583, %v1057, -inf
      %4588 = vmax.xlane.f32.xlu0 %v4587
      %v4589 = vpop.xlane.xlu0 %4588
      %v4590 = vsel %vm4583, %v1062, -inf
      %4591 = vmax.xlane.f32.xlu0 %v4590
      %v4592 = vpop.xlane.xlu0 %4591
      %v4593 = vsel %vm4583, %v1065, -inf
      %4594 = vmax.xlane.f32.xlu0 %v4593
      %v4595 = vpop.xlane.xlu0 %4594
      %v4596 = vsel %vm4583, %v1070, -inf
      %4597 = vmax.xlane.f32.xlu0 %v4596
      %v4598 = vpop.xlane.xlu0 %4597
      %v4599 = vsel %vm4583, %v1073, -inf
      %4600 = vmax.xlane.f32.xlu0 %v4599
      %v4601 = vpop.xlane.xlu0 %4600
      %v4602 = vsel %vm4583, %v1078, -inf
      %4603 = vmax.xlane.f32.xlu0 %v4602
      %v4604 = vpop.xlane.xlu0 %4603
      %v4605 = vsel %vm4583, %v1081, -inf
      %4606 = vmax.xlane.f32.xlu0 %v4605
      %v4607 = vpop.xlane.xlu0 %4606
      %v4608 = vsub.f32 %v1054, %v4586
      %v4609 = vsub.f32 %v1057, %v4589
      %v4610 = vsub.f32 %v1062, %v4592
      %v4611 = vsub.f32 %v1065, %v4595
      %v4612 = vsub.f32 %v1070, %v4598
      %v4613 = vsub.f32 %v1073, %v4601
      %v4614 = vsub.f32 %v1078, %v4604
      %v4615 = vsub.f32 %v1081, %v4607
      %v4616 = vmul.f32 %v4608, 1.442695
      %v4617 = vpow.pop %v4616
      %v4618 = vmul.f32 %v4609, 1.442695
      %v4619 = vpow.pop %v4618
      %v4620 = vmul.f32 %v4610, 1.442695
      %v4621 = vpow.pop %v4620
      %v4622 = vmul.f32 %v4611, 1.442695
      %v4623 = vpow.pop %v4622
      %v4624 = vmul.f32 %v4612, 1.442695
      %v4625 = vpow.pop %v4624
      %v4626 = vmul.f32 %v4613, 1.442695
      %v4627 = vpow.pop %v4626
      %v4628 = vmul.f32 %v4614, 1.442695
      %v4629 = vpow.pop %v4628
      %v4630 = vmul.f32 %v4615, 1.442695
      %v4631 = vpow.pop %v4630
      %4640 = vrot.lane.b32.xlu0 %v4617, 88
      %v4641 = vpop.permute.xlu0 %4640
      %4642 = vrot.lane.b32.xlu0 %v4619, 88
      %v4643 = vpop.permute.xlu0 %4642
      %4644 = vrot.lane.b32.xlu0 %v4621, 88
      %v4645 = vpop.permute.xlu0 %4644
      %4646 = vrot.lane.b32.xlu0 %v4623, 88
      %v4647 = vpop.permute.xlu0 %4646
      %4648 = vrot.lane.b32.xlu0 %v4625, 88
      %v4649 = vpop.permute.xlu0 %4648
      %4650 = vrot.lane.b32.xlu0 %v4627, 88
      %v4651 = vpop.permute.xlu0 %4650
      %4652 = vrot.lane.b32.xlu0 %v4629, 88
      %v4653 = vpop.permute.xlu0 %4652
      %4654 = vrot.lane.b32.xlu0 %v4631, 88
      %v4655 = vpop.permute.xlu0 %4654
      %v4664 = vsel %vm1759, %v4641, 0.0
      %4665 = vadd.xlane.f32.xlu0 %v4664
      %v4666 = vpop.xlane.xlu0 %4665
      %v4667 = vsel %vm1759, %v4643, 0.0
      %4668 = vadd.xlane.f32.xlu0 %v4667
      %v4669 = vpop.xlane.xlu0 %4668
      %v4670 = vsel %vm1759, %v4645, 0.0
      %4671 = vadd.xlane.f32.xlu0 %v4670
      %v4672 = vpop.xlane.xlu0 %4671
      %v4673 = vsel %vm1759, %v4647, 0.0
      %4674 = vadd.xlane.f32.xlu0 %v4673
      %v4675 = vpop.xlane.xlu0 %4674
      %v4676 = vsel %vm1759, %v4649, 0.0
      %4677 = vadd.xlane.f32.xlu0 %v4676
      %v4678 = vpop.xlane.xlu0 %4677
      %v4679 = vsel %vm1759, %v4651, 0.0
      %4680 = vadd.xlane.f32.xlu0 %v4679
      %v4681 = vpop.xlane.xlu0 %4680
      %v4682 = vsel %vm1759, %v4653, 0.0
      %4683 = vadd.xlane.f32.xlu0 %v4682
      %v4684 = vpop.xlane.xlu0 %4683
      %v4685 = vsel %vm1759, %v4655, 0.0
      %4686 = vadd.xlane.f32.xlu0 %v4685
      %v4687 = vpop.xlane.xlu0 %4686
      %v4688 = vrcp.pop %v4666
      %v4689 = vrcp.pop %v4669
      %v4690 = vrcp.pop %v4672
      %v4691 = vrcp.pop %v4675
      %v4692 = vrcp.pop %v4678
      %v4693 = vrcp.pop %v4681
      %v4694 = vrcp.pop %v4684
      %v4695 = vrcp.pop %v4687
      %v4696 = vmul.f32 %v4617, %v4688
      %v4697 = vmul.f32 %v4619, %v4689
      %v4698 = vmul.f32 %v4621, %v4690
      %v4699 = vmul.f32 %v4623, %v4691
      %v4700 = vmul.f32 %v4625, %v4692
      %v4701 = vmul.f32 %v4627, %v4693
      %v4702 = vmul.f32 %v4629, %v4694
      %v4703 = vmul.f32 %v4631, %v4695
      %4712 = vrot.lane.b32.xlu0 %v4696, 112
      %v4713 = vpop.permute.xlu0 %4712
      %4714 = vrot.lane.b32.xlu0 %v4697, 112
      %v4715 = vpop.permute.xlu0 %4714
      %4716 = vrot.lane.b32.xlu0 %v4698, 112
      %v4717 = vpop.permute.xlu0 %4716
      %4718 = vrot.lane.b32.xlu0 %v4699, 112
      %v4719 = vpop.permute.xlu0 %4718
      %4720 = vrot.lane.b32.xlu0 %v4700, 112
      %v4721 = vpop.permute.xlu0 %4720
      %4722 = vrot.lane.b32.xlu0 %v4701, 112
      %v4723 = vpop.permute.xlu0 %4722
      %4724 = vrot.lane.b32.xlu0 %v4702, 112
      %v4725 = vpop.permute.xlu0 %4724
      %4726 = vrot.lane.b32.xlu0 %v4703, 112
      %v4727 = vpop.permute.xlu0 %4726
      %v4736 = vmul.f32 %v1516, %v4713
      %v4737 = vmul.f32 %v1517, %v4715
      %v4738 = vmul.f32 %v1518, %v4717
      %v4739 = vmul.f32 %v1519, %v4719
      %v4740 = vmul.f32 %v1520, %v4721
      %v4741 = vmul.f32 %v1521, %v4723
      %v4742 = vmul.f32 %v1522, %v4725
      %v4743 = vmul.f32 %v1523, %v4727
      %v4744 = vmul.f32 %v1604, %v4713
      %v4745 = vmul.f32 %v1605, %v4715
      %v4746 = vmul.f32 %v1606, %v4717
      %v4747 = vmul.f32 %v1607, %v4719
      %v4748 = vmul.f32 %v1608, %v4721
      %v4749 = vmul.f32 %v1609, %v4723
      %v4750 = vmul.f32 %v1610, %v4725
      %v4751 = vmul.f32 %v1611, %v4727
      %v4752 = vmul.f32 %v1628, %v4713
      %v4753 = vmul.f32 %v1629, %v4715
      %v4754 = vmul.f32 %v1630, %v4717
      %v4755 = vmul.f32 %v1631, %v4719
      %v4756 = vmul.f32 %v1632, %v4721
      %v4757 = vmul.f32 %v1633, %v4723
      %v4758 = vmul.f32 %v1634, %v4725
      %v4759 = vmul.f32 %v1635, %v4727
      %v4760 = vmul.f32 %v1652, %v4713
      %v4761 = vmul.f32 %v1653, %v4715
      %v4762 = vmul.f32 %v1654, %v4717
      %v4763 = vmul.f32 %v1655, %v4719
      %v4764 = vmul.f32 %v1656, %v4721
      %v4765 = vmul.f32 %v1657, %v4723
      %v4766 = vmul.f32 %v1658, %v4725
      %v4767 = vmul.f32 %v1659, %v4727
      %4768 = vset.pattern.permute.xlu0 8
      %4769 = vperm.xlu0 %4768, %v1404
      %v4770 = vpop.permute.xlu0 %4769
      %4771 = vset.pattern.permute.xlu0 8
      %4772 = vperm.xlu0 %4771, %v1405
      %v4773 = vpop.permute.xlu0 %4772
      %4774 = vset.pattern.permute.xlu0 8
      %4775 = vperm.xlu0 %4774, %v1406
      %v4776 = vpop.permute.xlu0 %4775
      %4777 = vset.pattern.permute.xlu0 8
      %4778 = vperm.xlu0 %4777, %v1407
      %v4779 = vpop.permute.xlu0 %4778
      %4780 = vset.pattern.permute.xlu0 8
      %4781 = vperm.xlu0 %4780, %v1408
      %v4782 = vpop.permute.xlu0 %4781
      %4783 = vset.pattern.permute.xlu0 8
      %4784 = vperm.xlu0 %4783, %v1409
      %v4785 = vpop.permute.xlu0 %4784
      %4786 = vset.pattern.permute.xlu0 8
      %4787 = vperm.xlu0 %4786, %v1410
      %v4788 = vpop.permute.xlu0 %4787
      %4789 = vset.pattern.permute.xlu0 8
      %4790 = vperm.xlu0 %4789, %v1411
      %v4791 = vpop.permute.xlu0 %4790
      %vm4792 = vcmp.eq.s32.totalorder %v4770, %v1661
      %vm4793 = vcmp.eq.s32.totalorder %v4773, %v1661
      %vm4794 = vcmp.eq.s32.totalorder %v4776, %v1661
      %vm4795 = vcmp.eq.s32.totalorder %v4779, %v1661
      %vm4796 = vcmp.eq.s32.totalorder %v4782, %v1661
      %vm4797 = vcmp.eq.s32.totalorder %v4785, %v1661
      %vm4798 = vcmp.eq.s32.totalorder %v4788, %v1661
      %vm4799 = vcmp.eq.s32.totalorder %v4791, %v1661
      %4801 = vset.pattern.permute.xlu0 24
      %4802 = vperm.xlu0 %4801, %v4736
      %v4803 = vpop.permute.xlu0 %4802
      %4806 = vset.pattern.permute.xlu0 24
      %4807 = vperm.xlu0 %4806, %v4737
      %v4808 = vpop.permute.xlu0 %4807
      %4811 = vset.pattern.permute.xlu0 24
      %4812 = vperm.xlu0 %4811, %v4738
      %v4813 = vpop.permute.xlu0 %4812
      %4816 = vset.pattern.permute.xlu0 24
      %4817 = vperm.xlu0 %4816, %v4739
      %v4818 = vpop.permute.xlu0 %4817
      %4821 = vset.pattern.permute.xlu0 24
      %4822 = vperm.xlu0 %4821, %v4740
      %v4823 = vpop.permute.xlu0 %4822
      %4826 = vset.pattern.permute.xlu0 24
      %4827 = vperm.xlu0 %4826, %v4741
      %v4828 = vpop.permute.xlu0 %4827
      %4831 = vset.pattern.permute.xlu0 24
      %4832 = vperm.xlu0 %4831, %v4742
      %v4833 = vpop.permute.xlu0 %4832
      %4836 = vset.pattern.permute.xlu0 24
      %4837 = vperm.xlu0 %4836, %v4743
      %v4838 = vpop.permute.xlu0 %4837
      %v4840 = vsel %vm4792, %v4803, 0.0
      %v4841 = vsel %vm4793, %v4808, 0.0
      %v4842 = vsel %vm4794, %v4813, 0.0
      %v4843 = vsel %vm4795, %v4818, 0.0
      %v4844 = vsel %vm4796, %v4823, 0.0
      %v4845 = vsel %vm4797, %v4828, 0.0
      %v4846 = vsel %vm4798, %v4833, 0.0
      %v4847 = vsel %vm4799, %v4838, 0.0
      %4848 = vset.pattern.permute.xlu0 8
      %4849 = vperm.xlu0 %4848, %v1412
      %v4850 = vpop.permute.xlu0 %4849
      %4851 = vset.pattern.permute.xlu0 8
      %4852 = vperm.xlu0 %4851, %v1413
      %v4853 = vpop.permute.xlu0 %4852
      %4854 = vset.pattern.permute.xlu0 8
      %4855 = vperm.xlu0 %4854, %v1414
      %v4856 = vpop.permute.xlu0 %4855
      %4857 = vset.pattern.permute.xlu0 8
      %4858 = vperm.xlu0 %4857, %v1415
      %v4859 = vpop.permute.xlu0 %4858
      %4860 = vset.pattern.permute.xlu0 8
      %4861 = vperm.xlu0 %4860, %v1416
      %v4862 = vpop.permute.xlu0 %4861
      %4863 = vset.pattern.permute.xlu0 8
      %4864 = vperm.xlu0 %4863, %v1417
      %v4865 = vpop.permute.xlu0 %4864
      %4866 = vset.pattern.permute.xlu0 8
      %4867 = vperm.xlu0 %4866, %v1418
      %v4868 = vpop.permute.xlu0 %4867
      %4869 = vset.pattern.permute.xlu0 8
      %4870 = vperm.xlu0 %4869, %v1419
      %v4871 = vpop.permute.xlu0 %4870
      %vm4872 = vcmp.eq.s32.totalorder %v4850, %v1661
      %vm4873 = vcmp.eq.s32.totalorder %v4853, %v1661
      %vm4874 = vcmp.eq.s32.totalorder %v4856, %v1661
      %vm4875 = vcmp.eq.s32.totalorder %v4859, %v1661
      %vm4876 = vcmp.eq.s32.totalorder %v4862, %v1661
      %vm4877 = vcmp.eq.s32.totalorder %v4865, %v1661
      %vm4878 = vcmp.eq.s32.totalorder %v4868, %v1661
      %vm4879 = vcmp.eq.s32.totalorder %v4871, %v1661
      %4881 = vset.pattern.permute.xlu0 24
      %4882 = vperm.xlu0 %4881, %v4744
      %v4883 = vpop.permute.xlu0 %4882
      %4886 = vset.pattern.permute.xlu0 24
      %4887 = vperm.xlu0 %4886, %v4745
      %v4888 = vpop.permute.xlu0 %4887
      %4891 = vset.pattern.permute.xlu0 24
      %4892 = vperm.xlu0 %4891, %v4746
      %v4893 = vpop.permute.xlu0 %4892
      %4896 = vset.pattern.permute.xlu0 24
      %4897 = vperm.xlu0 %4896, %v4747
      %v4898 = vpop.permute.xlu0 %4897
      %4901 = vset.pattern.permute.xlu0 24
      %4902 = vperm.xlu0 %4901, %v4748
      %v4903 = vpop.permute.xlu0 %4902
      %4906 = vset.pattern.permute.xlu0 24
      %4907 = vperm.xlu0 %4906, %v4749
      %v4908 = vpop.permute.xlu0 %4907
      %4911 = vset.pattern.permute.xlu0 24
      %4912 = vperm.xlu0 %4911, %v4750
      %v4913 = vpop.permute.xlu0 %4912
      %4916 = vset.pattern.permute.xlu0 24
      %4917 = vperm.xlu0 %4916, %v4751
      %v4918 = vpop.permute.xlu0 %4917
      %v4920 = vsel %vm4872, %v4883, 0.0
      %v4921 = vsel %vm4873, %v4888, 0.0
      %v4922 = vsel %vm4874, %v4893, 0.0
      %v4923 = vsel %vm4875, %v4898, 0.0
      %v4924 = vsel %vm4876, %v4903, 0.0
      %v4925 = vsel %vm4877, %v4908, 0.0
      %v4926 = vsel %vm4878, %v4913, 0.0
      %v4927 = vsel %vm4879, %v4918, 0.0
      %v4928 = vadd.f32 %v4840, %v4920
      %v4929 = vadd.f32 %v4841, %v4921
      %v4930 = vadd.f32 %v4842, %v4922
      %v4931 = vadd.f32 %v4843, %v4923
      %v4932 = vadd.f32 %v4844, %v4924
      %v4933 = vadd.f32 %v4845, %v4925
      %v4934 = vadd.f32 %v4846, %v4926
      %v4935 = vadd.f32 %v4847, %v4927
      %4936 = vset.pattern.permute.xlu0 8
      %4937 = vperm.xlu0 %4936, %v1420
      %v4938 = vpop.permute.xlu0 %4937
      %4939 = vset.pattern.permute.xlu0 8
      %4940 = vperm.xlu0 %4939, %v1421
      %v4941 = vpop.permute.xlu0 %4940
      %4942 = vset.pattern.permute.xlu0 8
      %4943 = vperm.xlu0 %4942, %v1422
      %v4944 = vpop.permute.xlu0 %4943
      %4945 = vset.pattern.permute.xlu0 8
      %4946 = vperm.xlu0 %4945, %v1423
      %v4947 = vpop.permute.xlu0 %4946
      %4948 = vset.pattern.permute.xlu0 8
      %4949 = vperm.xlu0 %4948, %v1424
      %v4950 = vpop.permute.xlu0 %4949
      %4951 = vset.pattern.permute.xlu0 8
      %4952 = vperm.xlu0 %4951, %v1425
      %v4953 = vpop.permute.xlu0 %4952
      %4954 = vset.pattern.permute.xlu0 8
      %4955 = vperm.xlu0 %4954, %v1426
      %v4956 = vpop.permute.xlu0 %4955
      %4957 = vset.pattern.permute.xlu0 8
      %4958 = vperm.xlu0 %4957, %v1427
      %v4959 = vpop.permute.xlu0 %4958
      %vm4960 = vcmp.eq.s32.totalorder %v4938, %v1661
      %vm4961 = vcmp.eq.s32.totalorder %v4941, %v1661
      %vm4962 = vcmp.eq.s32.totalorder %v4944, %v1661
      %vm4963 = vcmp.eq.s32.totalorder %v4947, %v1661
      %vm4964 = vcmp.eq.s32.totalorder %v4950, %v1661
      %vm4965 = vcmp.eq.s32.totalorder %v4953, %v1661
      %vm4966 = vcmp.eq.s32.totalorder %v4956, %v1661
      %vm4967 = vcmp.eq.s32.totalorder %v4959, %v1661
      %4969 = vset.pattern.permute.xlu0 24
      %4970 = vperm.xlu0 %4969, %v4752
      %v4971 = vpop.permute.xlu0 %4970
      %4974 = vset.pattern.permute.xlu0 24
      %4975 = vperm.xlu0 %4974, %v4753
      %v4976 = vpop.permute.xlu0 %4975
      %4979 = vset.pattern.permute.xlu0 24
      %4980 = vperm.xlu0 %4979, %v4754
      %v4981 = vpop.permute.xlu0 %4980
      %4984 = vset.pattern.permute.xlu0 24
      %4985 = vperm.xlu0 %4984, %v4755
      %v4986 = vpop.permute.xlu0 %4985
      %4989 = vset.pattern.permute.xlu0 24
      %4990 = vperm.xlu0 %4989, %v4756
      %v4991 = vpop.permute.xlu0 %4990
      %4994 = vset.pattern.permute.xlu0 24
      %4995 = vperm.xlu0 %4994, %v4757
      %v4996 = vpop.permute.xlu0 %4995
      %4999 = vset.pattern.permute.xlu0 24
      %5000 = vperm.xlu0 %4999, %v4758
      %v5001 = vpop.permute.xlu0 %5000
      %5004 = vset.pattern.permute.xlu0 24
      %5005 = vperm.xlu0 %5004, %v4759
      %v5006 = vpop.permute.xlu0 %5005
      %v5008 = vsel %vm4960, %v4971, 0.0
      %v5009 = vsel %vm4961, %v4976, 0.0
      %v5010 = vsel %vm4962, %v4981, 0.0
      %v5011 = vsel %vm4963, %v4986, 0.0
      %v5012 = vsel %vm4964, %v4991, 0.0
      %v5013 = vsel %vm4965, %v4996, 0.0
      %v5014 = vsel %vm4966, %v5001, 0.0
      %v5015 = vsel %vm4967, %v5006, 0.0
      %v5016 = vadd.f32 %v4928, %v5008
      %v5017 = vadd.f32 %v4929, %v5009
      %v5018 = vadd.f32 %v4930, %v5010
      %v5019 = vadd.f32 %v4931, %v5011
      %v5020 = vadd.f32 %v4932, %v5012
      %v5021 = vadd.f32 %v4933, %v5013
      %v5022 = vadd.f32 %v4934, %v5014
      %v5023 = vadd.f32 %v4935, %v5015
      %5024 = vset.pattern.permute.xlu0 8
      %5025 = vperm.xlu0 %5024, %v1428
      %v5026 = vpop.permute.xlu0 %5025
      %5027 = vset.pattern.permute.xlu0 8
      %5028 = vperm.xlu0 %5027, %v1429
      %v5029 = vpop.permute.xlu0 %5028
      %5030 = vset.pattern.permute.xlu0 8
      %5031 = vperm.xlu0 %5030, %v1430
      %v5032 = vpop.permute.xlu0 %5031
      %5033 = vset.pattern.permute.xlu0 8
      %5034 = vperm.xlu0 %5033, %v1431
      %v5035 = vpop.permute.xlu0 %5034
      %5036 = vset.pattern.permute.xlu0 8
      %5037 = vperm.xlu0 %5036, %v1432
      %v5038 = vpop.permute.xlu0 %5037
      %5039 = vset.pattern.permute.xlu0 8
      %5040 = vperm.xlu0 %5039, %v1433
      %v5041 = vpop.permute.xlu0 %5040
      %5042 = vset.pattern.permute.xlu0 8
      %5043 = vperm.xlu0 %5042, %v1434
      %v5044 = vpop.permute.xlu0 %5043
      %5045 = vset.pattern.permute.xlu0 8
      %5046 = vperm.xlu0 %5045, %v1435
      %v5047 = vpop.permute.xlu0 %5046
      %vm5048 = vcmp.eq.s32.totalorder %v5026, %v1661
      %vm5049 = vcmp.eq.s32.totalorder %v5029, %v1661
      %vm5050 = vcmp.eq.s32.totalorder %v5032, %v1661
      %vm5051 = vcmp.eq.s32.totalorder %v5035, %v1661
      %vm5052 = vcmp.eq.s32.totalorder %v5038, %v1661
      %vm5053 = vcmp.eq.s32.totalorder %v5041, %v1661
      %vm5054 = vcmp.eq.s32.totalorder %v5044, %v1661
      %vm5055 = vcmp.eq.s32.totalorder %v5047, %v1661
      %5057 = vset.pattern.permute.xlu0 24
      %5058 = vperm.xlu0 %5057, %v4760
      %v5059 = vpop.permute.xlu0 %5058
      %5062 = vset.pattern.permute.xlu0 24
      %5063 = vperm.xlu0 %5062, %v4761
      %v5064 = vpop.permute.xlu0 %5063
      %5067 = vset.pattern.permute.xlu0 24
      %5068 = vperm.xlu0 %5067, %v4762
      %v5069 = vpop.permute.xlu0 %5068
      %5072 = vset.pattern.permute.xlu0 24
      %5073 = vperm.xlu0 %5072, %v4763
      %v5074 = vpop.permute.xlu0 %5073
      %5077 = vset.pattern.permute.xlu0 24
      %5078 = vperm.xlu0 %5077, %v4764
      %v5079 = vpop.permute.xlu0 %5078
      %5082 = vset.pattern.permute.xlu0 24
      %5083 = vperm.xlu0 %5082, %v4765
      %v5084 = vpop.permute.xlu0 %5083
      %5087 = vset.pattern.permute.xlu0 24
      %5088 = vperm.xlu0 %5087, %v4766
      %v5089 = vpop.permute.xlu0 %5088
      %5092 = vset.pattern.permute.xlu0 24
      %5093 = vperm.xlu0 %5092, %v4767
      %v5094 = vpop.permute.xlu0 %5093
      %v5096 = vsel %vm5048, %v5059, 0.0
      %v5097 = vsel %vm5049, %v5064, 0.0
      %v5098 = vsel %vm5050, %v5069, 0.0
      %v5099 = vsel %vm5051, %v5074, 0.0
      %v5100 = vsel %vm5052, %v5079, 0.0
      %v5101 = vsel %vm5053, %v5084, 0.0
      %v5102 = vsel %vm5054, %v5089, 0.0
      %v5103 = vsel %vm5055, %v5094, 0.0
      %v5104 = vadd.f32 %v5016, %v5096
      %v5105 = vadd.f32 %v5017, %v5097
      %v5106 = vadd.f32 %v5018, %v5098
      %v5107 = vadd.f32 %v5019, %v5099
      %v5108 = vadd.f32 %v5020, %v5100
      %v5109 = vadd.f32 %v5021, %v5101
      %v5110 = vadd.f32 %v5022, %v5102
      %v5111 = vadd.f32 %v5023, %v5103
      %v5112 = vadd.f32 %v5104, 0.0
      %v5113 = vadd.f32 %v5105, 0.0
      %v5114 = vadd.f32 %v5106, 0.0
      %v5115 = vadd.f32 %v5107, 0.0
      %v5116 = vadd.f32 %v5108, 0.0
      %v5117 = vadd.f32 %v5109, 0.0
      %v5118 = vadd.f32 %v5110, 0.0
      %v5119 = vadd.f32 %v5111, 0.0
      %5120 = vset.pattern.permute.xlu0 9
      %5121 = vperm.xlu0 %5120, %v1404
      %v5122 = vpop.permute.xlu0 %5121
      %5123 = vset.pattern.permute.xlu0 9
      %5124 = vperm.xlu0 %5123, %v1405
      %v5125 = vpop.permute.xlu0 %5124
      %5126 = vset.pattern.permute.xlu0 9
      %5127 = vperm.xlu0 %5126, %v1406
      %v5128 = vpop.permute.xlu0 %5127
      %5129 = vset.pattern.permute.xlu0 9
      %5130 = vperm.xlu0 %5129, %v1407
      %v5131 = vpop.permute.xlu0 %5130
      %5132 = vset.pattern.permute.xlu0 9
      %5133 = vperm.xlu0 %5132, %v1408
      %v5134 = vpop.permute.xlu0 %5133
      %5135 = vset.pattern.permute.xlu0 9
      %5136 = vperm.xlu0 %5135, %v1409
      %v5137 = vpop.permute.xlu0 %5136
      %5138 = vset.pattern.permute.xlu0 9
      %5139 = vperm.xlu0 %5138, %v1410
      %v5140 = vpop.permute.xlu0 %5139
      %5141 = vset.pattern.permute.xlu0 9
      %5142 = vperm.xlu0 %5141, %v1411
      %v5143 = vpop.permute.xlu0 %5142
      %vm5144 = vcmp.eq.s32.totalorder %v5122, %v1661
      %vm5145 = vcmp.eq.s32.totalorder %v5125, %v1661
      %vm5146 = vcmp.eq.s32.totalorder %v5128, %v1661
      %vm5147 = vcmp.eq.s32.totalorder %v5131, %v1661
      %vm5148 = vcmp.eq.s32.totalorder %v5134, %v1661
      %vm5149 = vcmp.eq.s32.totalorder %v5137, %v1661
      %vm5150 = vcmp.eq.s32.totalorder %v5140, %v1661
      %vm5151 = vcmp.eq.s32.totalorder %v5143, %v1661
      %5152 = vset.pattern.permute.xlu0 25
      %5153 = vperm.xlu0 %5152, %v4736
      %v5154 = vpop.permute.xlu0 %5153
      %5156 = vset.pattern.permute.xlu0 25
      %5157 = vperm.xlu0 %5156, %v4737
      %v5158 = vpop.permute.xlu0 %5157
      %5160 = vset.pattern.permute.xlu0 25
      %5161 = vperm.xlu0 %5160, %v4738
      %v5162 = vpop.permute.xlu0 %5161
      %5164 = vset.pattern.permute.xlu0 25
      %5165 = vperm.xlu0 %5164, %v4739
      %v5166 = vpop.permute.xlu0 %5165
      %5168 = vset.pattern.permute.xlu0 25
      %5169 = vperm.xlu0 %5168, %v4740
      %v5170 = vpop.permute.xlu0 %5169
      %5172 = vset.pattern.permute.xlu0 25
      %5173 = vperm.xlu0 %5172, %v4741
      %v5174 = vpop.permute.xlu0 %5173
      %5176 = vset.pattern.permute.xlu0 25
      %5177 = vperm.xlu0 %5176, %v4742
      %v5178 = vpop.permute.xlu0 %5177
      %5180 = vset.pattern.permute.xlu0 25
      %5181 = vperm.xlu0 %5180, %v4743
      %v5182 = vpop.permute.xlu0 %5181
      %v5184 = vsel %vm5144, %v5154, 0.0
      %v5185 = vsel %vm5145, %v5158, 0.0
      %v5186 = vsel %vm5146, %v5162, 0.0
      %v5187 = vsel %vm5147, %v5166, 0.0
      %v5188 = vsel %vm5148, %v5170, 0.0
      %v5189 = vsel %vm5149, %v5174, 0.0
      %v5190 = vsel %vm5150, %v5178, 0.0
      %v5191 = vsel %vm5151, %v5182, 0.0
      %5192 = vset.pattern.permute.xlu0 9
      %5193 = vperm.xlu0 %5192, %v1412
      %v5194 = vpop.permute.xlu0 %5193
      %5195 = vset.pattern.permute.xlu0 9
      %5196 = vperm.xlu0 %5195, %v1413
      %v5197 = vpop.permute.xlu0 %5196
      %5198 = vset.pattern.permute.xlu0 9
      %5199 = vperm.xlu0 %5198, %v1414
      %v5200 = vpop.permute.xlu0 %5199
      %5201 = vset.pattern.permute.xlu0 9
      %5202 = vperm.xlu0 %5201, %v1415
      %v5203 = vpop.permute.xlu0 %5202
      %5204 = vset.pattern.permute.xlu0 9
      %5205 = vperm.xlu0 %5204, %v1416
      %v5206 = vpop.permute.xlu0 %5205
      %5207 = vset.pattern.permute.xlu0 9
      %5208 = vperm.xlu0 %5207, %v1417
      %v5209 = vpop.permute.xlu0 %5208
      %5210 = vset.pattern.permute.xlu0 9
      %5211 = vperm.xlu0 %5210, %v1418
      %v5212 = vpop.permute.xlu0 %5211
      %5213 = vset.pattern.permute.xlu0 9
      %5214 = vperm.xlu0 %5213, %v1419
      %v5215 = vpop.permute.xlu0 %5214
      %vm5216 = vcmp.eq.s32.totalorder %v5194, %v1661
      %vm5217 = vcmp.eq.s32.totalorder %v5197, %v1661
      %vm5218 = vcmp.eq.s32.totalorder %v5200, %v1661
      %vm5219 = vcmp.eq.s32.totalorder %v5203, %v1661
      %vm5220 = vcmp.eq.s32.totalorder %v5206, %v1661
      %vm5221 = vcmp.eq.s32.totalorder %v5209, %v1661
      %vm5222 = vcmp.eq.s32.totalorder %v5212, %v1661
      %vm5223 = vcmp.eq.s32.totalorder %v5215, %v1661
      %5224 = vset.pattern.permute.xlu0 25
      %5225 = vperm.xlu0 %5224, %v4744
      %v5226 = vpop.permute.xlu0 %5225
      %5228 = vset.pattern.permute.xlu0 25
      %5229 = vperm.xlu0 %5228, %v4745
      %v5230 = vpop.permute.xlu0 %5229
      %5232 = vset.pattern.permute.xlu0 25
      %5233 = vperm.xlu0 %5232, %v4746
      %v5234 = vpop.permute.xlu0 %5233
      %5236 = vset.pattern.permute.xlu0 25
      %5237 = vperm.xlu0 %5236, %v4747
      %v5238 = vpop.permute.xlu0 %5237
      %5240 = vset.pattern.permute.xlu0 25
      %5241 = vperm.xlu0 %5240, %v4748
      %v5242 = vpop.permute.xlu0 %5241
      %5244 = vset.pattern.permute.xlu0 25
      %5245 = vperm.xlu0 %5244, %v4749
      %v5246 = vpop.permute.xlu0 %5245
      %5248 = vset.pattern.permute.xlu0 25
      %5249 = vperm.xlu0 %5248, %v4750
      %v5250 = vpop.permute.xlu0 %5249
      %5252 = vset.pattern.permute.xlu0 25
      %5253 = vperm.xlu0 %5252, %v4751
      %v5254 = vpop.permute.xlu0 %5253
      %v5256 = vsel %vm5216, %v5226, 0.0
      %v5257 = vsel %vm5217, %v5230, 0.0
      %v5258 = vsel %vm5218, %v5234, 0.0
      %v5259 = vsel %vm5219, %v5238, 0.0
      %v5260 = vsel %vm5220, %v5242, 0.0
      %v5261 = vsel %vm5221, %v5246, 0.0
      %v5262 = vsel %vm5222, %v5250, 0.0
      %v5263 = vsel %vm5223, %v5254, 0.0
      %v5264 = vadd.f32 %v5184, %v5256
      %v5265 = vadd.f32 %v5185, %v5257
      %v5266 = vadd.f32 %v5186, %v5258
      %v5267 = vadd.f32 %v5187, %v5259
      %v5268 = vadd.f32 %v5188, %v5260
      %v5269 = vadd.f32 %v5189, %v5261
      %v5270 = vadd.f32 %v5190, %v5262
      %v5271 = vadd.f32 %v5191, %v5263
      %5272 = vset.pattern.permute.xlu0 9
      %5273 = vperm.xlu0 %5272, %v1420
      %v5274 = vpop.permute.xlu0 %5273
      %5275 = vset.pattern.permute.xlu0 9
      %5276 = vperm.xlu0 %5275, %v1421
      %v5277 = vpop.permute.xlu0 %5276
      %5278 = vset.pattern.permute.xlu0 9
      %5279 = vperm.xlu0 %5278, %v1422
      %v5280 = vpop.permute.xlu0 %5279
      %5281 = vset.pattern.permute.xlu0 9
      %5282 = vperm.xlu0 %5281, %v1423
      %v5283 = vpop.permute.xlu0 %5282
      %5284 = vset.pattern.permute.xlu0 9
      %5285 = vperm.xlu0 %5284, %v1424
      %v5286 = vpop.permute.xlu0 %5285
      %5287 = vset.pattern.permute.xlu0 9
      %5288 = vperm.xlu0 %5287, %v1425
      %v5289 = vpop.permute.xlu0 %5288
      %5290 = vset.pattern.permute.xlu0 9
      %5291 = vperm.xlu0 %5290, %v1426
      %v5292 = vpop.permute.xlu0 %5291
      %5293 = vset.pattern.permute.xlu0 9
      %5294 = vperm.xlu0 %5293, %v1427
      %v5295 = vpop.permute.xlu0 %5294
      %vm5296 = vcmp.eq.s32.totalorder %v5274, %v1661
      %vm5297 = vcmp.eq.s32.totalorder %v5277, %v1661
      %vm5298 = vcmp.eq.s32.totalorder %v5280, %v1661
      %vm5299 = vcmp.eq.s32.totalorder %v5283, %v1661
      %vm5300 = vcmp.eq.s32.totalorder %v5286, %v1661
      %vm5301 = vcmp.eq.s32.totalorder %v5289, %v1661
      %vm5302 = vcmp.eq.s32.totalorder %v5292, %v1661
      %vm5303 = vcmp.eq.s32.totalorder %v5295, %v1661
      %5304 = vset.pattern.permute.xlu0 25
      %5305 = vperm.xlu0 %5304, %v4752
      %v5306 = vpop.permute.xlu0 %5305
      %5308 = vset.pattern.permute.xlu0 25
      %5309 = vperm.xlu0 %5308, %v4753
      %v5310 = vpop.permute.xlu0 %5309
      %5312 = vset.pattern.permute.xlu0 25
      %5313 = vperm.xlu0 %5312, %v4754
      %v5314 = vpop.permute.xlu0 %5313
      %5316 = vset.pattern.permute.xlu0 25
      %5317 = vperm.xlu0 %5316, %v4755
      %v5318 = vpop.permute.xlu0 %5317
      %5320 = vset.pattern.permute.xlu0 25
      %5321 = vperm.xlu0 %5320, %v4756
      %v5322 = vpop.permute.xlu0 %5321
      %5324 = vset.pattern.permute.xlu0 25
      %5325 = vperm.xlu0 %5324, %v4757
      %v5326 = vpop.permute.xlu0 %5325
      %5328 = vset.pattern.permute.xlu0 25
      %5329 = vperm.xlu0 %5328, %v4758
      %v5330 = vpop.permute.xlu0 %5329
      %5332 = vset.pattern.permute.xlu0 25
      %5333 = vperm.xlu0 %5332, %v4759
      %v5334 = vpop.permute.xlu0 %5333
      %v5336 = vsel %vm5296, %v5306, 0.0
      %v5337 = vsel %vm5297, %v5310, 0.0
      %v5338 = vsel %vm5298, %v5314, 0.0
      %v5339 = vsel %vm5299, %v5318, 0.0
      %v5340 = vsel %vm5300, %v5322, 0.0
      %v5341 = vsel %vm5301, %v5326, 0.0
      %v5342 = vsel %vm5302, %v5330, 0.0
      %v5343 = vsel %vm5303, %v5334, 0.0
      %v5344 = vadd.f32 %v5264, %v5336
      %v5345 = vadd.f32 %v5265, %v5337
      %v5346 = vadd.f32 %v5266, %v5338
      %v5347 = vadd.f32 %v5267, %v5339
      %v5348 = vadd.f32 %v5268, %v5340
      %v5349 = vadd.f32 %v5269, %v5341
      %v5350 = vadd.f32 %v5270, %v5342
      %v5351 = vadd.f32 %v5271, %v5343
      %5352 = vset.pattern.permute.xlu0 9
      %5353 = vperm.xlu0 %5352, %v1428
      %v5354 = vpop.permute.xlu0 %5353
      %5355 = vset.pattern.permute.xlu0 9
      %5356 = vperm.xlu0 %5355, %v1429
      %v5357 = vpop.permute.xlu0 %5356
      %5358 = vset.pattern.permute.xlu0 9
      %5359 = vperm.xlu0 %5358, %v1430
      %v5360 = vpop.permute.xlu0 %5359
      %5361 = vset.pattern.permute.xlu0 9
      %5362 = vperm.xlu0 %5361, %v1431
      %v5363 = vpop.permute.xlu0 %5362
      %5364 = vset.pattern.permute.xlu0 9
      %5365 = vperm.xlu0 %5364, %v1432
      %v5366 = vpop.permute.xlu0 %5365
      %5367 = vset.pattern.permute.xlu0 9
      %5368 = vperm.xlu0 %5367, %v1433
      %v5369 = vpop.permute.xlu0 %5368
      %5370 = vset.pattern.permute.xlu0 9
      %5371 = vperm.xlu0 %5370, %v1434
      %v5372 = vpop.permute.xlu0 %5371
      %5373 = vset.pattern.permute.xlu0 9
      %5374 = vperm.xlu0 %5373, %v1435
      %v5375 = vpop.permute.xlu0 %5374
      %vm5376 = vcmp.eq.s32.totalorder %v5354, %v1661
      %vm5377 = vcmp.eq.s32.totalorder %v5357, %v1661
      %vm5378 = vcmp.eq.s32.totalorder %v5360, %v1661
      %vm5379 = vcmp.eq.s32.totalorder %v5363, %v1661
      %vm5380 = vcmp.eq.s32.totalorder %v5366, %v1661
      %vm5381 = vcmp.eq.s32.totalorder %v5369, %v1661
      %vm5382 = vcmp.eq.s32.totalorder %v5372, %v1661
      %vm5383 = vcmp.eq.s32.totalorder %v5375, %v1661
      %5384 = vset.pattern.permute.xlu0 25
      %5385 = vperm.xlu0 %5384, %v4760
      %v5386 = vpop.permute.xlu0 %5385
      %5388 = vset.pattern.permute.xlu0 25
      %5389 = vperm.xlu0 %5388, %v4761
      %v5390 = vpop.permute.xlu0 %5389
      %5392 = vset.pattern.permute.xlu0 25
      %5393 = vperm.xlu0 %5392, %v4762
      %v5394 = vpop.permute.xlu0 %5393
      %5396 = vset.pattern.permute.xlu0 25
      %5397 = vperm.xlu0 %5396, %v4763
      %v5398 = vpop.permute.xlu0 %5397
      %5400 = vset.pattern.permute.xlu0 25
      %5401 = vperm.xlu0 %5400, %v4764
      %v5402 = vpop.permute.xlu0 %5401
      %5404 = vset.pattern.permute.xlu0 25
      %5405 = vperm.xlu0 %5404, %v4765
      %v5406 = vpop.permute.xlu0 %5405
      %5408 = vset.pattern.permute.xlu0 25
      %5409 = vperm.xlu0 %5408, %v4766
      %v5410 = vpop.permute.xlu0 %5409
      %5412 = vset.pattern.permute.xlu0 25
      %5413 = vperm.xlu0 %5412, %v4767
      %v5414 = vpop.permute.xlu0 %5413
      %v5416 = vsel %vm5376, %v5386, 0.0
      %v5417 = vsel %vm5377, %v5390, 0.0
      %v5418 = vsel %vm5378, %v5394, 0.0
      %v5419 = vsel %vm5379, %v5398, 0.0
      %v5420 = vsel %vm5380, %v5402, 0.0
      %v5421 = vsel %vm5381, %v5406, 0.0
      %v5422 = vsel %vm5382, %v5410, 0.0
      %v5423 = vsel %vm5383, %v5414, 0.0
      %v5424 = vadd.f32 %v5344, %v5416
      %v5425 = vadd.f32 %v5345, %v5417
      %v5426 = vadd.f32 %v5346, %v5418
      %v5427 = vadd.f32 %v5347, %v5419
      %v5428 = vadd.f32 %v5348, %v5420
      %v5429 = vadd.f32 %v5349, %v5421
      %v5430 = vadd.f32 %v5350, %v5422
      %v5431 = vadd.f32 %v5351, %v5423
      %v5432 = vadd.f32 %v5112, %v5424
      %v5433 = vadd.f32 %v5113, %v5425
      %v5434 = vadd.f32 %v5114, %v5426
      %v5435 = vadd.f32 %v5115, %v5427
      %v5436 = vadd.f32 %v5116, %v5428
      %v5437 = vadd.f32 %v5117, %v5429
      %v5438 = vadd.f32 %v5118, %v5430
      %v5439 = vadd.f32 %v5119, %v5431
      %5440 = vset.pattern.permute.xlu0 10
      %5441 = vperm.xlu0 %5440, %v1404
      %v5442 = vpop.permute.xlu0 %5441
      %5443 = vset.pattern.permute.xlu0 10
      %5444 = vperm.xlu0 %5443, %v1405
      %v5445 = vpop.permute.xlu0 %5444
      %5446 = vset.pattern.permute.xlu0 10
      %5447 = vperm.xlu0 %5446, %v1406
      %v5448 = vpop.permute.xlu0 %5447
      %5449 = vset.pattern.permute.xlu0 10
      %5450 = vperm.xlu0 %5449, %v1407
      %v5451 = vpop.permute.xlu0 %5450
      %5452 = vset.pattern.permute.xlu0 10
      %5453 = vperm.xlu0 %5452, %v1408
      %v5454 = vpop.permute.xlu0 %5453
      %5455 = vset.pattern.permute.xlu0 10
      %5456 = vperm.xlu0 %5455, %v1409
      %v5457 = vpop.permute.xlu0 %5456
      %5458 = vset.pattern.permute.xlu0 10
      %5459 = vperm.xlu0 %5458, %v1410
      %v5460 = vpop.permute.xlu0 %5459
      %5461 = vset.pattern.permute.xlu0 10
      %5462 = vperm.xlu0 %5461, %v1411
      %v5463 = vpop.permute.xlu0 %5462
      %vm5464 = vcmp.eq.s32.totalorder %v5442, %v1661
      %vm5465 = vcmp.eq.s32.totalorder %v5445, %v1661
      %vm5466 = vcmp.eq.s32.totalorder %v5448, %v1661
      %vm5467 = vcmp.eq.s32.totalorder %v5451, %v1661
      %vm5468 = vcmp.eq.s32.totalorder %v5454, %v1661
      %vm5469 = vcmp.eq.s32.totalorder %v5457, %v1661
      %vm5470 = vcmp.eq.s32.totalorder %v5460, %v1661
      %vm5471 = vcmp.eq.s32.totalorder %v5463, %v1661
      %5472 = vset.pattern.permute.xlu0 26
      %5473 = vperm.xlu0 %5472, %v4736
      %v5474 = vpop.permute.xlu0 %5473
      %5476 = vset.pattern.permute.xlu0 26
      %5477 = vperm.xlu0 %5476, %v4737
      %v5478 = vpop.permute.xlu0 %5477
      %5480 = vset.pattern.permute.xlu0 26
      %5481 = vperm.xlu0 %5480, %v4738
      %v5482 = vpop.permute.xlu0 %5481
      %5484 = vset.pattern.permute.xlu0 26
      %5485 = vperm.xlu0 %5484, %v4739
      %v5486 = vpop.permute.xlu0 %5485
      %5488 = vset.pattern.permute.xlu0 26
      %5489 = vperm.xlu0 %5488, %v4740
      %v5490 = vpop.permute.xlu0 %5489
      %5492 = vset.pattern.permute.xlu0 26
      %5493 = vperm.xlu0 %5492, %v4741
      %v5494 = vpop.permute.xlu0 %5493
      %5496 = vset.pattern.permute.xlu0 26
      %5497 = vperm.xlu0 %5496, %v4742
      %v5498 = vpop.permute.xlu0 %5497
      %5500 = vset.pattern.permute.xlu0 26
      %5501 = vperm.xlu0 %5500, %v4743
      %v5502 = vpop.permute.xlu0 %5501
      %v5504 = vsel %vm5464, %v5474, 0.0
      %v5505 = vsel %vm5465, %v5478, 0.0
      %v5506 = vsel %vm5466, %v5482, 0.0
      %v5507 = vsel %vm5467, %v5486, 0.0
      %v5508 = vsel %vm5468, %v5490, 0.0
      %v5509 = vsel %vm5469, %v5494, 0.0
      %v5510 = vsel %vm5470, %v5498, 0.0
      %v5511 = vsel %vm5471, %v5502, 0.0
      %5512 = vset.pattern.permute.xlu0 10
      %5513 = vperm.xlu0 %5512, %v1412
      %v5514 = vpop.permute.xlu0 %5513
      %5515 = vset.pattern.permute.xlu0 10
      %5516 = vperm.xlu0 %5515, %v1413
      %v5517 = vpop.permute.xlu0 %5516
      %5518 = vset.pattern.permute.xlu0 10
      %5519 = vperm.xlu0 %5518, %v1414
      %v5520 = vpop.permute.xlu0 %5519
      %5521 = vset.pattern.permute.xlu0 10
      %5522 = vperm.xlu0 %5521, %v1415
      %v5523 = vpop.permute.xlu0 %5522
      %5524 = vset.pattern.permute.xlu0 10
      %5525 = vperm.xlu0 %5524, %v1416
      %v5526 = vpop.permute.xlu0 %5525
      %5527 = vset.pattern.permute.xlu0 10
      %5528 = vperm.xlu0 %5527, %v1417
      %v5529 = vpop.permute.xlu0 %5528
      %5530 = vset.pattern.permute.xlu0 10
      %5531 = vperm.xlu0 %5530, %v1418
      %v5532 = vpop.permute.xlu0 %5531
      %5533 = vset.pattern.permute.xlu0 10
      %5534 = vperm.xlu0 %5533, %v1419
      %v5535 = vpop.permute.xlu0 %5534
      %vm5536 = vcmp.eq.s32.totalorder %v5514, %v1661
      %vm5537 = vcmp.eq.s32.totalorder %v5517, %v1661
      %vm5538 = vcmp.eq.s32.totalorder %v5520, %v1661
      %vm5539 = vcmp.eq.s32.totalorder %v5523, %v1661
      %vm5540 = vcmp.eq.s32.totalorder %v5526, %v1661
      %vm5541 = vcmp.eq.s32.totalorder %v5529, %v1661
      %vm5542 = vcmp.eq.s32.totalorder %v5532, %v1661
      %vm5543 = vcmp.eq.s32.totalorder %v5535, %v1661
      %5544 = vset.pattern.permute.xlu0 26
      %5545 = vperm.xlu0 %5544, %v4744
      %v5546 = vpop.permute.xlu0 %5545
      %5548 = vset.pattern.permute.xlu0 26
      %5549 = vperm.xlu0 %5548, %v4745
      %v5550 = vpop.permute.xlu0 %5549
      %5552 = vset.pattern.permute.xlu0 26
      %5553 = vperm.xlu0 %5552, %v4746
      %v5554 = vpop.permute.xlu0 %5553
      %5556 = vset.pattern.permute.xlu0 26
      %5557 = vperm.xlu0 %5556, %v4747
      %v5558 = vpop.permute.xlu0 %5557
      %5560 = vset.pattern.permute.xlu0 26
      %5561 = vperm.xlu0 %5560, %v4748
      %v5562 = vpop.permute.xlu0 %5561
      %5564 = vset.pattern.permute.xlu0 26
      %5565 = vperm.xlu0 %5564, %v4749
      %v5566 = vpop.permute.xlu0 %5565
      %5568 = vset.pattern.permute.xlu0 26
      %5569 = vperm.xlu0 %5568, %v4750
      %v5570 = vpop.permute.xlu0 %5569
      %5572 = vset.pattern.permute.xlu0 26
      %5573 = vperm.xlu0 %5572, %v4751
      %v5574 = vpop.permute.xlu0 %5573
      %v5576 = vsel %vm5536, %v5546, 0.0
      %v5577 = vsel %vm5537, %v5550, 0.0
      %v5578 = vsel %vm5538, %v5554, 0.0
      %v5579 = vsel %vm5539, %v5558, 0.0
      %v5580 = vsel %vm5540, %v5562, 0.0
      %v5581 = vsel %vm5541, %v5566, 0.0
      %v5582 = vsel %vm5542, %v5570, 0.0
      %v5583 = vsel %vm5543, %v5574, 0.0
      %v5584 = vadd.f32 %v5504, %v5576
      %v5585 = vadd.f32 %v5505, %v5577
      %v5586 = vadd.f32 %v5506, %v5578
      %v5587 = vadd.f32 %v5507, %v5579
      %v5588 = vadd.f32 %v5508, %v5580
      %v5589 = vadd.f32 %v5509, %v5581
      %v5590 = vadd.f32 %v5510, %v5582
      %v5591 = vadd.f32 %v5511, %v5583
      %5592 = vset.pattern.permute.xlu0 10
      %5593 = vperm.xlu0 %5592, %v1420
      %v5594 = vpop.permute.xlu0 %5593
      %5595 = vset.pattern.permute.xlu0 10
      %5596 = vperm.xlu0 %5595, %v1421
      %v5597 = vpop.permute.xlu0 %5596
      %5598 = vset.pattern.permute.xlu0 10
      %5599 = vperm.xlu0 %5598, %v1422
      %v5600 = vpop.permute.xlu0 %5599
      %5601 = vset.pattern.permute.xlu0 10
      %5602 = vperm.xlu0 %5601, %v1423
      %v5603 = vpop.permute.xlu0 %5602
      %5604 = vset.pattern.permute.xlu0 10
      %5605 = vperm.xlu0 %5604, %v1424
      %v5606 = vpop.permute.xlu0 %5605
      %5607 = vset.pattern.permute.xlu0 10
      %5608 = vperm.xlu0 %5607, %v1425
      %v5609 = vpop.permute.xlu0 %5608
      %5610 = vset.pattern.permute.xlu0 10
      %5611 = vperm.xlu0 %5610, %v1426
      %v5612 = vpop.permute.xlu0 %5611
      %5613 = vset.pattern.permute.xlu0 10
      %5614 = vperm.xlu0 %5613, %v1427
      %v5615 = vpop.permute.xlu0 %5614
      %vm5616 = vcmp.eq.s32.totalorder %v5594, %v1661
      %vm5617 = vcmp.eq.s32.totalorder %v5597, %v1661
      %vm5618 = vcmp.eq.s32.totalorder %v5600, %v1661
      %vm5619 = vcmp.eq.s32.totalorder %v5603, %v1661
      %vm5620 = vcmp.eq.s32.totalorder %v5606, %v1661
      %vm5621 = vcmp.eq.s32.totalorder %v5609, %v1661
      %vm5622 = vcmp.eq.s32.totalorder %v5612, %v1661
      %vm5623 = vcmp.eq.s32.totalorder %v5615, %v1661
      %5624 = vset.pattern.permute.xlu0 26
      %5625 = vperm.xlu0 %5624, %v4752
      %v5626 = vpop.permute.xlu0 %5625
      %5628 = vset.pattern.permute.xlu0 26
      %5629 = vperm.xlu0 %5628, %v4753
      %v5630 = vpop.permute.xlu0 %5629
      %5632 = vset.pattern.permute.xlu0 26
      %5633 = vperm.xlu0 %5632, %v4754
      %v5634 = vpop.permute.xlu0 %5633
      %5636 = vset.pattern.permute.xlu0 26
      %5637 = vperm.xlu0 %5636, %v4755
      %v5638 = vpop.permute.xlu0 %5637
      %5640 = vset.pattern.permute.xlu0 26
      %5641 = vperm.xlu0 %5640, %v4756
      %v5642 = vpop.permute.xlu0 %5641
      %5644 = vset.pattern.permute.xlu0 26
      %5645 = vperm.xlu0 %5644, %v4757
      %v5646 = vpop.permute.xlu0 %5645
      %5648 = vset.pattern.permute.xlu0 26
      %5649 = vperm.xlu0 %5648, %v4758
      %v5650 = vpop.permute.xlu0 %5649
      %5652 = vset.pattern.permute.xlu0 26
      %5653 = vperm.xlu0 %5652, %v4759
      %v5654 = vpop.permute.xlu0 %5653
      %v5656 = vsel %vm5616, %v5626, 0.0
      %v5657 = vsel %vm5617, %v5630, 0.0
      %v5658 = vsel %vm5618, %v5634, 0.0
      %v5659 = vsel %vm5619, %v5638, 0.0
      %v5660 = vsel %vm5620, %v5642, 0.0
      %v5661 = vsel %vm5621, %v5646, 0.0
      %v5662 = vsel %vm5622, %v5650, 0.0
      %v5663 = vsel %vm5623, %v5654, 0.0
      %v5664 = vadd.f32 %v5584, %v5656
      %v5665 = vadd.f32 %v5585, %v5657
      %v5666 = vadd.f32 %v5586, %v5658
      %v5667 = vadd.f32 %v5587, %v5659
      %v5668 = vadd.f32 %v5588, %v5660
      %v5669 = vadd.f32 %v5589, %v5661
      %v5670 = vadd.f32 %v5590, %v5662
      %v5671 = vadd.f32 %v5591, %v5663
      %5672 = vset.pattern.permute.xlu0 10
      %5673 = vperm.xlu0 %5672, %v1428
      %v5674 = vpop.permute.xlu0 %5673
      %5675 = vset.pattern.permute.xlu0 10
      %5676 = vperm.xlu0 %5675, %v1429
      %v5677 = vpop.permute.xlu0 %5676
      %5678 = vset.pattern.permute.xlu0 10
      %5679 = vperm.xlu0 %5678, %v1430
      %v5680 = vpop.permute.xlu0 %5679
      %5681 = vset.pattern.permute.xlu0 10
      %5682 = vperm.xlu0 %5681, %v1431
      %v5683 = vpop.permute.xlu0 %5682
      %5684 = vset.pattern.permute.xlu0 10
      %5685 = vperm.xlu0 %5684, %v1432
      %v5686 = vpop.permute.xlu0 %5685
      %5687 = vset.pattern.permute.xlu0 10
      %5688 = vperm.xlu0 %5687, %v1433
      %v5689 = vpop.permute.xlu0 %5688
      %5690 = vset.pattern.permute.xlu0 10
      %5691 = vperm.xlu0 %5690, %v1434
      %v5692 = vpop.permute.xlu0 %5691
      %5693 = vset.pattern.permute.xlu0 10
      %5694 = vperm.xlu0 %5693, %v1435
      %v5695 = vpop.permute.xlu0 %5694
      %vm5696 = vcmp.eq.s32.totalorder %v5674, %v1661
      %vm5697 = vcmp.eq.s32.totalorder %v5677, %v1661
      %vm5698 = vcmp.eq.s32.totalorder %v5680, %v1661
      %vm5699 = vcmp.eq.s32.totalorder %v5683, %v1661
      %vm5700 = vcmp.eq.s32.totalorder %v5686, %v1661
      %vm5701 = vcmp.eq.s32.totalorder %v5689, %v1661
      %vm5702 = vcmp.eq.s32.totalorder %v5692, %v1661
      %vm5703 = vcmp.eq.s32.totalorder %v5695, %v1661
      %5704 = vset.pattern.permute.xlu0 26
      %5705 = vperm.xlu0 %5704, %v4760
      %v5706 = vpop.permute.xlu0 %5705
      %5708 = vset.pattern.permute.xlu0 26
      %5709 = vperm.xlu0 %5708, %v4761
      %v5710 = vpop.permute.xlu0 %5709
      %5712 = vset.pattern.permute.xlu0 26
      %5713 = vperm.xlu0 %5712, %v4762
      %v5714 = vpop.permute.xlu0 %5713
      %5716 = vset.pattern.permute.xlu0 26
      %5717 = vperm.xlu0 %5716, %v4763
      %v5718 = vpop.permute.xlu0 %5717
      %5720 = vset.pattern.permute.xlu0 26
      %5721 = vperm.xlu0 %5720, %v4764
      %v5722 = vpop.permute.xlu0 %5721
      %5724 = vset.pattern.permute.xlu0 26
      %5725 = vperm.xlu0 %5724, %v4765
      %v5726 = vpop.permute.xlu0 %5725
      %5728 = vset.pattern.permute.xlu0 26
      %5729 = vperm.xlu0 %5728, %v4766
      %v5730 = vpop.permute.xlu0 %5729
      %5732 = vset.pattern.permute.xlu0 26
      %5733 = vperm.xlu0 %5732, %v4767
      %v5734 = vpop.permute.xlu0 %5733
      %v5736 = vsel %vm5696, %v5706, 0.0
      %v5737 = vsel %vm5697, %v5710, 0.0
      %v5738 = vsel %vm5698, %v5714, 0.0
      %v5739 = vsel %vm5699, %v5718, 0.0
      %v5740 = vsel %vm5700, %v5722, 0.0
      %v5741 = vsel %vm5701, %v5726, 0.0
      %v5742 = vsel %vm5702, %v5730, 0.0
      %v5743 = vsel %vm5703, %v5734, 0.0
      %v5744 = vadd.f32 %v5664, %v5736
      %v5745 = vadd.f32 %v5665, %v5737
      %v5746 = vadd.f32 %v5666, %v5738
      %v5747 = vadd.f32 %v5667, %v5739
      %v5748 = vadd.f32 %v5668, %v5740
      %v5749 = vadd.f32 %v5669, %v5741
      %v5750 = vadd.f32 %v5670, %v5742
      %v5751 = vadd.f32 %v5671, %v5743
      %v5752 = vadd.f32 %v5432, %v5744
      %v5753 = vadd.f32 %v5433, %v5745
      %v5754 = vadd.f32 %v5434, %v5746
      %v5755 = vadd.f32 %v5435, %v5747
      %v5756 = vadd.f32 %v5436, %v5748
      %v5757 = vadd.f32 %v5437, %v5749
      %v5758 = vadd.f32 %v5438, %v5750
      %v5759 = vadd.f32 %v5439, %v5751
      %5760 = vset.pattern.permute.xlu0 11
      %5761 = vperm.xlu0 %5760, %v1404
      %v5762 = vpop.permute.xlu0 %5761
      %5763 = vset.pattern.permute.xlu0 11
      %5764 = vperm.xlu0 %5763, %v1405
      %v5765 = vpop.permute.xlu0 %5764
      %5766 = vset.pattern.permute.xlu0 11
      %5767 = vperm.xlu0 %5766, %v1406
      %v5768 = vpop.permute.xlu0 %5767
      %5769 = vset.pattern.permute.xlu0 11
      %5770 = vperm.xlu0 %5769, %v1407
      %v5771 = vpop.permute.xlu0 %5770
      %5772 = vset.pattern.permute.xlu0 11
      %5773 = vperm.xlu0 %5772, %v1408
      %v5774 = vpop.permute.xlu0 %5773
      %5775 = vset.pattern.permute.xlu0 11
      %5776 = vperm.xlu0 %5775, %v1409
      %v5777 = vpop.permute.xlu0 %5776
      %5778 = vset.pattern.permute.xlu0 11
      %5779 = vperm.xlu0 %5778, %v1410
      %v5780 = vpop.permute.xlu0 %5779
      %5781 = vset.pattern.permute.xlu0 11
      %5782 = vperm.xlu0 %5781, %v1411
      %v5783 = vpop.permute.xlu0 %5782
      %vm5784 = vcmp.eq.s32.totalorder %v5762, %v1661
      %vm5785 = vcmp.eq.s32.totalorder %v5765, %v1661
      %vm5786 = vcmp.eq.s32.totalorder %v5768, %v1661
      %vm5787 = vcmp.eq.s32.totalorder %v5771, %v1661
      %vm5788 = vcmp.eq.s32.totalorder %v5774, %v1661
      %vm5789 = vcmp.eq.s32.totalorder %v5777, %v1661
      %vm5790 = vcmp.eq.s32.totalorder %v5780, %v1661
      %vm5791 = vcmp.eq.s32.totalorder %v5783, %v1661
      %5792 = vset.pattern.permute.xlu0 27
      %5793 = vperm.xlu0 %5792, %v4736
      %v5794 = vpop.permute.xlu0 %5793
      %5796 = vset.pattern.permute.xlu0 27
      %5797 = vperm.xlu0 %5796, %v4737
      %v5798 = vpop.permute.xlu0 %5797
      %5800 = vset.pattern.permute.xlu0 27
      %5801 = vperm.xlu0 %5800, %v4738
      %v5802 = vpop.permute.xlu0 %5801
      %5804 = vset.pattern.permute.xlu0 27
      %5805 = vperm.xlu0 %5804, %v4739
      %v5806 = vpop.permute.xlu0 %5805
      %5808 = vset.pattern.permute.xlu0 27
      %5809 = vperm.xlu0 %5808, %v4740
      %v5810 = vpop.permute.xlu0 %5809
      %5812 = vset.pattern.permute.xlu0 27
      %5813 = vperm.xlu0 %5812, %v4741
      %v5814 = vpop.permute.xlu0 %5813
      %5816 = vset.pattern.permute.xlu0 27
      %5817 = vperm.xlu0 %5816, %v4742
      %v5818 = vpop.permute.xlu0 %5817
      %5820 = vset.pattern.permute.xlu0 27
      %5821 = vperm.xlu0 %5820, %v4743
      %v5822 = vpop.permute.xlu0 %5821
      %v5824 = vsel %vm5784, %v5794, 0.0
      %v5825 = vsel %vm5785, %v5798, 0.0
      %v5826 = vsel %vm5786, %v5802, 0.0
      %v5827 = vsel %vm5787, %v5806, 0.0
      %v5828 = vsel %vm5788, %v5810, 0.0
      %v5829 = vsel %vm5789, %v5814, 0.0
      %v5830 = vsel %vm5790, %v5818, 0.0
      %v5831 = vsel %vm5791, %v5822, 0.0
      %5832 = vset.pattern.permute.xlu0 11
      %5833 = vperm.xlu0 %5832, %v1412
      %v5834 = vpop.permute.xlu0 %5833
      %5835 = vset.pattern.permute.xlu0 11
      %5836 = vperm.xlu0 %5835, %v1413
      %v5837 = vpop.permute.xlu0 %5836
      %5838 = vset.pattern.permute.xlu0 11
      %5839 = vperm.xlu0 %5838, %v1414
      %v5840 = vpop.permute.xlu0 %5839
      %5841 = vset.pattern.permute.xlu0 11
      %5842 = vperm.xlu0 %5841, %v1415
      %v5843 = vpop.permute.xlu0 %5842
      %5844 = vset.pattern.permute.xlu0 11
      %5845 = vperm.xlu0 %5844, %v1416
      %v5846 = vpop.permute.xlu0 %5845
      %5847 = vset.pattern.permute.xlu0 11
      %5848 = vperm.xlu0 %5847, %v1417
      %v5849 = vpop.permute.xlu0 %5848
      %5850 = vset.pattern.permute.xlu0 11
      %5851 = vperm.xlu0 %5850, %v1418
      %v5852 = vpop.permute.xlu0 %5851
      %5853 = vset.pattern.permute.xlu0 11
      %5854 = vperm.xlu0 %5853, %v1419
      %v5855 = vpop.permute.xlu0 %5854
      %vm5856 = vcmp.eq.s32.totalorder %v5834, %v1661
      %vm5857 = vcmp.eq.s32.totalorder %v5837, %v1661
      %vm5858 = vcmp.eq.s32.totalorder %v5840, %v1661
      %vm5859 = vcmp.eq.s32.totalorder %v5843, %v1661
      %vm5860 = vcmp.eq.s32.totalorder %v5846, %v1661
      %vm5861 = vcmp.eq.s32.totalorder %v5849, %v1661
      %vm5862 = vcmp.eq.s32.totalorder %v5852, %v1661
      %vm5863 = vcmp.eq.s32.totalorder %v5855, %v1661
      %5864 = vset.pattern.permute.xlu0 27
      %5865 = vperm.xlu0 %5864, %v4744
      %v5866 = vpop.permute.xlu0 %5865
      %5868 = vset.pattern.permute.xlu0 27
      %5869 = vperm.xlu0 %5868, %v4745
      %v5870 = vpop.permute.xlu0 %5869
      %5872 = vset.pattern.permute.xlu0 27
      %5873 = vperm.xlu0 %5872, %v4746
      %v5874 = vpop.permute.xlu0 %5873
      %5876 = vset.pattern.permute.xlu0 27
      %5877 = vperm.xlu0 %5876, %v4747
      %v5878 = vpop.permute.xlu0 %5877
      %5880 = vset.pattern.permute.xlu0 27
      %5881 = vperm.xlu0 %5880, %v4748
      %v5882 = vpop.permute.xlu0 %5881
      %5884 = vset.pattern.permute.xlu0 27
      %5885 = vperm.xlu0 %5884, %v4749
      %v5886 = vpop.permute.xlu0 %5885
      %5888 = vset.pattern.permute.xlu0 27
      %5889 = vperm.xlu0 %5888, %v4750
      %v5890 = vpop.permute.xlu0 %5889
      %5892 = vset.pattern.permute.xlu0 27
      %5893 = vperm.xlu0 %5892, %v4751
      %v5894 = vpop.permute.xlu0 %5893
      %v5896 = vsel %vm5856, %v5866, 0.0
      %v5897 = vsel %vm5857, %v5870, 0.0
      %v5898 = vsel %vm5858, %v5874, 0.0
      %v5899 = vsel %vm5859, %v5878, 0.0
      %v5900 = vsel %vm5860, %v5882, 0.0
      %v5901 = vsel %vm5861, %v5886, 0.0
      %v5902 = vsel %vm5862, %v5890, 0.0
      %v5903 = vsel %vm5863, %v5894, 0.0
      %v5904 = vadd.f32 %v5824, %v5896
      %v5905 = vadd.f32 %v5825, %v5897
      %v5906 = vadd.f32 %v5826, %v5898
      %v5907 = vadd.f32 %v5827, %v5899
      %v5908 = vadd.f32 %v5828, %v5900
      %v5909 = vadd.f32 %v5829, %v5901
      %v5910 = vadd.f32 %v5830, %v5902
      %v5911 = vadd.f32 %v5831, %v5903
      %5912 = vset.pattern.permute.xlu0 11
      %5913 = vperm.xlu0 %5912, %v1420
      %v5914 = vpop.permute.xlu0 %5913
      %5915 = vset.pattern.permute.xlu0 11
      %5916 = vperm.xlu0 %5915, %v1421
      %v5917 = vpop.permute.xlu0 %5916
      %5918 = vset.pattern.permute.xlu0 11
      %5919 = vperm.xlu0 %5918, %v1422
      %v5920 = vpop.permute.xlu0 %5919
      %5921 = vset.pattern.permute.xlu0 11
      %5922 = vperm.xlu0 %5921, %v1423
      %v5923 = vpop.permute.xlu0 %5922
      %5924 = vset.pattern.permute.xlu0 11
      %5925 = vperm.xlu0 %5924, %v1424
      %v5926 = vpop.permute.xlu0 %5925
      %5927 = vset.pattern.permute.xlu0 11
      %5928 = vperm.xlu0 %5927, %v1425
      %v5929 = vpop.permute.xlu0 %5928
      %5930 = vset.pattern.permute.xlu0 11
      %5931 = vperm.xlu0 %5930, %v1426
      %v5932 = vpop.permute.xlu0 %5931
      %5933 = vset.pattern.permute.xlu0 11
      %5934 = vperm.xlu0 %5933, %v1427
      %v5935 = vpop.permute.xlu0 %5934
      %vm5936 = vcmp.eq.s32.totalorder %v5914, %v1661
      %vm5937 = vcmp.eq.s32.totalorder %v5917, %v1661
      %vm5938 = vcmp.eq.s32.totalorder %v5920, %v1661
      %vm5939 = vcmp.eq.s32.totalorder %v5923, %v1661
      %vm5940 = vcmp.eq.s32.totalorder %v5926, %v1661
      %vm5941 = vcmp.eq.s32.totalorder %v5929, %v1661
      %vm5942 = vcmp.eq.s32.totalorder %v5932, %v1661
      %vm5943 = vcmp.eq.s32.totalorder %v5935, %v1661
      %5944 = vset.pattern.permute.xlu0 27
      %5945 = vperm.xlu0 %5944, %v4752
      %v5946 = vpop.permute.xlu0 %5945
      %5948 = vset.pattern.permute.xlu0 27
      %5949 = vperm.xlu0 %5948, %v4753
      %v5950 = vpop.permute.xlu0 %5949
      %5952 = vset.pattern.permute.xlu0 27
      %5953 = vperm.xlu0 %5952, %v4754
      %v5954 = vpop.permute.xlu0 %5953
      %5956 = vset.pattern.permute.xlu0 27
      %5957 = vperm.xlu0 %5956, %v4755
      %v5958 = vpop.permute.xlu0 %5957
      %5960 = vset.pattern.permute.xlu0 27
      %5961 = vperm.xlu0 %5960, %v4756
      %v5962 = vpop.permute.xlu0 %5961
      %5964 = vset.pattern.permute.xlu0 27
      %5965 = vperm.xlu0 %5964, %v4757
      %v5966 = vpop.permute.xlu0 %5965
      %5968 = vset.pattern.permute.xlu0 27
      %5969 = vperm.xlu0 %5968, %v4758
      %v5970 = vpop.permute.xlu0 %5969
      %5972 = vset.pattern.permute.xlu0 27
      %5973 = vperm.xlu0 %5972, %v4759
      %v5974 = vpop.permute.xlu0 %5973
      %v5976 = vsel %vm5936, %v5946, 0.0
      %v5977 = vsel %vm5937, %v5950, 0.0
      %v5978 = vsel %vm5938, %v5954, 0.0
      %v5979 = vsel %vm5939, %v5958, 0.0
      %v5980 = vsel %vm5940, %v5962, 0.0
      %v5981 = vsel %vm5941, %v5966, 0.0
      %v5982 = vsel %vm5942, %v5970, 0.0
      %v5983 = vsel %vm5943, %v5974, 0.0
      %v5984 = vadd.f32 %v5904, %v5976
      %v5985 = vadd.f32 %v5905, %v5977
      %v5986 = vadd.f32 %v5906, %v5978
      %v5987 = vadd.f32 %v5907, %v5979
      %v5988 = vadd.f32 %v5908, %v5980
      %v5989 = vadd.f32 %v5909, %v5981
      %v5990 = vadd.f32 %v5910, %v5982
      %v5991 = vadd.f32 %v5911, %v5983
      %5992 = vset.pattern.permute.xlu0 11
      %5993 = vperm.xlu0 %5992, %v1428
      %v5994 = vpop.permute.xlu0 %5993
      %5995 = vset.pattern.permute.xlu0 11
      %5996 = vperm.xlu0 %5995, %v1429
      %v5997 = vpop.permute.xlu0 %5996
      %5998 = vset.pattern.permute.xlu0 11
      %5999 = vperm.xlu0 %5998, %v1430
      %v6000 = vpop.permute.xlu0 %5999
      %6001 = vset.pattern.permute.xlu0 11
      %6002 = vperm.xlu0 %6001, %v1431
      %v6003 = vpop.permute.xlu0 %6002
      %6004 = vset.pattern.permute.xlu0 11
      %6005 = vperm.xlu0 %6004, %v1432
      %v6006 = vpop.permute.xlu0 %6005
      %6007 = vset.pattern.permute.xlu0 11
      %6008 = vperm.xlu0 %6007, %v1433
      %v6009 = vpop.permute.xlu0 %6008
      %6010 = vset.pattern.permute.xlu0 11
      %6011 = vperm.xlu0 %6010, %v1434
      %v6012 = vpop.permute.xlu0 %6011
      %6013 = vset.pattern.permute.xlu0 11
      %6014 = vperm.xlu0 %6013, %v1435
      %v6015 = vpop.permute.xlu0 %6014
      %vm6016 = vcmp.eq.s32.totalorder %v5994, %v1661
      %vm6017 = vcmp.eq.s32.totalorder %v5997, %v1661
      %vm6018 = vcmp.eq.s32.totalorder %v6000, %v1661
      %vm6019 = vcmp.eq.s32.totalorder %v6003, %v1661
      %vm6020 = vcmp.eq.s32.totalorder %v6006, %v1661
      %vm6021 = vcmp.eq.s32.totalorder %v6009, %v1661
      %vm6022 = vcmp.eq.s32.totalorder %v6012, %v1661
      %vm6023 = vcmp.eq.s32.totalorder %v6015, %v1661
      %6024 = vset.pattern.permute.xlu0 27
      %6025 = vperm.xlu0 %6024, %v4760
      %v6026 = vpop.permute.xlu0 %6025
      %6028 = vset.pattern.permute.xlu0 27
      %6029 = vperm.xlu0 %6028, %v4761
      %v6030 = vpop.permute.xlu0 %6029
      %6032 = vset.pattern.permute.xlu0 27
      %6033 = vperm.xlu0 %6032, %v4762
      %v6034 = vpop.permute.xlu0 %6033
      %6036 = vset.pattern.permute.xlu0 27
      %6037 = vperm.xlu0 %6036, %v4763
      %v6038 = vpop.permute.xlu0 %6037
      %6040 = vset.pattern.permute.xlu0 27
      %6041 = vperm.xlu0 %6040, %v4764
      %v6042 = vpop.permute.xlu0 %6041
      %6044 = vset.pattern.permute.xlu0 27
      %6045 = vperm.xlu0 %6044, %v4765
      %v6046 = vpop.permute.xlu0 %6045
      %6048 = vset.pattern.permute.xlu0 27
      %6049 = vperm.xlu0 %6048, %v4766
      %v6050 = vpop.permute.xlu0 %6049
      %6052 = vset.pattern.permute.xlu0 27
      %6053 = vperm.xlu0 %6052, %v4767
      %v6054 = vpop.permute.xlu0 %6053
      %v6056 = vsel %vm6016, %v6026, 0.0
      %v6057 = vsel %vm6017, %v6030, 0.0
      %v6058 = vsel %vm6018, %v6034, 0.0
      %v6059 = vsel %vm6019, %v6038, 0.0
      %v6060 = vsel %vm6020, %v6042, 0.0
      %v6061 = vsel %vm6021, %v6046, 0.0
      %v6062 = vsel %vm6022, %v6050, 0.0
      %v6063 = vsel %vm6023, %v6054, 0.0
      %v6064 = vadd.f32 %v5984, %v6056
      %v6065 = vadd.f32 %v5985, %v6057
      %v6066 = vadd.f32 %v5986, %v6058
      %v6067 = vadd.f32 %v5987, %v6059
      %v6068 = vadd.f32 %v5988, %v6060
      %v6069 = vadd.f32 %v5989, %v6061
      %v6070 = vadd.f32 %v5990, %v6062
      %v6071 = vadd.f32 %v5991, %v6063
      %v6072 = vadd.f32 %v5752, %v6064
      %v6073 = vadd.f32 %v5753, %v6065
      %v6074 = vadd.f32 %v5754, %v6066
      %v6075 = vadd.f32 %v5755, %v6067
      %v6076 = vadd.f32 %v5756, %v6068
      %v6077 = vadd.f32 %v5757, %v6069
      %v6078 = vadd.f32 %v5758, %v6070
      %v6079 = vadd.f32 %v5759, %v6071
      %6080 = vset.pattern.permute.xlu0 12
      %6081 = vperm.xlu0 %6080, %v1404
      %v6082 = vpop.permute.xlu0 %6081
      %6083 = vset.pattern.permute.xlu0 12
      %6084 = vperm.xlu0 %6083, %v1405
      %v6085 = vpop.permute.xlu0 %6084
      %6086 = vset.pattern.permute.xlu0 12
      %6087 = vperm.xlu0 %6086, %v1406
      %v6088 = vpop.permute.xlu0 %6087
      %6089 = vset.pattern.permute.xlu0 12
      %6090 = vperm.xlu0 %6089, %v1407
      %v6091 = vpop.permute.xlu0 %6090
      %6092 = vset.pattern.permute.xlu0 12
      %6093 = vperm.xlu0 %6092, %v1408
      %v6094 = vpop.permute.xlu0 %6093
      %6095 = vset.pattern.permute.xlu0 12
      %6096 = vperm.xlu0 %6095, %v1409
      %v6097 = vpop.permute.xlu0 %6096
      %6098 = vset.pattern.permute.xlu0 12
      %6099 = vperm.xlu0 %6098, %v1410
      %v6100 = vpop.permute.xlu0 %6099
      %6101 = vset.pattern.permute.xlu0 12
      %6102 = vperm.xlu0 %6101, %v1411
      %v6103 = vpop.permute.xlu0 %6102
      %vm6104 = vcmp.eq.s32.totalorder %v6082, %v1661
      %vm6105 = vcmp.eq.s32.totalorder %v6085, %v1661
      %vm6106 = vcmp.eq.s32.totalorder %v6088, %v1661
      %vm6107 = vcmp.eq.s32.totalorder %v6091, %v1661
      %vm6108 = vcmp.eq.s32.totalorder %v6094, %v1661
      %vm6109 = vcmp.eq.s32.totalorder %v6097, %v1661
      %vm6110 = vcmp.eq.s32.totalorder %v6100, %v1661
      %vm6111 = vcmp.eq.s32.totalorder %v6103, %v1661
      %6112 = vset.pattern.permute.xlu0 28
      %6113 = vperm.xlu0 %6112, %v4736
      %v6114 = vpop.permute.xlu0 %6113
      %6116 = vset.pattern.permute.xlu0 28
      %6117 = vperm.xlu0 %6116, %v4737
      %v6118 = vpop.permute.xlu0 %6117
      %6120 = vset.pattern.permute.xlu0 28
      %6121 = vperm.xlu0 %6120, %v4738
      %v6122 = vpop.permute.xlu0 %6121
      %6124 = vset.pattern.permute.xlu0 28
      %6125 = vperm.xlu0 %6124, %v4739
      %v6126 = vpop.permute.xlu0 %6125
      %6128 = vset.pattern.permute.xlu0 28
      %6129 = vperm.xlu0 %6128, %v4740
      %v6130 = vpop.permute.xlu0 %6129
      %6132 = vset.pattern.permute.xlu0 28
      %6133 = vperm.xlu0 %6132, %v4741
      %v6134 = vpop.permute.xlu0 %6133
      %6136 = vset.pattern.permute.xlu0 28
      %6137 = vperm.xlu0 %6136, %v4742
      %v6138 = vpop.permute.xlu0 %6137
      %6140 = vset.pattern.permute.xlu0 28
      %6141 = vperm.xlu0 %6140, %v4743
      %v6142 = vpop.permute.xlu0 %6141
      %v6144 = vsel %vm6104, %v6114, 0.0
      %v6145 = vsel %vm6105, %v6118, 0.0
      %v6146 = vsel %vm6106, %v6122, 0.0
      %v6147 = vsel %vm6107, %v6126, 0.0
      %v6148 = vsel %vm6108, %v6130, 0.0
      %v6149 = vsel %vm6109, %v6134, 0.0
      %v6150 = vsel %vm6110, %v6138, 0.0
      %v6151 = vsel %vm6111, %v6142, 0.0
      %6152 = vset.pattern.permute.xlu0 12
      %6153 = vperm.xlu0 %6152, %v1412
      %v6154 = vpop.permute.xlu0 %6153
      %6155 = vset.pattern.permute.xlu0 12
      %6156 = vperm.xlu0 %6155, %v1413
      %v6157 = vpop.permute.xlu0 %6156
      %6158 = vset.pattern.permute.xlu0 12
      %6159 = vperm.xlu0 %6158, %v1414
      %v6160 = vpop.permute.xlu0 %6159
      %6161 = vset.pattern.permute.xlu0 12
      %6162 = vperm.xlu0 %6161, %v1415
      %v6163 = vpop.permute.xlu0 %6162
      %6164 = vset.pattern.permute.xlu0 12
      %6165 = vperm.xlu0 %6164, %v1416
      %v6166 = vpop.permute.xlu0 %6165
      %6167 = vset.pattern.permute.xlu0 12
      %6168 = vperm.xlu0 %6167, %v1417
      %v6169 = vpop.permute.xlu0 %6168
      %6170 = vset.pattern.permute.xlu0 12
      %6171 = vperm.xlu0 %6170, %v1418
      %v6172 = vpop.permute.xlu0 %6171
      %6173 = vset.pattern.permute.xlu0 12
      %6174 = vperm.xlu0 %6173, %v1419
      %v6175 = vpop.permute.xlu0 %6174
      %vm6176 = vcmp.eq.s32.totalorder %v6154, %v1661
      %vm6177 = vcmp.eq.s32.totalorder %v6157, %v1661
      %vm6178 = vcmp.eq.s32.totalorder %v6160, %v1661
      %vm6179 = vcmp.eq.s32.totalorder %v6163, %v1661
      %vm6180 = vcmp.eq.s32.totalorder %v6166, %v1661
      %vm6181 = vcmp.eq.s32.totalorder %v6169, %v1661
      %vm6182 = vcmp.eq.s32.totalorder %v6172, %v1661
      %vm6183 = vcmp.eq.s32.totalorder %v6175, %v1661
      %6184 = vset.pattern.permute.xlu0 28
      %6185 = vperm.xlu0 %6184, %v4744
      %v6186 = vpop.permute.xlu0 %6185
      %6188 = vset.pattern.permute.xlu0 28
      %6189 = vperm.xlu0 %6188, %v4745
      %v6190 = vpop.permute.xlu0 %6189
      %6192 = vset.pattern.permute.xlu0 28
      %6193 = vperm.xlu0 %6192, %v4746
      %v6194 = vpop.permute.xlu0 %6193
      %6196 = vset.pattern.permute.xlu0 28
      %6197 = vperm.xlu0 %6196, %v4747
      %v6198 = vpop.permute.xlu0 %6197
      %6200 = vset.pattern.permute.xlu0 28
      %6201 = vperm.xlu0 %6200, %v4748
      %v6202 = vpop.permute.xlu0 %6201
      %6204 = vset.pattern.permute.xlu0 28
      %6205 = vperm.xlu0 %6204, %v4749
      %v6206 = vpop.permute.xlu0 %6205
      %6208 = vset.pattern.permute.xlu0 28
      %6209 = vperm.xlu0 %6208, %v4750
      %v6210 = vpop.permute.xlu0 %6209
      %6212 = vset.pattern.permute.xlu0 28
      %6213 = vperm.xlu0 %6212, %v4751
      %v6214 = vpop.permute.xlu0 %6213
      %v6216 = vsel %vm6176, %v6186, 0.0
      %v6217 = vsel %vm6177, %v6190, 0.0
      %v6218 = vsel %vm6178, %v6194, 0.0
      %v6219 = vsel %vm6179, %v6198, 0.0
      %v6220 = vsel %vm6180, %v6202, 0.0
      %v6221 = vsel %vm6181, %v6206, 0.0
      %v6222 = vsel %vm6182, %v6210, 0.0
      %v6223 = vsel %vm6183, %v6214, 0.0
      %v6224 = vadd.f32 %v6144, %v6216
      %v6225 = vadd.f32 %v6145, %v6217
      %v6226 = vadd.f32 %v6146, %v6218
      %v6227 = vadd.f32 %v6147, %v6219
      %v6228 = vadd.f32 %v6148, %v6220
      %v6229 = vadd.f32 %v6149, %v6221
      %v6230 = vadd.f32 %v6150, %v6222
      %v6231 = vadd.f32 %v6151, %v6223
      %6232 = vset.pattern.permute.xlu0 12
      %6233 = vperm.xlu0 %6232, %v1420
      %v6234 = vpop.permute.xlu0 %6233
      %6235 = vset.pattern.permute.xlu0 12
      %6236 = vperm.xlu0 %6235, %v1421
      %v6237 = vpop.permute.xlu0 %6236
      %6238 = vset.pattern.permute.xlu0 12
      %6239 = vperm.xlu0 %6238, %v1422
      %v6240 = vpop.permute.xlu0 %6239
      %6241 = vset.pattern.permute.xlu0 12
      %6242 = vperm.xlu0 %6241, %v1423
      %v6243 = vpop.permute.xlu0 %6242
      %6244 = vset.pattern.permute.xlu0 12
      %6245 = vperm.xlu0 %6244, %v1424
      %v6246 = vpop.permute.xlu0 %6245
      %6247 = vset.pattern.permute.xlu0 12
      %6248 = vperm.xlu0 %6247, %v1425
      %v6249 = vpop.permute.xlu0 %6248
      %6250 = vset.pattern.permute.xlu0 12
      %6251 = vperm.xlu0 %6250, %v1426
      %v6252 = vpop.permute.xlu0 %6251
      %6253 = vset.pattern.permute.xlu0 12
      %6254 = vperm.xlu0 %6253, %v1427
      %v6255 = vpop.permute.xlu0 %6254
      %vm6256 = vcmp.eq.s32.totalorder %v6234, %v1661
      %vm6257 = vcmp.eq.s32.totalorder %v6237, %v1661
      %vm6258 = vcmp.eq.s32.totalorder %v6240, %v1661
      %vm6259 = vcmp.eq.s32.totalorder %v6243, %v1661
      %vm6260 = vcmp.eq.s32.totalorder %v6246, %v1661
      %vm6261 = vcmp.eq.s32.totalorder %v6249, %v1661
      %vm6262 = vcmp.eq.s32.totalorder %v6252, %v1661
      %vm6263 = vcmp.eq.s32.totalorder %v6255, %v1661
      %6264 = vset.pattern.permute.xlu0 28
      %6265 = vperm.xlu0 %6264, %v4752
      %v6266 = vpop.permute.xlu0 %6265
      %6268 = vset.pattern.permute.xlu0 28
      %6269 = vperm.xlu0 %6268, %v4753
      %v6270 = vpop.permute.xlu0 %6269
      %6272 = vset.pattern.permute.xlu0 28
      %6273 = vperm.xlu0 %6272, %v4754
      %v6274 = vpop.permute.xlu0 %6273
      %6276 = vset.pattern.permute.xlu0 28
      %6277 = vperm.xlu0 %6276, %v4755
      %v6278 = vpop.permute.xlu0 %6277
      %6280 = vset.pattern.permute.xlu0 28
      %6281 = vperm.xlu0 %6280, %v4756
      %v6282 = vpop.permute.xlu0 %6281
      %6284 = vset.pattern.permute.xlu0 28
      %6285 = vperm.xlu0 %6284, %v4757
      %v6286 = vpop.permute.xlu0 %6285
      %6288 = vset.pattern.permute.xlu0 28
      %6289 = vperm.xlu0 %6288, %v4758
      %v6290 = vpop.permute.xlu0 %6289
      %6292 = vset.pattern.permute.xlu0 28
      %6293 = vperm.xlu0 %6292, %v4759
      %v6294 = vpop.permute.xlu0 %6293
      %v6296 = vsel %vm6256, %v6266, 0.0
      %v6297 = vsel %vm6257, %v6270, 0.0
      %v6298 = vsel %vm6258, %v6274, 0.0
      %v6299 = vsel %vm6259, %v6278, 0.0
      %v6300 = vsel %vm6260, %v6282, 0.0
      %v6301 = vsel %vm6261, %v6286, 0.0
      %v6302 = vsel %vm6262, %v6290, 0.0
      %v6303 = vsel %vm6263, %v6294, 0.0
      %v6304 = vadd.f32 %v6224, %v6296
      %v6305 = vadd.f32 %v6225, %v6297
      %v6306 = vadd.f32 %v6226, %v6298
      %v6307 = vadd.f32 %v6227, %v6299
      %v6308 = vadd.f32 %v6228, %v6300
      %v6309 = vadd.f32 %v6229, %v6301
      %v6310 = vadd.f32 %v6230, %v6302
      %v6311 = vadd.f32 %v6231, %v6303
      %6312 = vset.pattern.permute.xlu0 12
      %6313 = vperm.xlu0 %6312, %v1428
      %v6314 = vpop.permute.xlu0 %6313
      %6315 = vset.pattern.permute.xlu0 12
      %6316 = vperm.xlu0 %6315, %v1429
      %v6317 = vpop.permute.xlu0 %6316
      %6318 = vset.pattern.permute.xlu0 12
      %6319 = vperm.xlu0 %6318, %v1430
      %v6320 = vpop.permute.xlu0 %6319
      %6321 = vset.pattern.permute.xlu0 12
      %6322 = vperm.xlu0 %6321, %v1431
      %v6323 = vpop.permute.xlu0 %6322
      %6324 = vset.pattern.permute.xlu0 12
      %6325 = vperm.xlu0 %6324, %v1432
      %v6326 = vpop.permute.xlu0 %6325
      %6327 = vset.pattern.permute.xlu0 12
      %6328 = vperm.xlu0 %6327, %v1433
      %v6329 = vpop.permute.xlu0 %6328
      %6330 = vset.pattern.permute.xlu0 12
      %6331 = vperm.xlu0 %6330, %v1434
      %v6332 = vpop.permute.xlu0 %6331
      %6333 = vset.pattern.permute.xlu0 12
      %6334 = vperm.xlu0 %6333, %v1435
      %v6335 = vpop.permute.xlu0 %6334
      %vm6336 = vcmp.eq.s32.totalorder %v6314, %v1661
      %vm6337 = vcmp.eq.s32.totalorder %v6317, %v1661
      %vm6338 = vcmp.eq.s32.totalorder %v6320, %v1661
      %vm6339 = vcmp.eq.s32.totalorder %v6323, %v1661
      %vm6340 = vcmp.eq.s32.totalorder %v6326, %v1661
      %vm6341 = vcmp.eq.s32.totalorder %v6329, %v1661
      %vm6342 = vcmp.eq.s32.totalorder %v6332, %v1661
      %vm6343 = vcmp.eq.s32.totalorder %v6335, %v1661
      %6344 = vset.pattern.permute.xlu0 28
      %6345 = vperm.xlu0 %6344, %v4760
      %v6346 = vpop.permute.xlu0 %6345
      %6348 = vset.pattern.permute.xlu0 28
      %6349 = vperm.xlu0 %6348, %v4761
      %v6350 = vpop.permute.xlu0 %6349
      %6352 = vset.pattern.permute.xlu0 28
      %6353 = vperm.xlu0 %6352, %v4762
      %v6354 = vpop.permute.xlu0 %6353
      %6356 = vset.pattern.permute.xlu0 28
      %6357 = vperm.xlu0 %6356, %v4763
      %v6358 = vpop.permute.xlu0 %6357
      %6360 = vset.pattern.permute.xlu0 28
      %6361 = vperm.xlu0 %6360, %v4764
      %v6362 = vpop.permute.xlu0 %6361
      %6364 = vset.pattern.permute.xlu0 28
      %6365 = vperm.xlu0 %6364, %v4765
      %v6366 = vpop.permute.xlu0 %6365
      %6368 = vset.pattern.permute.xlu0 28
      %6369 = vperm.xlu0 %6368, %v4766
      %v6370 = vpop.permute.xlu0 %6369
      %6372 = vset.pattern.permute.xlu0 28
      %6373 = vperm.xlu0 %6372, %v4767
      %v6374 = vpop.permute.xlu0 %6373
      %v6376 = vsel %vm6336, %v6346, 0.0
      %v6377 = vsel %vm6337, %v6350, 0.0
      %v6378 = vsel %vm6338, %v6354, 0.0
      %v6379 = vsel %vm6339, %v6358, 0.0
      %v6380 = vsel %vm6340, %v6362, 0.0
      %v6381 = vsel %vm6341, %v6366, 0.0
      %v6382 = vsel %vm6342, %v6370, 0.0
      %v6383 = vsel %vm6343, %v6374, 0.0
      %v6384 = vadd.f32 %v6304, %v6376
      %v6385 = vadd.f32 %v6305, %v6377
      %v6386 = vadd.f32 %v6306, %v6378
      %v6387 = vadd.f32 %v6307, %v6379
      %v6388 = vadd.f32 %v6308, %v6380
      %v6389 = vadd.f32 %v6309, %v6381
      %v6390 = vadd.f32 %v6310, %v6382
      %v6391 = vadd.f32 %v6311, %v6383
      %v6392 = vadd.f32 %v6072, %v6384
      %v6393 = vadd.f32 %v6073, %v6385
      %v6394 = vadd.f32 %v6074, %v6386
      %v6395 = vadd.f32 %v6075, %v6387
      %v6396 = vadd.f32 %v6076, %v6388
      %v6397 = vadd.f32 %v6077, %v6389
      %v6398 = vadd.f32 %v6078, %v6390
      %v6399 = vadd.f32 %v6079, %v6391
      %6400 = vset.pattern.permute.xlu0 13
      %6401 = vperm.xlu0 %6400, %v1404
      %v6402 = vpop.permute.xlu0 %6401
      %6403 = vset.pattern.permute.xlu0 13
      %6404 = vperm.xlu0 %6403, %v1405
      %v6405 = vpop.permute.xlu0 %6404
      %6406 = vset.pattern.permute.xlu0 13
      %6407 = vperm.xlu0 %6406, %v1406
      %v6408 = vpop.permute.xlu0 %6407
      %6409 = vset.pattern.permute.xlu0 13
      %6410 = vperm.xlu0 %6409, %v1407
      %v6411 = vpop.permute.xlu0 %6410
      %6412 = vset.pattern.permute.xlu0 13
      %6413 = vperm.xlu0 %6412, %v1408
      %v6414 = vpop.permute.xlu0 %6413
      %6415 = vset.pattern.permute.xlu0 13
      %6416 = vperm.xlu0 %6415, %v1409
      %v6417 = vpop.permute.xlu0 %6416
      %6418 = vset.pattern.permute.xlu0 13
      %6419 = vperm.xlu0 %6418, %v1410
      %v6420 = vpop.permute.xlu0 %6419
      %6421 = vset.pattern.permute.xlu0 13
      %6422 = vperm.xlu0 %6421, %v1411
      %v6423 = vpop.permute.xlu0 %6422
      %vm6424 = vcmp.eq.s32.totalorder %v6402, %v1661
      %vm6425 = vcmp.eq.s32.totalorder %v6405, %v1661
      %vm6426 = vcmp.eq.s32.totalorder %v6408, %v1661
      %vm6427 = vcmp.eq.s32.totalorder %v6411, %v1661
      %vm6428 = vcmp.eq.s32.totalorder %v6414, %v1661
      %vm6429 = vcmp.eq.s32.totalorder %v6417, %v1661
      %vm6430 = vcmp.eq.s32.totalorder %v6420, %v1661
      %vm6431 = vcmp.eq.s32.totalorder %v6423, %v1661
      %6432 = vset.pattern.permute.xlu0 29
      %6433 = vperm.xlu0 %6432, %v4736
      %v6434 = vpop.permute.xlu0 %6433
      %6436 = vset.pattern.permute.xlu0 29
      %6437 = vperm.xlu0 %6436, %v4737
      %v6438 = vpop.permute.xlu0 %6437
      %6440 = vset.pattern.permute.xlu0 29
      %6441 = vperm.xlu0 %6440, %v4738
      %v6442 = vpop.permute.xlu0 %6441
      %6444 = vset.pattern.permute.xlu0 29
      %6445 = vperm.xlu0 %6444, %v4739
      %v6446 = vpop.permute.xlu0 %6445
      %6448 = vset.pattern.permute.xlu0 29
      %6449 = vperm.xlu0 %6448, %v4740
      %v6450 = vpop.permute.xlu0 %6449
      %6452 = vset.pattern.permute.xlu0 29
      %6453 = vperm.xlu0 %6452, %v4741
      %v6454 = vpop.permute.xlu0 %6453
      %6456 = vset.pattern.permute.xlu0 29
      %6457 = vperm.xlu0 %6456, %v4742
      %v6458 = vpop.permute.xlu0 %6457
      %6460 = vset.pattern.permute.xlu0 29
      %6461 = vperm.xlu0 %6460, %v4743
      %v6462 = vpop.permute.xlu0 %6461
      %v6464 = vsel %vm6424, %v6434, 0.0
      %v6465 = vsel %vm6425, %v6438, 0.0
      %v6466 = vsel %vm6426, %v6442, 0.0
      %v6467 = vsel %vm6427, %v6446, 0.0
      %v6468 = vsel %vm6428, %v6450, 0.0
      %v6469 = vsel %vm6429, %v6454, 0.0
      %v6470 = vsel %vm6430, %v6458, 0.0
      %v6471 = vsel %vm6431, %v6462, 0.0
      %6472 = vset.pattern.permute.xlu0 13
      %6473 = vperm.xlu0 %6472, %v1412
      %v6474 = vpop.permute.xlu0 %6473
      %6475 = vset.pattern.permute.xlu0 13
      %6476 = vperm.xlu0 %6475, %v1413
      %v6477 = vpop.permute.xlu0 %6476
      %6478 = vset.pattern.permute.xlu0 13
      %6479 = vperm.xlu0 %6478, %v1414
      %v6480 = vpop.permute.xlu0 %6479
      %6481 = vset.pattern.permute.xlu0 13
      %6482 = vperm.xlu0 %6481, %v1415
      %v6483 = vpop.permute.xlu0 %6482
      %6484 = vset.pattern.permute.xlu0 13
      %6485 = vperm.xlu0 %6484, %v1416
      %v6486 = vpop.permute.xlu0 %6485
      %6487 = vset.pattern.permute.xlu0 13
      %6488 = vperm.xlu0 %6487, %v1417
      %v6489 = vpop.permute.xlu0 %6488
      %6490 = vset.pattern.permute.xlu0 13
      %6491 = vperm.xlu0 %6490, %v1418
      %v6492 = vpop.permute.xlu0 %6491
      %6493 = vset.pattern.permute.xlu0 13
      %6494 = vperm.xlu0 %6493, %v1419
      %v6495 = vpop.permute.xlu0 %6494
      %vm6496 = vcmp.eq.s32.totalorder %v6474, %v1661
      %vm6497 = vcmp.eq.s32.totalorder %v6477, %v1661
      %vm6498 = vcmp.eq.s32.totalorder %v6480, %v1661
      %vm6499 = vcmp.eq.s32.totalorder %v6483, %v1661
      %vm6500 = vcmp.eq.s32.totalorder %v6486, %v1661
      %vm6501 = vcmp.eq.s32.totalorder %v6489, %v1661
      %vm6502 = vcmp.eq.s32.totalorder %v6492, %v1661
      %vm6503 = vcmp.eq.s32.totalorder %v6495, %v1661
      %6504 = vset.pattern.permute.xlu0 29
      %6505 = vperm.xlu0 %6504, %v4744
      %v6506 = vpop.permute.xlu0 %6505
      %6508 = vset.pattern.permute.xlu0 29
      %6509 = vperm.xlu0 %6508, %v4745
      %v6510 = vpop.permute.xlu0 %6509
      %6512 = vset.pattern.permute.xlu0 29
      %6513 = vperm.xlu0 %6512, %v4746
      %v6514 = vpop.permute.xlu0 %6513
      %6516 = vset.pattern.permute.xlu0 29
      %6517 = vperm.xlu0 %6516, %v4747
      %v6518 = vpop.permute.xlu0 %6517
      %6520 = vset.pattern.permute.xlu0 29
      %6521 = vperm.xlu0 %6520, %v4748
      %v6522 = vpop.permute.xlu0 %6521
      %6524 = vset.pattern.permute.xlu0 29
      %6525 = vperm.xlu0 %6524, %v4749
      %v6526 = vpop.permute.xlu0 %6525
      %6528 = vset.pattern.permute.xlu0 29
      %6529 = vperm.xlu0 %6528, %v4750
      %v6530 = vpop.permute.xlu0 %6529
      %6532 = vset.pattern.permute.xlu0 29
      %6533 = vperm.xlu0 %6532, %v4751
      %v6534 = vpop.permute.xlu0 %6533
      %v6536 = vsel %vm6496, %v6506, 0.0
      %v6537 = vsel %vm6497, %v6510, 0.0
      %v6538 = vsel %vm6498, %v6514, 0.0
      %v6539 = vsel %vm6499, %v6518, 0.0
      %v6540 = vsel %vm6500, %v6522, 0.0
      %v6541 = vsel %vm6501, %v6526, 0.0
      %v6542 = vsel %vm6502, %v6530, 0.0
      %v6543 = vsel %vm6503, %v6534, 0.0
      %v6544 = vadd.f32 %v6464, %v6536
      %v6545 = vadd.f32 %v6465, %v6537
      %v6546 = vadd.f32 %v6466, %v6538
      %v6547 = vadd.f32 %v6467, %v6539
      %v6548 = vadd.f32 %v6468, %v6540
      %v6549 = vadd.f32 %v6469, %v6541
      %v6550 = vadd.f32 %v6470, %v6542
      %v6551 = vadd.f32 %v6471, %v6543
      %6552 = vset.pattern.permute.xlu0 13
      %6553 = vperm.xlu0 %6552, %v1420
      %v6554 = vpop.permute.xlu0 %6553
      %6555 = vset.pattern.permute.xlu0 13
      %6556 = vperm.xlu0 %6555, %v1421
      %v6557 = vpop.permute.xlu0 %6556
      %6558 = vset.pattern.permute.xlu0 13
      %6559 = vperm.xlu0 %6558, %v1422
      %v6560 = vpop.permute.xlu0 %6559
      %6561 = vset.pattern.permute.xlu0 13
      %6562 = vperm.xlu0 %6561, %v1423
      %v6563 = vpop.permute.xlu0 %6562
      %6564 = vset.pattern.permute.xlu0 13
      %6565 = vperm.xlu0 %6564, %v1424
      %v6566 = vpop.permute.xlu0 %6565
      %6567 = vset.pattern.permute.xlu0 13
      %6568 = vperm.xlu0 %6567, %v1425
      %v6569 = vpop.permute.xlu0 %6568
      %6570 = vset.pattern.permute.xlu0 13
      %6571 = vperm.xlu0 %6570, %v1426
      %v6572 = vpop.permute.xlu0 %6571
      %6573 = vset.pattern.permute.xlu0 13
      %6574 = vperm.xlu0 %6573, %v1427
      %v6575 = vpop.permute.xlu0 %6574
      %vm6576 = vcmp.eq.s32.totalorder %v6554, %v1661
      %vm6577 = vcmp.eq.s32.totalorder %v6557, %v1661
      %vm6578 = vcmp.eq.s32.totalorder %v6560, %v1661
      %vm6579 = vcmp.eq.s32.totalorder %v6563, %v1661
      %vm6580 = vcmp.eq.s32.totalorder %v6566, %v1661
      %vm6581 = vcmp.eq.s32.totalorder %v6569, %v1661
      %vm6582 = vcmp.eq.s32.totalorder %v6572, %v1661
      %vm6583 = vcmp.eq.s32.totalorder %v6575, %v1661
      %6584 = vset.pattern.permute.xlu0 29
      %6585 = vperm.xlu0 %6584, %v4752
      %v6586 = vpop.permute.xlu0 %6585
      %6588 = vset.pattern.permute.xlu0 29
      %6589 = vperm.xlu0 %6588, %v4753
      %v6590 = vpop.permute.xlu0 %6589
      %6592 = vset.pattern.permute.xlu0 29
      %6593 = vperm.xlu0 %6592, %v4754
      %v6594 = vpop.permute.xlu0 %6593
      %6596 = vset.pattern.permute.xlu0 29
      %6597 = vperm.xlu0 %6596, %v4755
      %v6598 = vpop.permute.xlu0 %6597
      %6600 = vset.pattern.permute.xlu0 29
      %6601 = vperm.xlu0 %6600, %v4756
      %v6602 = vpop.permute.xlu0 %6601
      %6604 = vset.pattern.permute.xlu0 29
      %6605 = vperm.xlu0 %6604, %v4757
      %v6606 = vpop.permute.xlu0 %6605
      %6608 = vset.pattern.permute.xlu0 29
      %6609 = vperm.xlu0 %6608, %v4758
      %v6610 = vpop.permute.xlu0 %6609
      %6612 = vset.pattern.permute.xlu0 29
      %6613 = vperm.xlu0 %6612, %v4759
      %v6614 = vpop.permute.xlu0 %6613
      %v6616 = vsel %vm6576, %v6586, 0.0
      %v6617 = vsel %vm6577, %v6590, 0.0
      %v6618 = vsel %vm6578, %v6594, 0.0
      %v6619 = vsel %vm6579, %v6598, 0.0
      %v6620 = vsel %vm6580, %v6602, 0.0
      %v6621 = vsel %vm6581, %v6606, 0.0
      %v6622 = vsel %vm6582, %v6610, 0.0
      %v6623 = vsel %vm6583, %v6614, 0.0
      %v6624 = vadd.f32 %v6544, %v6616
      %v6625 = vadd.f32 %v6545, %v6617
      %v6626 = vadd.f32 %v6546, %v6618
      %v6627 = vadd.f32 %v6547, %v6619
      %v6628 = vadd.f32 %v6548, %v6620
      %v6629 = vadd.f32 %v6549, %v6621
      %v6630 = vadd.f32 %v6550, %v6622
      %v6631 = vadd.f32 %v6551, %v6623
      %6632 = vset.pattern.permute.xlu0 13
      %6633 = vperm.xlu0 %6632, %v1428
      %v6634 = vpop.permute.xlu0 %6633
      %6635 = vset.pattern.permute.xlu0 13
      %6636 = vperm.xlu0 %6635, %v1429
      %v6637 = vpop.permute.xlu0 %6636
      %6638 = vset.pattern.permute.xlu0 13
      %6639 = vperm.xlu0 %6638, %v1430
      %v6640 = vpop.permute.xlu0 %6639
      %6641 = vset.pattern.permute.xlu0 13
      %6642 = vperm.xlu0 %6641, %v1431
      %v6643 = vpop.permute.xlu0 %6642
      %6644 = vset.pattern.permute.xlu0 13
      %6645 = vperm.xlu0 %6644, %v1432
      %v6646 = vpop.permute.xlu0 %6645
      %6647 = vset.pattern.permute.xlu0 13
      %6648 = vperm.xlu0 %6647, %v1433
      %v6649 = vpop.permute.xlu0 %6648
      %6650 = vset.pattern.permute.xlu0 13
      %6651 = vperm.xlu0 %6650, %v1434
      %v6652 = vpop.permute.xlu0 %6651
      %6653 = vset.pattern.permute.xlu0 13
      %6654 = vperm.xlu0 %6653, %v1435
      %v6655 = vpop.permute.xlu0 %6654
      %vm6656 = vcmp.eq.s32.totalorder %v6634, %v1661
      %vm6657 = vcmp.eq.s32.totalorder %v6637, %v1661
      %vm6658 = vcmp.eq.s32.totalorder %v6640, %v1661
      %vm6659 = vcmp.eq.s32.totalorder %v6643, %v1661
      %vm6660 = vcmp.eq.s32.totalorder %v6646, %v1661
      %vm6661 = vcmp.eq.s32.totalorder %v6649, %v1661
      %vm6662 = vcmp.eq.s32.totalorder %v6652, %v1661
      %vm6663 = vcmp.eq.s32.totalorder %v6655, %v1661
      %6664 = vset.pattern.permute.xlu0 29
      %6665 = vperm.xlu0 %6664, %v4760
      %v6666 = vpop.permute.xlu0 %6665
      %6668 = vset.pattern.permute.xlu0 29
      %6669 = vperm.xlu0 %6668, %v4761
      %v6670 = vpop.permute.xlu0 %6669
      %6672 = vset.pattern.permute.xlu0 29
      %6673 = vperm.xlu0 %6672, %v4762
      %v6674 = vpop.permute.xlu0 %6673
      %6676 = vset.pattern.permute.xlu0 29
      %6677 = vperm.xlu0 %6676, %v4763
      %v6678 = vpop.permute.xlu0 %6677
      %6680 = vset.pattern.permute.xlu0 29
      %6681 = vperm.xlu0 %6680, %v4764
      %v6682 = vpop.permute.xlu0 %6681
      %6684 = vset.pattern.permute.xlu0 29
      %6685 = vperm.xlu0 %6684, %v4765
      %v6686 = vpop.permute.xlu0 %6685
      %6688 = vset.pattern.permute.xlu0 29
      %6689 = vperm.xlu0 %6688, %v4766
      %v6690 = vpop.permute.xlu0 %6689
      %6692 = vset.pattern.permute.xlu0 29
      %6693 = vperm.xlu0 %6692, %v4767
      %v6694 = vpop.permute.xlu0 %6693
      %v6696 = vsel %vm6656, %v6666, 0.0
      %v6697 = vsel %vm6657, %v6670, 0.0
      %v6698 = vsel %vm6658, %v6674, 0.0
      %v6699 = vsel %vm6659, %v6678, 0.0
      %v6700 = vsel %vm6660, %v6682, 0.0
      %v6701 = vsel %vm6661, %v6686, 0.0
      %v6702 = vsel %vm6662, %v6690, 0.0
      %v6703 = vsel %vm6663, %v6694, 0.0
      %v6704 = vadd.f32 %v6624, %v6696
      %v6705 = vadd.f32 %v6625, %v6697
      %v6706 = vadd.f32 %v6626, %v6698
      %v6707 = vadd.f32 %v6627, %v6699
      %v6708 = vadd.f32 %v6628, %v6700
      %v6709 = vadd.f32 %v6629, %v6701
      %v6710 = vadd.f32 %v6630, %v6702
      %v6711 = vadd.f32 %v6631, %v6703
      %v6712 = vadd.f32 %v6392, %v6704
      %v6713 = vadd.f32 %v6393, %v6705
      %v6714 = vadd.f32 %v6394, %v6706
      %v6715 = vadd.f32 %v6395, %v6707
      %v6716 = vadd.f32 %v6396, %v6708
      %v6717 = vadd.f32 %v6397, %v6709
      %v6718 = vadd.f32 %v6398, %v6710
      %v6719 = vadd.f32 %v6399, %v6711
      %6720 = vset.pattern.permute.xlu0 14
      %6721 = vperm.xlu0 %6720, %v1404
      %v6722 = vpop.permute.xlu0 %6721
      %6723 = vset.pattern.permute.xlu0 14
      %6724 = vperm.xlu0 %6723, %v1405
      %v6725 = vpop.permute.xlu0 %6724
      %6726 = vset.pattern.permute.xlu0 14
      %6727 = vperm.xlu0 %6726, %v1406
      %v6728 = vpop.permute.xlu0 %6727
      %6729 = vset.pattern.permute.xlu0 14
      %6730 = vperm.xlu0 %6729, %v1407
      %v6731 = vpop.permute.xlu0 %6730
      %6732 = vset.pattern.permute.xlu0 14
      %6733 = vperm.xlu0 %6732, %v1408
      %v6734 = vpop.permute.xlu0 %6733
      %6735 = vset.pattern.permute.xlu0 14
      %6736 = vperm.xlu0 %6735, %v1409
      %v6737 = vpop.permute.xlu0 %6736
      %6738 = vset.pattern.permute.xlu0 14
      %6739 = vperm.xlu0 %6738, %v1410
      %v6740 = vpop.permute.xlu0 %6739
      %6741 = vset.pattern.permute.xlu0 14
      %6742 = vperm.xlu0 %6741, %v1411
      %v6743 = vpop.permute.xlu0 %6742
      %vm6744 = vcmp.eq.s32.totalorder %v6722, %v1661
      %vm6745 = vcmp.eq.s32.totalorder %v6725, %v1661
      %vm6746 = vcmp.eq.s32.totalorder %v6728, %v1661
      %vm6747 = vcmp.eq.s32.totalorder %v6731, %v1661
      %vm6748 = vcmp.eq.s32.totalorder %v6734, %v1661
      %vm6749 = vcmp.eq.s32.totalorder %v6737, %v1661
      %vm6750 = vcmp.eq.s32.totalorder %v6740, %v1661
      %vm6751 = vcmp.eq.s32.totalorder %v6743, %v1661
      %6752 = vset.pattern.permute.xlu0 30
      %6753 = vperm.xlu0 %6752, %v4736
      %v6754 = vpop.permute.xlu0 %6753
      %6756 = vset.pattern.permute.xlu0 30
      %6757 = vperm.xlu0 %6756, %v4737
      %v6758 = vpop.permute.xlu0 %6757
      %6760 = vset.pattern.permute.xlu0 30
      %6761 = vperm.xlu0 %6760, %v4738
      %v6762 = vpop.permute.xlu0 %6761
      %6764 = vset.pattern.permute.xlu0 30
      %6765 = vperm.xlu0 %6764, %v4739
      %v6766 = vpop.permute.xlu0 %6765
      %6768 = vset.pattern.permute.xlu0 30
      %6769 = vperm.xlu0 %6768, %v4740
      %v6770 = vpop.permute.xlu0 %6769
      %6772 = vset.pattern.permute.xlu0 30
      %6773 = vperm.xlu0 %6772, %v4741
      %v6774 = vpop.permute.xlu0 %6773
      %6776 = vset.pattern.permute.xlu0 30
      %6777 = vperm.xlu0 %6776, %v4742
      %v6778 = vpop.permute.xlu0 %6777
      %6780 = vset.pattern.permute.xlu0 30
      %6781 = vperm.xlu0 %6780, %v4743
      %v6782 = vpop.permute.xlu0 %6781
      %v6784 = vsel %vm6744, %v6754, 0.0
      %v6785 = vsel %vm6745, %v6758, 0.0
      %v6786 = vsel %vm6746, %v6762, 0.0
      %v6787 = vsel %vm6747, %v6766, 0.0
      %v6788 = vsel %vm6748, %v6770, 0.0
      %v6789 = vsel %vm6749, %v6774, 0.0
      %v6790 = vsel %vm6750, %v6778, 0.0
      %v6791 = vsel %vm6751, %v6782, 0.0
      %6792 = vset.pattern.permute.xlu0 14
      %6793 = vperm.xlu0 %6792, %v1412
      %v6794 = vpop.permute.xlu0 %6793
      %6795 = vset.pattern.permute.xlu0 14
      %6796 = vperm.xlu0 %6795, %v1413
      %v6797 = vpop.permute.xlu0 %6796
      %6798 = vset.pattern.permute.xlu0 14
      %6799 = vperm.xlu0 %6798, %v1414
      %v6800 = vpop.permute.xlu0 %6799
      %6801 = vset.pattern.permute.xlu0 14
      %6802 = vperm.xlu0 %6801, %v1415
      %v6803 = vpop.permute.xlu0 %6802
      %6804 = vset.pattern.permute.xlu0 14
      %6805 = vperm.xlu0 %6804, %v1416
      %v6806 = vpop.permute.xlu0 %6805
      %6807 = vset.pattern.permute.xlu0 14
      %6808 = vperm.xlu0 %6807, %v1417
      %v6809 = vpop.permute.xlu0 %6808
      %6810 = vset.pattern.permute.xlu0 14
      %6811 = vperm.xlu0 %6810, %v1418
      %v6812 = vpop.permute.xlu0 %6811
      %6813 = vset.pattern.permute.xlu0 14
      %6814 = vperm.xlu0 %6813, %v1419
      %v6815 = vpop.permute.xlu0 %6814
      %vm6816 = vcmp.eq.s32.totalorder %v6794, %v1661
      %vm6817 = vcmp.eq.s32.totalorder %v6797, %v1661
      %vm6818 = vcmp.eq.s32.totalorder %v6800, %v1661
      %vm6819 = vcmp.eq.s32.totalorder %v6803, %v1661
      %vm6820 = vcmp.eq.s32.totalorder %v6806, %v1661
      %vm6821 = vcmp.eq.s32.totalorder %v6809, %v1661
      %vm6822 = vcmp.eq.s32.totalorder %v6812, %v1661
      %vm6823 = vcmp.eq.s32.totalorder %v6815, %v1661
      %6824 = vset.pattern.permute.xlu0 30
      %6825 = vperm.xlu0 %6824, %v4744
      %v6826 = vpop.permute.xlu0 %6825
      %6828 = vset.pattern.permute.xlu0 30
      %6829 = vperm.xlu0 %6828, %v4745
      %v6830 = vpop.permute.xlu0 %6829
      %6832 = vset.pattern.permute.xlu0 30
      %6833 = vperm.xlu0 %6832, %v4746
      %v6834 = vpop.permute.xlu0 %6833
      %6836 = vset.pattern.permute.xlu0 30
      %6837 = vperm.xlu0 %6836, %v4747
      %v6838 = vpop.permute.xlu0 %6837
      %6840 = vset.pattern.permute.xlu0 30
      %6841 = vperm.xlu0 %6840, %v4748
      %v6842 = vpop.permute.xlu0 %6841
      %6844 = vset.pattern.permute.xlu0 30
      %6845 = vperm.xlu0 %6844, %v4749
      %v6846 = vpop.permute.xlu0 %6845
      %6848 = vset.pattern.permute.xlu0 30
      %6849 = vperm.xlu0 %6848, %v4750
      %v6850 = vpop.permute.xlu0 %6849
      %6852 = vset.pattern.permute.xlu0 30
      %6853 = vperm.xlu0 %6852, %v4751
      %v6854 = vpop.permute.xlu0 %6853
      %v6856 = vsel %vm6816, %v6826, 0.0
      %v6857 = vsel %vm6817, %v6830, 0.0
      %v6858 = vsel %vm6818, %v6834, 0.0
      %v6859 = vsel %vm6819, %v6838, 0.0
      %v6860 = vsel %vm6820, %v6842, 0.0
      %v6861 = vsel %vm6821, %v6846, 0.0
      %v6862 = vsel %vm6822, %v6850, 0.0
      %v6863 = vsel %vm6823, %v6854, 0.0
      %v6864 = vadd.f32 %v6784, %v6856
      %v6865 = vadd.f32 %v6785, %v6857
      %v6866 = vadd.f32 %v6786, %v6858
      %v6867 = vadd.f32 %v6787, %v6859
      %v6868 = vadd.f32 %v6788, %v6860
      %v6869 = vadd.f32 %v6789, %v6861
      %v6870 = vadd.f32 %v6790, %v6862
      %v6871 = vadd.f32 %v6791, %v6863
      %6872 = vset.pattern.permute.xlu0 14
      %6873 = vperm.xlu0 %6872, %v1420
      %v6874 = vpop.permute.xlu0 %6873
      %6875 = vset.pattern.permute.xlu0 14
      %6876 = vperm.xlu0 %6875, %v1421
      %v6877 = vpop.permute.xlu0 %6876
      %6878 = vset.pattern.permute.xlu0 14
      %6879 = vperm.xlu0 %6878, %v1422
      %v6880 = vpop.permute.xlu0 %6879
      %6881 = vset.pattern.permute.xlu0 14
      %6882 = vperm.xlu0 %6881, %v1423
      %v6883 = vpop.permute.xlu0 %6882
      %6884 = vset.pattern.permute.xlu0 14
      %6885 = vperm.xlu0 %6884, %v1424
      %v6886 = vpop.permute.xlu0 %6885
      %6887 = vset.pattern.permute.xlu0 14
      %6888 = vperm.xlu0 %6887, %v1425
      %v6889 = vpop.permute.xlu0 %6888
      %6890 = vset.pattern.permute.xlu0 14
      %6891 = vperm.xlu0 %6890, %v1426
      %v6892 = vpop.permute.xlu0 %6891
      %6893 = vset.pattern.permute.xlu0 14
      %6894 = vperm.xlu0 %6893, %v1427
      %v6895 = vpop.permute.xlu0 %6894
      %vm6896 = vcmp.eq.s32.totalorder %v6874, %v1661
      %vm6897 = vcmp.eq.s32.totalorder %v6877, %v1661
      %vm6898 = vcmp.eq.s32.totalorder %v6880, %v1661
      %vm6899 = vcmp.eq.s32.totalorder %v6883, %v1661
      %vm6900 = vcmp.eq.s32.totalorder %v6886, %v1661
      %vm6901 = vcmp.eq.s32.totalorder %v6889, %v1661
      %vm6902 = vcmp.eq.s32.totalorder %v6892, %v1661
      %vm6903 = vcmp.eq.s32.totalorder %v6895, %v1661
      %6904 = vset.pattern.permute.xlu0 30
      %6905 = vperm.xlu0 %6904, %v4752
      %v6906 = vpop.permute.xlu0 %6905
      %6908 = vset.pattern.permute.xlu0 30
      %6909 = vperm.xlu0 %6908, %v4753
      %v6910 = vpop.permute.xlu0 %6909
      %6912 = vset.pattern.permute.xlu0 30
      %6913 = vperm.xlu0 %6912, %v4754
      %v6914 = vpop.permute.xlu0 %6913
      %6916 = vset.pattern.permute.xlu0 30
      %6917 = vperm.xlu0 %6916, %v4755
      %v6918 = vpop.permute.xlu0 %6917
      %6920 = vset.pattern.permute.xlu0 30
      %6921 = vperm.xlu0 %6920, %v4756
      %v6922 = vpop.permute.xlu0 %6921
      %6924 = vset.pattern.permute.xlu0 30
      %6925 = vperm.xlu0 %6924, %v4757
      %v6926 = vpop.permute.xlu0 %6925
      %6928 = vset.pattern.permute.xlu0 30
      %6929 = vperm.xlu0 %6928, %v4758
      %v6930 = vpop.permute.xlu0 %6929
      %6932 = vset.pattern.permute.xlu0 30
      %6933 = vperm.xlu0 %6932, %v4759
      %v6934 = vpop.permute.xlu0 %6933
      %v6936 = vsel %vm6896, %v6906, 0.0
      %v6937 = vsel %vm6897, %v6910, 0.0
      %v6938 = vsel %vm6898, %v6914, 0.0
      %v6939 = vsel %vm6899, %v6918, 0.0
      %v6940 = vsel %vm6900, %v6922, 0.0
      %v6941 = vsel %vm6901, %v6926, 0.0
      %v6942 = vsel %vm6902, %v6930, 0.0
      %v6943 = vsel %vm6903, %v6934, 0.0
      %v6944 = vadd.f32 %v6864, %v6936
      %v6945 = vadd.f32 %v6865, %v6937
      %v6946 = vadd.f32 %v6866, %v6938
      %v6947 = vadd.f32 %v6867, %v6939
      %v6948 = vadd.f32 %v6868, %v6940
      %v6949 = vadd.f32 %v6869, %v6941
      %v6950 = vadd.f32 %v6870, %v6942
      %v6951 = vadd.f32 %v6871, %v6943
      %6952 = vset.pattern.permute.xlu0 14
      %6953 = vperm.xlu0 %6952, %v1428
      %v6954 = vpop.permute.xlu0 %6953
      %6955 = vset.pattern.permute.xlu0 14
      %6956 = vperm.xlu0 %6955, %v1429
      %v6957 = vpop.permute.xlu0 %6956
      %6958 = vset.pattern.permute.xlu0 14
      %6959 = vperm.xlu0 %6958, %v1430
      %v6960 = vpop.permute.xlu0 %6959
      %6961 = vset.pattern.permute.xlu0 14
      %6962 = vperm.xlu0 %6961, %v1431
      %v6963 = vpop.permute.xlu0 %6962
      %6964 = vset.pattern.permute.xlu0 14
      %6965 = vperm.xlu0 %6964, %v1432
      %v6966 = vpop.permute.xlu0 %6965
      %6967 = vset.pattern.permute.xlu0 14
      %6968 = vperm.xlu0 %6967, %v1433
      %v6969 = vpop.permute.xlu0 %6968
      %6970 = vset.pattern.permute.xlu0 14
      %6971 = vperm.xlu0 %6970, %v1434
      %v6972 = vpop.permute.xlu0 %6971
      %6973 = vset.pattern.permute.xlu0 14
      %6974 = vperm.xlu0 %6973, %v1435
      %v6975 = vpop.permute.xlu0 %6974
      %vm6976 = vcmp.eq.s32.totalorder %v6954, %v1661
      %vm6977 = vcmp.eq.s32.totalorder %v6957, %v1661
      %vm6978 = vcmp.eq.s32.totalorder %v6960, %v1661
      %vm6979 = vcmp.eq.s32.totalorder %v6963, %v1661
      %vm6980 = vcmp.eq.s32.totalorder %v6966, %v1661
      %vm6981 = vcmp.eq.s32.totalorder %v6969, %v1661
      %vm6982 = vcmp.eq.s32.totalorder %v6972, %v1661
      %vm6983 = vcmp.eq.s32.totalorder %v6975, %v1661
      %6984 = vset.pattern.permute.xlu0 30
      %6985 = vperm.xlu0 %6984, %v4760
      %v6986 = vpop.permute.xlu0 %6985
      %6988 = vset.pattern.permute.xlu0 30
      %6989 = vperm.xlu0 %6988, %v4761
      %v6990 = vpop.permute.xlu0 %6989
      %6992 = vset.pattern.permute.xlu0 30
      %6993 = vperm.xlu0 %6992, %v4762
      %v6994 = vpop.permute.xlu0 %6993
      %6996 = vset.pattern.permute.xlu0 30
      %6997 = vperm.xlu0 %6996, %v4763
      %v6998 = vpop.permute.xlu0 %6997
      %7000 = vset.pattern.permute.xlu0 30
      %7001 = vperm.xlu0 %7000, %v4764
      %v7002 = vpop.permute.xlu0 %7001
      %7004 = vset.pattern.permute.xlu0 30
      %7005 = vperm.xlu0 %7004, %v4765
      %v7006 = vpop.permute.xlu0 %7005
      %7008 = vset.pattern.permute.xlu0 30
      %7009 = vperm.xlu0 %7008, %v4766
      %v7010 = vpop.permute.xlu0 %7009
      %7012 = vset.pattern.permute.xlu0 30
      %7013 = vperm.xlu0 %7012, %v4767
      %v7014 = vpop.permute.xlu0 %7013
      %v7016 = vsel %vm6976, %v6986, 0.0
      %v7017 = vsel %vm6977, %v6990, 0.0
      %v7018 = vsel %vm6978, %v6994, 0.0
      %v7019 = vsel %vm6979, %v6998, 0.0
      %v7020 = vsel %vm6980, %v7002, 0.0
      %v7021 = vsel %vm6981, %v7006, 0.0
      %v7022 = vsel %vm6982, %v7010, 0.0
      %v7023 = vsel %vm6983, %v7014, 0.0
      %v7024 = vadd.f32 %v6944, %v7016
      %v7025 = vadd.f32 %v6945, %v7017
      %v7026 = vadd.f32 %v6946, %v7018
      %v7027 = vadd.f32 %v6947, %v7019
      %v7028 = vadd.f32 %v6948, %v7020
      %v7029 = vadd.f32 %v6949, %v7021
      %v7030 = vadd.f32 %v6950, %v7022
      %v7031 = vadd.f32 %v6951, %v7023
      %v7032 = vadd.f32 %v6712, %v7024
      %v7033 = vadd.f32 %v6713, %v7025
      %v7034 = vadd.f32 %v6714, %v7026
      %v7035 = vadd.f32 %v6715, %v7027
      %v7036 = vadd.f32 %v6716, %v7028
      %v7037 = vadd.f32 %v6717, %v7029
      %v7038 = vadd.f32 %v6718, %v7030
      %v7039 = vadd.f32 %v6719, %v7031
      %7040 = vset.pattern.permute.xlu0 15
      %7041 = vperm.xlu0 %7040, %v1404
      %v7042 = vpop.permute.xlu0 %7041
      %7043 = vset.pattern.permute.xlu0 15
      %7044 = vperm.xlu0 %7043, %v1405
      %v7045 = vpop.permute.xlu0 %7044
      %7046 = vset.pattern.permute.xlu0 15
      %7047 = vperm.xlu0 %7046, %v1406
      %v7048 = vpop.permute.xlu0 %7047
      %7049 = vset.pattern.permute.xlu0 15
      %7050 = vperm.xlu0 %7049, %v1407
      %v7051 = vpop.permute.xlu0 %7050
      %7052 = vset.pattern.permute.xlu0 15
      %7053 = vperm.xlu0 %7052, %v1408
      %v7054 = vpop.permute.xlu0 %7053
      %7055 = vset.pattern.permute.xlu0 15
      %7056 = vperm.xlu0 %7055, %v1409
      %v7057 = vpop.permute.xlu0 %7056
      %7058 = vset.pattern.permute.xlu0 15
      %7059 = vperm.xlu0 %7058, %v1410
      %v7060 = vpop.permute.xlu0 %7059
      %7061 = vset.pattern.permute.xlu0 15
      %7062 = vperm.xlu0 %7061, %v1411
      %v7063 = vpop.permute.xlu0 %7062
      %vm7064 = vcmp.eq.s32.totalorder %v7042, %v1661
      %vm7065 = vcmp.eq.s32.totalorder %v7045, %v1661
      %vm7066 = vcmp.eq.s32.totalorder %v7048, %v1661
      %vm7067 = vcmp.eq.s32.totalorder %v7051, %v1661
      %vm7068 = vcmp.eq.s32.totalorder %v7054, %v1661
      %vm7069 = vcmp.eq.s32.totalorder %v7057, %v1661
      %vm7070 = vcmp.eq.s32.totalorder %v7060, %v1661
      %vm7071 = vcmp.eq.s32.totalorder %v7063, %v1661
      %7072 = vset.pattern.permute.xlu0 31
      %7073 = vperm.xlu0 %7072, %v4736
      %v7074 = vpop.permute.xlu0 %7073
      %7076 = vset.pattern.permute.xlu0 31
      %7077 = vperm.xlu0 %7076, %v4737
      %v7078 = vpop.permute.xlu0 %7077
      %7080 = vset.pattern.permute.xlu0 31
      %7081 = vperm.xlu0 %7080, %v4738
      %v7082 = vpop.permute.xlu0 %7081
      %7084 = vset.pattern.permute.xlu0 31
      %7085 = vperm.xlu0 %7084, %v4739
      %v7086 = vpop.permute.xlu0 %7085
      %7088 = vset.pattern.permute.xlu0 31
      %7089 = vperm.xlu0 %7088, %v4740
      %v7090 = vpop.permute.xlu0 %7089
      %7092 = vset.pattern.permute.xlu0 31
      %7093 = vperm.xlu0 %7092, %v4741
      %v7094 = vpop.permute.xlu0 %7093
      %7096 = vset.pattern.permute.xlu0 31
      %7097 = vperm.xlu0 %7096, %v4742
      %v7098 = vpop.permute.xlu0 %7097
      %7100 = vset.pattern.permute.xlu0 31
      %7101 = vperm.xlu0 %7100, %v4743
      %v7102 = vpop.permute.xlu0 %7101
      %v7104 = vsel %vm7064, %v7074, 0.0
      %v7105 = vsel %vm7065, %v7078, 0.0
      %v7106 = vsel %vm7066, %v7082, 0.0
      %v7107 = vsel %vm7067, %v7086, 0.0
      %v7108 = vsel %vm7068, %v7090, 0.0
      %v7109 = vsel %vm7069, %v7094, 0.0
      %v7110 = vsel %vm7070, %v7098, 0.0
      %v7111 = vsel %vm7071, %v7102, 0.0
      %7112 = vset.pattern.permute.xlu0 15
      %7113 = vperm.xlu0 %7112, %v1412
      %v7114 = vpop.permute.xlu0 %7113
      %7115 = vset.pattern.permute.xlu0 15
      %7116 = vperm.xlu0 %7115, %v1413
      %v7117 = vpop.permute.xlu0 %7116
      %7118 = vset.pattern.permute.xlu0 15
      %7119 = vperm.xlu0 %7118, %v1414
      %v7120 = vpop.permute.xlu0 %7119
      %7121 = vset.pattern.permute.xlu0 15
      %7122 = vperm.xlu0 %7121, %v1415
      %v7123 = vpop.permute.xlu0 %7122
      %7124 = vset.pattern.permute.xlu0 15
      %7125 = vperm.xlu0 %7124, %v1416
      %v7126 = vpop.permute.xlu0 %7125
      %7127 = vset.pattern.permute.xlu0 15
      %7128 = vperm.xlu0 %7127, %v1417
      %v7129 = vpop.permute.xlu0 %7128
      %7130 = vset.pattern.permute.xlu0 15
      %7131 = vperm.xlu0 %7130, %v1418
      %v7132 = vpop.permute.xlu0 %7131
      %7133 = vset.pattern.permute.xlu0 15
      %7134 = vperm.xlu0 %7133, %v1419
      %v7135 = vpop.permute.xlu0 %7134
      %vm7136 = vcmp.eq.s32.totalorder %v7114, %v1661
      %vm7137 = vcmp.eq.s32.totalorder %v7117, %v1661
      %vm7138 = vcmp.eq.s32.totalorder %v7120, %v1661
      %vm7139 = vcmp.eq.s32.totalorder %v7123, %v1661
      %vm7140 = vcmp.eq.s32.totalorder %v7126, %v1661
      %vm7141 = vcmp.eq.s32.totalorder %v7129, %v1661
      %vm7142 = vcmp.eq.s32.totalorder %v7132, %v1661
      %vm7143 = vcmp.eq.s32.totalorder %v7135, %v1661
      %7144 = vset.pattern.permute.xlu0 31
      %7145 = vperm.xlu0 %7144, %v4744
      %v7146 = vpop.permute.xlu0 %7145
      %7148 = vset.pattern.permute.xlu0 31
      %7149 = vperm.xlu0 %7148, %v4745
      %v7150 = vpop.permute.xlu0 %7149
      %7152 = vset.pattern.permute.xlu0 31
      %7153 = vperm.xlu0 %7152, %v4746
      %v7154 = vpop.permute.xlu0 %7153
      %7156 = vset.pattern.permute.xlu0 31
      %7157 = vperm.xlu0 %7156, %v4747
      %v7158 = vpop.permute.xlu0 %7157
      %7160 = vset.pattern.permute.xlu0 31
      %7161 = vperm.xlu0 %7160, %v4748
      %v7162 = vpop.permute.xlu0 %7161
      %7164 = vset.pattern.permute.xlu0 31
      %7165 = vperm.xlu0 %7164, %v4749
      %v7166 = vpop.permute.xlu0 %7165
      %7168 = vset.pattern.permute.xlu0 31
      %7169 = vperm.xlu0 %7168, %v4750
      %v7170 = vpop.permute.xlu0 %7169
      %7172 = vset.pattern.permute.xlu0 31
      %7173 = vperm.xlu0 %7172, %v4751
      %v7174 = vpop.permute.xlu0 %7173
      %v7176 = vsel %vm7136, %v7146, 0.0
      %v7177 = vsel %vm7137, %v7150, 0.0
      %v7178 = vsel %vm7138, %v7154, 0.0
      %v7179 = vsel %vm7139, %v7158, 0.0
      %v7180 = vsel %vm7140, %v7162, 0.0
      %v7181 = vsel %vm7141, %v7166, 0.0
      %v7182 = vsel %vm7142, %v7170, 0.0
      %v7183 = vsel %vm7143, %v7174, 0.0
      %v7184 = vadd.f32 %v7104, %v7176
      %v7185 = vadd.f32 %v7105, %v7177
      %v7186 = vadd.f32 %v7106, %v7178
      %v7187 = vadd.f32 %v7107, %v7179
      %v7188 = vadd.f32 %v7108, %v7180
      %v7189 = vadd.f32 %v7109, %v7181
      %v7190 = vadd.f32 %v7110, %v7182
      %v7191 = vadd.f32 %v7111, %v7183
      %7192 = vset.pattern.permute.xlu0 15
      %7193 = vperm.xlu0 %7192, %v1420
      %v7194 = vpop.permute.xlu0 %7193
      %7195 = vset.pattern.permute.xlu0 15
      %7196 = vperm.xlu0 %7195, %v1421
      %v7197 = vpop.permute.xlu0 %7196
      %7198 = vset.pattern.permute.xlu0 15
      %7199 = vperm.xlu0 %7198, %v1422
      %v7200 = vpop.permute.xlu0 %7199
      %7201 = vset.pattern.permute.xlu0 15
      %7202 = vperm.xlu0 %7201, %v1423
      %v7203 = vpop.permute.xlu0 %7202
      %7204 = vset.pattern.permute.xlu0 15
      %7205 = vperm.xlu0 %7204, %v1424
      %v7206 = vpop.permute.xlu0 %7205
      %7207 = vset.pattern.permute.xlu0 15
      %7208 = vperm.xlu0 %7207, %v1425
      %v7209 = vpop.permute.xlu0 %7208
      %7210 = vset.pattern.permute.xlu0 15
      %7211 = vperm.xlu0 %7210, %v1426
      %v7212 = vpop.permute.xlu0 %7211
      %7213 = vset.pattern.permute.xlu0 15
      %7214 = vperm.xlu0 %7213, %v1427
      %v7215 = vpop.permute.xlu0 %7214
      %vm7216 = vcmp.eq.s32.totalorder %v7194, %v1661
      %vm7217 = vcmp.eq.s32.totalorder %v7197, %v1661
      %vm7218 = vcmp.eq.s32.totalorder %v7200, %v1661
      %vm7219 = vcmp.eq.s32.totalorder %v7203, %v1661
      %vm7220 = vcmp.eq.s32.totalorder %v7206, %v1661
      %vm7221 = vcmp.eq.s32.totalorder %v7209, %v1661
      %vm7222 = vcmp.eq.s32.totalorder %v7212, %v1661
      %vm7223 = vcmp.eq.s32.totalorder %v7215, %v1661
      %7224 = vset.pattern.permute.xlu0 31
      %7225 = vperm.xlu0 %7224, %v4752
      %v7226 = vpop.permute.xlu0 %7225
      %7228 = vset.pattern.permute.xlu0 31
      %7229 = vperm.xlu0 %7228, %v4753
      %v7230 = vpop.permute.xlu0 %7229
      %7232 = vset.pattern.permute.xlu0 31
      %7233 = vperm.xlu0 %7232, %v4754
      %v7234 = vpop.permute.xlu0 %7233
      %7236 = vset.pattern.permute.xlu0 31
      %7237 = vperm.xlu0 %7236, %v4755
      %v7238 = vpop.permute.xlu0 %7237
      %7240 = vset.pattern.permute.xlu0 31
      %7241 = vperm.xlu0 %7240, %v4756
      %v7242 = vpop.permute.xlu0 %7241
      %7244 = vset.pattern.permute.xlu0 31
      %7245 = vperm.xlu0 %7244, %v4757
      %v7246 = vpop.permute.xlu0 %7245
      %7248 = vset.pattern.permute.xlu0 31
      %7249 = vperm.xlu0 %7248, %v4758
      %v7250 = vpop.permute.xlu0 %7249
      %7252 = vset.pattern.permute.xlu0 31
      %7253 = vperm.xlu0 %7252, %v4759
      %v7254 = vpop.permute.xlu0 %7253
      %v7256 = vsel %vm7216, %v7226, 0.0
      %v7257 = vsel %vm7217, %v7230, 0.0
      %v7258 = vsel %vm7218, %v7234, 0.0
      %v7259 = vsel %vm7219, %v7238, 0.0
      %v7260 = vsel %vm7220, %v7242, 0.0
      %v7261 = vsel %vm7221, %v7246, 0.0
      %v7262 = vsel %vm7222, %v7250, 0.0
      %v7263 = vsel %vm7223, %v7254, 0.0
      %v7264 = vadd.f32 %v7184, %v7256
      %v7265 = vadd.f32 %v7185, %v7257
      %v7266 = vadd.f32 %v7186, %v7258
      %v7267 = vadd.f32 %v7187, %v7259
      %v7268 = vadd.f32 %v7188, %v7260
      %v7269 = vadd.f32 %v7189, %v7261
      %v7270 = vadd.f32 %v7190, %v7262
      %v7271 = vadd.f32 %v7191, %v7263
      %7272 = vset.pattern.permute.xlu0 15
      %7273 = vperm.xlu0 %7272, %v1428
      %v7274 = vpop.permute.xlu0 %7273
      %7275 = vset.pattern.permute.xlu0 15
      %7276 = vperm.xlu0 %7275, %v1429
      %v7277 = vpop.permute.xlu0 %7276
      %7278 = vset.pattern.permute.xlu0 15
      %7279 = vperm.xlu0 %7278, %v1430
      %v7280 = vpop.permute.xlu0 %7279
      %7281 = vset.pattern.permute.xlu0 15
      %7282 = vperm.xlu0 %7281, %v1431
      %v7283 = vpop.permute.xlu0 %7282
      %7284 = vset.pattern.permute.xlu0 15
      %7285 = vperm.xlu0 %7284, %v1432
      %v7286 = vpop.permute.xlu0 %7285
      %7287 = vset.pattern.permute.xlu0 15
      %7288 = vperm.xlu0 %7287, %v1433
      %v7289 = vpop.permute.xlu0 %7288
      %7290 = vset.pattern.permute.xlu0 15
      %7291 = vperm.xlu0 %7290, %v1434
      %v7292 = vpop.permute.xlu0 %7291
      %7293 = vset.pattern.permute.xlu0 15
      %7294 = vperm.xlu0 %7293, %v1435
      %v7295 = vpop.permute.xlu0 %7294
      %vm7296 = vcmp.eq.s32.totalorder %v7274, %v1661
      %vm7297 = vcmp.eq.s32.totalorder %v7277, %v1661
      %vm7298 = vcmp.eq.s32.totalorder %v7280, %v1661
      %vm7299 = vcmp.eq.s32.totalorder %v7283, %v1661
      %vm7300 = vcmp.eq.s32.totalorder %v7286, %v1661
      %vm7301 = vcmp.eq.s32.totalorder %v7289, %v1661
      %vm7302 = vcmp.eq.s32.totalorder %v7292, %v1661
      %vm7303 = vcmp.eq.s32.totalorder %v7295, %v1661
      %7304 = vset.pattern.permute.xlu0 31
      %7305 = vperm.xlu0 %7304, %v4760
      %v7306 = vpop.permute.xlu0 %7305
      %7308 = vset.pattern.permute.xlu0 31
      %7309 = vperm.xlu0 %7308, %v4761
      %v7310 = vpop.permute.xlu0 %7309
      %7312 = vset.pattern.permute.xlu0 31
      %7313 = vperm.xlu0 %7312, %v4762
      %v7314 = vpop.permute.xlu0 %7313
      %7316 = vset.pattern.permute.xlu0 31
      %7317 = vperm.xlu0 %7316, %v4763
      %v7318 = vpop.permute.xlu0 %7317
      %7320 = vset.pattern.permute.xlu0 31
      %7321 = vperm.xlu0 %7320, %v4764
      %v7322 = vpop.permute.xlu0 %7321
      %7324 = vset.pattern.permute.xlu0 31
      %7325 = vperm.xlu0 %7324, %v4765
      %v7326 = vpop.permute.xlu0 %7325
      %7328 = vset.pattern.permute.xlu0 31
      %7329 = vperm.xlu0 %7328, %v4766
      %v7330 = vpop.permute.xlu0 %7329
      %7332 = vset.pattern.permute.xlu0 31
      %7333 = vperm.xlu0 %7332, %v4767
      %v7334 = vpop.permute.xlu0 %7333
      %v7336 = vsel %vm7296, %v7306, 0.0
      %v7337 = vsel %vm7297, %v7310, 0.0
      %v7338 = vsel %vm7298, %v7314, 0.0
      %v7339 = vsel %vm7299, %v7318, 0.0
      %v7340 = vsel %vm7300, %v7322, 0.0
      %v7341 = vsel %vm7301, %v7326, 0.0
      %v7342 = vsel %vm7302, %v7330, 0.0
      %v7343 = vsel %vm7303, %v7334, 0.0
      %v7344 = vadd.f32 %v7264, %v7336
      %v7345 = vadd.f32 %v7265, %v7337
      %v7346 = vadd.f32 %v7266, %v7338
      %v7347 = vadd.f32 %v7267, %v7339
      %v7348 = vadd.f32 %v7268, %v7340
      %v7349 = vadd.f32 %v7269, %v7341
      %v7350 = vadd.f32 %v7270, %v7342
      %v7351 = vadd.f32 %v7271, %v7343
      %v7352 = vadd.f32 %v7032, %v7344
      %v7353 = vadd.f32 %v7033, %v7345
      %v7354 = vadd.f32 %v7034, %v7346
      %v7355 = vadd.f32 %v7035, %v7347
      %v7356 = vadd.f32 %v7036, %v7348
      %v7357 = vadd.f32 %v7037, %v7349
      %v7358 = vadd.f32 %v7038, %v7350
      %v7359 = vadd.f32 %v7039, %v7351
      %v7360 = vpack.c.bf16 %v7353, %v7352
      %v7361 = vpack.c.bf16 %v7355, %v7354
      %v7362 = vpack.c.bf16 %v7357, %v7356
      %v7363 = vpack.c.bf16 %v7359, %v7358
      %7364 = vmatprep.subr.bf16.mxu0 0
      %7365 = vmatpush1.bf16.msra.mxu0 %v4499
      %7366 = vmatprep.subr.bf16.mxu0 0
      %7367 = vmatpush1.bf16.msra.mxu0 %v4498
      %7368 = vmatprep.subr.bf16.mxu0 0
      %7369 = vmatpush1.bf16.msra.mxu0 %v4497
      %7370 = vmatprep.subr.bf16.mxu0 0
      %7371 = vmatpush1.bf16.msra.mxu0 %v4496
      %7372 = vmatprep.subr.bf16.mxu0 0
      %7373 = vmatpush1.bf16.msra.mxu0 %v4495
      %7374 = vmatprep.subr.bf16.mxu0 0
      %7375 = vmatpush1.bf16.msra.mxu0 %v4494
      %7376 = vmatprep.subr.bf16.mxu0 0
      %7377 = vmatpush1.bf16.msra.mxu0 %v4493
      %7378 = vmatprep.subr.bf16.mxu0 0
      %7379 = vmatpush1.bf16.msra.mxu0 %v4492
      %7380 = vmatprep.subr.bf16.mxu0 0
      %7381 = vmatpush2.bf16.msra.mxu0 0
      %7382 = vmatprep.subr.bf16.mxu0 0
      %7383 = vmatpush2.bf16.msra.mxu0 0
      %7384 = vmatprep.subr.bf16.mxu0 0
      %7385 = vmatpush2.bf16.msra.mxu0 0
      %7386 = vmatprep.subr.bf16.mxu0 0
      %7387 = vmatpush2.bf16.msra.mxu0 0
      %7388 = vmatprep.subr.bf16.mxu0 0
      %7389 = vmatpush2.bf16.msra.mxu0 0
      %7390 = vmatprep.subr.bf16.mxu0 0
      %7391 = vmatpush2.bf16.msra.mxu0 0
      %7392 = vmatprep.subr.bf16.mxu0 0
      %7393 = vmatpush2.bf16.msra.mxu0 0
      %7394 = vmatprep.subr.bf16.mxu0 0
      %7395 = vmatpush2.bf16.msra.mxu0 0
      %7396 = vmatprep.mubr.bf16.mxu0 0
      %7397 = vmatmul.mubr.bf16.gmra.mxu0 %v7360
      %v7398 = vpop.f32.mrf.mxu0
      %v7399 = vadd.f32 0.0, %v7398
      %v7400 = vpop.f32.mrf.mxu0
      %v7401 = vpop.f32.mrf.mxu0
      %v7402 = vadd.f32 0.0, %v7401
      %v7403 = vpop.f32.mrf.mxu0
      %7404 = vmatprep.mubr.bf16.mxu0 0
      %7405 = vmatmul.mubr.bf16.gmra.mxu0 %v7361
      %v7406 = vpop.f32.mrf.mxu0
      %v7407 = vadd.f32 0.0, %v7406
      %v7408 = vpop.f32.mrf.mxu0
      %v7409 = vpop.f32.mrf.mxu0
      %v7410 = vadd.f32 0.0, %v7409
      %v7411 = vpop.f32.mrf.mxu0
      %7412 = vmatprep.mubr.bf16.mxu0 0
      %7413 = vmatmul.mubr.bf16.gmra.mxu0 %v7362
      %v7414 = vpop.f32.mrf.mxu0
      %v7415 = vadd.f32 0.0, %v7414
      %v7416 = vpop.f32.mrf.mxu0
      %v7417 = vpop.f32.mrf.mxu0
      %v7418 = vadd.f32 0.0, %v7417
      %v7419 = vpop.f32.mrf.mxu0
      %7420 = vmatprep.mubr.bf16.mxu0 0
      %7421 = vmatmul.mubr.bf16.gmra.mxu0 %v7363
      %v7422 = vpop.f32.mrf.mxu0
      %v7423 = vadd.f32 0.0, %v7422
      %v7424 = vpop.f32.mrf.mxu0
      %v7425 = vpop.f32.mrf.mxu0
      %v7426 = vadd.f32 0.0, %v7425
      %v7427 = vpop.f32.mrf.mxu0
      %7428 = vdwg.mxu0
      %v7429 = vpack.c.bf16 %v7402, %v7399
      %v7430 = vpack.c.bf16 %v7410, %v7407
      %v7431 = vpack.c.bf16 %v7418, %v7415
      %v7432 = vpack.c.bf16 %v7426, %v7423
      %s7433 = scalar_lea.vmem %s9, 32
      %v7434 = vld [vmem:[%s7433] sm:$0xff]
      %v7435 = vld [vmem:[%s7433 + $0x8] sm:$0xff]
      %v7436 = vld [vmem:[%s7433 + $0x10] sm:$0xff]
      %v7437 = vld [vmem:[%s7433 + $0x18] sm:$0xff]
      %v7438 = vpack.c.bf16 %v7435, %v7434
      %v7439 = vpack.c.bf16 %v7437, %v7436
      %v7441 = vsel %vm1006, %v7429, 0
      %v7444 = vsel %vm1006, %v7430, 0
      %v7447 = vsel %vm1006, %v7431, 0
      %v7450 = vsel %vm1006, %v7432, 0
      %7452 = vmatprep.subr.bf16.mxu0 0
      %7453 = vmatpush1.bf16.msra.mxu0 0
      %7454 = vmatprep.subr.bf16.mxu0 0
      %7455 = vmatpush1.bf16.msra.mxu0 0
      %7456 = vmatprep.subr.bf16.mxu0 0
      %7457 = vmatpush1.bf16.msra.mxu0 0
      %7458 = vmatprep.subr.bf16.mxu0 0
      %7459 = vmatpush1.bf16.msra.mxu0 0
      %7460 = vmatprep.subr.bf16.mxu0 0
      %7461 = vmatpush1.bf16.msra.mxu0 0
      %7462 = vmatprep.subr.bf16.mxu0 0
      %7463 = vmatpush1.bf16.msra.mxu0 0
      %7464 = vmatprep.subr.bf16.mxu0 0
      %7465 = vmatpush1.bf16.msra.mxu0 %v7439
      %7466 = vmatprep.subr.bf16.mxu0 0
      %7467 = vmatpush1.bf16.msra.mxu0 %v7438
      %7468 = vmatprep.subr.bf16.mxu0 0
      %7469 = vmatpush2.bf16.msra.mxu0 0
      %7470 = vmatprep.subr.bf16.mxu0 0
      %7471 = vmatpush2.bf16.msra.mxu0 0
      %7472 = vmatprep.subr.bf16.mxu0 0
      %7473 = vmatpush2.bf16.msra.mxu0 0
      %7474 = vmatprep.subr.bf16.mxu0 0
      %7475 = vmatpush2.bf16.msra.mxu0 0
      %7476 = vmatprep.subr.bf16.mxu0 0
      %7477 = vmatpush2.bf16.msra.mxu0 0
      %7478 = vmatprep.subr.bf16.mxu0 0
      %7479 = vmatpush2.bf16.msra.mxu0 0
      %7480 = vmatprep.subr.bf16.mxu0 0
      %7481 = vmatpush2.bf16.msra.mxu0 0
      %7482 = vmatprep.subr.bf16.mxu0 0
      %7483 = vmatpush2.bf16.msra.mxu0 0
      %7484 = vmatprep.mubr.bf16.mxu0 0
      %7485 = vmatmul.mubr.bf16.gmra.mxu0 %v7441
      %v7486 = vpop.f32.mrf.mxu0
      %v7487 = vadd.f32 0.0, %v7486
      %v7488 = vpop.f32.mrf.mxu0
      %v7489 = vpop.f32.mrf.mxu0
      %v7490 = vadd.f32 0.0, %v7489
      %v7491 = vpop.f32.mrf.mxu0
      %7492 = vmatprep.mubr.bf16.mxu0 0
      %7493 = vmatmul.mubr.bf16.gmra.mxu0 %v7444
      %v7494 = vpop.f32.mrf.mxu0
      %v7495 = vadd.f32 0.0, %v7494
      %v7496 = vpop.f32.mrf.mxu0
      %v7497 = vpop.f32.mrf.mxu0
      %v7498 = vadd.f32 0.0, %v7497
      %v7499 = vpop.f32.mrf.mxu0
      %7500 = vmatprep.mubr.bf16.mxu0 0
      %7501 = vmatmul.mubr.bf16.gmra.mxu0 %v7447
      %v7502 = vpop.f32.mrf.mxu0
      %v7503 = vadd.f32 0.0, %v7502
      %v7504 = vpop.f32.mrf.mxu0
      %v7505 = vpop.f32.mrf.mxu0
      %v7506 = vadd.f32 0.0, %v7505
      %v7507 = vpop.f32.mrf.mxu0
      %7508 = vmatprep.mubr.bf16.mxu0 0
      %7509 = vmatmul.mubr.bf16.gmra.mxu0 %v7450
      %v7510 = vpop.f32.mrf.mxu0
      %v7511 = vadd.f32 0.0, %v7510
      %v7512 = vpop.f32.mrf.mxu0
      %v7513 = vpop.f32.mrf.mxu0
      %v7514 = vadd.f32 0.0, %v7513
      %v7515 = vpop.f32.mrf.mxu0
      %7516 = vdwg.mxu0
      %v7518 = vsel %vm1006, %v4573, 0
      %v7521 = vsel %vm1006, %v4574, 0
      %v7524 = vsel %vm1006, %v4575, 0
      %v7527 = vsel %vm1006, %v4576, 0
      %7529 = vmatprep.subr.bf16.mxu0 0
      %7530 = vmatpush1.bf16.msra.mxu0 0
      %7531 = vmatprep.subr.bf16.mxu0 0
      %7532 = vmatpush1.bf16.msra.mxu0 0
      %7533 = vmatprep.subr.bf16.mxu0 0
      %7534 = vmatpush1.bf16.msra.mxu0 0
      %7535 = vmatprep.subr.bf16.mxu0 0
      %7536 = vmatpush1.bf16.msra.mxu0 0
      %7537 = vmatprep.subr.bf16.mxu0 0
      %7538 = vmatpush1.bf16.msra.mxu0 0
      %7539 = vmatprep.subr.bf16.mxu0 0
      %7540 = vmatpush1.bf16.msra.mxu0 0
      %7541 = vmatprep.subr.bf16.mxu0 0
      %7542 = vmatpush1.bf16.msra.mxu0 %v4582
      %7543 = vmatprep.subr.bf16.mxu0 0
      %7544 = vmatpush1.bf16.msra.mxu0 %v4581
      %7545 = vmatprep.subr.bf16.mxu0 0
      %7546 = vmatpush2.bf16.msra.mxu0 0
      %7547 = vmatprep.subr.bf16.mxu0 0
      %7548 = vmatpush2.bf16.msra.mxu0 0
      %7549 = vmatprep.subr.bf16.mxu0 0
      %7550 = vmatpush2.bf16.msra.mxu0 0
      %7551 = vmatprep.subr.bf16.mxu0 0
      %7552 = vmatpush2.bf16.msra.mxu0 0
      %7553 = vmatprep.subr.bf16.mxu0 0
      %7554 = vmatpush2.bf16.msra.mxu0 0
      %7555 = vmatprep.subr.bf16.mxu0 0
      %7556 = vmatpush2.bf16.msra.mxu0 0
      %7557 = vmatprep.subr.bf16.mxu0 0
      %7558 = vmatpush2.bf16.msra.mxu0 0
      %7559 = vmatprep.subr.bf16.mxu0 0
      %7560 = vmatpush2.bf16.msra.mxu0 0
      %7561 = vmatprep.mubr.bf16.mxu0 0
      %7562 = vmatmul.mubr.bf16.gmra.mxu0 %v7518
      %v7563 = vpop.f32.mrf.mxu0
      %v7564 = vadd.f32 %v7487, %v7563
      %v7565 = vpop.f32.mrf.mxu0
      %v7566 = vpop.f32.mrf.mxu0
      %v7567 = vadd.f32 %v7490, %v7566
      %v7568 = vpop.f32.mrf.mxu0
      %7569 = vmatprep.mubr.bf16.mxu0 0
      %7570 = vmatmul.mubr.bf16.gmra.mxu0 %v7521
      %v7571 = vpop.f32.mrf.mxu0
      %v7572 = vadd.f32 %v7495, %v7571
      %v7573 = vpop.f32.mrf.mxu0
      %v7574 = vpop.f32.mrf.mxu0
      %v7575 = vadd.f32 %v7498, %v7574
      %v7576 = vpop.f32.mrf.mxu0
      %7577 = vmatprep.mubr.bf16.mxu0 0
      %7578 = vmatmul.mubr.bf16.gmra.mxu0 %v7524
      %v7579 = vpop.f32.mrf.mxu0
      %v7580 = vadd.f32 %v7503, %v7579
      %v7581 = vpop.f32.mrf.mxu0
      %v7582 = vpop.f32.mrf.mxu0
      %v7583 = vadd.f32 %v7506, %v7582
      %v7584 = vpop.f32.mrf.mxu0
      %7585 = vmatprep.mubr.bf16.mxu0 0
      %7586 = vmatmul.mubr.bf16.gmra.mxu0 %v7527
      %v7587 = vpop.f32.mrf.mxu0
      %v7588 = vadd.f32 %v7511, %v7587
      %v7589 = vpop.f32.mrf.mxu0
      %v7590 = vpop.f32.mrf.mxu0
      %v7591 = vadd.f32 %v7514, %v7590
      %v7592 = vpop.f32.mrf.mxu0
      %7593 = vdwg.mxu0
      %v7594 = vld [vmem:[%s10] sm:$0x1]
      %v7596 = vlaneseq
      %v7597 = vshrl.u32 %v7596, 7
      %v7598 = vsub.s32 0, %v7597
      %v7599 = vrot.slane %v7594, %v7598
      %v7601 = vadd.f32 %v7564, %v7599
      %v7602 = vadd.f32 %v7567, %v7599
      %v7603 = vadd.f32 %v7572, %v7599
      %v7604 = vadd.f32 %v7575, %v7599
      %v7605 = vadd.f32 %v7580, %v7599
      %v7606 = vadd.f32 %v7583, %v7599
      %v7607 = vadd.f32 %v7588, %v7599
      %v7608 = vadd.f32 %v7591, %v7599
      %v7609 = vadd.f32 %v965, %v7601
      %v7610 = vadd.f32 %v966, %v7602
      %v7611 = vadd.f32 %v967, %v7603
      %v7612 = vadd.f32 %v968, %v7604
      %v7613 = vadd.f32 %v969, %v7605
      %v7614 = vadd.f32 %v970, %v7606
      %v7615 = vadd.f32 %v971, %v7607
      %v7616 = vadd.f32 %v972, %v7608
      %v7617 = vld [vmem:[%s11] sm:$0x1]
      %v7618 = vld [vmem:[%s12] sm:$0x1]
      %v7619 = vsel %vm1006, %v7609, 0.0
      %7620 = vadd.xlane.f32.xlu0 %v7619
      %v7621 = vpop.xlane.xlu0 %7620
      %v7622 = vsel %vm1006, %v7610, 0.0
      %7623 = vadd.xlane.f32.xlu0 %v7622
      %v7624 = vpop.xlane.xlu0 %7623
      %v7625 = vsel %vm1006, %v7611, 0.0
      %7626 = vadd.xlane.f32.xlu0 %v7625
      %v7627 = vpop.xlane.xlu0 %7626
      %v7628 = vsel %vm1006, %v7612, 0.0
      %7629 = vadd.xlane.f32.xlu0 %v7628
      %v7630 = vpop.xlane.xlu0 %7629
      %v7631 = vsel %vm1006, %v7613, 0.0
      %7632 = vadd.xlane.f32.xlu0 %v7631
      %v7633 = vpop.xlane.xlu0 %7632
      %v7634 = vsel %vm1006, %v7614, 0.0
      %7635 = vadd.xlane.f32.xlu0 %v7634
      %v7636 = vpop.xlane.xlu0 %7635
      %v7637 = vsel %vm1006, %v7615, 0.0
      %7638 = vadd.xlane.f32.xlu0 %v7637
      %v7639 = vpop.xlane.xlu0 %7638
      %v7640 = vsel %vm1006, %v7616, 0.0
      %7641 = vadd.xlane.f32.xlu0 %v7640
      %v7642 = vpop.xlane.xlu0 %7641
      %v7643 = vrcp.pop 32.0
      %v7644 = vmul.f32 %v7621, %v7643
      %v7645 = vmul.f32 %v7624, %v7643
      %v7646 = vmul.f32 %v7627, %v7643
      %v7647 = vmul.f32 %v7630, %v7643
      %v7648 = vmul.f32 %v7633, %v7643
      %v7649 = vmul.f32 %v7636, %v7643
      %v7650 = vmul.f32 %v7639, %v7643
      %v7651 = vmul.f32 %v7642, %v7643
      %v7652 = vsub.f32 %v7609, %v7644
      %v7653 = vsub.f32 %v7610, %v7645
      %v7654 = vsub.f32 %v7611, %v7646
      %v7655 = vsub.f32 %v7612, %v7647
      %v7656 = vsub.f32 %v7613, %v7648
      %v7657 = vsub.f32 %v7614, %v7649
      %v7658 = vsub.f32 %v7615, %v7650
      %v7659 = vsub.f32 %v7616, %v7651
      %v7660 = vmul.f32 %v7652, %v7652
      %v7661 = vmul.f32 %v7653, %v7653
      %v7662 = vmul.f32 %v7654, %v7654
      %v7663 = vmul.f32 %v7655, %v7655
      %v7664 = vmul.f32 %v7656, %v7656
      %v7665 = vmul.f32 %v7657, %v7657
      %v7666 = vmul.f32 %v7658, %v7658
      %v7667 = vmul.f32 %v7659, %v7659
      %v7668 = vsel %vm1006, %v7660, 0.0
      %7669 = vadd.xlane.f32.xlu0 %v7668
      %v7670 = vpop.xlane.xlu0 %7669
      %v7671 = vsel %vm1006, %v7661, 0.0
      %7672 = vadd.xlane.f32.xlu0 %v7671
      %v7673 = vpop.xlane.xlu0 %7672
      %v7674 = vsel %vm1006, %v7662, 0.0
      %7675 = vadd.xlane.f32.xlu0 %v7674
      %v7676 = vpop.xlane.xlu0 %7675
      %v7677 = vsel %vm1006, %v7663, 0.0
      %7678 = vadd.xlane.f32.xlu0 %v7677
      %v7679 = vpop.xlane.xlu0 %7678
      %v7680 = vsel %vm1006, %v7664, 0.0
      %7681 = vadd.xlane.f32.xlu0 %v7680
      %v7682 = vpop.xlane.xlu0 %7681
      %v7683 = vsel %vm1006, %v7665, 0.0
      %7684 = vadd.xlane.f32.xlu0 %v7683
      %v7685 = vpop.xlane.xlu0 %7684
      %v7686 = vsel %vm1006, %v7666, 0.0
      %7687 = vadd.xlane.f32.xlu0 %v7686
      %v7688 = vpop.xlane.xlu0 %7687
      %v7689 = vsel %vm1006, %v7667, 0.0
      %7690 = vadd.xlane.f32.xlu0 %v7689
      %v7691 = vpop.xlane.xlu0 %7690
      %v7692 = vmul.f32 %v7670, %v7643
      %v7693 = vmul.f32 %v7673, %v7643
      %v7694 = vmul.f32 %v7676, %v7643
      %v7695 = vmul.f32 %v7679, %v7643
      %v7696 = vmul.f32 %v7682, %v7643
      %v7697 = vmul.f32 %v7685, %v7643
      %v7698 = vmul.f32 %v7688, %v7643
      %v7699 = vmul.f32 %v7691, %v7643
      %v7700 = vadd.f32 %v7692, 1e-05
      %v7701 = vadd.f32 %v7693, 1e-05
      %v7702 = vadd.f32 %v7694, 1e-05
      %v7703 = vadd.f32 %v7695, 1e-05
      %v7704 = vadd.f32 %v7696, 1e-05
      %v7705 = vadd.f32 %v7697, 1e-05
      %v7706 = vadd.f32 %v7698, 1e-05
      %v7707 = vadd.f32 %v7699, 1e-05
      %v7708 = vrsqrt.pop %v7700
      %v7709 = vrsqrt.pop %v7701
      %v7710 = vrsqrt.pop %v7702
      %v7711 = vrsqrt.pop %v7703
      %v7712 = vrsqrt.pop %v7704
      %v7713 = vrsqrt.pop %v7705
      %v7714 = vrsqrt.pop %v7706
      %v7715 = vrsqrt.pop %v7707
      %v7716 = vmul.f32 %v7652, %v7708
      %v7717 = vmul.f32 %v7653, %v7709
      %v7718 = vmul.f32 %v7654, %v7710
      %v7719 = vmul.f32 %v7655, %v7711
      %v7720 = vmul.f32 %v7656, %v7712
      %v7721 = vmul.f32 %v7657, %v7713
      %v7722 = vmul.f32 %v7658, %v7714
      %v7723 = vmul.f32 %v7659, %v7715
      %v7725 = vlaneseq
      %v7726 = vshrl.u32 %v7725, 7
      %v7727 = vsub.s32 0, %v7726
      %v7728 = vrot.slane %v7617, %v7727
      %v7730 = vmul.f32 %v7716, %v7728
      %v7731 = vmul.f32 %v7717, %v7728
      %v7732 = vmul.f32 %v7718, %v7728
      %v7733 = vmul.f32 %v7719, %v7728
      %v7734 = vmul.f32 %v7720, %v7728
      %v7735 = vmul.f32 %v7721, %v7728
      %v7736 = vmul.f32 %v7722, %v7728
      %v7737 = vmul.f32 %v7723, %v7728
      %v7739 = vlaneseq
      %v7740 = vshrl.u32 %v7739, 7
      %v7741 = vsub.s32 0, %v7740
      %v7742 = vrot.slane %v7618, %v7741
      %v7744 = vadd.f32 %v7730, %v7742
      %v7745 = vadd.f32 %v7731, %v7742
      %v7746 = vadd.f32 %v7732, %v7742
      %v7747 = vadd.f32 %v7733, %v7742
      %v7748 = vadd.f32 %v7734, %v7742
      %v7749 = vadd.f32 %v7735, %v7742
      %v7750 = vadd.f32 %v7736, %v7742
      %v7751 = vadd.f32 %v7737, %v7742
      %v7752 = vpack.c.bf16 %v7745, %v7744
      %v7753 = vpack.c.bf16 %v7747, %v7746
      %v7754 = vpack.c.bf16 %v7749, %v7748
      %v7755 = vpack.c.bf16 %v7751, %v7750
      %v7756 = vld [vmem:[%s13] sm:$0xff]
      %v7757 = vld [vmem:[%s13 + $0x8] sm:$0xff]
      %v7758 = vld [vmem:[%s13 + $0x10] sm:$0xff]
      %v7759 = vld [vmem:[%s13 + $0x18] sm:$0xff]
      %v7760 = vpack.c.bf16 %v7757, %v7756
      %v7761 = vpack.c.bf16 %v7759, %v7758
      %v7762 = vld [vmem:[%s14] sm:$0x1]
      %v7764 = vlaneseq
      %v7765 = vshrl.u32 %v7764, 7
      %v7766 = vsub.s32 0, %v7765
      %v7767 = vrot.slane %v7762, %v7766
      %v7770 = vsel %vm1006, %v7752, 0
      %v7773 = vsel %vm1006, %v7753, 0
      %v7776 = vsel %vm1006, %v7754, 0
      %v7779 = vsel %vm1006, %v7755, 0
      %7781 = vmatprep.subr.bf16.mxu0 0
      %7782 = vmatpush1.bf16.msra.mxu0 0
      %7783 = vmatprep.subr.bf16.mxu0 0
      %7784 = vmatpush1.bf16.msra.mxu0 0
      %7785 = vmatprep.subr.bf16.mxu0 0
      %7786 = vmatpush1.bf16.msra.mxu0 0
      %7787 = vmatprep.subr.bf16.mxu0 0
      %7788 = vmatpush1.bf16.msra.mxu0 0
      %7789 = vmatprep.subr.bf16.mxu0 0
      %7790 = vmatpush1.bf16.msra.mxu0 0
      %7791 = vmatprep.subr.bf16.mxu0 0
      %7792 = vmatpush1.bf16.msra.mxu0 0
      %7793 = vmatprep.subr.bf16.mxu0 0
      %7794 = vmatpush1.bf16.msra.mxu0 %v7761
      %7795 = vmatprep.subr.bf16.mxu0 0
      %7796 = vmatpush1.bf16.msra.mxu0 %v7760
      %7797 = vmatprep.subr.bf16.mxu0 0
      %7798 = vmatpush2.bf16.msra.mxu0 0
      %7799 = vmatprep.subr.bf16.mxu0 0
      %7800 = vmatpush2.bf16.msra.mxu0 0
      %7801 = vmatprep.subr.bf16.mxu0 0
      %7802 = vmatpush2.bf16.msra.mxu0 0
      %7803 = vmatprep.subr.bf16.mxu0 0
      %7804 = vmatpush2.bf16.msra.mxu0 0
      %7805 = vmatprep.subr.bf16.mxu0 0
      %7806 = vmatpush2.bf16.msra.mxu0 0
      %7807 = vmatprep.subr.bf16.mxu0 0
      %7808 = vmatpush2.bf16.msra.mxu0 0
      %7809 = vmatprep.subr.bf16.mxu0 0
      %7810 = vmatpush2.bf16.msra.mxu0 0
      %7811 = vmatprep.subr.bf16.mxu0 0
      %7812 = vmatpush2.bf16.msra.mxu0 0
      %7813 = vmatprep.mubr.bf16.mxu0 0
      %7814 = vmatmul.mubr.bf16.gmra.mxu0 %v7770
      %v7815 = vpop.f32.mrf.mxu0
      %v7816 = vadd.f32 %v7767, %v7815
      %v7817 = vpop.f32.mrf.mxu0
      %v7818 = vpop.f32.mrf.mxu0
      %v7819 = vadd.f32 %v7767, %v7818
      %v7820 = vpop.f32.mrf.mxu0
      %7821 = vmatprep.mubr.bf16.mxu0 0
      %7822 = vmatmul.mubr.bf16.gmra.mxu0 %v7773
      %v7823 = vpop.f32.mrf.mxu0
      %v7824 = vadd.f32 %v7767, %v7823
      %v7825 = vpop.f32.mrf.mxu0
      %v7826 = vpop.f32.mrf.mxu0
      %v7827 = vadd.f32 %v7767, %v7826
      %v7828 = vpop.f32.mrf.mxu0
      %7829 = vmatprep.mubr.bf16.mxu0 0
      %7830 = vmatmul.mubr.bf16.gmra.mxu0 %v7776
      %v7831 = vpop.f32.mrf.mxu0
      %v7832 = vadd.f32 %v7767, %v7831
      %v7833 = vpop.f32.mrf.mxu0
      %v7834 = vpop.f32.mrf.mxu0
      %v7835 = vadd.f32 %v7767, %v7834
      %v7836 = vpop.f32.mrf.mxu0
      %7837 = vmatprep.mubr.bf16.mxu0 0
      %7838 = vmatmul.mubr.bf16.gmra.mxu0 %v7779
      %v7839 = vpop.f32.mrf.mxu0
      %v7840 = vadd.f32 %v7767, %v7839
      %v7841 = vpop.f32.mrf.mxu0
      %v7842 = vpop.f32.mrf.mxu0
      %v7843 = vadd.f32 %v7767, %v7842
      %v7844 = vpop.f32.mrf.mxu0
      %7845 = vdwg.mxu0
      %v7846 = vmax.f32 %v7816, 0.0
      %v7847 = vmax.f32 %v7819, 0.0
      %v7848 = vmax.f32 %v7824, 0.0
      %v7849 = vmax.f32 %v7827, 0.0
      %v7850 = vmax.f32 %v7832, 0.0
      %v7851 = vmax.f32 %v7835, 0.0
      %v7852 = vmax.f32 %v7840, 0.0
      %v7853 = vmax.f32 %v7843, 0.0
      %v7854 = vpack.c.bf16 %v7847, %v7846
      %v7855 = vpack.c.bf16 %v7849, %v7848
      %v7856 = vpack.c.bf16 %v7851, %v7850
      %v7857 = vpack.c.bf16 %v7853, %v7852
      %v7858 = vld [vmem:[%s15] sm:$0xff]
      %v7859 = vld [vmem:[%s15 + $0x8] sm:$0xff]
      %v7860 = vld [vmem:[%s15 + $0x10] sm:$0xff]
      %v7861 = vld [vmem:[%s15 + $0x18] sm:$0xff]
      %v7862 = vld [vmem:[%s15 + $0x20] sm:$0xff]
      %v7863 = vld [vmem:[%s15 + $0x28] sm:$0xff]
      %v7864 = vld [vmem:[%s15 + $0x30] sm:$0xff]
      %v7865 = vld [vmem:[%s15 + $0x38] sm:$0xff]
      %v7866 = vpack.c.bf16 %v7859, %v7858
      %v7867 = vpack.c.bf16 %v7861, %v7860
      %v7868 = vpack.c.bf16 %v7863, %v7862
      %v7869 = vpack.c.bf16 %v7865, %v7864
      %v7870 = vld [vmem:[%s16] sm:$0x1]
      %v7872 = vlaneseq
      %v7873 = vshrl.u32 %v7872, 7
      %v7874 = vsub.s32 0, %v7873
      %v7875 = vrot.slane %v7870, %v7874
      %vm7877 = vcmask 523264
      %v7879 = vsel %vm7877, %v7854, 0
      %v7882 = vsel %vm7877, %v7855, 0
      %v7885 = vsel %vm7877, %v7856, 0
      %v7888 = vsel %vm7877, %v7857, 0
      %7890 = vmatprep.subr.bf16.mxu0 0
      %7891 = vmatpush1.bf16.msra.mxu0 0
      %7892 = vmatprep.subr.bf16.mxu0 0
      %7893 = vmatpush1.bf16.msra.mxu0 0
      %7894 = vmatprep.subr.bf16.mxu0 0
      %7895 = vmatpush1.bf16.msra.mxu0 0
      %7896 = vmatprep.subr.bf16.mxu0 0
      %7897 = vmatpush1.bf16.msra.mxu0 0
      %7898 = vmatprep.subr.bf16.mxu0 0
      %7899 = vmatpush1.bf16.msra.mxu0 %v7869
      %7900 = vmatprep.subr.bf16.mxu0 0
      %7901 = vmatpush1.bf16.msra.mxu0 %v7868
      %7902 = vmatprep.subr.bf16.mxu0 0
      %7903 = vmatpush1.bf16.msra.mxu0 %v7867
      %7904 = vmatprep.subr.bf16.mxu0 0
      %7905 = vmatpush1.bf16.msra.mxu0 %v7866
      %7906 = vmatprep.subr.bf16.mxu0 0
      %7907 = vmatpush2.bf16.msra.mxu0 0
      %7908 = vmatprep.subr.bf16.mxu0 0
      %7909 = vmatpush2.bf16.msra.mxu0 0
      %7910 = vmatprep.subr.bf16.mxu0 0
      %7911 = vmatpush2.bf16.msra.mxu0 0
      %7912 = vmatprep.subr.bf16.mxu0 0
      %7913 = vmatpush2.bf16.msra.mxu0 0
      %7914 = vmatprep.subr.bf16.mxu0 0
      %7915 = vmatpush2.bf16.msra.mxu0 0
      %7916 = vmatprep.subr.bf16.mxu0 0
      %7917 = vmatpush2.bf16.msra.mxu0 0
      %7918 = vmatprep.subr.bf16.mxu0 0
      %7919 = vmatpush2.bf16.msra.mxu0 0
      %7920 = vmatprep.subr.bf16.mxu0 0
      %7921 = vmatpush2.bf16.msra.mxu0 0
      %7922 = vmatprep.mubr.bf16.mxu0 0
      %7923 = vmatmul.mubr.bf16.gmra.mxu0 %v7879
      %v7924 = vpop.f32.mrf.mxu0
      %v7925 = vadd.f32 %v7875, %v7924
      %v7926 = vpop.f32.mrf.mxu0
      %v7927 = vpop.f32.mrf.mxu0
      %v7928 = vadd.f32 %v7875, %v7927
      %v7929 = vpop.f32.mrf.mxu0
      %7930 = vmatprep.mubr.bf16.mxu0 0
      %7931 = vmatmul.mubr.bf16.gmra.mxu0 %v7882
      %v7932 = vpop.f32.mrf.mxu0
      %v7933 = vadd.f32 %v7875, %v7932
      %v7934 = vpop.f32.mrf.mxu0
      %v7935 = vpop.f32.mrf.mxu0
      %v7936 = vadd.f32 %v7875, %v7935
      %v7937 = vpop.f32.mrf.mxu0
      %7938 = vmatprep.mubr.bf16.mxu0 0
      %7939 = vmatmul.mubr.bf16.gmra.mxu0 %v7885
      %v7940 = vpop.f32.mrf.mxu0
      %v7941 = vadd.f32 %v7875, %v7940
      %v7942 = vpop.f32.mrf.mxu0
      %v7943 = vpop.f32.mrf.mxu0
      %v7944 = vadd.f32 %v7875, %v7943
      %v7945 = vpop.f32.mrf.mxu0
      %7946 = vmatprep.mubr.bf16.mxu0 0
      %7947 = vmatmul.mubr.bf16.gmra.mxu0 %v7888
      %v7948 = vpop.f32.mrf.mxu0
      %v7949 = vadd.f32 %v7875, %v7948
      %v7950 = vpop.f32.mrf.mxu0
      %v7951 = vpop.f32.mrf.mxu0
      %v7952 = vadd.f32 %v7875, %v7951
      %v7953 = vpop.f32.mrf.mxu0
      %7954 = vdwg.mxu0
      %v7955 = vadd.f32 %v7744, %v7925
      %v7956 = vadd.f32 %v7745, %v7928
      %v7957 = vadd.f32 %v7746, %v7933
      %v7958 = vadd.f32 %v7747, %v7936
      %v7959 = vadd.f32 %v7748, %v7941
      %v7960 = vadd.f32 %v7749, %v7944
      %v7961 = vadd.f32 %v7750, %v7949
      %v7962 = vadd.f32 %v7751, %v7952
      %v7963 = vld [vmem:[%s17] sm:$0x1]
      %v7964 = vld [vmem:[%s18] sm:$0x1]
      %v7965 = vsel %vm1006, %v7955, 0.0
      %7966 = vadd.xlane.f32.xlu0 %v7965
      %v7967 = vpop.xlane.xlu0 %7966
      %v7968 = vsel %vm1006, %v7956, 0.0
      %7969 = vadd.xlane.f32.xlu0 %v7968
      %v7970 = vpop.xlane.xlu0 %7969
      %v7971 = vsel %vm1006, %v7957, 0.0
      %7972 = vadd.xlane.f32.xlu0 %v7971
      %v7973 = vpop.xlane.xlu0 %7972
      %v7974 = vsel %vm1006, %v7958, 0.0
      %7975 = vadd.xlane.f32.xlu0 %v7974
      %v7976 = vpop.xlane.xlu0 %7975
      %v7977 = vsel %vm1006, %v7959, 0.0
      %7978 = vadd.xlane.f32.xlu0 %v7977
      %v7979 = vpop.xlane.xlu0 %7978
      %v7980 = vsel %vm1006, %v7960, 0.0
      %7981 = vadd.xlane.f32.xlu0 %v7980
      %v7982 = vpop.xlane.xlu0 %7981
      %v7983 = vsel %vm1006, %v7961, 0.0
      %7984 = vadd.xlane.f32.xlu0 %v7983
      %v7985 = vpop.xlane.xlu0 %7984
      %v7986 = vsel %vm1006, %v7962, 0.0
      %7987 = vadd.xlane.f32.xlu0 %v7986
      %v7988 = vpop.xlane.xlu0 %7987
      %v7989 = vmul.f32 %v7967, %v7643
      %v7990 = vmul.f32 %v7970, %v7643
      %v7991 = vmul.f32 %v7973, %v7643
      %v7992 = vmul.f32 %v7976, %v7643
      %v7993 = vmul.f32 %v7979, %v7643
      %v7994 = vmul.f32 %v7982, %v7643
      %v7995 = vmul.f32 %v7985, %v7643
      %v7996 = vmul.f32 %v7988, %v7643
      %v7997 = vsub.f32 %v7955, %v7989
      %v7998 = vsub.f32 %v7956, %v7990
      %v7999 = vsub.f32 %v7957, %v7991
      %v8000 = vsub.f32 %v7958, %v7992
      %v8001 = vsub.f32 %v7959, %v7993
      %v8002 = vsub.f32 %v7960, %v7994
      %v8003 = vsub.f32 %v7961, %v7995
      %v8004 = vsub.f32 %v7962, %v7996
      %v8005 = vmul.f32 %v7997, %v7997
      %v8006 = vmul.f32 %v7998, %v7998
      %v8007 = vmul.f32 %v7999, %v7999
      %v8008 = vmul.f32 %v8000, %v8000
      %v8009 = vmul.f32 %v8001, %v8001
      %v8010 = vmul.f32 %v8002, %v8002
      %v8011 = vmul.f32 %v8003, %v8003
      %v8012 = vmul.f32 %v8004, %v8004
      %v8013 = vsel %vm1006, %v8005, 0.0
      %8014 = vadd.xlane.f32.xlu0 %v8013
      %v8015 = vpop.xlane.xlu0 %8014
      %v8016 = vsel %vm1006, %v8006, 0.0
      %8017 = vadd.xlane.f32.xlu0 %v8016
      %v8018 = vpop.xlane.xlu0 %8017
      %v8019 = vsel %vm1006, %v8007, 0.0
      %8020 = vadd.xlane.f32.xlu0 %v8019
      %v8021 = vpop.xlane.xlu0 %8020
      %v8022 = vsel %vm1006, %v8008, 0.0
      %8023 = vadd.xlane.f32.xlu0 %v8022
      %v8024 = vpop.xlane.xlu0 %8023
      %v8025 = vsel %vm1006, %v8009, 0.0
      %8026 = vadd.xlane.f32.xlu0 %v8025
      %v8027 = vpop.xlane.xlu0 %8026
      %v8028 = vsel %vm1006, %v8010, 0.0
      %8029 = vadd.xlane.f32.xlu0 %v8028
      %v8030 = vpop.xlane.xlu0 %8029
      %v8031 = vsel %vm1006, %v8011, 0.0
      %8032 = vadd.xlane.f32.xlu0 %v8031
      %v8033 = vpop.xlane.xlu0 %8032
      %v8034 = vsel %vm1006, %v8012, 0.0
      %8035 = vadd.xlane.f32.xlu0 %v8034
      %v8036 = vpop.xlane.xlu0 %8035
      %v8037 = vmul.f32 %v8015, %v7643
      %v8038 = vmul.f32 %v8018, %v7643
      %v8039 = vmul.f32 %v8021, %v7643
      %v8040 = vmul.f32 %v8024, %v7643
      %v8041 = vmul.f32 %v8027, %v7643
      %v8042 = vmul.f32 %v8030, %v7643
      %v8043 = vmul.f32 %v8033, %v7643
      %v8044 = vmul.f32 %v8036, %v7643
      %v8045 = vadd.f32 %v8037, 1e-05
      %v8046 = vadd.f32 %v8038, 1e-05
      %v8047 = vadd.f32 %v8039, 1e-05
      %v8048 = vadd.f32 %v8040, 1e-05
      %v8049 = vadd.f32 %v8041, 1e-05
      %v8050 = vadd.f32 %v8042, 1e-05
      %v8051 = vadd.f32 %v8043, 1e-05
      %v8052 = vadd.f32 %v8044, 1e-05
      %v8053 = vrsqrt.pop %v8045
      %v8054 = vrsqrt.pop %v8046
      %v8055 = vrsqrt.pop %v8047
      %v8056 = vrsqrt.pop %v8048
      %v8057 = vrsqrt.pop %v8049
      %v8058 = vrsqrt.pop %v8050
      %v8059 = vrsqrt.pop %v8051
      %v8060 = vrsqrt.pop %v8052
      %v8061 = vmul.f32 %v7997, %v8053
      %v8062 = vmul.f32 %v7998, %v8054
      %v8063 = vmul.f32 %v7999, %v8055
      %v8064 = vmul.f32 %v8000, %v8056
      %v8065 = vmul.f32 %v8001, %v8057
      %v8066 = vmul.f32 %v8002, %v8058
      %v8067 = vmul.f32 %v8003, %v8059
      %v8068 = vmul.f32 %v8004, %v8060
      %v8070 = vlaneseq
      %v8071 = vshrl.u32 %v8070, 7
      %v8072 = vsub.s32 0, %v8071
      %v8073 = vrot.slane %v7963, %v8072
      %v8075 = vmul.f32 %v8061, %v8073
      %v8076 = vmul.f32 %v8062, %v8073
      %v8077 = vmul.f32 %v8063, %v8073
      %v8078 = vmul.f32 %v8064, %v8073
      %v8079 = vmul.f32 %v8065, %v8073
      %v8080 = vmul.f32 %v8066, %v8073
      %v8081 = vmul.f32 %v8067, %v8073
      %v8082 = vmul.f32 %v8068, %v8073
      %v8084 = vlaneseq
      %v8085 = vshrl.u32 %v8084, 7
      %v8086 = vsub.s32 0, %v8085
      %v8087 = vrot.slane %v7964, %v8086
      %v8089 = vadd.f32 %v8075, %v8087
      %v8090 = vadd.f32 %v8076, %v8087
      %v8091 = vadd.f32 %v8077, %v8087
      %v8092 = vadd.f32 %v8078, %v8087
      %v8093 = vadd.f32 %v8079, %v8087
      %v8094 = vadd.f32 %v8080, %v8087
      %v8095 = vadd.f32 %v8081, %v8087
      %v8096 = vadd.f32 %v8082, %v8087
      %8097 = vst.msk [vmem:[%s718] sm:$0xff] %vm1006, %v8089
      %8098 = vst.msk [vmem:[%s718 + $0x8] sm:$0xff] %vm1006, %v8090
      %8099 = vst.msk [vmem:[%s718 + $0x10] sm:$0xff] %vm1006, %v8091
      %8100 = vst.msk [vmem:[%s718 + $0x18] sm:$0xff] %vm1006, %v8092
      %8101 = vst.msk [vmem:[%s718 + $0x20] sm:$0xff] %vm1006, %v8093
      %8102 = vst.msk [vmem:[%s718 + $0x28] sm:$0xff] %vm1006, %v8094
      %8103 = vst.msk [vmem:[%s718 + $0x30] sm:$0xff] %vm1006, %v8095
      %8104 = vst.msk [vmem:[%s718 + $0x38] sm:$0xff] %vm1006, %v8096
      %s8105 = smul.u32 8, %s35
      %p8106 = scmp.lt.s32.totalorder %s34, 1
      %s8107 = scalar_select %p8106, %s34, 1
      %p8108 = scmp.lt.s32.totalorder %s8105, 15
      %s8109 = scalar_select %p8108, %s8105, 15
      %s8110 = smul.addr %s8107, 16
      %s8111 = sadd.s32 %s8109, %s8110
      %s8112 = smul.addr %s8111, 8
      %s8113 = scalar_lea.vmem %s19, %s8112
      // Predicated region
      $region101: #{encoder_forward.2} parent=95 // pred_check
        %p8114 = pneg %p485
      $region102: #{encoder_forward.2} parent=95 // pred_check_branch
        %8116 = sbr.rel (%p8114) target = $region104
      $region103: #{encoder_forward.2} parent=95 // pred_region
        %s8117 = smul.u32 8, %s35
      $region104: #{encoder_forward.2} parent=95 // pred_fallthru
        _
    $region96: #{encoder_forward.2} parent=5 // pred_fallthru
      _
    %p8118 = scmp.le.s32.totalorder 2, %s25
    // Predicated region
    $region105: #{encoder_forward.2} parent=5 // pred_check
      %p8119 = pneg %p8118
    $region106: #{encoder_forward.2} parent=5 // pred_check_branch
      %8121 = sbr.rel (%p8119) target = $region108
    $region107: #{encoder_forward.2} parent=5 // pred_region
      %s8122 = ssub.s32 %s25, 2
      // Predicated region
      $region109: #{encoder_forward.2} parent=107 // pred_check
        %p8123 = pneg %p491
      $region110: #{encoder_forward.2} parent=107 // pred_check_branch
        %8125 = sbr.rel (%p8123) target = $region112
      $region111: #{encoder_forward.2} parent=107 // pred_region
        %s8126 = smul.u32 8, %s37
        %p8127 = scmp.lt.s32.totalorder %s36, 1
        %s8128 = scalar_select %p8127, %s36, 1
        %p8129 = scmp.lt.s32.totalorder %s8126, 15
        %s8130 = scalar_select %p8129, %s8126, 15
        %s8131 = smul.addr %s8128, 16
        %s8132 = sadd.s32 %s8130, %s8131
        %s8133 = smul.addr %s8132, 8
        %s8134 = scalar_lea.vmem %s19, %s8133
      $region112: #{encoder_forward.2} parent=107 // pred_fallthru
        _
    $region108: #{encoder_forward.2} parent=5 // pred_fallthru
      _
  $region6: #{encoder_forward.2} parent=0 // loop_footer
    %s29 = sadd.s32 1, %s25
  $region7: #{encoder_forward.2} parent=0 // loop_footer_branch
    %24 = sbr.rel target = $region3
  $region8: #{encoder_forward.2} parent=0 // loop_exit
    _

</llo_original>
